<compile_context>
chip_gen: v7x
topology: tpu7x:2x2x1
jax: 0.10.0
libtpu: 0.0.40
codegen_flags: <defaults>
</compile_context>

<pallas_src>
import jax
import jax.numpy as jnp
from jax import lax
from jax.experimental import pallas as pl
from jax.experimental.pallas import tpu as pltpu

EPS = 1e-5
POOL = 4                                         # nn.MaxPool1d(4) after every conv block
CONV_CFG = [(80, 16), (3, 1), (3, 1), (3, 1)]    # (kernel_size, stride) per conv layer


# ---------------------------------------------------------------------------
# fused forward kernel (one grid step == one batch element)
# ---------------------------------------------------------------------------
def _pool4(src_ref, start, n):
    """MaxPool1d(4) of the channel-last activation in `src_ref` (shape (L, C)):
    returns value[t] = max_{r<4} src_ref[4*(start+t)+r, :]   -> shape (n, C),
    i.e. the window [start, start+n) of the pooled sequence, via stride-4 sublane reads."""
    v = src_ref[pl.ds(POOL * start + 0, n, stride=POOL), :]
    v = jnp.maximum(v, src_ref[pl.ds(POOL * start + 1, n, stride=POOL), :])
    v = jnp.maximum(v, src_ref[pl.ds(POOL * start + 2, n, stride=POOL), :])
    v = jnp.maximum(v, src_ref[pl.ds(POOL * start + 3, n, stride=POOL), :])
    return v


def _fused_kernel(x_ref, w1_ref, s1_ref, b1_ref,
                  w2_ref, s2_ref, b2_ref,
                  w3_ref, s3_ref, b3_ref,
                  w4_ref, s4_ref, b4_ref,
                  wh1_ref, bh1_ref, wh2_ref, bh2_ref,
                  out_ref,
                  a1_ref, a2_ref, a3_ref, a4_ref):
    f32 = jnp.float32

    # ---- layer 1: Conv1d(1, C1, k=80, s=16) as 5 shifted (L1,16)@(16,C1) dots + BN + ReLU ----
    L1 = a1_ref.shape[0]
    sub = x_ref.shape[2]                         # = conv-1 stride (16); k=80 -> 5 chunks
    y = jnp.dot(x_ref[0, pl.ds(0, L1), :], w1_ref[0:sub, :], preferred_element_type=f32)
    for j in range(1, w1_ref.shape[0] // sub):
        y = y + jnp.dot(x_ref[0, pl.ds(j, L1), :], w1_ref[sub * j:sub * (j + 1), :],
                        preferred_element_type=f32)
    a1_ref[...] = jnp.maximum(y * s1_ref[...] + b1_ref[...], 0.0)

    # ---- layers 2-4: MaxPool1d(4) of previous activation + Conv1d(k=3,s=1) + BN + ReLU ----
    def pool_conv3(src_ref, w_ref, s_ref, b_ref, n_out):
        cin = src_ref.shape[1]
        y = jnp.dot(_pool4(src_ref, 0, n_out), w_ref[0:cin, :], preferred_element_type=f32)
        for j in (1, 2):
            y = y + jnp.dot(_pool4(src_ref, j, n_out), w_ref[cin * j:cin * (j + 1), :],
                            preferred_element_type=f32)
        return jnp.maximum(y * s_ref[...] + b_ref[...], 0.0)

    a2_ref[...] = pool_conv3(a1_ref, w2_ref, s2_ref, b2_ref, a2_ref.shape[0])
    a3_ref[...] = pool_conv3(a2_ref, w3_ref, s3_ref, b3_ref, a3_ref.shape[0])
    a4_ref[...] = pool_conv3(a3_ref, w4_ref, s4_ref, b4_ref, a4_ref.shape[0])

    # ---- final MaxPool1d(4) + global average pool + the 3 fused linear heads ----
    p4 = a4_ref.shape[0] // POOL
    pooled = _pool4(a4_ref, 0, p4)                                 # (p4, C4)
    feat = jnp.sum(pooled, axis=0, keepdims=True) * (1.0 / p4)     # (1, C4)  == avg_pool1d(full)
    h = jnp.dot(feat, wh1_ref[...], preferred_element_type=f32) + bh1_ref[...]   # (1, 192)
    o = jnp.dot(h, wh2_ref[...], preferred_element_type=f32) + bh2_ref[...]      # (1, 10)
    out_ref[0] = o


# ---------------------------------------------------------------------------
# host-side glue: BN folding, weight packing, pallas_call
# ---------------------------------------------------------------------------
def _fold_bn(layer):
    scale = layer["gamma"] * lax.rsqrt(layer["var"] + EPS)
    bias = (layer["b"] - layer["mean"]) * scale + layer["beta"]
    return scale[None, :], bias[None, :]


def _stack_conv_w(w):
    # (Cout, Cin, K) -> (K*Cin, Cout) with rows [j*Cin:(j+1)*Cin] = W[:, :, j].T
    cout, cin, k = w.shape
    return jnp.transpose(w, (2, 1, 0)).reshape(k * cin, cout)


@jax.jit
def audio_classifier_forward(x, params):
    B, cin, L = x.shape
    k1, st1 = CONV_CFG[0]
    assert cin == 1 and L >= k1 and L % st1 == 0 and k1 % st1 == 0
    L1 = (L - k1) // st1 + 1            # conv1 output length
    L2 = L1 // POOL - 2                 # conv2 output length
    L3 = L2 // POOL - 2                 # conv3 output length
    L4 = L3 // POOL - 2                 # conv4 output length
    assert L2 >= 1 and L3 >= 1 and L4 >= POOL

    x_r = x.reshape(B, L // st1, st1)   # free reinterpret: row m, col p == sample 16*m + p

    feats = params["features"]
    conv_args = []
    for layer in feats:
        s, b = _fold_bn(layer)
        conv_args += [_stack_conv_w(layer["w"]), s, b]

    hd = params["heads"]
    names = ("emotion", "intensity", "gender")
    wh1 = jnp.concatenate([hd[n]["w1"] for n in names], axis=1)           # (C4, 192)
    bh1 = jnp.concatenate([hd[n]["b1"] for n in names])[None, :]          # (1, 192)
    hidden = hd["emotion"]["w1"].shape[1]
    douts = [hd[n]["w2"].shape[1] for n in names]
    n_out = sum(douts)
    wh2 = jnp.zeros((len(names) * hidden, n_out), jnp.float32)            # block-diagonal (192, 10)
    col = 0
    for i, nm in enumerate(names):
        wh2 = wh2.at[i * hidden:(i + 1) * hidden, col:col + douts[i]].set(hd[nm]["w2"])
        col += douts[i]
    bh2 = jnp.concatenate([hd[n]["b2"] for n in names])[None, :]          # (1, n_out)

    args = (x_r, *conv_args, wh1, bh1, wh2, bh2)

    def full_spec(a):
        nd = a.ndim
        return pl.BlockSpec(a.shape, lambda b, _n=nd: (0,) * _n)

    in_specs = [pl.BlockSpec((1, L // st1, st1), lambda b: (b, 0, 0))]
    in_specs += [full_spec(a) for a in args[1:]]

    chans = [layer["w"].shape[0] for layer in feats]
    out = pl.pallas_call(
        _fused_kernel,
        out_shape=jax.ShapeDtypeStruct((B, 1, n_out), jnp.float32),
        grid=(B,),
        in_specs=in_specs,
        out_specs=pl.BlockSpec((1, 1, n_out), lambda b: (b, 0, 0)),
        scratch_shapes=[
            pltpu.VMEM((L1, chans[0]), jnp.float32),   # conv1 activation (pre-pool)
            pltpu.VMEM((L2, chans[1]), jnp.float32),   # conv2 activation
            pltpu.VMEM((L3, chans[2]), jnp.float32),   # conv3 activation
            pltpu.VMEM((L4, chans[3]), jnp.float32),   # conv4 activation
        ],
        compiler_params=pltpu.CompilerParams(dimension_semantics=("parallel",)),
    )(*args)

    e, i_, _ = douts
    return (out[:, :, 0:e], out[:, :, e:e + i_], out[:, :, e + i_:n_out])


# ---------------------------------------------------------------------------
# Deterministic parameter init (shapes from the PyTorch __init__)
# ---------------------------------------------------------------------------
def init_params(key, n_input=1, n_channel=32,
                emotion_n_output=8, emotion_intensity_output=1, gender_output=1):
    keys = iter(jax.random.split(key, 64))

    def u(shape, bound):
        return jax.random.uniform(next(keys), shape, jnp.float32, -bound, bound)

    params = {"features": [], "heads": {}}
    conv_dims = [(n_input, n_channel, 80), (n_channel, n_channel, 3),
                 (n_channel, 2 * n_channel, 3), (2 * n_channel, 2 * n_channel, 3)]
    for cin, cout, ksz in conv_dims:
        bound = 1.0 / (cin * ksz) ** 0.5
        params["features"].append({
            "w": u((cout, cin, ksz), bound),
            "b": u((cout,), bound),
            "gamma": 1.0 + 0.1 * jax.random.normal(next(keys), (cout,), jnp.float32),
            "beta": 0.1 * jax.random.normal(next(keys), (cout,), jnp.float32),
            "mean": 0.1 * jax.random.normal(next(keys), (cout,), jnp.float32),
            "var": jax.random.uniform(next(keys), (cout,), jnp.float32, 0.5, 1.5),
        })
    C = 2 * n_channel
    for name, nout in (("emotion", emotion_n_output),
                       ("intensity", emotion_intensity_output),
                       ("gender", gender_output)):
        b1, b2 = 1.0 / C ** 0.5, 1.0 / 64 ** 0.5
        params["heads"][name] = {
            "w1": u((C, 64), b1), "b1": u((64,), b1),
            "w2": u((64, nout), b2), "b2": u((nout,), b2),
        }
    return params


# ---------------------------------------------------------------------------
# Pure-JAX reference (exact PyTorch forward semantics, f32 HIGHEST) for validation
# ---------------------------------------------------------------------------
def reference_forward(x, params):
    HI = jax.lax.Precision.HIGHEST
    for (ksz, stride), layer in zip(CONV_CFG, params["features"]):
        y = lax.conv_general_dilated(
            x, layer["w"], (stride,), "VALID",
            dimension_numbers=("NCH", "OIH", "NCH"), precision=HI)
        y = y + layer["b"][None, :, None]
        y = (y - layer["mean"][None, :, None]) / jnp.sqrt(layer["var"][None, :, None] + EPS)
        y = y * layer["gamma"][None, :, None] + layer["beta"][None, :, None]
        y = jnp.maximum(y, 0.0)
        B, C, L = y.shape
        W = L // POOL
        x = y[:, :, :POOL * W].reshape(B, C, W, POOL).max(axis=-1)
    x = x.mean(axis=-1, keepdims=True)      # F.avg_pool1d(x, x.shape[-1])
    x = x.transpose(0, 2, 1)                # permute(0, 2, 1)
    outs = []
    for name in ("emotion", "intensity", "gender"):
        p = params["heads"][name]
        h = jnp.einsum("blc,cd->bld", x, p["w1"], precision=HI) + p["b1"]
        outs.append(jnp.einsum("bld,de->ble", h, p["w2"], precision=HI) + p["b2"])
    return tuple(outs)


if __name__ == "__main__":
    B, L = 2, 8000                     # 1 second @ 8 kHz (minimal-ish length the conv stack supports)
    x = jax.random.normal(jax.random.PRNGKey(0), (B, 1, L), dtype=jnp.float32)
    params = init_params(jax.random.PRNGKey(42))

    outs = jax.block_until_ready(audio_classifier_forward(x, params))

    refs = reference_forward(x, params)
    expected_shapes = [(B, 1, 8), (B, 1, 1), (B, 1, 1)]
    # Kernel matmuls run at default (bf16-operand) MXU precision vs. an f32-HIGHEST reference,
    # so allow a few-percent tolerance; structural bugs would be orders of magnitude larger.
    for o, r, s in zip(outs, refs, expected_shapes):
        assert o.shape == s, (o.shape, s)
        assert jnp.allclose(o, r, atol=5e-2, rtol=5e-2), float(jnp.max(jnp.abs(o - r)))
    print("KERNEL_OK")
</pallas_src>

<mosaic_0001>
module attributes {stable_mosaic.version = 11 : i64} {
  func.func @_fused_kernel(%arg0: i32, %arg1: memref<1x500x16xf32, #tpu.memory_space<vmem>>, %arg2: memref<80x32xf32, #tpu.memory_space<vmem>>, %arg3: memref<1x32xf32, #tpu.memory_space<vmem>>, %arg4: memref<1x32xf32, #tpu.memory_space<vmem>>, %arg5: memref<96x32xf32, #tpu.memory_space<vmem>>, %arg6: memref<1x32xf32, #tpu.memory_space<vmem>>, %arg7: memref<1x32xf32, #tpu.memory_space<vmem>>, %arg8: memref<96x64xf32, #tpu.memory_space<vmem>>, %arg9: memref<1x64xf32, #tpu.memory_space<vmem>>, %arg10: memref<1x64xf32, #tpu.memory_space<vmem>>, %arg11: memref<192x64xf32, #tpu.memory_space<vmem>>, %arg12: memref<1x64xf32, #tpu.memory_space<vmem>>, %arg13: memref<1x64xf32, #tpu.memory_space<vmem>>, %arg14: memref<64x192xf32, #tpu.memory_space<vmem>>, %arg15: memref<1x192xf32, #tpu.memory_space<vmem>>, %arg16: memref<192x10xf32, #tpu.memory_space<vmem>>, %arg17: memref<1x10xf32, #tpu.memory_space<vmem>>, %arg18: memref<1x1x10xf32, #tpu.memory_space<vmem>>, %arg19: memref<496x32xf32, #tpu.memory_space<vmem>>, %arg20: memref<122x32xf32, #tpu.memory_space<vmem>>, %arg21: memref<28x64xf32, #tpu.memory_space<vmem>>, %arg22: memref<5x64xf32, #tpu.memory_space<vmem>>) attributes {dimension_semantics = [#tpu.dimension_semantics<parallel>], iteration_bounds = array<i64: 2>, scalar_prefetch = 0 : i64, scratch_operands = 4 : i64, tpu.core_type = #tpu.core_type<tc>, window_params = [{transform_indices = @transform_0, window_bounds = array<i64: 1, 500, 16>}, {pipeline_mode = #tpu.pipeline_mode<synchronous>, transform_indices = @transform_1, window_bounds = array<i64: 80, 32>}, {pipeline_mode = #tpu.pipeline_mode<synchronous>, transform_indices = @transform_2, window_bounds = array<i64: 1, 32>}, {pipeline_mode = #tpu.pipeline_mode<synchronous>, transform_indices = @transform_3, window_bounds = array<i64: 1, 32>}, {pipeline_mode = #tpu.pipeline_mode<synchronous>, transform_indices = @transform_4, window_bounds = array<i64: 96, 32>}, {pipeline_mode = #tpu.pipeline_mode<synchronous>, transform_indices = @transform_5, window_bounds = array<i64: 1, 32>}, {pipeline_mode = #tpu.pipeline_mode<synchronous>, transform_indices = @transform_6, window_bounds = array<i64: 1, 32>}, {pipeline_mode = #tpu.pipeline_mode<synchronous>, transform_indices = @transform_7, window_bounds = array<i64: 96, 64>}, {pipeline_mode = #tpu.pipeline_mode<synchronous>, transform_indices = @transform_8, window_bounds = array<i64: 1, 64>}, {pipeline_mode = #tpu.pipeline_mode<synchronous>, transform_indices = @transform_9, window_bounds = array<i64: 1, 64>}, {pipeline_mode = #tpu.pipeline_mode<synchronous>, transform_indices = @transform_10, window_bounds = array<i64: 192, 64>}, {pipeline_mode = #tpu.pipeline_mode<synchronous>, transform_indices = @transform_11, window_bounds = array<i64: 1, 64>}, {pipeline_mode = #tpu.pipeline_mode<synchronous>, transform_indices = @transform_12, window_bounds = array<i64: 1, 64>}, {pipeline_mode = #tpu.pipeline_mode<synchronous>, transform_indices = @transform_13, window_bounds = array<i64: 64, 192>}, {pipeline_mode = #tpu.pipeline_mode<synchronous>, transform_indices = @transform_14, window_bounds = array<i64: 1, 192>}, {pipeline_mode = #tpu.pipeline_mode<synchronous>, transform_indices = @transform_15, window_bounds = array<i64: 192, 10>}, {pipeline_mode = #tpu.pipeline_mode<synchronous>, transform_indices = @transform_16, window_bounds = array<i64: 1, 10>}, {transform_indices = @transform_17, window_bounds = array<i64: 1, 1, 10>}]} {
    %c0 = arith.constant 0 : index
    %c0_0 = arith.constant 0 : index
    %c0_1 = arith.constant 0 : index
    %0 = vector.load %arg1[%c0, %c0_0, %c0_1] : memref<1x500x16xf32, #tpu.memory_space<vmem>>, vector<1x496x16xf32>
    %1 = vector.shape_cast %0 : vector<1x496x16xf32> to vector<496x16xf32>
    %c0_2 = arith.constant 0 : index
    %c0_3 = arith.constant 0 : index
    %2 = vector.load %arg2[%c0_2, %c0_3] : memref<80x32xf32, #tpu.memory_space<vmem>>, vector<16x32xf32>
    %cst = arith.constant dense<0.000000e+00> : vector<496x32xf32>
    %3 = tpu.matmul %1, %2, %cst {dimension_numbers = #tpu.dot_dimension_numbers<[1], [0], [0], [1], [0, 0, 1, 1], [], []>} : vector<496x16xf32>, vector<16x32xf32>, vector<496x32xf32> -> vector<496x32xf32>
    %c0_4 = arith.constant 0 : index
    %c1 = arith.constant 1 : index
    %c0_5 = arith.constant 0 : index
    %4 = vector.load %arg1[%c0_4, %c1, %c0_5] : memref<1x500x16xf32, #tpu.memory_space<vmem>>, vector<1x496x16xf32>
    %5 = vector.shape_cast %4 : vector<1x496x16xf32> to vector<496x16xf32>
    %c16 = arith.constant 16 : index
    %c0_6 = arith.constant 0 : index
    %6 = vector.load %arg2[%c16, %c0_6] : memref<80x32xf32, #tpu.memory_space<vmem>>, vector<16x32xf32>
    %cst_7 = arith.constant dense<0.000000e+00> : vector<496x32xf32>
    %7 = tpu.matmul %5, %6, %cst_7 {dimension_numbers = #tpu.dot_dimension_numbers<[1], [0], [0], [1], [0, 0, 1, 1], [], []>} : vector<496x16xf32>, vector<16x32xf32>, vector<496x32xf32> -> vector<496x32xf32>
    %8 = arith.addf %3, %7 : vector<496x32xf32>
    %c0_8 = arith.constant 0 : index
    %c2 = arith.constant 2 : index
    %c0_9 = arith.constant 0 : index
    %9 = vector.load %arg1[%c0_8, %c2, %c0_9] : memref<1x500x16xf32, #tpu.memory_space<vmem>>, vector<1x496x16xf32>
    %10 = vector.shape_cast %9 : vector<1x496x16xf32> to vector<496x16xf32>
    %c32 = arith.constant 32 : index
    %c0_10 = arith.constant 0 : index
    %11 = vector.load %arg2[%c32, %c0_10] : memref<80x32xf32, #tpu.memory_space<vmem>>, vector<16x32xf32>
    %cst_11 = arith.constant dense<0.000000e+00> : vector<496x32xf32>
    %12 = tpu.matmul %10, %11, %cst_11 {dimension_numbers = #tpu.dot_dimension_numbers<[1], [0], [0], [1], [0, 0, 1, 1], [], []>} : vector<496x16xf32>, vector<16x32xf32>, vector<496x32xf32> -> vector<496x32xf32>
    %13 = arith.addf %8, %12 : vector<496x32xf32>
    %c0_12 = arith.constant 0 : index
    %c3 = arith.constant 3 : index
    %c0_13 = arith.constant 0 : index
    %14 = vector.load %arg1[%c0_12, %c3, %c0_13] : memref<1x500x16xf32, #tpu.memory_space<vmem>>, vector<1x496x16xf32>
    %15 = vector.shape_cast %14 : vector<1x496x16xf32> to vector<496x16xf32>
    %c48 = arith.constant 48 : index
    %c0_14 = arith.constant 0 : index
    %16 = vector.load %arg2[%c48, %c0_14] : memref<80x32xf32, #tpu.memory_space<vmem>>, vector<16x32xf32>
    %cst_15 = arith.constant dense<0.000000e+00> : vector<496x32xf32>
    %17 = tpu.matmul %15, %16, %cst_15 {dimension_numbers = #tpu.dot_dimension_numbers<[1], [0], [0], [1], [0, 0, 1, 1], [], []>} : vector<496x16xf32>, vector<16x32xf32>, vector<496x32xf32> -> vector<496x32xf32>
    %18 = arith.addf %13, %17 : vector<496x32xf32>
    %c0_16 = arith.constant 0 : index
    %c4 = arith.constant 4 : index
    %c0_17 = arith.constant 0 : index
    %19 = vector.load %arg1[%c0_16, %c4, %c0_17] : memref<1x500x16xf32, #tpu.memory_space<vmem>>, vector<1x496x16xf32>
    %20 = vector.shape_cast %19 : vector<1x496x16xf32> to vector<496x16xf32>
    %c64 = arith.constant 64 : index
    %c0_18 = arith.constant 0 : index
    %21 = vector.load %arg2[%c64, %c0_18] : memref<80x32xf32, #tpu.memory_space<vmem>>, vector<16x32xf32>
    %cst_19 = arith.constant dense<0.000000e+00> : vector<496x32xf32>
    %22 = tpu.matmul %20, %21, %cst_19 {dimension_numbers = #tpu.dot_dimension_numbers<[1], [0], [0], [1], [0, 0, 1, 1], [], []>} : vector<496x16xf32>, vector<16x32xf32>, vector<496x32xf32> -> vector<496x32xf32>
    %23 = arith.addf %18, %22 : vector<496x32xf32>
    %c0_20 = arith.constant 0 : index
    %c0_21 = arith.constant 0 : index
    %24 = vector.load %arg3[%c0_20, %c0_21] : memref<1x32xf32, #tpu.memory_space<vmem>>, vector<1x32xf32>
    %25 = vector.broadcast %24 : vector<1x32xf32> to vector<496x32xf32>
    %26 = arith.mulf %23, %25 : vector<496x32xf32>
    %c0_22 = arith.constant 0 : index
    %c0_23 = arith.constant 0 : index
    %27 = vector.load %arg4[%c0_22, %c0_23] : memref<1x32xf32, #tpu.memory_space<vmem>>, vector<1x32xf32>
    %28 = vector.broadcast %27 : vector<1x32xf32> to vector<496x32xf32>
    %29 = arith.addf %26, %28 : vector<496x32xf32>
    %cst_24 = arith.constant 0.000000e+00 : f32
    %30 = vector.broadcast %cst_24 : f32 to vector<496x32xf32>
    %31 = arith.maximumf %29, %30 : vector<496x32xf32>
    %c0_25 = arith.constant 0 : index
    %c0_26 = arith.constant 0 : index
    %32 = vector.load %arg19[%c0_25, %c0_26] : memref<496x32xf32, #tpu.memory_space<vmem>>, vector<496x32xf32>
    tpu.vector_store %arg19[%c0_25, %c0_26], %31 {strides = array<i32>} : memref<496x32xf32, #tpu.memory_space<vmem>>, vector<496x32xf32>,
    %c0_27 = arith.constant 0 : index
    %c0_28 = arith.constant 0 : index
    %33 = tpu.strided_load %arg19[%c0_27, %c0_28] {strides = array<i32: 4, 1>} : memref<496x32xf32, #tpu.memory_space<vmem>>, vector<122x32xf32>
    %c1_29 = arith.constant 1 : index
    %c0_30 = arith.constant 0 : index
    %34 = tpu.strided_load %arg19[%c1_29, %c0_30] {strides = array<i32: 4, 1>} : memref<496x32xf32, #tpu.memory_space<vmem>>, vector<122x32xf32>
    %35 = arith.maximumf %33, %34 : vector<122x32xf32>
    %c2_31 = arith.constant 2 : index
    %c0_32 = arith.constant 0 : index
    %36 = tpu.strided_load %arg19[%c2_31, %c0_32] {strides = array<i32: 4, 1>} : memref<496x32xf32, #tpu.memory_space<vmem>>, vector<122x32xf32>
    %37 = arith.maximumf %35, %36 : vector<122x32xf32>
    %c3_33 = arith.constant 3 : index
    %c0_34 = arith.constant 0 : index
    %38 = tpu.strided_load %arg19[%c3_33, %c0_34] {strides = array<i32: 4, 1>} : memref<496x32xf32, #tpu.memory_space<vmem>>, vector<122x32xf32>
    %39 = arith.maximumf %37, %38 : vector<122x32xf32>
    %c0_35 = arith.constant 0 : index
    %c0_36 = arith.constant 0 : index
    %40 = vector.load %arg5[%c0_35, %c0_36] : memref<96x32xf32, #tpu.memory_space<vmem>>, vector<32x32xf32>
    %cst_37 = arith.constant dense<0.000000e+00> : vector<122x32xf32>
    %41 = tpu.matmul %39, %40, %cst_37 {dimension_numbers = #tpu.dot_dimension_numbers<[1], [0], [0], [1], [0, 0, 1, 1], [], []>} : vector<122x32xf32>, vector<32x32xf32>, vector<122x32xf32> -> vector<122x32xf32>
    %c4_38 = arith.constant 4 : index
    %c0_39 = arith.constant 0 : index
    %42 = tpu.strided_load %arg19[%c4_38, %c0_39] {strides = array<i32: 4, 1>} : memref<496x32xf32, #tpu.memory_space<vmem>>, vector<122x32xf32>
    %c5 = arith.constant 5 : index
    %c0_40 = arith.constant 0 : index
    %43 = tpu.strided_load %arg19[%c5, %c0_40] {strides = array<i32: 4, 1>} : memref<496x32xf32, #tpu.memory_space<vmem>>, vector<122x32xf32>
    %44 = arith.maximumf %42, %43 : vector<122x32xf32>
    %c6 = arith.constant 6 : index
    %c0_41 = arith.constant 0 : index
    %45 = tpu.strided_load %arg19[%c6, %c0_41] {strides = array<i32: 4, 1>} : memref<496x32xf32, #tpu.memory_space<vmem>>, vector<122x32xf32>
    %46 = arith.maximumf %44, %45 : vector<122x32xf32>
    %c7 = arith.constant 7 : index
    %c0_42 = arith.constant 0 : index
    %47 = tpu.strided_load %arg19[%c7, %c0_42] {strides = array<i32: 4, 1>} : memref<496x32xf32, #tpu.memory_space<vmem>>, vector<122x32xf32>
    %48 = arith.maximumf %46, %47 : vector<122x32xf32>
    %c32_43 = arith.constant 32 : index
    %c0_44 = arith.constant 0 : index
    %49 = vector.load %arg5[%c32_43, %c0_44] : memref<96x32xf32, #tpu.memory_space<vmem>>, vector<32x32xf32>
    %cst_45 = arith.constant dense<0.000000e+00> : vector<122x32xf32>
    %50 = tpu.matmul %48, %49, %cst_45 {dimension_numbers = #tpu.dot_dimension_numbers<[1], [0], [0], [1], [0, 0, 1, 1], [], []>} : vector<122x32xf32>, vector<32x32xf32>, vector<122x32xf32> -> vector<122x32xf32>
    %51 = arith.addf %41, %50 : vector<122x32xf32>
    %c8 = arith.constant 8 : index
    %c0_46 = arith.constant 0 : index
    %52 = tpu.strided_load %arg19[%c8, %c0_46] {strides = array<i32: 4, 1>} : memref<496x32xf32, #tpu.memory_space<vmem>>, vector<122x32xf32>
    %c9 = arith.constant 9 : index
    %c0_47 = arith.constant 0 : index
    %53 = tpu.strided_load %arg19[%c9, %c0_47] {strides = array<i32: 4, 1>} : memref<496x32xf32, #tpu.memory_space<vmem>>, vector<122x32xf32>
    %54 = arith.maximumf %52, %53 : vector<122x32xf32>
    %c10 = arith.constant 10 : index
    %c0_48 = arith.constant 0 : index
    %55 = tpu.strided_load %arg19[%c10, %c0_48] {strides = array<i32: 4, 1>} : memref<496x32xf32, #tpu.memory_space<vmem>>, vector<122x32xf32>
    %56 = arith.maximumf %54, %55 : vector<122x32xf32>
    %c11 = arith.constant 11 : index
    %c0_49 = arith.constant 0 : index
    %57 = tpu.strided_load %arg19[%c11, %c0_49] {strides = array<i32: 4, 1>} : memref<496x32xf32, #tpu.memory_space<vmem>>, vector<122x32xf32>
    %58 = arith.maximumf %56, %57 : vector<122x32xf32>
    %c64_50 = arith.constant 64 : index
    %c0_51 = arith.constant 0 : index
    %59 = vector.load %arg5[%c64_50, %c0_51] : memref<96x32xf32, #tpu.memory_space<vmem>>, vector<32x32xf32>
    %cst_52 = arith.constant dense<0.000000e+00> : vector<122x32xf32>
    %60 = tpu.matmul %58, %59, %cst_52 {dimension_numbers = #tpu.dot_dimension_numbers<[1], [0], [0], [1], [0, 0, 1, 1], [], []>} : vector<122x32xf32>, vector<32x32xf32>, vector<122x32xf32> -> vector<122x32xf32>
    %61 = arith.addf %51, %60 : vector<122x32xf32>
    %c0_53 = arith.constant 0 : index
    %c0_54 = arith.constant 0 : index
    %62 = vector.load %arg6[%c0_53, %c0_54] : memref<1x32xf32, #tpu.memory_space<vmem>>, vector<1x32xf32>
    %63 = vector.broadcast %62 : vector<1x32xf32> to vector<122x32xf32>
    %64 = arith.mulf %61, %63 : vector<122x32xf32>
    %c0_55 = arith.constant 0 : index
    %c0_56 = arith.constant 0 : index
    %65 = vector.load %arg7[%c0_55, %c0_56] : memref<1x32xf32, #tpu.memory_space<vmem>>, vector<1x32xf32>
    %66 = vector.broadcast %65 : vector<1x32xf32> to vector<122x32xf32>
    %67 = arith.addf %64, %66 : vector<122x32xf32>
    %cst_57 = arith.constant 0.000000e+00 : f32
    %68 = vector.broadcast %cst_57 : f32 to vector<122x32xf32>
    %69 = arith.maximumf %67, %68 : vector<122x32xf32>
    %c0_58 = arith.constant 0 : index
    %c0_59 = arith.constant 0 : index
    %70 = vector.load %arg20[%c0_58, %c0_59] : memref<122x32xf32, #tpu.memory_space<vmem>>, vector<122x32xf32>
    tpu.vector_store %arg20[%c0_58, %c0_59], %69 {strides = array<i32>} : memref<122x32xf32, #tpu.memory_space<vmem>>, vector<122x32xf32>,
    %c0_60 = arith.constant 0 : index
    %c0_61 = arith.constant 0 : index
    %71 = tpu.strided_load %arg20[%c0_60, %c0_61] {strides = array<i32: 4, 1>} : memref<122x32xf32, #tpu.memory_space<vmem>>, vector<28x32xf32>
    %c1_62 = arith.constant 1 : index
    %c0_63 = arith.constant 0 : index
    %72 = tpu.strided_load %arg20[%c1_62, %c0_63] {strides = array<i32: 4, 1>} : memref<122x32xf32, #tpu.memory_space<vmem>>, vector<28x32xf32>
    %73 = arith.maximumf %71, %72 : vector<28x32xf32>
    %c2_64 = arith.constant 2 : index
    %c0_65 = arith.constant 0 : index
    %74 = tpu.strided_load %arg20[%c2_64, %c0_65] {strides = array<i32: 4, 1>} : memref<122x32xf32, #tpu.memory_space<vmem>>, vector<28x32xf32>
    %75 = arith.maximumf %73, %74 : vector<28x32xf32>
    %c3_66 = arith.constant 3 : index
    %c0_67 = arith.constant 0 : index
    %76 = tpu.strided_load %arg20[%c3_66, %c0_67] {strides = array<i32: 4, 1>} : memref<122x32xf32, #tpu.memory_space<vmem>>, vector<28x32xf32>
    %77 = arith.maximumf %75, %76 : vector<28x32xf32>
    %c0_68 = arith.constant 0 : index
    %c0_69 = arith.constant 0 : index
    %78 = vector.load %arg8[%c0_68, %c0_69] : memref<96x64xf32, #tpu.memory_space<vmem>>, vector<32x64xf32>
    %cst_70 = arith.constant dense<0.000000e+00> : vector<28x64xf32>
    %79 = tpu.matmul %77, %78, %cst_70 {dimension_numbers = #tpu.dot_dimension_numbers<[1], [0], [0], [1], [0, 0, 1, 1], [], []>} : vector<28x32xf32>, vector<32x64xf32>, vector<28x64xf32> -> vector<28x64xf32>
    %c4_71 = arith.constant 4 : index
    %c0_72 = arith.constant 0 : index
    %80 = tpu.strided_load %arg20[%c4_71, %c0_72] {strides = array<i32: 4, 1>} : memref<122x32xf32, #tpu.memory_space<vmem>>, vector<28x32xf32>
    %c5_73 = arith.constant 5 : index
    %c0_74 = arith.constant 0 : index
    %81 = tpu.strided_load %arg20[%c5_73, %c0_74] {strides = array<i32: 4, 1>} : memref<122x32xf32, #tpu.memory_space<vmem>>, vector<28x32xf32>
    %82 = arith.maximumf %80, %81 : vector<28x32xf32>
    %c6_75 = arith.constant 6 : index
    %c0_76 = arith.constant 0 : index
    %83 = tpu.strided_load %arg20[%c6_75, %c0_76] {strides = array<i32: 4, 1>} : memref<122x32xf32, #tpu.memory_space<vmem>>, vector<28x32xf32>
    %84 = arith.maximumf %82, %83 : vector<28x32xf32>
    %c7_77 = arith.constant 7 : index
    %c0_78 = arith.constant 0 : index
    %85 = tpu.strided_load %arg20[%c7_77, %c0_78] {strides = array<i32: 4, 1>} : memref<122x32xf32, #tpu.memory_space<vmem>>, vector<28x32xf32>
    %86 = arith.maximumf %84, %85 : vector<28x32xf32>
    %c32_79 = arith.constant 32 : index
    %c0_80 = arith.constant 0 : index
    %87 = vector.load %arg8[%c32_79, %c0_80] : memref<96x64xf32, #tpu.memory_space<vmem>>, vector<32x64xf32>
    %cst_81 = arith.constant dense<0.000000e+00> : vector<28x64xf32>
    %88 = tpu.matmul %86, %87, %cst_81 {dimension_numbers = #tpu.dot_dimension_numbers<[1], [0], [0], [1], [0, 0, 1, 1], [], []>} : vector<28x32xf32>, vector<32x64xf32>, vector<28x64xf32> -> vector<28x64xf32>
    %89 = arith.addf %79, %88 : vector<28x64xf32>
    %c8_82 = arith.constant 8 : index
    %c0_83 = arith.constant 0 : index
    %90 = tpu.strided_load %arg20[%c8_82, %c0_83] {strides = array<i32: 4, 1>} : memref<122x32xf32, #tpu.memory_space<vmem>>, vector<28x32xf32>
    %c9_84 = arith.constant 9 : index
    %c0_85 = arith.constant 0 : index
    %91 = tpu.strided_load %arg20[%c9_84, %c0_85] {strides = array<i32: 4, 1>} : memref<122x32xf32, #tpu.memory_space<vmem>>, vector<28x32xf32>
    %92 = arith.maximumf %90, %91 : vector<28x32xf32>
    %c10_86 = arith.constant 10 : index
    %c0_87 = arith.constant 0 : index
    %93 = tpu.strided_load %arg20[%c10_86, %c0_87] {strides = array<i32: 4, 1>} : memref<122x32xf32, #tpu.memory_space<vmem>>, vector<28x32xf32>
    %94 = arith.maximumf %92, %93 : vector<28x32xf32>
    %c11_88 = arith.constant 11 : index
    %c0_89 = arith.constant 0 : index
    %95 = tpu.strided_load %arg20[%c11_88, %c0_89] {strides = array<i32: 4, 1>} : memref<122x32xf32, #tpu.memory_space<vmem>>, vector<28x32xf32>
    %96 = arith.maximumf %94, %95 : vector<28x32xf32>
    %c64_90 = arith.constant 64 : index
    %c0_91 = arith.constant 0 : index
    %97 = vector.load %arg8[%c64_90, %c0_91] : memref<96x64xf32, #tpu.memory_space<vmem>>, vector<32x64xf32>
    %cst_92 = arith.constant dense<0.000000e+00> : vector<28x64xf32>
    %98 = tpu.matmul %96, %97, %cst_92 {dimension_numbers = #tpu.dot_dimension_numbers<[1], [0], [0], [1], [0, 0, 1, 1], [], []>} : vector<28x32xf32>, vector<32x64xf32>, vector<28x64xf32> -> vector<28x64xf32>
    %99 = arith.addf %89, %98 : vector<28x64xf32>
    %c0_93 = arith.constant 0 : index
    %c0_94 = arith.constant 0 : index
    %100 = vector.load %arg9[%c0_93, %c0_94] : memref<1x64xf32, #tpu.memory_space<vmem>>, vector<1x64xf32>
    %101 = vector.broadcast %100 : vector<1x64xf32> to vector<28x64xf32>
    %102 = arith.mulf %99, %101 : vector<28x64xf32>
    %c0_95 = arith.constant 0 : index
    %c0_96 = arith.constant 0 : index
    %103 = vector.load %arg10[%c0_95, %c0_96] : memref<1x64xf32, #tpu.memory_space<vmem>>, vector<1x64xf32>
    %104 = vector.broadcast %103 : vector<1x64xf32> to vector<28x64xf32>
    %105 = arith.addf %102, %104 : vector<28x64xf32>
    %cst_97 = arith.constant 0.000000e+00 : f32
    %106 = vector.broadcast %cst_97 : f32 to vector<28x64xf32>
    %107 = arith.maximumf %105, %106 : vector<28x64xf32>
    %c0_98 = arith.constant 0 : index
    %c0_99 = arith.constant 0 : index
    %108 = vector.load %arg21[%c0_98, %c0_99] : memref<28x64xf32, #tpu.memory_space<vmem>>, vector<28x64xf32>
    tpu.vector_store %arg21[%c0_98, %c0_99], %107 {strides = array<i32>} : memref<28x64xf32, #tpu.memory_space<vmem>>, vector<28x64xf32>,
    %c0_100 = arith.constant 0 : index
    %c0_101 = arith.constant 0 : index
    %109 = tpu.strided_load %arg21[%c0_100, %c0_101] {strides = array<i32: 4, 1>} : memref<28x64xf32, #tpu.memory_space<vmem>>, vector<5x64xf32>
    %c1_102 = arith.constant 1 : index
    %c0_103 = arith.constant 0 : index
    %110 = tpu.strided_load %arg21[%c1_102, %c0_103] {strides = array<i32: 4, 1>} : memref<28x64xf32, #tpu.memory_space<vmem>>, vector<5x64xf32>
    %111 = arith.maximumf %109, %110 : vector<5x64xf32>
    %c2_104 = arith.constant 2 : index
    %c0_105 = arith.constant 0 : index
    %112 = tpu.strided_load %arg21[%c2_104, %c0_105] {strides = array<i32: 4, 1>} : memref<28x64xf32, #tpu.memory_space<vmem>>, vector<5x64xf32>
    %113 = arith.maximumf %111, %112 : vector<5x64xf32>
    %c3_106 = arith.constant 3 : index
    %c0_107 = arith.constant 0 : index
    %114 = tpu.strided_load %arg21[%c3_106, %c0_107] {strides = array<i32: 4, 1>} : memref<28x64xf32, #tpu.memory_space<vmem>>, vector<5x64xf32>
    %115 = arith.maximumf %113, %114 : vector<5x64xf32>
    %c0_108 = arith.constant 0 : index
    %c0_109 = arith.constant 0 : index
    %116 = vector.load %arg11[%c0_108, %c0_109] : memref<192x64xf32, #tpu.memory_space<vmem>>, vector<64x64xf32>
    %cst_110 = arith.constant dense<0.000000e+00> : vector<5x64xf32>
    %117 = tpu.matmul %115, %116, %cst_110 {dimension_numbers = #tpu.dot_dimension_numbers<[1], [0], [0], [1], [0, 0, 1, 1], [], []>} : vector<5x64xf32>, vector<64x64xf32>, vector<5x64xf32> -> vector<5x64xf32>
    %c4_111 = arith.constant 4 : index
    %c0_112 = arith.constant 0 : index
    %118 = tpu.strided_load %arg21[%c4_111, %c0_112] {strides = array<i32: 4, 1>} : memref<28x64xf32, #tpu.memory_space<vmem>>, vector<5x64xf32>
    %c5_113 = arith.constant 5 : index
    %c0_114 = arith.constant 0 : index
    %119 = tpu.strided_load %arg21[%c5_113, %c0_114] {strides = array<i32: 4, 1>} : memref<28x64xf32, #tpu.memory_space<vmem>>, vector<5x64xf32>
    %120 = arith.maximumf %118, %119 : vector<5x64xf32>
    %c6_115 = arith.constant 6 : index
    %c0_116 = arith.constant 0 : index
    %121 = tpu.strided_load %arg21[%c6_115, %c0_116] {strides = array<i32: 4, 1>} : memref<28x64xf32, #tpu.memory_space<vmem>>, vector<5x64xf32>
    %122 = arith.maximumf %120, %121 : vector<5x64xf32>
    %c7_117 = arith.constant 7 : index
    %c0_118 = arith.constant 0 : index
    %123 = tpu.strided_load %arg21[%c7_117, %c0_118] {strides = array<i32: 4, 1>} : memref<28x64xf32, #tpu.memory_space<vmem>>, vector<5x64xf32>
    %124 = arith.maximumf %122, %123 : vector<5x64xf32>
    %c64_119 = arith.constant 64 : index
    %c0_120 = arith.constant 0 : index
    %125 = vector.load %arg11[%c64_119, %c0_120] : memref<192x64xf32, #tpu.memory_space<vmem>>, vector<64x64xf32>
    %cst_121 = arith.constant dense<0.000000e+00> : vector<5x64xf32>
    %126 = tpu.matmul %124, %125, %cst_121 {dimension_numbers = #tpu.dot_dimension_numbers<[1], [0], [0], [1], [0, 0, 1, 1], [], []>} : vector<5x64xf32>, vector<64x64xf32>, vector<5x64xf32> -> vector<5x64xf32>
    %127 = arith.addf %117, %126 : vector<5x64xf32>
    %c8_122 = arith.constant 8 : index
    %c0_123 = arith.constant 0 : index
    %128 = tpu.strided_load %arg21[%c8_122, %c0_123] {strides = array<i32: 4, 1>} : memref<28x64xf32, #tpu.memory_space<vmem>>, vector<5x64xf32>
    %c9_124 = arith.constant 9 : index
    %c0_125 = arith.constant 0 : index
    %129 = tpu.strided_load %arg21[%c9_124, %c0_125] {strides = array<i32: 4, 1>} : memref<28x64xf32, #tpu.memory_space<vmem>>, vector<5x64xf32>
    %130 = arith.maximumf %128, %129 : vector<5x64xf32>
    %c10_126 = arith.constant 10 : index
    %c0_127 = arith.constant 0 : index
    %131 = tpu.strided_load %arg21[%c10_126, %c0_127] {strides = array<i32: 4, 1>} : memref<28x64xf32, #tpu.memory_space<vmem>>, vector<5x64xf32>
    %132 = arith.maximumf %130, %131 : vector<5x64xf32>
    %c11_128 = arith.constant 11 : index
    %c0_129 = arith.constant 0 : index
    %133 = tpu.strided_load %arg21[%c11_128, %c0_129] {strides = array<i32: 4, 1>} : memref<28x64xf32, #tpu.memory_space<vmem>>, vector<5x64xf32>
    %134 = arith.maximumf %132, %133 : vector<5x64xf32>
    %c128 = arith.constant 128 : index
    %c0_130 = arith.constant 0 : index
    %135 = vector.load %arg11[%c128, %c0_130] : memref<192x64xf32, #tpu.memory_space<vmem>>, vector<64x64xf32>
    %cst_131 = arith.constant dense<0.000000e+00> : vector<5x64xf32>
    %136 = tpu.matmul %134, %135, %cst_131 {dimension_numbers = #tpu.dot_dimension_numbers<[1], [0], [0], [1], [0, 0, 1, 1], [], []>} : vector<5x64xf32>, vector<64x64xf32>, vector<5x64xf32> -> vector<5x64xf32>
    %137 = arith.addf %127, %136 : vector<5x64xf32>
    %c0_132 = arith.constant 0 : index
    %c0_133 = arith.constant 0 : index
    %138 = vector.load %arg12[%c0_132, %c0_133] : memref<1x64xf32, #tpu.memory_space<vmem>>, vector<1x64xf32>
    %139 = vector.broadcast %138 : vector<1x64xf32> to vector<5x64xf32>
    %140 = arith.mulf %137, %139 : vector<5x64xf32>
    %c0_134 = arith.constant 0 : index
    %c0_135 = arith.constant 0 : index
    %141 = vector.load %arg13[%c0_134, %c0_135] : memref<1x64xf32, #tpu.memory_space<vmem>>, vector<1x64xf32>
    %142 = vector.broadcast %141 : vector<1x64xf32> to vector<5x64xf32>
    %143 = arith.addf %140, %142 : vector<5x64xf32>
    %cst_136 = arith.constant 0.000000e+00 : f32
    %144 = vector.broadcast %cst_136 : f32 to vector<5x64xf32>
    %145 = arith.maximumf %143, %144 : vector<5x64xf32>
    %c0_137 = arith.constant 0 : index
    %c0_138 = arith.constant 0 : index
    %146 = vector.load %arg22[%c0_137, %c0_138] : memref<5x64xf32, #tpu.memory_space<vmem>>, vector<5x64xf32>
    tpu.vector_store %arg22[%c0_137, %c0_138], %145 {strides = array<i32>} : memref<5x64xf32, #tpu.memory_space<vmem>>, vector<5x64xf32>,
    %c0_139 = arith.constant 0 : index
    %c0_140 = arith.constant 0 : index
    %147 = tpu.strided_load %arg22[%c0_139, %c0_140] {strides = array<i32: 4, 1>} : memref<5x64xf32, #tpu.memory_space<vmem>>, vector<1x64xf32>
    %c1_141 = arith.constant 1 : index
    %c0_142 = arith.constant 0 : index
    %148 = tpu.strided_load %arg22[%c1_141, %c0_142] {strides = array<i32: 4, 1>} : memref<5x64xf32, #tpu.memory_space<vmem>>, vector<1x64xf32>
    %149 = arith.maximumf %147, %148 : vector<1x64xf32>
    %c2_143 = arith.constant 2 : index
    %c0_144 = arith.constant 0 : index
    %150 = tpu.strided_load %arg22[%c2_143, %c0_144] {strides = array<i32: 4, 1>} : memref<5x64xf32, #tpu.memory_space<vmem>>, vector<1x64xf32>
    %151 = arith.maximumf %149, %150 : vector<1x64xf32>
    %c3_145 = arith.constant 3 : index
    %c0_146 = arith.constant 0 : index
    %152 = tpu.strided_load %arg22[%c3_145, %c0_146] {strides = array<i32: 4, 1>} : memref<5x64xf32, #tpu.memory_space<vmem>>, vector<1x64xf32>
    %153 = arith.maximumf %151, %152 : vector<1x64xf32>
    %cst_147 = arith.constant dense<0.000000e+00> : vector<64xf32>
    %154 = vector.multi_reduction <add>, %153, %cst_147 [0] : vector<1x64xf32> to vector<64xf32>
    %155 = vector.shape_cast %154 : vector<64xf32> to vector<1x64xf32>
    %cst_148 = arith.constant 1.000000e+00 : f32
    %156 = vector.broadcast %cst_148 : f32 to vector<1x64xf32>
    %157 = arith.mulf %155, %156 : vector<1x64xf32>
    %c0_149 = arith.constant 0 : index
    %c0_150 = arith.constant 0 : index
    %158 = vector.load %arg14[%c0_149, %c0_150] : memref<64x192xf32, #tpu.memory_space<vmem>>, vector<64x192xf32>
    %cst_151 = arith.constant dense<0.000000e+00> : vector<1x192xf32>
    %159 = tpu.matmul %157, %158, %cst_151 {dimension_numbers = #tpu.dot_dimension_numbers<[1], [0], [0], [1], [0, 0, 1, 1], [], []>} : vector<1x64xf32>, vector<64x192xf32>, vector<1x192xf32> -> vector<1x192xf32>
    %c0_152 = arith.constant 0 : index
    %c0_153 = arith.constant 0 : index
    %160 = vector.load %arg15[%c0_152, %c0_153] : memref<1x192xf32, #tpu.memory_space<vmem>>, vector<1x192xf32>
    %161 = arith.addf %159, %160 : vector<1x192xf32>
    %c0_154 = arith.constant 0 : index
    %c0_155 = arith.constant 0 : index
    %162 = vector.load %arg16[%c0_154, %c0_155] : memref<192x10xf32, #tpu.memory_space<vmem>>, vector<192x10xf32>
    %cst_156 = arith.constant dense<0.000000e+00> : vector<1x10xf32>
    %163 = tpu.matmul %161, %162, %cst_156 {dimension_numbers = #tpu.dot_dimension_numbers<[1], [0], [0], [1], [0, 0, 1, 1], [], []>} : vector<1x192xf32>, vector<192x10xf32>, vector<1x10xf32> -> vector<1x10xf32>
    %c0_157 = arith.constant 0 : index
    %c0_158 = arith.constant 0 : index
    %164 = vector.load %arg17[%c0_157, %c0_158] : memref<1x10xf32, #tpu.memory_space<vmem>>, vector<1x10xf32>
    %165 = arith.addf %163, %164 : vector<1x10xf32>
    %c0_159 = arith.constant 0 : index
    %c0_160 = arith.constant 0 : index
    %c0_161 = arith.constant 0 : index
    %166 = vector.load %arg18[%c0_159, %c0_160, %c0_161] : memref<1x1x10xf32, #tpu.memory_space<vmem>>, vector<1x1x10xf32>
    %167 = vector.shape_cast %166 : vector<1x1x10xf32> to vector<1x10xf32>
    %168 = vector.shape_cast %165 : vector<1x10xf32> to vector<1x1x10xf32>
    tpu.vector_store %arg18[%c0_159, %c0_160, %c0_161], %168 {strides = array<i32>} : memref<1x1x10xf32, #tpu.memory_space<vmem>>, vector<1x1x10xf32>,
    return
  }
  func.func @transform_0(%arg0: i32) -> (i32, i32, i32) {
    %c0_i32 = arith.constant 0 : i32
    %c0_i32_0 = arith.constant 0 : i32
    %c0_i32_1 = arith.constant 0 : i32
    return %arg0, %c0_i32, %c0_i32_0 : i32, i32, i32
  }
  func.func @transform_1(%arg0: i32) -> (i32, i32) {
    %c0_i32 = arith.constant 0 : i32
    %c0_i32_0 = arith.constant 0 : i32
    %c0_i32_1 = arith.constant 0 : i32
    return %c0_i32, %c0_i32_0 : i32, i32
  }
  func.func @transform_2(%arg0: i32) -> (i32, i32) {
    %c0_i32 = arith.constant 0 : i32
    %c0_i32_0 = arith.constant 0 : i32
    %c0_i32_1 = arith.constant 0 : i32
    return %c0_i32, %c0_i32_0 : i32, i32
  }
  func.func @transform_3(%arg0: i32) -> (i32, i32) {
    %c0_i32 = arith.constant 0 : i32
    %c0_i32_0 = arith.constant 0 : i32
    %c0_i32_1 = arith.constant 0 : i32
    return %c0_i32, %c0_i32_0 : i32, i32
  }
  func.func @transform_4(%arg0: i32) -> (i32, i32) {
    %c0_i32 = arith.constant 0 : i32
    %c0_i32_0 = arith.constant 0 : i32
    %c0_i32_1 = arith.constant 0 : i32
    return %c0_i32, %c0_i32_0 : i32, i32
  }
  func.func @transform_5(%arg0: i32) -> (i32, i32) {
    %c0_i32 = arith.constant 0 : i32
    %c0_i32_0 = arith.constant 0 : i32
    %c0_i32_1 = arith.constant 0 : i32
    return %c0_i32, %c0_i32_0 : i32, i32
  }
  func.func @transform_6(%arg0: i32) -> (i32, i32) {
    %c0_i32 = arith.constant 0 : i32
    %c0_i32_0 = arith.constant 0 : i32
    %c0_i32_1 = arith.constant 0 : i32
    return %c0_i32, %c0_i32_0 : i32, i32
  }
  func.func @transform_7(%arg0: i32) -> (i32, i32) {
    %c0_i32 = arith.constant 0 : i32
    %c0_i32_0 = arith.constant 0 : i32
    %c0_i32_1 = arith.constant 0 : i32
    return %c0_i32, %c0_i32_0 : i32, i32
  }
  func.func @transform_8(%arg0: i32) -> (i32, i32) {
    %c0_i32 = arith.constant 0 : i32
    %c0_i32_0 = arith.constant 0 : i32
    %c0_i32_1 = arith.constant 0 : i32
    return %c0_i32, %c0_i32_0 : i32, i32
  }
  func.func @transform_9(%arg0: i32) -> (i32, i32) {
    %c0_i32 = arith.constant 0 : i32
    %c0_i32_0 = arith.constant 0 : i32
    %c0_i32_1 = arith.constant 0 : i32
    return %c0_i32, %c0_i32_0 : i32, i32
  }
  func.func @transform_10(%arg0: i32) -> (i32, i32) {
    %c0_i32 = arith.constant 0 : i32
    %c0_i32_0 = arith.constant 0 : i32
    %c0_i32_1 = arith.constant 0 : i32
    return %c0_i32, %c0_i32_0 : i32, i32
  }
  func.func @transform_11(%arg0: i32) -> (i32, i32) {
    %c0_i32 = arith.constant 0 : i32
    %c0_i32_0 = arith.constant 0 : i32
    %c0_i32_1 = arith.constant 0 : i32
    return %c0_i32, %c0_i32_0 : i32, i32
  }
  func.func @transform_12(%arg0: i32) -> (i32, i32) {
    %c0_i32 = arith.constant 0 : i32
    %c0_i32_0 = arith.constant 0 : i32
    %c0_i32_1 = arith.constant 0 : i32
    return %c0_i32, %c0_i32_0 : i32, i32
  }
  func.func @transform_13(%arg0: i32) -> (i32, i32) {
    %c0_i32 = arith.constant 0 : i32
    %c0_i32_0 = arith.constant 0 : i32
    %c0_i32_1 = arith.constant 0 : i32
    return %c0_i32, %c0_i32_0 : i32, i32
  }
  func.func @transform_14(%arg0: i32) -> (i32, i32) {
    %c0_i32 = arith.constant 0 : i32
    %c0_i32_0 = arith.constant 0 : i32
    %c0_i32_1 = arith.constant 0 : i32
    return %c0_i32, %c0_i32_0 : i32, i32
  }
  func.func @transform_15(%arg0: i32) -> (i32, i32) {
    %c0_i32 = arith.constant 0 : i32
    %c0_i32_0 = arith.constant 0 : i32
    %c0_i32_1 = arith.constant 0 : i32
    return %c0_i32, %c0_i32_0 : i32, i32
  }
  func.func @transform_16(%arg0: i32) -> (i32, i32) {
    %c0_i32 = arith.constant 0 : i32
    %c0_i32_0 = arith.constant 0 : i32
    %c0_i32_1 = arith.constant 0 : i32
    return %c0_i32, %c0_i32_0 : i32, i32
  }
  func.func @transform_17(%arg0: i32) -> (i32, i32, i32) {
    %c0_i32 = arith.constant 0 : i32
    %c0_i32_0 = arith.constant 0 : i32
    %c0_i32_1 = arith.constant 0 : i32
    return %arg0, %c0_i32, %c0_i32_0 : i32, i32, i32
  }
}

</mosaic_0001>

<llo_original>
// kernel: audio_classifier_forward.1
$region0: #{audio_classifier_forward.1}
  #allocation0 [shape = 'u32[]', space=smem, size = 0x4, offset = 0x4, fixed_abs, tag = 'smem constant byte address 0x4 - core index']
  #allocation1 [shape = 'u32[144,128]{1,0:T(1,128)}', space=vmem, size = 0x12000, scoped, tag = 'internal scratch']
  #allocation2 [shape = 'f32[496,32]{1,0:T(8,128)}', space=vmem, size = 0x3e000, scoped, tag = 'scratch operand']
  #allocation3 [shape = 'f32[122,32]{1,0:T(8,128)}', space=vmem, size = 0x10000, scoped, tag = 'scratch operand']
  #allocation4 [shape = 'f32[28,64]{1,0:T(8,128)}', space=vmem, size = 0x4000, scoped, tag = 'scratch operand']
  #allocation5 [shape = 'f32[5,64]{1,0:T(8,128)}', space=vmem, size = 0x1000, scoped, tag = 'scratch operand']
  %s0 = inlined_call_operand.vmem [shape: f32[2,500,16], index: 0, kind: input, shape index: {}]
  %s1 = inlined_call_operand.vmem [shape: f32[80,32], index: 1, kind: input, shape index: {}]
  %s2 = inlined_call_operand.vmem [shape: f32[1,32], index: 2, kind: input, shape index: {}]
  %s3 = inlined_call_operand.vmem [shape: f32[1,32], index: 3, kind: input, shape index: {}]
  %s4 = inlined_call_operand.vmem [shape: f32[96,32], index: 4, kind: input, shape index: {}]
  %s5 = inlined_call_operand.vmem [shape: f32[1,32], index: 5, kind: input, shape index: {}]
  %s6 = inlined_call_operand.vmem [shape: f32[1,32], index: 6, kind: input, shape index: {}]
  %s7 = inlined_call_operand.vmem [shape: f32[96,64], index: 7, kind: input, shape index: {}]
  %s8 = inlined_call_operand.vmem [shape: f32[1,64], index: 8, kind: input, shape index: {}]
  %s9 = inlined_call_operand.vmem [shape: f32[1,64], index: 9, kind: input, shape index: {}]
  %s10 = inlined_call_operand.vmem [shape: f32[192,64], index: 10, kind: input, shape index: {}]
  %s11 = inlined_call_operand.vmem [shape: f32[1,64], index: 11, kind: input, shape index: {}]
  %s12 = inlined_call_operand.vmem [shape: f32[1,64], index: 12, kind: input, shape index: {}]
  %s13 = inlined_call_operand.vmem [shape: f32[64,192], index: 13, kind: input, shape index: {}]
  %s14 = inlined_call_operand.vmem [shape: f32[1,192], index: 14, kind: input, shape index: {}]
  %s15 = inlined_call_operand.vmem [shape: f32[192,10], index: 15, kind: input, shape index: {}]
  %s16 = inlined_call_operand.vmem [shape: f32[1,10], index: 16, kind: input, shape index: {}]
  %s17 = inlined_call_operand.vmem [shape: f32[2,1,10], index: 17, kind: output, shape index: {}]
  %s18 = sld [smem:[#allocation0]]
  $region101: #{audio_classifier_forward.1} parent=0
    _
  %s20 = ssub.s32 1, %s18
  %s21 = scalar_select 0, %s20, %s18
  loop: start=0, step=1, limit=4
  $region2: #{audio_classifier_forward.1} parent=0 // loop_pre_header
    _
  $region3: #{audio_classifier_forward.1} parent=0 // loop_header
    %s23 = sphi 0, %s27
    %p24 = scmp.ge.s32.totalorder %s23, 4
    %s33 = sphi 0, %s35
    %s36 = sphi 0, %s33
    %s37 = sphi 0, %s36
    %s53 = sphi 0, %s37
    %s57 = sphi 0, %s57
    %s59 = sphi 0, %s57
    %s60 = sphi 0, %s59
    %s74 = sphi 0, %s60
    %s78 = sphi 0, %s78
    %s80 = sphi 0, %s78
    %s81 = sphi 0, %s80
    %s95 = sphi 0, %s81
    %s99 = sphi 0, %s99
    %s101 = sphi 0, %s99
    %s102 = sphi 0, %s101
    %s116 = sphi 0, %s102
    %s120 = sphi 0, %s120
    %s122 = sphi 0, %s120
    %s123 = sphi 0, %s122
    %s137 = sphi 0, %s123
    %s141 = sphi 0, %s141
    %s143 = sphi 0, %s141
    %s144 = sphi 0, %s143
    %s158 = sphi 0, %s144
    %s162 = sphi 0, %s162
    %s164 = sphi 0, %s162
    %s165 = sphi 0, %s164
    %s179 = sphi 0, %s165
    %s183 = sphi 0, %s183
    %s185 = sphi 0, %s183
    %s186 = sphi 0, %s185
    %s200 = sphi 0, %s186
    %s204 = sphi 0, %s204
    %s206 = sphi 0, %s204
    %s207 = sphi 0, %s206
    %s221 = sphi 0, %s207
    %s225 = sphi 0, %s225
    %s227 = sphi 0, %s225
    %s228 = sphi 0, %s227
    %s242 = sphi 0, %s228
    %s246 = sphi 0, %s246
    %s248 = sphi 0, %s246
    %s249 = sphi 0, %s248
    %s263 = sphi 0, %s249
    %s267 = sphi 0, %s267
    %s269 = sphi 0, %s267
    %s270 = sphi 0, %s269
    %s284 = sphi 0, %s270
    %s288 = sphi 0, %s288
    %s290 = sphi 0, %s288
    %s291 = sphi 0, %s290
    %s305 = sphi 0, %s291
    %s309 = sphi 0, %s309
    %s311 = sphi 0, %s309
    %s312 = sphi 0, %s311
    %s326 = sphi 0, %s312
    %s330 = sphi 0, %s330
    %s332 = sphi 0, %s330
    %s333 = sphi 0, %s332
    %s347 = sphi 0, %s333
    %s351 = sphi 0, %s351
    %s353 = sphi 0, %s351
    %s354 = sphi 0, %s353
    %s368 = sphi 0, %s354
    %s372 = sphi 0, %s372
    %s374 = sphi 0, %s372
    %s375 = sphi 0, %s374
    %s389 = sphi 0, %s375
    %s395 = sphi 0, %s397
    %s398 = sphi 0, %s395
    %s399 = sphi 0, %s398
    %s415 = sphi 0, %s399
  $region4: #{audio_classifier_forward.1} parent=0 // loop_header_branch
    %26 = sbr.rel (%p24) target = $region8
  $region5: #{audio_classifier_forward.1} parent=0 // loop_body
    %s28 = ssub.s32 %s23, 1
    %s29 = ssub.s32 %s23, 2
    %s30 = sadd.s32 %s23, 1
    %s31 = ssub.s32 %s23, %s30
    %p32 = scmp.eq.s32.totalorder %s31, 0
    %s34 = sadd.s32 %s33, 1
    %s35 = scalar_select %p32, %s33, %s34
    %p38 = pneg %p32
    %p39 = scmp.eq.s32.totalorder %s23, 1
    %p40 = por %p38, %p39
    %p41 = scmp.ne.s32.totalorder %s33, %s36
    %p42 = scmp.eq.s32.totalorder %s23, 0
    %p43 = por %p41, %p42
    %p44 = scmp.ne.s32.totalorder %s33, %s36
    %p45 = scmp.eq.s32.totalorder %s28, 1
    %p46 = por %p44, %p45
    %p47 = scmp.ne.s32.totalorder %s36, %s37
    %p48 = scmp.eq.s32.totalorder %s28, 0
    %p49 = por %p47, %p48
    %p50 = scmp.ne.s32.totalorder %s36, %s37
    %p51 = scmp.eq.s32.totalorder %s29, 1
    %p52 = por %p50, %p51
    %p54 = scmp.ne.s32.totalorder %s37, %s53
    %p55 = scmp.eq.s32.totalorder %s29, 0
    %p56 = por %p54, %p55
    %s58 = sadd.s32 %s57, 1
    %p61 = scmp.eq.s32.totalorder %s23, 1
    %p62 = scmp.ne.s32.totalorder %s57, %s59
    %p63 = scmp.eq.s32.totalorder %s23, 0
    %p64 = por %p62, %p63
    %p65 = scmp.ne.s32.totalorder %s57, %s59
    %p66 = scmp.eq.s32.totalorder %s28, 1
    %p67 = por %p65, %p66
    %p68 = scmp.ne.s32.totalorder %s59, %s60
    %p69 = scmp.eq.s32.totalorder %s28, 0
    %p70 = por %p68, %p69
    %p71 = scmp.ne.s32.totalorder %s59, %s60
    %p72 = scmp.eq.s32.totalorder %s29, 1
    %p73 = por %p71, %p72
    %p75 = scmp.ne.s32.totalorder %s60, %s74
    %p76 = scmp.eq.s32.totalorder %s29, 0
    %p77 = por %p75, %p76
    %s79 = sadd.s32 %s78, 1
    %p82 = scmp.eq.s32.totalorder %s23, 1
    %p83 = scmp.ne.s32.totalorder %s78, %s80
    %p84 = scmp.eq.s32.totalorder %s23, 0
    %p85 = por %p83, %p84
    %p86 = scmp.ne.s32.totalorder %s78, %s80
    %p87 = scmp.eq.s32.totalorder %s28, 1
    %p88 = por %p86, %p87
    %p89 = scmp.ne.s32.totalorder %s80, %s81
    %p90 = scmp.eq.s32.totalorder %s28, 0
    %p91 = por %p89, %p90
    %p92 = scmp.ne.s32.totalorder %s80, %s81
    %p93 = scmp.eq.s32.totalorder %s29, 1
    %p94 = por %p92, %p93
    %p96 = scmp.ne.s32.totalorder %s81, %s95
    %p97 = scmp.eq.s32.totalorder %s29, 0
    %p98 = por %p96, %p97
    %s100 = sadd.s32 %s99, 1
    %p103 = scmp.eq.s32.totalorder %s23, 1
    %p104 = scmp.ne.s32.totalorder %s99, %s101
    %p105 = scmp.eq.s32.totalorder %s23, 0
    %p106 = por %p104, %p105
    %p107 = scmp.ne.s32.totalorder %s99, %s101
    %p108 = scmp.eq.s32.totalorder %s28, 1
    %p109 = por %p107, %p108
    %p110 = scmp.ne.s32.totalorder %s101, %s102
    %p111 = scmp.eq.s32.totalorder %s28, 0
    %p112 = por %p110, %p111
    %p113 = scmp.ne.s32.totalorder %s101, %s102
    %p114 = scmp.eq.s32.totalorder %s29, 1
    %p115 = por %p113, %p114
    %p117 = scmp.ne.s32.totalorder %s102, %s116
    %p118 = scmp.eq.s32.totalorder %s29, 0
    %p119 = por %p117, %p118
    %s121 = sadd.s32 %s120, 1
    %p124 = scmp.eq.s32.totalorder %s23, 1
    %p125 = scmp.ne.s32.totalorder %s120, %s122
    %p126 = scmp.eq.s32.totalorder %s23, 0
    %p127 = por %p125, %p126
    %p128 = scmp.ne.s32.totalorder %s120, %s122
    %p129 = scmp.eq.s32.totalorder %s28, 1
    %p130 = por %p128, %p129
    %p131 = scmp.ne.s32.totalorder %s122, %s123
    %p132 = scmp.eq.s32.totalorder %s28, 0
    %p133 = por %p131, %p132
    %p134 = scmp.ne.s32.totalorder %s122, %s123
    %p135 = scmp.eq.s32.totalorder %s29, 1
    %p136 = por %p134, %p135
    %p138 = scmp.ne.s32.totalorder %s123, %s137
    %p139 = scmp.eq.s32.totalorder %s29, 0
    %p140 = por %p138, %p139
    %s142 = sadd.s32 %s141, 1
    %p145 = scmp.eq.s32.totalorder %s23, 1
    %p146 = scmp.ne.s32.totalorder %s141, %s143
    %p147 = scmp.eq.s32.totalorder %s23, 0
    %p148 = por %p146, %p147
    %p149 = scmp.ne.s32.totalorder %s141, %s143
    %p150 = scmp.eq.s32.totalorder %s28, 1
    %p151 = por %p149, %p150
    %p152 = scmp.ne.s32.totalorder %s143, %s144
    %p153 = scmp.eq.s32.totalorder %s28, 0
    %p154 = por %p152, %p153
    %p155 = scmp.ne.s32.totalorder %s143, %s144
    %p156 = scmp.eq.s32.totalorder %s29, 1
    %p157 = por %p155, %p156
    %p159 = scmp.ne.s32.totalorder %s144, %s158
    %p160 = scmp.eq.s32.totalorder %s29, 0
    %p161 = por %p159, %p160
    %s163 = sadd.s32 %s162, 1
    %p166 = scmp.eq.s32.totalorder %s23, 1
    %p167 = scmp.ne.s32.totalorder %s162, %s164
    %p168 = scmp.eq.s32.totalorder %s23, 0
    %p169 = por %p167, %p168
    %p170 = scmp.ne.s32.totalorder %s162, %s164
    %p171 = scmp.eq.s32.totalorder %s28, 1
    %p172 = por %p170, %p171
    %p173 = scmp.ne.s32.totalorder %s164, %s165
    %p174 = scmp.eq.s32.totalorder %s28, 0
    %p175 = por %p173, %p174
    %p176 = scmp.ne.s32.totalorder %s164, %s165
    %p177 = scmp.eq.s32.totalorder %s29, 1
    %p178 = por %p176, %p177
    %p180 = scmp.ne.s32.totalorder %s165, %s179
    %p181 = scmp.eq.s32.totalorder %s29, 0
    %p182 = por %p180, %p181
    %s184 = sadd.s32 %s183, 1
    %p187 = scmp.eq.s32.totalorder %s23, 1
    %p188 = scmp.ne.s32.totalorder %s183, %s185
    %p189 = scmp.eq.s32.totalorder %s23, 0
    %p190 = por %p188, %p189
    %p191 = scmp.ne.s32.totalorder %s183, %s185
    %p192 = scmp.eq.s32.totalorder %s28, 1
    %p193 = por %p191, %p192
    %p194 = scmp.ne.s32.totalorder %s185, %s186
    %p195 = scmp.eq.s32.totalorder %s28, 0
    %p196 = por %p194, %p195
    %p197 = scmp.ne.s32.totalorder %s185, %s186
    %p198 = scmp.eq.s32.totalorder %s29, 1
    %p199 = por %p197, %p198
    %p201 = scmp.ne.s32.totalorder %s186, %s200
    %p202 = scmp.eq.s32.totalorder %s29, 0
    %p203 = por %p201, %p202
    %s205 = sadd.s32 %s204, 1
    %p208 = scmp.eq.s32.totalorder %s23, 1
    %p209 = scmp.ne.s32.totalorder %s204, %s206
    %p210 = scmp.eq.s32.totalorder %s23, 0
    %p211 = por %p209, %p210
    %p212 = scmp.ne.s32.totalorder %s204, %s206
    %p213 = scmp.eq.s32.totalorder %s28, 1
    %p214 = por %p212, %p213
    %p215 = scmp.ne.s32.totalorder %s206, %s207
    %p216 = scmp.eq.s32.totalorder %s28, 0
    %p217 = por %p215, %p216
    %p218 = scmp.ne.s32.totalorder %s206, %s207
    %p219 = scmp.eq.s32.totalorder %s29, 1
    %p220 = por %p218, %p219
    %p222 = scmp.ne.s32.totalorder %s207, %s221
    %p223 = scmp.eq.s32.totalorder %s29, 0
    %p224 = por %p222, %p223
    %s226 = sadd.s32 %s225, 1
    %p229 = scmp.eq.s32.totalorder %s23, 1
    %p230 = scmp.ne.s32.totalorder %s225, %s227
    %p231 = scmp.eq.s32.totalorder %s23, 0
    %p232 = por %p230, %p231
    %p233 = scmp.ne.s32.totalorder %s225, %s227
    %p234 = scmp.eq.s32.totalorder %s28, 1
    %p235 = por %p233, %p234
    %p236 = scmp.ne.s32.totalorder %s227, %s228
    %p237 = scmp.eq.s32.totalorder %s28, 0
    %p238 = por %p236, %p237
    %p239 = scmp.ne.s32.totalorder %s227, %s228
    %p240 = scmp.eq.s32.totalorder %s29, 1
    %p241 = por %p239, %p240
    %p243 = scmp.ne.s32.totalorder %s228, %s242
    %p244 = scmp.eq.s32.totalorder %s29, 0
    %p245 = por %p243, %p244
    %s247 = sadd.s32 %s246, 1
    %p250 = scmp.eq.s32.totalorder %s23, 1
    %p251 = scmp.ne.s32.totalorder %s246, %s248
    %p252 = scmp.eq.s32.totalorder %s23, 0
    %p253 = por %p251, %p252
    %p254 = scmp.ne.s32.totalorder %s246, %s248
    %p255 = scmp.eq.s32.totalorder %s28, 1
    %p256 = por %p254, %p255
    %p257 = scmp.ne.s32.totalorder %s248, %s249
    %p258 = scmp.eq.s32.totalorder %s28, 0
    %p259 = por %p257, %p258
    %p260 = scmp.ne.s32.totalorder %s248, %s249
    %p261 = scmp.eq.s32.totalorder %s29, 1
    %p262 = por %p260, %p261
    %p264 = scmp.ne.s32.totalorder %s249, %s263
    %p265 = scmp.eq.s32.totalorder %s29, 0
    %p266 = por %p264, %p265
    %s268 = sadd.s32 %s267, 1
    %p271 = scmp.eq.s32.totalorder %s23, 1
    %p272 = scmp.ne.s32.totalorder %s267, %s269
    %p273 = scmp.eq.s32.totalorder %s23, 0
    %p274 = por %p272, %p273
    %p275 = scmp.ne.s32.totalorder %s267, %s269
    %p276 = scmp.eq.s32.totalorder %s28, 1
    %p277 = por %p275, %p276
    %p278 = scmp.ne.s32.totalorder %s269, %s270
    %p279 = scmp.eq.s32.totalorder %s28, 0
    %p280 = por %p278, %p279
    %p281 = scmp.ne.s32.totalorder %s269, %s270
    %p282 = scmp.eq.s32.totalorder %s29, 1
    %p283 = por %p281, %p282
    %p285 = scmp.ne.s32.totalorder %s270, %s284
    %p286 = scmp.eq.s32.totalorder %s29, 0
    %p287 = por %p285, %p286
    %s289 = sadd.s32 %s288, 1
    %p292 = scmp.eq.s32.totalorder %s23, 1
    %p293 = scmp.ne.s32.totalorder %s288, %s290
    %p294 = scmp.eq.s32.totalorder %s23, 0
    %p295 = por %p293, %p294
    %p296 = scmp.ne.s32.totalorder %s288, %s290
    %p297 = scmp.eq.s32.totalorder %s28, 1
    %p298 = por %p296, %p297
    %p299 = scmp.ne.s32.totalorder %s290, %s291
    %p300 = scmp.eq.s32.totalorder %s28, 0
    %p301 = por %p299, %p300
    %p302 = scmp.ne.s32.totalorder %s290, %s291
    %p303 = scmp.eq.s32.totalorder %s29, 1
    %p304 = por %p302, %p303
    %p306 = scmp.ne.s32.totalorder %s291, %s305
    %p307 = scmp.eq.s32.totalorder %s29, 0
    %p308 = por %p306, %p307
    %s310 = sadd.s32 %s309, 1
    %p313 = scmp.eq.s32.totalorder %s23, 1
    %p314 = scmp.ne.s32.totalorder %s309, %s311
    %p315 = scmp.eq.s32.totalorder %s23, 0
    %p316 = por %p314, %p315
    %p317 = scmp.ne.s32.totalorder %s309, %s311
    %p318 = scmp.eq.s32.totalorder %s28, 1
    %p319 = por %p317, %p318
    %p320 = scmp.ne.s32.totalorder %s311, %s312
    %p321 = scmp.eq.s32.totalorder %s28, 0
    %p322 = por %p320, %p321
    %p323 = scmp.ne.s32.totalorder %s311, %s312
    %p324 = scmp.eq.s32.totalorder %s29, 1
    %p325 = por %p323, %p324
    %p327 = scmp.ne.s32.totalorder %s312, %s326
    %p328 = scmp.eq.s32.totalorder %s29, 0
    %p329 = por %p327, %p328
    %s331 = sadd.s32 %s330, 1
    %p334 = scmp.eq.s32.totalorder %s23, 1
    %p335 = scmp.ne.s32.totalorder %s330, %s332
    %p336 = scmp.eq.s32.totalorder %s23, 0
    %p337 = por %p335, %p336
    %p338 = scmp.ne.s32.totalorder %s330, %s332
    %p339 = scmp.eq.s32.totalorder %s28, 1
    %p340 = por %p338, %p339
    %p341 = scmp.ne.s32.totalorder %s332, %s333
    %p342 = scmp.eq.s32.totalorder %s28, 0
    %p343 = por %p341, %p342
    %p344 = scmp.ne.s32.totalorder %s332, %s333
    %p345 = scmp.eq.s32.totalorder %s29, 1
    %p346 = por %p344, %p345
    %p348 = scmp.ne.s32.totalorder %s333, %s347
    %p349 = scmp.eq.s32.totalorder %s29, 0
    %p350 = por %p348, %p349
    %s352 = sadd.s32 %s351, 1
    %p355 = scmp.eq.s32.totalorder %s23, 1
    %p356 = scmp.ne.s32.totalorder %s351, %s353
    %p357 = scmp.eq.s32.totalorder %s23, 0
    %p358 = por %p356, %p357
    %p359 = scmp.ne.s32.totalorder %s351, %s353
    %p360 = scmp.eq.s32.totalorder %s28, 1
    %p361 = por %p359, %p360
    %p362 = scmp.ne.s32.totalorder %s353, %s354
    %p363 = scmp.eq.s32.totalorder %s28, 0
    %p364 = por %p362, %p363
    %p365 = scmp.ne.s32.totalorder %s353, %s354
    %p366 = scmp.eq.s32.totalorder %s29, 1
    %p367 = por %p365, %p366
    %p369 = scmp.ne.s32.totalorder %s354, %s368
    %p370 = scmp.eq.s32.totalorder %s29, 0
    %p371 = por %p369, %p370
    %s373 = sadd.s32 %s372, 1
    %p376 = scmp.eq.s32.totalorder %s23, 1
    %p377 = scmp.ne.s32.totalorder %s372, %s374
    %p378 = scmp.eq.s32.totalorder %s23, 0
    %p379 = por %p377, %p378
    %p380 = scmp.ne.s32.totalorder %s372, %s374
    %p381 = scmp.eq.s32.totalorder %s28, 1
    %p382 = por %p380, %p381
    %p383 = scmp.ne.s32.totalorder %s374, %s375
    %p384 = scmp.eq.s32.totalorder %s28, 0
    %p385 = por %p383, %p384
    %p386 = scmp.ne.s32.totalorder %s374, %s375
    %p387 = scmp.eq.s32.totalorder %s29, 1
    %p388 = por %p386, %p387
    %p390 = scmp.ne.s32.totalorder %s375, %s389
    %p391 = scmp.eq.s32.totalorder %s29, 0
    %p392 = por %p390, %p391
    %s393 = ssub.s32 %s23, %s30
    %p394 = scmp.eq.s32.totalorder %s393, 0
    %s396 = sadd.s32 %s395, 1
    %s397 = scalar_select %p394, %s395, %s396
    %p400 = pneg %p394
    %p401 = scmp.eq.s32.totalorder %s23, 1
    %p402 = por %p400, %p401
    %p403 = scmp.ne.s32.totalorder %s395, %s398
    %p404 = scmp.eq.s32.totalorder %s23, 0
    %p405 = por %p403, %p404
    %p406 = scmp.ne.s32.totalorder %s395, %s398
    %p407 = scmp.eq.s32.totalorder %s28, 1
    %p408 = por %p406, %p407
    %p409 = scmp.ne.s32.totalorder %s398, %s399
    %p410 = scmp.eq.s32.totalorder %s28, 0
    %p411 = por %p409, %p410
    %p412 = scmp.ne.s32.totalorder %s398, %s399
    %p413 = scmp.eq.s32.totalorder %s29, 1
    %p414 = por %p412, %p413
    %p416 = scmp.ne.s32.totalorder %s399, %s415
    %p417 = scmp.eq.s32.totalorder %s29, 0
    %p418 = por %p416, %p417
    %p419 = scmp.le.s32.totalorder 1, %s23
    %p420 = scmp.lt.s32.totalorder %s23, 3
    %p421 = pnand %p419, %p420
    %p422 = pneg %p421
    // Predicated region
    $region9: #{audio_classifier_forward.1} parent=5 // pred_check
      _
    $region10: #{audio_classifier_forward.1} parent=5 // pred_check_branch
      %424 = sbr.rel (%p421) target = $region12
    $region11: #{audio_classifier_forward.1} parent=5 // pred_region
      %s425 = ssub.s32 %s23, 1
      // Predicated region
      $region13: #{audio_classifier_forward.1} parent=11 // pred_check
        %p426 = pneg %p70
      $region14: #{audio_classifier_forward.1} parent=11 // pred_check_branch
        %428 = sbr.rel (%p426) target = $region16
      $region15: #{audio_classifier_forward.1} parent=11 // pred_region
        _
      $region16: #{audio_classifier_forward.1} parent=11 // pred_fallthru
        _
      // Predicated region
      $region17: #{audio_classifier_forward.1} parent=11 // pred_check
        %p429 = pneg %p91
      $region18: #{audio_classifier_forward.1} parent=11 // pred_check_branch
        %431 = sbr.rel (%p429) target = $region20
      $region19: #{audio_classifier_forward.1} parent=11 // pred_region
        _
      $region20: #{audio_classifier_forward.1} parent=11 // pred_fallthru
        _
      // Predicated region
      $region21: #{audio_classifier_forward.1} parent=11 // pred_check
        %p432 = pneg %p112
      $region22: #{audio_classifier_forward.1} parent=11 // pred_check_branch
        %434 = sbr.rel (%p432) target = $region24
      $region23: #{audio_classifier_forward.1} parent=11 // pred_region
        _
      $region24: #{audio_classifier_forward.1} parent=11 // pred_fallthru
        _
      // Predicated region
      $region25: #{audio_classifier_forward.1} parent=11 // pred_check
        %p435 = pneg %p133
      $region26: #{audio_classifier_forward.1} parent=11 // pred_check_branch
        %437 = sbr.rel (%p435) target = $region28
      $region27: #{audio_classifier_forward.1} parent=11 // pred_region
        _
      $region28: #{audio_classifier_forward.1} parent=11 // pred_fallthru
        _
      // Predicated region
      $region29: #{audio_classifier_forward.1} parent=11 // pred_check
        %p438 = pneg %p154
      $region30: #{audio_classifier_forward.1} parent=11 // pred_check_branch
        %440 = sbr.rel (%p438) target = $region32
      $region31: #{audio_classifier_forward.1} parent=11 // pred_region
        _
      $region32: #{audio_classifier_forward.1} parent=11 // pred_fallthru
        _
      // Predicated region
      $region33: #{audio_classifier_forward.1} parent=11 // pred_check
        %p441 = pneg %p175
      $region34: #{audio_classifier_forward.1} parent=11 // pred_check_branch
        %443 = sbr.rel (%p441) target = $region36
      $region35: #{audio_classifier_forward.1} parent=11 // pred_region
        _
      $region36: #{audio_classifier_forward.1} parent=11 // pred_fallthru
        _
      // Predicated region
      $region37: #{audio_classifier_forward.1} parent=11 // pred_check
        %p444 = pneg %p196
      $region38: #{audio_classifier_forward.1} parent=11 // pred_check_branch
        %446 = sbr.rel (%p444) target = $region40
      $region39: #{audio_classifier_forward.1} parent=11 // pred_region
        _
      $region40: #{audio_classifier_forward.1} parent=11 // pred_fallthru
        _
      // Predicated region
      $region41: #{audio_classifier_forward.1} parent=11 // pred_check
        %p447 = pneg %p217
      $region42: #{audio_classifier_forward.1} parent=11 // pred_check_branch
        %449 = sbr.rel (%p447) target = $region44
      $region43: #{audio_classifier_forward.1} parent=11 // pred_region
        _
      $region44: #{audio_classifier_forward.1} parent=11 // pred_fallthru
        _
      // Predicated region
      $region45: #{audio_classifier_forward.1} parent=11 // pred_check
        %p450 = pneg %p238
      $region46: #{audio_classifier_forward.1} parent=11 // pred_check_branch
        %452 = sbr.rel (%p450) target = $region48
      $region47: #{audio_classifier_forward.1} parent=11 // pred_region
        _
      $region48: #{audio_classifier_forward.1} parent=11 // pred_fallthru
        _
      // Predicated region
      $region49: #{audio_classifier_forward.1} parent=11 // pred_check
        %p453 = pneg %p259
      $region50: #{audio_classifier_forward.1} parent=11 // pred_check_branch
        %455 = sbr.rel (%p453) target = $region52
      $region51: #{audio_classifier_forward.1} parent=11 // pred_region
        _
      $region52: #{audio_classifier_forward.1} parent=11 // pred_fallthru
        _
      // Predicated region
      $region53: #{audio_classifier_forward.1} parent=11 // pred_check
        %p456 = pneg %p280
      $region54: #{audio_classifier_forward.1} parent=11 // pred_check_branch
        %458 = sbr.rel (%p456) target = $region56
      $region55: #{audio_classifier_forward.1} parent=11 // pred_region
        _
      $region56: #{audio_classifier_forward.1} parent=11 // pred_fallthru
        _
      // Predicated region
      $region57: #{audio_classifier_forward.1} parent=11 // pred_check
        %p459 = pneg %p301
      $region58: #{audio_classifier_forward.1} parent=11 // pred_check_branch
        %461 = sbr.rel (%p459) target = $region60
      $region59: #{audio_classifier_forward.1} parent=11 // pred_region
        _
      $region60: #{audio_classifier_forward.1} parent=11 // pred_fallthru
        _
      // Predicated region
      $region61: #{audio_classifier_forward.1} parent=11 // pred_check
        %p462 = pneg %p322
      $region62: #{audio_classifier_forward.1} parent=11 // pred_check_branch
        %464 = sbr.rel (%p462) target = $region64
      $region63: #{audio_classifier_forward.1} parent=11 // pred_region
        _
      $region64: #{audio_classifier_forward.1} parent=11 // pred_fallthru
        _
      // Predicated region
      $region65: #{audio_classifier_forward.1} parent=11 // pred_check
        %p465 = pneg %p343
      $region66: #{audio_classifier_forward.1} parent=11 // pred_check_branch
        %467 = sbr.rel (%p465) target = $region68
      $region67: #{audio_classifier_forward.1} parent=11 // pred_region
        _
      $region68: #{audio_classifier_forward.1} parent=11 // pred_fallthru
        _
      // Predicated region
      $region69: #{audio_classifier_forward.1} parent=11 // pred_check
        %p468 = pneg %p364
      $region70: #{audio_classifier_forward.1} parent=11 // pred_check_branch
        %470 = sbr.rel (%p468) target = $region72
      $region71: #{audio_classifier_forward.1} parent=11 // pred_region
        _
      $region72: #{audio_classifier_forward.1} parent=11 // pred_fallthru
        _
      // Predicated region
      $region73: #{audio_classifier_forward.1} parent=11 // pred_check
        %p471 = pneg %p385
      $region74: #{audio_classifier_forward.1} parent=11 // pred_check_branch
        %473 = sbr.rel (%p471) target = $region76
      $region75: #{audio_classifier_forward.1} parent=11 // pred_region
        _
      $region76: #{audio_classifier_forward.1} parent=11 // pred_fallthru
        _
    $region12: #{audio_classifier_forward.1} parent=5 // pred_fallthru
      _
    %p474 = scmp.lt.s32.totalorder %s23, 2
    // Predicated region
    $region77: #{audio_classifier_forward.1} parent=5 // pred_check
      %p475 = pneg %p474
    $region78: #{audio_classifier_forward.1} parent=5 // pred_check_branch
      %477 = sbr.rel (%p475) target = $region80
    $region79: #{audio_classifier_forward.1} parent=5 // pred_region
      // Predicated region
      $region81: #{audio_classifier_forward.1} parent=79 // pred_check
        %p478 = pneg %p43
      $region82: #{audio_classifier_forward.1} parent=79 // pred_check_branch
        %480 = sbr.rel (%p478) target = $region84
      $region83: #{audio_classifier_forward.1} parent=79 // pred_region
        %p481 = scmp.lt.s32.totalorder %s23, 1
        %s482 = scalar_select %p481, %s23, 1
        %s483 = smul.addr %s482, 63
        %s484 = smul.addr %s483, 8
        %s485 = scalar_lea.vmem %s0, %s484
      $region84: #{audio_classifier_forward.1} parent=79 // pred_fallthru
        _
    $region80: #{audio_classifier_forward.1} parent=5 // pred_fallthru
      _
    %p486 = scmp.le.s32.totalorder 1, %s23
    %p487 = scmp.lt.s32.totalorder %s23, 3
    %p488 = pnand %p486, %p487
    %p489 = pneg %p488
    // Predicated region
    $region85: #{audio_classifier_forward.1} parent=5 // pred_check
      _
    $region86: #{audio_classifier_forward.1} parent=5 // pred_check_branch
      %491 = sbr.rel (%p488) target = $region88
    $region87: #{audio_classifier_forward.1} parent=5 // pred_region
      %s492 = ssub.s32 %s23, 1
      %p493 = scmp.lt.s32.totalorder %s28, 1
      %s494 = scalar_select %p493, %s28, 1
      %s495 = smul.addr %s494, 63
      %s496 = smul.addr %s495, 8
      %s497 = scalar_lea.vmem %s0, %s496
      %p498 = pneg %p49
      %p499 = pneg %p46
      %p500 = pneg %p70
      %p501 = pneg %p67
      %p502 = pneg %p91
      %p503 = pneg %p88
      %p504 = pneg %p112
      %p505 = pneg %p109
      %p506 = pneg %p133
      %p507 = pneg %p130
      %p508 = pneg %p154
      %p509 = pneg %p151
      %p510 = pneg %p175
      %p511 = pneg %p172
      %p512 = pneg %p196
      %p513 = pneg %p193
      %p514 = pneg %p217
      %p515 = pneg %p214
      %p516 = pneg %p238
      %p517 = pneg %p235
      %p518 = pneg %p259
      %p519 = pneg %p256
      %p520 = pneg %p280
      %p521 = pneg %p277
      %p522 = pneg %p301
      %p523 = pneg %p298
      %p524 = pneg %p322
      %p525 = pneg %p319
      %p526 = pneg %p343
      %p527 = pneg %p340
      %p528 = pneg %p364
      %p529 = pneg %p361
      %p530 = pneg %p385
      %p531 = pneg %p382
      %p532 = pneg %p411
      %p533 = pneg %p408
      %p534 = scmp.lt.s32.totalorder %s28, 1
      %s535 = scalar_select %p534, %s28, 1
      %s536 = scalar_lea.vmem %s17, %s535
      %p537 = scmp.lt.s32.totalorder %s28, 1
      %s538 = scalar_select %p537, %s28, 1
      %s539 = smul.addr %s538, 63
      %s540 = smul.addr %s539, 8
      %s541 = scalar_lea.vmem %s0, %s540
      %p542 = scmp.lt.s32.totalorder %s28, 1
      %s543 = scalar_select %p542, %s28, 1
      %s544 = scalar_lea.vmem %s17, %s543
      %v545 = vld [vmem:[%s541] sm:$0xff]
      %v546 = vld [vmem:[%s541 + $0x8] sm:$0xff]
      %v547 = vld [vmem:[%s541 + $0x10] sm:$0xff]
      %v548 = vld [vmem:[%s541 + $0x18] sm:$0xff]
      %v549 = vld [vmem:[%s541 + $0x20] sm:$0xff]
      %v550 = vld [vmem:[%s541 + $0x28] sm:$0xff]
      %v551 = vld [vmem:[%s541 + $0x30] sm:$0xff]
      %v552 = vld [vmem:[%s541 + $0x38] sm:$0xff]
      %v553 = vld [vmem:[%s541 + $0x40] sm:$0xff]
      %v554 = vld [vmem:[%s541 + $0x48] sm:$0xff]
      %v555 = vld [vmem:[%s541 + $0x50] sm:$0xff]
      %v556 = vld [vmem:[%s541 + $0x58] sm:$0xff]
      %v557 = vld [vmem:[%s541 + $0x60] sm:$0xff]
      %v558 = vld [vmem:[%s541 + $0x68] sm:$0xff]
      %v559 = vld [vmem:[%s541 + $0x70] sm:$0xff]
      %v560 = vld [vmem:[%s541 + $0x78] sm:$0xff]
      %v561 = vld [vmem:[%s541 + $0x80] sm:$0xff]
      %v562 = vld [vmem:[%s541 + $0x88] sm:$0xff]
      %v563 = vld [vmem:[%s541 + $0x90] sm:$0xff]
      %v564 = vld [vmem:[%s541 + $0x98] sm:$0xff]
      %v565 = vld [vmem:[%s541 + $0xa0] sm:$0xff]
      %v566 = vld [vmem:[%s541 + $0xa8] sm:$0xff]
      %v567 = vld [vmem:[%s541 + $0xb0] sm:$0xff]
      %v568 = vld [vmem:[%s541 + $0xb8] sm:$0xff]
      %v569 = vld [vmem:[%s541 + $0xc0] sm:$0xff]
      %v570 = vld [vmem:[%s541 + $0xc8] sm:$0xff]
      %v571 = vld [vmem:[%s541 + $0xd0] sm:$0xff]
      %v572 = vld [vmem:[%s541 + $0xd8] sm:$0xff]
      %v573 = vld [vmem:[%s541 + $0xe0] sm:$0xff]
      %v574 = vld [vmem:[%s541 + $0xe8] sm:$0xff]
      %v575 = vld [vmem:[%s541 + $0xf0] sm:$0xff]
      %v576 = vld [vmem:[%s541 + $0xf8] sm:$0xff]
      %v577 = vld [vmem:[%s541 + $0x100] sm:$0xff]
      %v578 = vld [vmem:[%s541 + $0x108] sm:$0xff]
      %v579 = vld [vmem:[%s541 + $0x110] sm:$0xff]
      %v580 = vld [vmem:[%s541 + $0x118] sm:$0xff]
      %v581 = vld [vmem:[%s541 + $0x120] sm:$0xff]
      %v582 = vld [vmem:[%s541 + $0x128] sm:$0xff]
      %v583 = vld [vmem:[%s541 + $0x130] sm:$0xff]
      %v584 = vld [vmem:[%s541 + $0x138] sm:$0xff]
      %v585 = vld [vmem:[%s541 + $0x140] sm:$0xff]
      %v586 = vld [vmem:[%s541 + $0x148] sm:$0xff]
      %v587 = vld [vmem:[%s541 + $0x150] sm:$0xff]
      %v588 = vld [vmem:[%s541 + $0x158] sm:$0xff]
      %v589 = vld [vmem:[%s541 + $0x160] sm:$0xff]
      %v590 = vld [vmem:[%s541 + $0x168] sm:$0xff]
      %v591 = vld [vmem:[%s541 + $0x170] sm:$0xff]
      %v592 = vld [vmem:[%s541 + $0x178] sm:$0xff]
      %v593 = vld [vmem:[%s541 + $0x180] sm:$0xff]
      %v594 = vld [vmem:[%s541 + $0x188] sm:$0xff]
      %v595 = vld [vmem:[%s541 + $0x190] sm:$0xff]
      %v596 = vld [vmem:[%s541 + $0x198] sm:$0xff]
      %v597 = vld [vmem:[%s541 + $0x1a0] sm:$0xff]
      %v598 = vld [vmem:[%s541 + $0x1a8] sm:$0xff]
      %v599 = vld [vmem:[%s541 + $0x1b0] sm:$0xff]
      %v600 = vld [vmem:[%s541 + $0x1b8] sm:$0xff]
      %v601 = vld [vmem:[%s541 + $0x1c0] sm:$0xff]
      %v602 = vld [vmem:[%s541 + $0x1c8] sm:$0xff]
      %v603 = vld [vmem:[%s541 + $0x1d0] sm:$0xff]
      %v604 = vld [vmem:[%s541 + $0x1d8] sm:$0xff]
      %v605 = vld [vmem:[%s541 + $0x1e0] sm:$0xff]
      %v606 = vld [vmem:[%s541 + $0x1e8] sm:$0xff]
      %v607 = vld [vmem:[%s1] sm:$0xff]
      %v608 = vld [vmem:[%s1 + $0x8] sm:$0xff]
      %v609 = vld [vmem:[%s541 + $0x1] sm:$0xff]
      %v610 = vld [vmem:[%s541 + $0x9] sm:$0xff]
      %v611 = vld [vmem:[%s541 + $0x11] sm:$0xff]
      %v612 = vld [vmem:[%s541 + $0x19] sm:$0xff]
      %v613 = vld [vmem:[%s541 + $0x21] sm:$0xff]
      %v614 = vld [vmem:[%s541 + $0x29] sm:$0xff]
      %v615 = vld [vmem:[%s541 + $0x31] sm:$0xff]
      %v616 = vld [vmem:[%s541 + $0x39] sm:$0xff]
      %v617 = vld [vmem:[%s541 + $0x41] sm:$0xff]
      %v618 = vld [vmem:[%s541 + $0x49] sm:$0xff]
      %v619 = vld [vmem:[%s541 + $0x51] sm:$0xff]
      %v620 = vld [vmem:[%s541 + $0x59] sm:$0xff]
      %v621 = vld [vmem:[%s541 + $0x61] sm:$0xff]
      %v622 = vld [vmem:[%s541 + $0x69] sm:$0xff]
      %v623 = vld [vmem:[%s541 + $0x71] sm:$0xff]
      %v624 = vld [vmem:[%s541 + $0x79] sm:$0xff]
      %v625 = vld [vmem:[%s541 + $0x81] sm:$0xff]
      %v626 = vld [vmem:[%s541 + $0x89] sm:$0xff]
      %v627 = vld [vmem:[%s541 + $0x91] sm:$0xff]
      %v628 = vld [vmem:[%s541 + $0x99] sm:$0xff]
      %v629 = vld [vmem:[%s541 + $0xa1] sm:$0xff]
      %v630 = vld [vmem:[%s541 + $0xa9] sm:$0xff]
      %v631 = vld [vmem:[%s541 + $0xb1] sm:$0xff]
      %v632 = vld [vmem:[%s541 + $0xb9] sm:$0xff]
      %v633 = vld [vmem:[%s541 + $0xc1] sm:$0xff]
      %v634 = vld [vmem:[%s541 + $0xc9] sm:$0xff]
      %v635 = vld [vmem:[%s541 + $0xd1] sm:$0xff]
      %v636 = vld [vmem:[%s541 + $0xd9] sm:$0xff]
      %v637 = vld [vmem:[%s541 + $0xe1] sm:$0xff]
      %v638 = vld [vmem:[%s541 + $0xe9] sm:$0xff]
      %v639 = vld [vmem:[%s541 + $0xf1] sm:$0xff]
      %v640 = vld [vmem:[%s541 + $0xf9] sm:$0xff]
      %v641 = vld [vmem:[%s541 + $0x101] sm:$0xff]
      %v642 = vld [vmem:[%s541 + $0x109] sm:$0xff]
      %v643 = vld [vmem:[%s541 + $0x111] sm:$0xff]
      %v644 = vld [vmem:[%s541 + $0x119] sm:$0xff]
      %v645 = vld [vmem:[%s541 + $0x121] sm:$0xff]
      %v646 = vld [vmem:[%s541 + $0x129] sm:$0xff]
      %v647 = vld [vmem:[%s541 + $0x131] sm:$0xff]
      %v648 = vld [vmem:[%s541 + $0x139] sm:$0xff]
      %v649 = vld [vmem:[%s541 + $0x141] sm:$0xff]
      %v650 = vld [vmem:[%s541 + $0x149] sm:$0xff]
      %v651 = vld [vmem:[%s541 + $0x151] sm:$0xff]
      %v652 = vld [vmem:[%s541 + $0x159] sm:$0xff]
      %v653 = vld [vmem:[%s541 + $0x161] sm:$0xff]
      %v654 = vld [vmem:[%s541 + $0x169] sm:$0xff]
      %v655 = vld [vmem:[%s541 + $0x171] sm:$0xff]
      %v656 = vld [vmem:[%s541 + $0x179] sm:$0xff]
      %v657 = vld [vmem:[%s541 + $0x181] sm:$0xff]
      %v658 = vld [vmem:[%s541 + $0x189] sm:$0xff]
      %v659 = vld [vmem:[%s541 + $0x191] sm:$0xff]
      %v660 = vld [vmem:[%s541 + $0x199] sm:$0xff]
      %v661 = vld [vmem:[%s541 + $0x1a1] sm:$0xff]
      %v662 = vld [vmem:[%s541 + $0x1a9] sm:$0xff]
      %v663 = vld [vmem:[%s541 + $0x1b1] sm:$0xff]
      %v664 = vld [vmem:[%s541 + $0x1b9] sm:$0xff]
      %v665 = vld [vmem:[%s541 + $0x1c1] sm:$0xff]
      %v666 = vld [vmem:[%s541 + $0x1c9] sm:$0xff]
      %v667 = vld [vmem:[%s541 + $0x1d1] sm:$0xff]
      %v668 = vld [vmem:[%s541 + $0x1d9] sm:$0xff]
      %v669 = vld [vmem:[%s541 + $0x1e1] sm:$0xff]
      %v670 = vld [vmem:[%s541 + $0x1e9] sm:$0xff]
      %v671 = vld [vmem:[%s1 + $0x10] sm:$0xff]
      %v672 = vld [vmem:[%s1 + $0x18] sm:$0xff]
      %vm673 = vcmask 130048
      %v675 = vsel %vm673, %v609, 0
      %v678 = vsel %vm673, %v610, 0
      %v681 = vsel %vm673, %v611, 0
      %v684 = vsel %vm673, %v612, 0
      %v687 = vsel %vm673, %v613, 0
      %v690 = vsel %vm673, %v614, 0
      %v693 = vsel %vm673, %v615, 0
      %v696 = vsel %vm673, %v616, 0
      %v699 = vsel %vm673, %v617, 0
      %v702 = vsel %vm673, %v618, 0
      %v705 = vsel %vm673, %v619, 0
      %v708 = vsel %vm673, %v620, 0
      %v711 = vsel %vm673, %v621, 0
      %v714 = vsel %vm673, %v622, 0
      %v717 = vsel %vm673, %v623, 0
      %v720 = vsel %vm673, %v624, 0
      %v723 = vsel %vm673, %v625, 0
      %v726 = vsel %vm673, %v626, 0
      %v729 = vsel %vm673, %v627, 0
      %v732 = vsel %vm673, %v628, 0
      %v735 = vsel %vm673, %v629, 0
      %v738 = vsel %vm673, %v630, 0
      %v741 = vsel %vm673, %v631, 0
      %v744 = vsel %vm673, %v632, 0
      %v747 = vsel %vm673, %v633, 0
      %v750 = vsel %vm673, %v634, 0
      %v753 = vsel %vm673, %v635, 0
      %v756 = vsel %vm673, %v636, 0
      %v759 = vsel %vm673, %v637, 0
      %v762 = vsel %vm673, %v638, 0
      %v765 = vsel %vm673, %v639, 0
      %v768 = vsel %vm673, %v640, 0
      %v771 = vsel %vm673, %v641, 0
      %v774 = vsel %vm673, %v642, 0
      %v777 = vsel %vm673, %v643, 0
      %v780 = vsel %vm673, %v644, 0
      %v783 = vsel %vm673, %v645, 0
      %v786 = vsel %vm673, %v646, 0
      %v789 = vsel %vm673, %v647, 0
      %v792 = vsel %vm673, %v648, 0
      %v795 = vsel %vm673, %v649, 0
      %v798 = vsel %vm673, %v650, 0
      %v801 = vsel %vm673, %v651, 0
      %v804 = vsel %vm673, %v652, 0
      %v807 = vsel %vm673, %v653, 0
      %v810 = vsel %vm673, %v654, 0
      %v813 = vsel %vm673, %v655, 0
      %v816 = vsel %vm673, %v656, 0
      %v819 = vsel %vm673, %v657, 0
      %v822 = vsel %vm673, %v658, 0
      %v825 = vsel %vm673, %v659, 0
      %v828 = vsel %vm673, %v660, 0
      %v831 = vsel %vm673, %v661, 0
      %v834 = vsel %vm673, %v662, 0
      %v837 = vsel %vm673, %v663, 0
      %v840 = vsel %vm673, %v664, 0
      %v843 = vsel %vm673, %v665, 0
      %v846 = vsel %vm673, %v666, 0
      %v849 = vsel %vm673, %v667, 0
      %v852 = vsel %vm673, %v668, 0
      %v855 = vsel %vm673, %v669, 0
      %v858 = vsel %vm673, %v670, 0
      %860 = vmatprep.subr.mxu0 0.0
      %861 = vmatpush1.msra.mxu0 %v671
      %862 = vmatprep.subr.mxu0 0.0
      %863 = vmatpush1.msra.mxu0 %v672
      %864 = vmatprep.subr.mxu0 0.0
      %865 = vmatpush1.msra.mxu0 0.0
      %866 = vmatprep.subr.mxu0 0.0
      %867 = vmatpush1.msra.mxu0 0.0
      %868 = vmatprep.subr.mxu0 0.0
      %869 = vmatpush1.msra.mxu0 0.0
      %870 = vmatprep.subr.mxu0 0.0
      %871 = vmatpush1.msra.mxu0 0.0
      %872 = vmatprep.subr.mxu0 0.0
      %873 = vmatpush1.msra.mxu0 0.0
      %874 = vmatprep.subr.mxu0 0.0
      %875 = vmatpush1.msra.mxu0 0.0
      %876 = vmatprep.subr.mxu0 0.0
      %877 = vmatpush1.msra.mxu0 0.0
      %878 = vmatprep.subr.mxu0 0.0
      %879 = vmatpush1.msra.mxu0 0.0
      %880 = vmatprep.subr.mxu0 0.0
      %881 = vmatpush1.msra.mxu0 0.0
      %882 = vmatprep.subr.mxu0 0.0
      %883 = vmatpush1.msra.mxu0 0.0
      %884 = vmatprep.subr.mxu0 0.0
      %885 = vmatpush1.msra.mxu0 0.0
      %886 = vmatprep.subr.mxu0 0.0
      %887 = vmatpush1.msra.mxu0 0.0
      %888 = vmatprep.subr.mxu0 0.0
      %889 = vmatpush1.msra.mxu0 0.0
      %890 = vmatprep.subr.mxu0 0.0
      %891 = vmatpush1.msra.mxu0 0.0
      %892 = vmatprep.subr.mxu0 0.0
      %893 = vmatpush1.msra.mxu0 0.0
      %894 = vmatprep.subr.mxu0 0.0
      %895 = vmatpush1.msra.mxu0 0.0
      %896 = vmatprep.subr.mxu0 0.0
      %897 = vmatpush1.msra.mxu0 0.0
      %898 = vmatprep.subr.mxu0 0.0
      %899 = vmatpush1.msra.mxu0 0.0
      %900 = vmatprep.subr.mxu0 0.0
      %901 = vmatpush1.msra.mxu0 0.0
      %902 = vmatprep.subr.mxu0 0.0
      %903 = vmatpush1.msra.mxu0 0.0
      %904 = vmatprep.subr.mxu0 0.0
      %905 = vmatpush1.msra.mxu0 0.0
      %906 = vmatprep.subr.mxu0 0.0
      %907 = vmatpush1.msra.mxu0 0.0
      %908 = vmatprep.subr.mxu0 0.0
      %909 = vmatpush1.msra.mxu0 0.0
      %910 = vmatprep.subr.mxu0 0.0
      %911 = vmatpush1.msra.mxu0 0.0
      %912 = vmatprep.subr.mxu0 0.0
      %913 = vmatpush1.msra.mxu0 0.0
      %914 = vmatprep.subr.mxu0 0.0
      %915 = vmatpush1.msra.mxu0 0.0
      %916 = vmatprep.subr.mxu0 0.0
      %917 = vmatpush1.msra.mxu0 0.0
      %918 = vmatprep.subr.mxu0 0.0
      %919 = vmatpush1.msra.mxu0 0.0
      %920 = vmatprep.subr.mxu0 0.0
      %921 = vmatpush1.msra.mxu0 0.0
      %922 = vmatprep.subr.mxu0 0.0
      %923 = vmatpush1.msra.mxu0 0.0
      %924 = vmatprep.mubr.f32.mxu0 0.0
      %925 = vmatmul.mubr.f32.gmra.mrb[0].mxu0 %v675
      %v926 = vpop.f32.mrb[0].mxu0
      %v927 = vadd.f32 0.0, %v926
      %v928 = vpop.f32.mrb[0].mxu0
      %929 = vmatprep.mubr.f32.mxu0 0.0
      %930 = vmatmul.mubr.f32.gmra.mrb[0].mxu0 %v678
      %v931 = vpop.f32.mrb[0].mxu0
      %v932 = vadd.f32 0.0, %v931
      %v933 = vpop.f32.mrb[0].mxu0
      %934 = vmatprep.mubr.f32.mxu0 0.0
      %935 = vmatmul.mubr.f32.gmra.mrb[0].mxu0 %v681
      %v936 = vpop.f32.mrb[0].mxu0
      %v937 = vadd.f32 0.0, %v936
      %v938 = vpop.f32.mrb[0].mxu0
      %939 = vmatprep.mubr.f32.mxu0 0.0
      %940 = vmatmul.mubr.f32.gmra.mrb[0].mxu0 %v684
      %v941 = vpop.f32.mrb[0].mxu0
      %v942 = vadd.f32 0.0, %v941
      %v943 = vpop.f32.mrb[0].mxu0
      %944 = vmatprep.mubr.f32.mxu0 0.0
      %945 = vmatmul.mubr.f32.gmra.mrb[0].mxu0 %v687
      %v946 = vpop.f32.mrb[0].mxu0
      %v947 = vadd.f32 0.0, %v946
      %v948 = vpop.f32.mrb[0].mxu0
      %949 = vmatprep.mubr.f32.mxu0 0.0
      %950 = vmatmul.mubr.f32.gmra.mrb[0].mxu0 %v690
      %v951 = vpop.f32.mrb[0].mxu0
      %v952 = vadd.f32 0.0, %v951
      %v953 = vpop.f32.mrb[0].mxu0
      %954 = vmatprep.mubr.f32.mxu0 0.0
      %955 = vmatmul.mubr.f32.gmra.mrb[0].mxu0 %v693
      %v956 = vpop.f32.mrb[0].mxu0
      %v957 = vadd.f32 0.0, %v956
      %v958 = vpop.f32.mrb[0].mxu0
      %959 = vmatprep.mubr.f32.mxu0 0.0
      %960 = vmatmul.mubr.f32.gmra.mrb[0].mxu0 %v696
      %v961 = vpop.f32.mrb[0].mxu0
      %v962 = vadd.f32 0.0, %v961
      %v963 = vpop.f32.mrb[0].mxu0
      %964 = vmatprep.mubr.f32.mxu0 0.0
      %965 = vmatmul.mubr.f32.gmra.mrb[0].mxu0 %v699
      %v966 = vpop.f32.mrb[0].mxu0
      %v967 = vadd.f32 0.0, %v966
      %v968 = vpop.f32.mrb[0].mxu0
      %969 = vmatprep.mubr.f32.mxu0 0.0
      %970 = vmatmul.mubr.f32.gmra.mrb[0].mxu0 %v702
      %v971 = vpop.f32.mrb[0].mxu0
      %v972 = vadd.f32 0.0, %v971
      %v973 = vpop.f32.mrb[0].mxu0
      %974 = vmatprep.mubr.f32.mxu0 0.0
      %975 = vmatmul.mubr.f32.gmra.mrb[0].mxu0 %v705
      %v976 = vpop.f32.mrb[0].mxu0
      %v977 = vadd.f32 0.0, %v976
      %v978 = vpop.f32.mrb[0].mxu0
      %979 = vmatprep.mubr.f32.mxu0 0.0
      %980 = vmatmul.mubr.f32.gmra.mrb[0].mxu0 %v708
      %v981 = vpop.f32.mrb[0].mxu0
      %v982 = vadd.f32 0.0, %v981
      %v983 = vpop.f32.mrb[0].mxu0
      %984 = vmatprep.mubr.f32.mxu0 0.0
      %985 = vmatmul.mubr.f32.gmra.mrb[0].mxu0 %v711
      %v986 = vpop.f32.mrb[0].mxu0
      %v987 = vadd.f32 0.0, %v986
      %v988 = vpop.f32.mrb[0].mxu0
      %989 = vmatprep.mubr.f32.mxu0 0.0
      %990 = vmatmul.mubr.f32.gmra.mrb[0].mxu0 %v714
      %v991 = vpop.f32.mrb[0].mxu0
      %v992 = vadd.f32 0.0, %v991
      %v993 = vpop.f32.mrb[0].mxu0
      %994 = vmatprep.mubr.f32.mxu0 0.0
      %995 = vmatmul.mubr.f32.gmra.mrb[0].mxu0 %v717
      %v996 = vpop.f32.mrb[0].mxu0
      %v997 = vadd.f32 0.0, %v996
      %v998 = vpop.f32.mrb[0].mxu0
      %999 = vmatprep.mubr.f32.mxu0 0.0
      %1000 = vmatmul.mubr.f32.gmra.mrb[0].mxu0 %v720
      %v1001 = vpop.f32.mrb[0].mxu0
      %v1002 = vadd.f32 0.0, %v1001
      %v1003 = vpop.f32.mrb[0].mxu0
      %1004 = vmatprep.mubr.f32.mxu0 0.0
      %1005 = vmatmul.mubr.f32.gmra.mrb[0].mxu0 %v723
      %v1006 = vpop.f32.mrb[0].mxu0
      %v1007 = vadd.f32 0.0, %v1006
      %v1008 = vpop.f32.mrb[0].mxu0
      %1009 = vmatprep.mubr.f32.mxu0 0.0
      %1010 = vmatmul.mubr.f32.gmra.mrb[0].mxu0 %v726
      %v1011 = vpop.f32.mrb[0].mxu0
      %v1012 = vadd.f32 0.0, %v1011
      %v1013 = vpop.f32.mrb[0].mxu0
      %1014 = vmatprep.mubr.f32.mxu0 0.0
      %1015 = vmatmul.mubr.f32.gmra.mrb[0].mxu0 %v729
      %v1016 = vpop.f32.mrb[0].mxu0
      %v1017 = vadd.f32 0.0, %v1016
      %v1018 = vpop.f32.mrb[0].mxu0
      %1019 = vmatprep.mubr.f32.mxu0 0.0
      %1020 = vmatmul.mubr.f32.gmra.mrb[0].mxu0 %v732
      %v1021 = vpop.f32.mrb[0].mxu0
      %v1022 = vadd.f32 0.0, %v1021
      %v1023 = vpop.f32.mrb[0].mxu0
      %1024 = vmatprep.mubr.f32.mxu0 0.0
      %1025 = vmatmul.mubr.f32.gmra.mrb[0].mxu0 %v735
      %v1026 = vpop.f32.mrb[0].mxu0
      %v1027 = vadd.f32 0.0, %v1026
      %v1028 = vpop.f32.mrb[0].mxu0
      %1029 = vmatprep.mubr.f32.mxu0 0.0
      %1030 = vmatmul.mubr.f32.gmra.mrb[0].mxu0 %v738
      %v1031 = vpop.f32.mrb[0].mxu0
      %v1032 = vadd.f32 0.0, %v1031
      %v1033 = vpop.f32.mrb[0].mxu0
      %1034 = vmatprep.mubr.f32.mxu0 0.0
      %1035 = vmatmul.mubr.f32.gmra.mrb[0].mxu0 %v741
      %v1036 = vpop.f32.mrb[0].mxu0
      %v1037 = vadd.f32 0.0, %v1036
      %v1038 = vpop.f32.mrb[0].mxu0
      %1039 = vmatprep.mubr.f32.mxu0 0.0
      %1040 = vmatmul.mubr.f32.gmra.mrb[0].mxu0 %v744
      %v1041 = vpop.f32.mrb[0].mxu0
      %v1042 = vadd.f32 0.0, %v1041
      %v1043 = vpop.f32.mrb[0].mxu0
      %1044 = vmatprep.mubr.f32.mxu0 0.0
      %1045 = vmatmul.mubr.f32.gmra.mrb[0].mxu0 %v747
      %v1046 = vpop.f32.mrb[0].mxu0
      %v1047 = vadd.f32 0.0, %v1046
      %v1048 = vpop.f32.mrb[0].mxu0
      %1049 = vmatprep.mubr.f32.mxu0 0.0
      %1050 = vmatmul.mubr.f32.gmra.mrb[0].mxu0 %v750
      %v1051 = vpop.f32.mrb[0].mxu0
      %v1052 = vadd.f32 0.0, %v1051
      %v1053 = vpop.f32.mrb[0].mxu0
      %1054 = vmatprep.mubr.f32.mxu0 0.0
      %1055 = vmatmul.mubr.f32.gmra.mrb[0].mxu0 %v753
      %v1056 = vpop.f32.mrb[0].mxu0
      %v1057 = vadd.f32 0.0, %v1056
      %v1058 = vpop.f32.mrb[0].mxu0
      %1059 = vmatprep.mubr.f32.mxu0 0.0
      %1060 = vmatmul.mubr.f32.gmra.mrb[0].mxu0 %v756
      %v1061 = vpop.f32.mrb[0].mxu0
      %v1062 = vadd.f32 0.0, %v1061
      %v1063 = vpop.f32.mrb[0].mxu0
      %1064 = vmatprep.mubr.f32.mxu0 0.0
      %1065 = vmatmul.mubr.f32.gmra.mrb[0].mxu0 %v759
      %v1066 = vpop.f32.mrb[0].mxu0
      %v1067 = vadd.f32 0.0, %v1066
      %v1068 = vpop.f32.mrb[0].mxu0
      %1069 = vmatprep.mubr.f32.mxu0 0.0
      %1070 = vmatmul.mubr.f32.gmra.mrb[0].mxu0 %v762
      %v1071 = vpop.f32.mrb[0].mxu0
      %v1072 = vadd.f32 0.0, %v1071
      %v1073 = vpop.f32.mrb[0].mxu0
      %1074 = vmatprep.mubr.f32.mxu0 0.0
      %1075 = vmatmul.mubr.f32.gmra.mrb[0].mxu0 %v765
      %v1076 = vpop.f32.mrb[0].mxu0
      %v1077 = vadd.f32 0.0, %v1076
      %v1078 = vpop.f32.mrb[0].mxu0
      %1079 = vmatprep.mubr.f32.mxu0 0.0
      %1080 = vmatmul.mubr.f32.gmra.mrb[0].mxu0 %v768
      %v1081 = vpop.f32.mrb[0].mxu0
      %v1082 = vadd.f32 0.0, %v1081
      %v1083 = vpop.f32.mrb[0].mxu0
      %1084 = vmatprep.mubr.f32.mxu0 0.0
      %1085 = vmatmul.mubr.f32.gmra.mrb[0].mxu0 %v771
      %v1086 = vpop.f32.mrb[0].mxu0
      %v1087 = vadd.f32 0.0, %v1086
      %v1088 = vpop.f32.mrb[0].mxu0
      %1089 = vmatprep.mubr.f32.mxu0 0.0
      %1090 = vmatmul.mubr.f32.gmra.mrb[0].mxu0 %v774
      %v1091 = vpop.f32.mrb[0].mxu0
      %v1092 = vadd.f32 0.0, %v1091
      %v1093 = vpop.f32.mrb[0].mxu0
      %1094 = vmatprep.mubr.f32.mxu0 0.0
      %1095 = vmatmul.mubr.f32.gmra.mrb[0].mxu0 %v777
      %v1096 = vpop.f32.mrb[0].mxu0
      %v1097 = vadd.f32 0.0, %v1096
      %v1098 = vpop.f32.mrb[0].mxu0
      %1099 = vmatprep.mubr.f32.mxu0 0.0
      %1100 = vmatmul.mubr.f32.gmra.mrb[0].mxu0 %v780
      %v1101 = vpop.f32.mrb[0].mxu0
      %v1102 = vadd.f32 0.0, %v1101
      %v1103 = vpop.f32.mrb[0].mxu0
      %1104 = vmatprep.mubr.f32.mxu0 0.0
      %1105 = vmatmul.mubr.f32.gmra.mrb[0].mxu0 %v783
      %v1106 = vpop.f32.mrb[0].mxu0
      %v1107 = vadd.f32 0.0, %v1106
      %v1108 = vpop.f32.mrb[0].mxu0
      %1109 = vmatprep.mubr.f32.mxu0 0.0
      %1110 = vmatmul.mubr.f32.gmra.mrb[0].mxu0 %v786
      %v1111 = vpop.f32.mrb[0].mxu0
      %v1112 = vadd.f32 0.0, %v1111
      %v1113 = vpop.f32.mrb[0].mxu0
      %1114 = vmatprep.mubr.f32.mxu0 0.0
      %1115 = vmatmul.mubr.f32.gmra.mrb[0].mxu0 %v789
      %v1116 = vpop.f32.mrb[0].mxu0
      %v1117 = vadd.f32 0.0, %v1116
      %v1118 = vpop.f32.mrb[0].mxu0
      %1119 = vmatprep.mubr.f32.mxu0 0.0
      %1120 = vmatmul.mubr.f32.gmra.mrb[0].mxu0 %v792
      %v1121 = vpop.f32.mrb[0].mxu0
      %v1122 = vadd.f32 0.0, %v1121
      %v1123 = vpop.f32.mrb[0].mxu0
      %1124 = vmatprep.mubr.f32.mxu0 0.0
      %1125 = vmatmul.mubr.f32.gmra.mrb[0].mxu0 %v795
      %v1126 = vpop.f32.mrb[0].mxu0
      %v1127 = vadd.f32 0.0, %v1126
      %v1128 = vpop.f32.mrb[0].mxu0
      %1129 = vmatprep.mubr.f32.mxu0 0.0
      %1130 = vmatmul.mubr.f32.gmra.mrb[0].mxu0 %v798
      %v1131 = vpop.f32.mrb[0].mxu0
      %v1132 = vadd.f32 0.0, %v1131
      %v1133 = vpop.f32.mrb[0].mxu0
      %1134 = vmatprep.mubr.f32.mxu0 0.0
      %1135 = vmatmul.mubr.f32.gmra.mrb[0].mxu0 %v801
      %v1136 = vpop.f32.mrb[0].mxu0
      %v1137 = vadd.f32 0.0, %v1136
      %v1138 = vpop.f32.mrb[0].mxu0
      %1139 = vmatprep.mubr.f32.mxu0 0.0
      %1140 = vmatmul.mubr.f32.gmra.mrb[0].mxu0 %v804
      %v1141 = vpop.f32.mrb[0].mxu0
      %v1142 = vadd.f32 0.0, %v1141
      %v1143 = vpop.f32.mrb[0].mxu0
      %1144 = vmatprep.mubr.f32.mxu0 0.0
      %1145 = vmatmul.mubr.f32.gmra.mrb[0].mxu0 %v807
      %v1146 = vpop.f32.mrb[0].mxu0
      %v1147 = vadd.f32 0.0, %v1146
      %v1148 = vpop.f32.mrb[0].mxu0
      %1149 = vmatprep.mubr.f32.mxu0 0.0
      %1150 = vmatmul.mubr.f32.gmra.mrb[0].mxu0 %v810
      %v1151 = vpop.f32.mrb[0].mxu0
      %v1152 = vadd.f32 0.0, %v1151
      %v1153 = vpop.f32.mrb[0].mxu0
      %1154 = vmatprep.mubr.f32.mxu0 0.0
      %1155 = vmatmul.mubr.f32.gmra.mrb[0].mxu0 %v813
      %v1156 = vpop.f32.mrb[0].mxu0
      %v1157 = vadd.f32 0.0, %v1156
      %v1158 = vpop.f32.mrb[0].mxu0
      %1159 = vmatprep.mubr.f32.mxu0 0.0
      %1160 = vmatmul.mubr.f32.gmra.mrb[0].mxu0 %v816
      %v1161 = vpop.f32.mrb[0].mxu0
      %v1162 = vadd.f32 0.0, %v1161
      %v1163 = vpop.f32.mrb[0].mxu0
      %1164 = vmatprep.mubr.f32.mxu0 0.0
      %1165 = vmatmul.mubr.f32.gmra.mrb[0].mxu0 %v819
      %v1166 = vpop.f32.mrb[0].mxu0
      %v1167 = vadd.f32 0.0, %v1166
      %v1168 = vpop.f32.mrb[0].mxu0
      %1169 = vmatprep.mubr.f32.mxu0 0.0
      %1170 = vmatmul.mubr.f32.gmra.mrb[0].mxu0 %v822
      %v1171 = vpop.f32.mrb[0].mxu0
      %v1172 = vadd.f32 0.0, %v1171
      %v1173 = vpop.f32.mrb[0].mxu0
      %1174 = vmatprep.mubr.f32.mxu0 0.0
      %1175 = vmatmul.mubr.f32.gmra.mrb[0].mxu0 %v825
      %v1176 = vpop.f32.mrb[0].mxu0
      %v1177 = vadd.f32 0.0, %v1176
      %v1178 = vpop.f32.mrb[0].mxu0
      %1179 = vmatprep.mubr.f32.mxu0 0.0
      %1180 = vmatmul.mubr.f32.gmra.mrb[0].mxu0 %v828
      %v1181 = vpop.f32.mrb[0].mxu0
      %v1182 = vadd.f32 0.0, %v1181
      %v1183 = vpop.f32.mrb[0].mxu0
      %1184 = vmatprep.mubr.f32.mxu0 0.0
      %1185 = vmatmul.mubr.f32.gmra.mrb[0].mxu0 %v831
      %v1186 = vpop.f32.mrb[0].mxu0
      %v1187 = vadd.f32 0.0, %v1186
      %v1188 = vpop.f32.mrb[0].mxu0
      %1189 = vmatprep.mubr.f32.mxu0 0.0
      %1190 = vmatmul.mubr.f32.gmra.mrb[0].mxu0 %v834
      %v1191 = vpop.f32.mrb[0].mxu0
      %v1192 = vadd.f32 0.0, %v1191
      %v1193 = vpop.f32.mrb[0].mxu0
      %1194 = vmatprep.mubr.f32.mxu0 0.0
      %1195 = vmatmul.mubr.f32.gmra.mrb[0].mxu0 %v837
      %v1196 = vpop.f32.mrb[0].mxu0
      %v1197 = vadd.f32 0.0, %v1196
      %v1198 = vpop.f32.mrb[0].mxu0
      %1199 = vmatprep.mubr.f32.mxu0 0.0
      %1200 = vmatmul.mubr.f32.gmra.mrb[0].mxu0 %v840
      %v1201 = vpop.f32.mrb[0].mxu0
      %v1202 = vadd.f32 0.0, %v1201
      %v1203 = vpop.f32.mrb[0].mxu0
      %1204 = vmatprep.mubr.f32.mxu0 0.0
      %1205 = vmatmul.mubr.f32.gmra.mrb[0].mxu0 %v843
      %v1206 = vpop.f32.mrb[0].mxu0
      %v1207 = vadd.f32 0.0, %v1206
      %v1208 = vpop.f32.mrb[0].mxu0
      %1209 = vmatprep.mubr.f32.mxu0 0.0
      %1210 = vmatmul.mubr.f32.gmra.mrb[0].mxu0 %v846
      %v1211 = vpop.f32.mrb[0].mxu0
      %v1212 = vadd.f32 0.0, %v1211
      %v1213 = vpop.f32.mrb[0].mxu0
      %1214 = vmatprep.mubr.f32.mxu0 0.0
      %1215 = vmatmul.mubr.f32.gmra.mrb[0].mxu0 %v849
      %v1216 = vpop.f32.mrb[0].mxu0
      %v1217 = vadd.f32 0.0, %v1216
      %v1218 = vpop.f32.mrb[0].mxu0
      %1219 = vmatprep.mubr.f32.mxu0 0.0
      %1220 = vmatmul.mubr.f32.gmra.mrb[0].mxu0 %v852
      %v1221 = vpop.f32.mrb[0].mxu0
      %v1222 = vadd.f32 0.0, %v1221
      %v1223 = vpop.f32.mrb[0].mxu0
      %1224 = vmatprep.mubr.f32.mxu0 0.0
      %1225 = vmatmul.mubr.f32.gmra.mrb[0].mxu0 %v855
      %v1226 = vpop.f32.mrb[0].mxu0
      %v1227 = vadd.f32 0.0, %v1226
      %v1228 = vpop.f32.mrb[0].mxu0
      %1229 = vmatprep.mubr.f32.mxu0 0.0
      %1230 = vmatmul.mubr.f32.gmra.mrb[0].mxu0 %v858
      %v1231 = vpop.f32.mrb[0].mxu0
      %v1232 = vadd.f32 0.0, %v1231
      %v1233 = vpop.f32.mrb[0].mxu0
      %1234 = vdwg.mxu0
      %v1236 = vsel %vm673, %v545, 0
      %v1239 = vsel %vm673, %v546, 0
      %v1242 = vsel %vm673, %v547, 0
      %v1245 = vsel %vm673, %v548, 0
      %v1248 = vsel %vm673, %v549, 0
      %v1251 = vsel %vm673, %v550, 0
      %v1254 = vsel %vm673, %v551, 0
      %v1257 = vsel %vm673, %v552, 0
      %v1260 = vsel %vm673, %v553, 0
      %v1263 = vsel %vm673, %v554, 0
      %v1266 = vsel %vm673, %v555, 0
      %v1269 = vsel %vm673, %v556, 0
      %v1272 = vsel %vm673, %v557, 0
      %v1275 = vsel %vm673, %v558, 0
      %v1278 = vsel %vm673, %v559, 0
      %v1281 = vsel %vm673, %v560, 0
      %v1284 = vsel %vm673, %v561, 0
      %v1287 = vsel %vm673, %v562, 0
      %v1290 = vsel %vm673, %v563, 0
      %v1293 = vsel %vm673, %v564, 0
      %v1296 = vsel %vm673, %v565, 0
      %v1299 = vsel %vm673, %v566, 0
      %v1302 = vsel %vm673, %v567, 0
      %v1305 = vsel %vm673, %v568, 0
      %v1308 = vsel %vm673, %v569, 0
      %v1311 = vsel %vm673, %v570, 0
      %v1314 = vsel %vm673, %v571, 0
      %v1317 = vsel %vm673, %v572, 0
      %v1320 = vsel %vm673, %v573, 0
      %v1323 = vsel %vm673, %v574, 0
      %v1326 = vsel %vm673, %v575, 0
      %v1329 = vsel %vm673, %v576, 0
      %v1332 = vsel %vm673, %v577, 0
      %v1335 = vsel %vm673, %v578, 0
      %v1338 = vsel %vm673, %v579, 0
      %v1341 = vsel %vm673, %v580, 0
      %v1344 = vsel %vm673, %v581, 0
      %v1347 = vsel %vm673, %v582, 0
      %v1350 = vsel %vm673, %v583, 0
      %v1353 = vsel %vm673, %v584, 0
      %v1356 = vsel %vm673, %v585, 0
      %v1359 = vsel %vm673, %v586, 0
      %v1362 = vsel %vm673, %v587, 0
      %v1365 = vsel %vm673, %v588, 0
      %v1368 = vsel %vm673, %v589, 0
      %v1371 = vsel %vm673, %v590, 0
      %v1374 = vsel %vm673, %v591, 0
      %v1377 = vsel %vm673, %v592, 0
      %v1380 = vsel %vm673, %v593, 0
      %v1383 = vsel %vm673, %v594, 0
      %v1386 = vsel %vm673, %v595, 0
      %v1389 = vsel %vm673, %v596, 0
      %v1392 = vsel %vm673, %v597, 0
      %v1395 = vsel %vm673, %v598, 0
      %v1398 = vsel %vm673, %v599, 0
      %v1401 = vsel %vm673, %v600, 0
      %v1404 = vsel %vm673, %v601, 0
      %v1407 = vsel %vm673, %v602, 0
      %v1410 = vsel %vm673, %v603, 0
      %v1413 = vsel %vm673, %v604, 0
      %v1416 = vsel %vm673, %v605, 0
      %v1419 = vsel %vm673, %v606, 0
      %1421 = vmatprep.subr.mxu0 0.0
      %1422 = vmatpush1.msra.mxu0 %v607
      %1423 = vmatprep.subr.mxu0 0.0
      %1424 = vmatpush1.msra.mxu0 %v608
      %1425 = vmatprep.subr.mxu0 0.0
      %1426 = vmatpush1.msra.mxu0 0.0
      %1427 = vmatprep.subr.mxu0 0.0
      %1428 = vmatpush1.msra.mxu0 0.0
      %1429 = vmatprep.subr.mxu0 0.0
      %1430 = vmatpush1.msra.mxu0 0.0
      %1431 = vmatprep.subr.mxu0 0.0
      %1432 = vmatpush1.msra.mxu0 0.0
      %1433 = vmatprep.subr.mxu0 0.0
      %1434 = vmatpush1.msra.mxu0 0.0
      %1435 = vmatprep.subr.mxu0 0.0
      %1436 = vmatpush1.msra.mxu0 0.0
      %1437 = vmatprep.subr.mxu0 0.0
      %1438 = vmatpush1.msra.mxu0 0.0
      %1439 = vmatprep.subr.mxu0 0.0
      %1440 = vmatpush1.msra.mxu0 0.0
      %1441 = vmatprep.subr.mxu0 0.0
      %1442 = vmatpush1.msra.mxu0 0.0
      %1443 = vmatprep.subr.mxu0 0.0
      %1444 = vmatpush1.msra.mxu0 0.0
      %1445 = vmatprep.subr.mxu0 0.0
      %1446 = vmatpush1.msra.mxu0 0.0
      %1447 = vmatprep.subr.mxu0 0.0
      %1448 = vmatpush1.msra.mxu0 0.0
      %1449 = vmatprep.subr.mxu0 0.0
      %1450 = vmatpush1.msra.mxu0 0.0
      %1451 = vmatprep.subr.mxu0 0.0
      %1452 = vmatpush1.msra.mxu0 0.0
      %1453 = vmatprep.subr.mxu0 0.0
      %1454 = vmatpush1.msra.mxu0 0.0
      %1455 = vmatprep.subr.mxu0 0.0
      %1456 = vmatpush1.msra.mxu0 0.0
      %1457 = vmatprep.subr.mxu0 0.0
      %1458 = vmatpush1.msra.mxu0 0.0
      %1459 = vmatprep.subr.mxu0 0.0
      %1460 = vmatpush1.msra.mxu0 0.0
      %1461 = vmatprep.subr.mxu0 0.0
      %1462 = vmatpush1.msra.mxu0 0.0
      %1463 = vmatprep.subr.mxu0 0.0
      %1464 = vmatpush1.msra.mxu0 0.0
      %1465 = vmatprep.subr.mxu0 0.0
      %1466 = vmatpush1.msra.mxu0 0.0
      %1467 = vmatprep.subr.mxu0 0.0
      %1468 = vmatpush1.msra.mxu0 0.0
      %1469 = vmatprep.subr.mxu0 0.0
      %1470 = vmatpush1.msra.mxu0 0.0
      %1471 = vmatprep.subr.mxu0 0.0
      %1472 = vmatpush1.msra.mxu0 0.0
      %1473 = vmatprep.subr.mxu0 0.0
      %1474 = vmatpush1.msra.mxu0 0.0
      %1475 = vmatprep.subr.mxu0 0.0
      %1476 = vmatpush1.msra.mxu0 0.0
      %1477 = vmatprep.subr.mxu0 0.0
      %1478 = vmatpush1.msra.mxu0 0.0
      %1479 = vmatprep.subr.mxu0 0.0
      %1480 = vmatpush1.msra.mxu0 0.0
      %1481 = vmatprep.subr.mxu0 0.0
      %1482 = vmatpush1.msra.mxu0 0.0
      %1483 = vmatprep.subr.mxu0 0.0
      %1484 = vmatpush1.msra.mxu0 0.0
      %1485 = vmatprep.mubr.f32.mxu0 0.0
      %1486 = vmatmul.mubr.f32.gmra.mrb[0].mxu0 %v1236
      %v1487 = vpop.f32.mrb[0].mxu0
      %v1488 = vadd.f32 %v927, %v1487
      %v1489 = vpop.f32.mrb[0].mxu0
      %1490 = vmatprep.mubr.f32.mxu0 0.0
      %1491 = vmatmul.mubr.f32.gmra.mrb[0].mxu0 %v1239
      %v1492 = vpop.f32.mrb[0].mxu0
      %v1493 = vadd.f32 %v932, %v1492
      %v1494 = vpop.f32.mrb[0].mxu0
      %1495 = vmatprep.mubr.f32.mxu0 0.0
      %1496 = vmatmul.mubr.f32.gmra.mrb[0].mxu0 %v1242
      %v1497 = vpop.f32.mrb[0].mxu0
      %v1498 = vadd.f32 %v937, %v1497
      %v1499 = vpop.f32.mrb[0].mxu0
      %1500 = vmatprep.mubr.f32.mxu0 0.0
      %1501 = vmatmul.mubr.f32.gmra.mrb[0].mxu0 %v1245
      %v1502 = vpop.f32.mrb[0].mxu0
      %v1503 = vadd.f32 %v942, %v1502
      %v1504 = vpop.f32.mrb[0].mxu0
      %1505 = vmatprep.mubr.f32.mxu0 0.0
      %1506 = vmatmul.mubr.f32.gmra.mrb[0].mxu0 %v1248
      %v1507 = vpop.f32.mrb[0].mxu0
      %v1508 = vadd.f32 %v947, %v1507
      %v1509 = vpop.f32.mrb[0].mxu0
      %1510 = vmatprep.mubr.f32.mxu0 0.0
      %1511 = vmatmul.mubr.f32.gmra.mrb[0].mxu0 %v1251
      %v1512 = vpop.f32.mrb[0].mxu0
      %v1513 = vadd.f32 %v952, %v1512
      %v1514 = vpop.f32.mrb[0].mxu0
      %1515 = vmatprep.mubr.f32.mxu0 0.0
      %1516 = vmatmul.mubr.f32.gmra.mrb[0].mxu0 %v1254
      %v1517 = vpop.f32.mrb[0].mxu0
      %v1518 = vadd.f32 %v957, %v1517
      %v1519 = vpop.f32.mrb[0].mxu0
      %1520 = vmatprep.mubr.f32.mxu0 0.0
      %1521 = vmatmul.mubr.f32.gmra.mrb[0].mxu0 %v1257
      %v1522 = vpop.f32.mrb[0].mxu0
      %v1523 = vadd.f32 %v962, %v1522
      %v1524 = vpop.f32.mrb[0].mxu0
      %1525 = vmatprep.mubr.f32.mxu0 0.0
      %1526 = vmatmul.mubr.f32.gmra.mrb[0].mxu0 %v1260
      %v1527 = vpop.f32.mrb[0].mxu0
      %v1528 = vadd.f32 %v967, %v1527
      %v1529 = vpop.f32.mrb[0].mxu0
      %1530 = vmatprep.mubr.f32.mxu0 0.0
      %1531 = vmatmul.mubr.f32.gmra.mrb[0].mxu0 %v1263
      %v1532 = vpop.f32.mrb[0].mxu0
      %v1533 = vadd.f32 %v972, %v1532
      %v1534 = vpop.f32.mrb[0].mxu0
      %1535 = vmatprep.mubr.f32.mxu0 0.0
      %1536 = vmatmul.mubr.f32.gmra.mrb[0].mxu0 %v1266
      %v1537 = vpop.f32.mrb[0].mxu0
      %v1538 = vadd.f32 %v977, %v1537
      %v1539 = vpop.f32.mrb[0].mxu0
      %1540 = vmatprep.mubr.f32.mxu0 0.0
      %1541 = vmatmul.mubr.f32.gmra.mrb[0].mxu0 %v1269
      %v1542 = vpop.f32.mrb[0].mxu0
      %v1543 = vadd.f32 %v982, %v1542
      %v1544 = vpop.f32.mrb[0].mxu0
      %1545 = vmatprep.mubr.f32.mxu0 0.0
      %1546 = vmatmul.mubr.f32.gmra.mrb[0].mxu0 %v1272
      %v1547 = vpop.f32.mrb[0].mxu0
      %v1548 = vadd.f32 %v987, %v1547
      %v1549 = vpop.f32.mrb[0].mxu0
      %1550 = vmatprep.mubr.f32.mxu0 0.0
      %1551 = vmatmul.mubr.f32.gmra.mrb[0].mxu0 %v1275
      %v1552 = vpop.f32.mrb[0].mxu0
      %v1553 = vadd.f32 %v992, %v1552
      %v1554 = vpop.f32.mrb[0].mxu0
      %1555 = vmatprep.mubr.f32.mxu0 0.0
      %1556 = vmatmul.mubr.f32.gmra.mrb[0].mxu0 %v1278
      %v1557 = vpop.f32.mrb[0].mxu0
      %v1558 = vadd.f32 %v997, %v1557
      %v1559 = vpop.f32.mrb[0].mxu0
      %1560 = vmatprep.mubr.f32.mxu0 0.0
      %1561 = vmatmul.mubr.f32.gmra.mrb[0].mxu0 %v1281
      %v1562 = vpop.f32.mrb[0].mxu0
      %v1563 = vadd.f32 %v1002, %v1562
      %v1564 = vpop.f32.mrb[0].mxu0
      %1565 = vmatprep.mubr.f32.mxu0 0.0
      %1566 = vmatmul.mubr.f32.gmra.mrb[0].mxu0 %v1284
      %v1567 = vpop.f32.mrb[0].mxu0
      %v1568 = vadd.f32 %v1007, %v1567
      %v1569 = vpop.f32.mrb[0].mxu0
      %1570 = vmatprep.mubr.f32.mxu0 0.0
      %1571 = vmatmul.mubr.f32.gmra.mrb[0].mxu0 %v1287
      %v1572 = vpop.f32.mrb[0].mxu0
      %v1573 = vadd.f32 %v1012, %v1572
      %v1574 = vpop.f32.mrb[0].mxu0
      %1575 = vmatprep.mubr.f32.mxu0 0.0
      %1576 = vmatmul.mubr.f32.gmra.mrb[0].mxu0 %v1290
      %v1577 = vpop.f32.mrb[0].mxu0
      %v1578 = vadd.f32 %v1017, %v1577
      %v1579 = vpop.f32.mrb[0].mxu0
      %1580 = vmatprep.mubr.f32.mxu0 0.0
      %1581 = vmatmul.mubr.f32.gmra.mrb[0].mxu0 %v1293
      %v1582 = vpop.f32.mrb[0].mxu0
      %v1583 = vadd.f32 %v1022, %v1582
      %v1584 = vpop.f32.mrb[0].mxu0
      %1585 = vmatprep.mubr.f32.mxu0 0.0
      %1586 = vmatmul.mubr.f32.gmra.mrb[0].mxu0 %v1296
      %v1587 = vpop.f32.mrb[0].mxu0
      %v1588 = vadd.f32 %v1027, %v1587
      %v1589 = vpop.f32.mrb[0].mxu0
      %1590 = vmatprep.mubr.f32.mxu0 0.0
      %1591 = vmatmul.mubr.f32.gmra.mrb[0].mxu0 %v1299
      %v1592 = vpop.f32.mrb[0].mxu0
      %v1593 = vadd.f32 %v1032, %v1592
      %v1594 = vpop.f32.mrb[0].mxu0
      %1595 = vmatprep.mubr.f32.mxu0 0.0
      %1596 = vmatmul.mubr.f32.gmra.mrb[0].mxu0 %v1302
      %v1597 = vpop.f32.mrb[0].mxu0
      %v1598 = vadd.f32 %v1037, %v1597
      %v1599 = vpop.f32.mrb[0].mxu0
      %1600 = vmatprep.mubr.f32.mxu0 0.0
      %1601 = vmatmul.mubr.f32.gmra.mrb[0].mxu0 %v1305
      %v1602 = vpop.f32.mrb[0].mxu0
      %v1603 = vadd.f32 %v1042, %v1602
      %v1604 = vpop.f32.mrb[0].mxu0
      %1605 = vmatprep.mubr.f32.mxu0 0.0
      %1606 = vmatmul.mubr.f32.gmra.mrb[0].mxu0 %v1308
      %v1607 = vpop.f32.mrb[0].mxu0
      %v1608 = vadd.f32 %v1047, %v1607
      %v1609 = vpop.f32.mrb[0].mxu0
      %1610 = vmatprep.mubr.f32.mxu0 0.0
      %1611 = vmatmul.mubr.f32.gmra.mrb[0].mxu0 %v1311
      %v1612 = vpop.f32.mrb[0].mxu0
      %v1613 = vadd.f32 %v1052, %v1612
      %v1614 = vpop.f32.mrb[0].mxu0
      %1615 = vmatprep.mubr.f32.mxu0 0.0
      %1616 = vmatmul.mubr.f32.gmra.mrb[0].mxu0 %v1314
      %v1617 = vpop.f32.mrb[0].mxu0
      %v1618 = vadd.f32 %v1057, %v1617
      %v1619 = vpop.f32.mrb[0].mxu0
      %1620 = vmatprep.mubr.f32.mxu0 0.0
      %1621 = vmatmul.mubr.f32.gmra.mrb[0].mxu0 %v1317
      %v1622 = vpop.f32.mrb[0].mxu0
      %v1623 = vadd.f32 %v1062, %v1622
      %v1624 = vpop.f32.mrb[0].mxu0
      %1625 = vmatprep.mubr.f32.mxu0 0.0
      %1626 = vmatmul.mubr.f32.gmra.mrb[0].mxu0 %v1320
      %v1627 = vpop.f32.mrb[0].mxu0
      %v1628 = vadd.f32 %v1067, %v1627
      %v1629 = vpop.f32.mrb[0].mxu0
      %1630 = vmatprep.mubr.f32.mxu0 0.0
      %1631 = vmatmul.mubr.f32.gmra.mrb[0].mxu0 %v1323
      %v1632 = vpop.f32.mrb[0].mxu0
      %v1633 = vadd.f32 %v1072, %v1632
      %v1634 = vpop.f32.mrb[0].mxu0
      %1635 = vmatprep.mubr.f32.mxu0 0.0
      %1636 = vmatmul.mubr.f32.gmra.mrb[0].mxu0 %v1326
      %v1637 = vpop.f32.mrb[0].mxu0
      %v1638 = vadd.f32 %v1077, %v1637
      %v1639 = vpop.f32.mrb[0].mxu0
      %1640 = vmatprep.mubr.f32.mxu0 0.0
      %1641 = vmatmul.mubr.f32.gmra.mrb[0].mxu0 %v1329
      %v1642 = vpop.f32.mrb[0].mxu0
      %v1643 = vadd.f32 %v1082, %v1642
      %v1644 = vpop.f32.mrb[0].mxu0
      %1645 = vmatprep.mubr.f32.mxu0 0.0
      %1646 = vmatmul.mubr.f32.gmra.mrb[0].mxu0 %v1332
      %v1647 = vpop.f32.mrb[0].mxu0
      %v1648 = vadd.f32 %v1087, %v1647
      %v1649 = vpop.f32.mrb[0].mxu0
      %1650 = vmatprep.mubr.f32.mxu0 0.0
      %1651 = vmatmul.mubr.f32.gmra.mrb[0].mxu0 %v1335
      %v1652 = vpop.f32.mrb[0].mxu0
      %v1653 = vadd.f32 %v1092, %v1652
      %v1654 = vpop.f32.mrb[0].mxu0
      %1655 = vmatprep.mubr.f32.mxu0 0.0
      %1656 = vmatmul.mubr.f32.gmra.mrb[0].mxu0 %v1338
      %v1657 = vpop.f32.mrb[0].mxu0
      %v1658 = vadd.f32 %v1097, %v1657
      %v1659 = vpop.f32.mrb[0].mxu0
      %1660 = vmatprep.mubr.f32.mxu0 0.0
      %1661 = vmatmul.mubr.f32.gmra.mrb[0].mxu0 %v1341
      %v1662 = vpop.f32.mrb[0].mxu0
      %v1663 = vadd.f32 %v1102, %v1662
      %v1664 = vpop.f32.mrb[0].mxu0
      %1665 = vmatprep.mubr.f32.mxu0 0.0
      %1666 = vmatmul.mubr.f32.gmra.mrb[0].mxu0 %v1344
      %v1667 = vpop.f32.mrb[0].mxu0
      %v1668 = vadd.f32 %v1107, %v1667
      %v1669 = vpop.f32.mrb[0].mxu0
      %1670 = vmatprep.mubr.f32.mxu0 0.0
      %1671 = vmatmul.mubr.f32.gmra.mrb[0].mxu0 %v1347
      %v1672 = vpop.f32.mrb[0].mxu0
      %v1673 = vadd.f32 %v1112, %v1672
      %v1674 = vpop.f32.mrb[0].mxu0
      %1675 = vmatprep.mubr.f32.mxu0 0.0
      %1676 = vmatmul.mubr.f32.gmra.mrb[0].mxu0 %v1350
      %v1677 = vpop.f32.mrb[0].mxu0
      %v1678 = vadd.f32 %v1117, %v1677
      %v1679 = vpop.f32.mrb[0].mxu0
      %1680 = vmatprep.mubr.f32.mxu0 0.0
      %1681 = vmatmul.mubr.f32.gmra.mrb[0].mxu0 %v1353
      %v1682 = vpop.f32.mrb[0].mxu0
      %v1683 = vadd.f32 %v1122, %v1682
      %v1684 = vpop.f32.mrb[0].mxu0
      %1685 = vmatprep.mubr.f32.mxu0 0.0
      %1686 = vmatmul.mubr.f32.gmra.mrb[0].mxu0 %v1356
      %v1687 = vpop.f32.mrb[0].mxu0
      %v1688 = vadd.f32 %v1127, %v1687
      %v1689 = vpop.f32.mrb[0].mxu0
      %1690 = vmatprep.mubr.f32.mxu0 0.0
      %1691 = vmatmul.mubr.f32.gmra.mrb[0].mxu0 %v1359
      %v1692 = vpop.f32.mrb[0].mxu0
      %v1693 = vadd.f32 %v1132, %v1692
      %v1694 = vpop.f32.mrb[0].mxu0
      %1695 = vmatprep.mubr.f32.mxu0 0.0
      %1696 = vmatmul.mubr.f32.gmra.mrb[0].mxu0 %v1362
      %v1697 = vpop.f32.mrb[0].mxu0
      %v1698 = vadd.f32 %v1137, %v1697
      %v1699 = vpop.f32.mrb[0].mxu0
      %1700 = vmatprep.mubr.f32.mxu0 0.0
      %1701 = vmatmul.mubr.f32.gmra.mrb[0].mxu0 %v1365
      %v1702 = vpop.f32.mrb[0].mxu0
      %v1703 = vadd.f32 %v1142, %v1702
      %v1704 = vpop.f32.mrb[0].mxu0
      %1705 = vmatprep.mubr.f32.mxu0 0.0
      %1706 = vmatmul.mubr.f32.gmra.mrb[0].mxu0 %v1368
      %v1707 = vpop.f32.mrb[0].mxu0
      %v1708 = vadd.f32 %v1147, %v1707
      %v1709 = vpop.f32.mrb[0].mxu0
      %1710 = vmatprep.mubr.f32.mxu0 0.0
      %1711 = vmatmul.mubr.f32.gmra.mrb[0].mxu0 %v1371
      %v1712 = vpop.f32.mrb[0].mxu0
      %v1713 = vadd.f32 %v1152, %v1712
      %v1714 = vpop.f32.mrb[0].mxu0
      %1715 = vmatprep.mubr.f32.mxu0 0.0
      %1716 = vmatmul.mubr.f32.gmra.mrb[0].mxu0 %v1374
      %v1717 = vpop.f32.mrb[0].mxu0
      %v1718 = vadd.f32 %v1157, %v1717
      %v1719 = vpop.f32.mrb[0].mxu0
      %1720 = vmatprep.mubr.f32.mxu0 0.0
      %1721 = vmatmul.mubr.f32.gmra.mrb[0].mxu0 %v1377
      %v1722 = vpop.f32.mrb[0].mxu0
      %v1723 = vadd.f32 %v1162, %v1722
      %v1724 = vpop.f32.mrb[0].mxu0
      %1725 = vmatprep.mubr.f32.mxu0 0.0
      %1726 = vmatmul.mubr.f32.gmra.mrb[0].mxu0 %v1380
      %v1727 = vpop.f32.mrb[0].mxu0
      %v1728 = vadd.f32 %v1167, %v1727
      %v1729 = vpop.f32.mrb[0].mxu0
      %1730 = vmatprep.mubr.f32.mxu0 0.0
      %1731 = vmatmul.mubr.f32.gmra.mrb[0].mxu0 %v1383
      %v1732 = vpop.f32.mrb[0].mxu0
      %v1733 = vadd.f32 %v1172, %v1732
      %v1734 = vpop.f32.mrb[0].mxu0
      %1735 = vmatprep.mubr.f32.mxu0 0.0
      %1736 = vmatmul.mubr.f32.gmra.mrb[0].mxu0 %v1386
      %v1737 = vpop.f32.mrb[0].mxu0
      %v1738 = vadd.f32 %v1177, %v1737
      %v1739 = vpop.f32.mrb[0].mxu0
      %1740 = vmatprep.mubr.f32.mxu0 0.0
      %1741 = vmatmul.mubr.f32.gmra.mrb[0].mxu0 %v1389
      %v1742 = vpop.f32.mrb[0].mxu0
      %v1743 = vadd.f32 %v1182, %v1742
      %v1744 = vpop.f32.mrb[0].mxu0
      %1745 = vmatprep.mubr.f32.mxu0 0.0
      %1746 = vmatmul.mubr.f32.gmra.mrb[0].mxu0 %v1392
      %v1747 = vpop.f32.mrb[0].mxu0
      %v1748 = vadd.f32 %v1187, %v1747
      %v1749 = vpop.f32.mrb[0].mxu0
      %1750 = vmatprep.mubr.f32.mxu0 0.0
      %1751 = vmatmul.mubr.f32.gmra.mrb[0].mxu0 %v1395
      %v1752 = vpop.f32.mrb[0].mxu0
      %v1753 = vadd.f32 %v1192, %v1752
      %v1754 = vpop.f32.mrb[0].mxu0
      %1755 = vmatprep.mubr.f32.mxu0 0.0
      %1756 = vmatmul.mubr.f32.gmra.mrb[0].mxu0 %v1398
      %v1757 = vpop.f32.mrb[0].mxu0
      %v1758 = vadd.f32 %v1197, %v1757
      %v1759 = vpop.f32.mrb[0].mxu0
      %1760 = vmatprep.mubr.f32.mxu0 0.0
      %1761 = vmatmul.mubr.f32.gmra.mrb[0].mxu0 %v1401
      %v1762 = vpop.f32.mrb[0].mxu0
      %v1763 = vadd.f32 %v1202, %v1762
      %v1764 = vpop.f32.mrb[0].mxu0
      %1765 = vmatprep.mubr.f32.mxu0 0.0
      %1766 = vmatmul.mubr.f32.gmra.mrb[0].mxu0 %v1404
      %v1767 = vpop.f32.mrb[0].mxu0
      %v1768 = vadd.f32 %v1207, %v1767
      %v1769 = vpop.f32.mrb[0].mxu0
      %1770 = vmatprep.mubr.f32.mxu0 0.0
      %1771 = vmatmul.mubr.f32.gmra.mrb[0].mxu0 %v1407
      %v1772 = vpop.f32.mrb[0].mxu0
      %v1773 = vadd.f32 %v1212, %v1772
      %v1774 = vpop.f32.mrb[0].mxu0
      %1775 = vmatprep.mubr.f32.mxu0 0.0
      %1776 = vmatmul.mubr.f32.gmra.mrb[0].mxu0 %v1410
      %v1777 = vpop.f32.mrb[0].mxu0
      %v1778 = vadd.f32 %v1217, %v1777
      %v1779 = vpop.f32.mrb[0].mxu0
      %1780 = vmatprep.mubr.f32.mxu0 0.0
      %1781 = vmatmul.mubr.f32.gmra.mrb[0].mxu0 %v1413
      %v1782 = vpop.f32.mrb[0].mxu0
      %v1783 = vadd.f32 %v1222, %v1782
      %v1784 = vpop.f32.mrb[0].mxu0
      %1785 = vmatprep.mubr.f32.mxu0 0.0
      %1786 = vmatmul.mubr.f32.gmra.mrb[0].mxu0 %v1416
      %v1787 = vpop.f32.mrb[0].mxu0
      %v1788 = vadd.f32 %v1227, %v1787
      %v1789 = vpop.f32.mrb[0].mxu0
      %1790 = vmatprep.mubr.f32.mxu0 0.0
      %1791 = vmatmul.mubr.f32.gmra.mrb[0].mxu0 %v1419
      %v1792 = vpop.f32.mrb[0].mxu0
      %v1793 = vadd.f32 %v1232, %v1792
      %v1794 = vpop.f32.mrb[0].mxu0
      %1795 = vdwg.mxu0
      %v1796 = vld [vmem:[%s541 + $0x2] sm:$0xff]
      %v1797 = vld [vmem:[%s541 + $0xa] sm:$0xff]
      %v1798 = vld [vmem:[%s541 + $0x12] sm:$0xff]
      %v1799 = vld [vmem:[%s541 + $0x1a] sm:$0xff]
      %v1800 = vld [vmem:[%s541 + $0x22] sm:$0xff]
      %v1801 = vld [vmem:[%s541 + $0x2a] sm:$0xff]
      %v1802 = vld [vmem:[%s541 + $0x32] sm:$0xff]
      %v1803 = vld [vmem:[%s541 + $0x3a] sm:$0xff]
      %v1804 = vld [vmem:[%s541 + $0x42] sm:$0xff]
      %v1805 = vld [vmem:[%s541 + $0x4a] sm:$0xff]
      %v1806 = vld [vmem:[%s541 + $0x52] sm:$0xff]
      %v1807 = vld [vmem:[%s541 + $0x5a] sm:$0xff]
      %v1808 = vld [vmem:[%s541 + $0x62] sm:$0xff]
      %v1809 = vld [vmem:[%s541 + $0x6a] sm:$0xff]
      %v1810 = vld [vmem:[%s541 + $0x72] sm:$0xff]
      %v1811 = vld [vmem:[%s541 + $0x7a] sm:$0xff]
      %v1812 = vld [vmem:[%s541 + $0x82] sm:$0xff]
      %v1813 = vld [vmem:[%s541 + $0x8a] sm:$0xff]
      %v1814 = vld [vmem:[%s541 + $0x92] sm:$0xff]
      %v1815 = vld [vmem:[%s541 + $0x9a] sm:$0xff]
      %v1816 = vld [vmem:[%s541 + $0xa2] sm:$0xff]
      %v1817 = vld [vmem:[%s541 + $0xaa] sm:$0xff]
      %v1818 = vld [vmem:[%s541 + $0xb2] sm:$0xff]
      %v1819 = vld [vmem:[%s541 + $0xba] sm:$0xff]
      %v1820 = vld [vmem:[%s541 + $0xc2] sm:$0xff]
      %v1821 = vld [vmem:[%s541 + $0xca] sm:$0xff]
      %v1822 = vld [vmem:[%s541 + $0xd2] sm:$0xff]
      %v1823 = vld [vmem:[%s541 + $0xda] sm:$0xff]
      %v1824 = vld [vmem:[%s541 + $0xe2] sm:$0xff]
      %v1825 = vld [vmem:[%s541 + $0xea] sm:$0xff]
      %v1826 = vld [vmem:[%s541 + $0xf2] sm:$0xff]
      %v1827 = vld [vmem:[%s541 + $0xfa] sm:$0xff]
      %v1828 = vld [vmem:[%s541 + $0x102] sm:$0xff]
      %v1829 = vld [vmem:[%s541 + $0x10a] sm:$0xff]
      %v1830 = vld [vmem:[%s541 + $0x112] sm:$0xff]
      %v1831 = vld [vmem:[%s541 + $0x11a] sm:$0xff]
      %v1832 = vld [vmem:[%s541 + $0x122] sm:$0xff]
      %v1833 = vld [vmem:[%s541 + $0x12a] sm:$0xff]
      %v1834 = vld [vmem:[%s541 + $0x132] sm:$0xff]
      %v1835 = vld [vmem:[%s541 + $0x13a] sm:$0xff]
      %v1836 = vld [vmem:[%s541 + $0x142] sm:$0xff]
      %v1837 = vld [vmem:[%s541 + $0x14a] sm:$0xff]
      %v1838 = vld [vmem:[%s541 + $0x152] sm:$0xff]
      %v1839 = vld [vmem:[%s541 + $0x15a] sm:$0xff]
      %v1840 = vld [vmem:[%s541 + $0x162] sm:$0xff]
      %v1841 = vld [vmem:[%s541 + $0x16a] sm:$0xff]
      %v1842 = vld [vmem:[%s541 + $0x172] sm:$0xff]
      %v1843 = vld [vmem:[%s541 + $0x17a] sm:$0xff]
      %v1844 = vld [vmem:[%s541 + $0x182] sm:$0xff]
      %v1845 = vld [vmem:[%s541 + $0x18a] sm:$0xff]
      %v1846 = vld [vmem:[%s541 + $0x192] sm:$0xff]
      %v1847 = vld [vmem:[%s541 + $0x19a] sm:$0xff]
      %v1848 = vld [vmem:[%s541 + $0x1a2] sm:$0xff]
      %v1849 = vld [vmem:[%s541 + $0x1aa] sm:$0xff]
      %v1850 = vld [vmem:[%s541 + $0x1b2] sm:$0xff]
      %v1851 = vld [vmem:[%s541 + $0x1ba] sm:$0xff]
      %v1852 = vld [vmem:[%s541 + $0x1c2] sm:$0xff]
      %v1853 = vld [vmem:[%s541 + $0x1ca] sm:$0xff]
      %v1854 = vld [vmem:[%s541 + $0x1d2] sm:$0xff]
      %v1855 = vld [vmem:[%s541 + $0x1da] sm:$0xff]
      %v1856 = vld [vmem:[%s541 + $0x1e2] sm:$0xff]
      %v1857 = vld [vmem:[%s541 + $0x1ea] sm:$0xff]
      %v1858 = vld [vmem:[%s1 + $0x20] sm:$0xff]
      %v1859 = vld [vmem:[%s1 + $0x28] sm:$0xff]
      %v1861 = vsel %vm673, %v1796, 0
      %v1864 = vsel %vm673, %v1797, 0
      %v1867 = vsel %vm673, %v1798, 0
      %v1870 = vsel %vm673, %v1799, 0
      %v1873 = vsel %vm673, %v1800, 0
      %v1876 = vsel %vm673, %v1801, 0
      %v1879 = vsel %vm673, %v1802, 0
      %v1882 = vsel %vm673, %v1803, 0
      %v1885 = vsel %vm673, %v1804, 0
      %v1888 = vsel %vm673, %v1805, 0
      %v1891 = vsel %vm673, %v1806, 0
      %v1894 = vsel %vm673, %v1807, 0
      %v1897 = vsel %vm673, %v1808, 0
      %v1900 = vsel %vm673, %v1809, 0
      %v1903 = vsel %vm673, %v1810, 0
      %v1906 = vsel %vm673, %v1811, 0
      %v1909 = vsel %vm673, %v1812, 0
      %v1912 = vsel %vm673, %v1813, 0
      %v1915 = vsel %vm673, %v1814, 0
      %v1918 = vsel %vm673, %v1815, 0
      %v1921 = vsel %vm673, %v1816, 0
      %v1924 = vsel %vm673, %v1817, 0
      %v1927 = vsel %vm673, %v1818, 0
      %v1930 = vsel %vm673, %v1819, 0
      %v1933 = vsel %vm673, %v1820, 0
      %v1936 = vsel %vm673, %v1821, 0
      %v1939 = vsel %vm673, %v1822, 0
      %v1942 = vsel %vm673, %v1823, 0
      %v1945 = vsel %vm673, %v1824, 0
      %v1948 = vsel %vm673, %v1825, 0
      %v1951 = vsel %vm673, %v1826, 0
      %v1954 = vsel %vm673, %v1827, 0
      %v1957 = vsel %vm673, %v1828, 0
      %v1960 = vsel %vm673, %v1829, 0
      %v1963 = vsel %vm673, %v1830, 0
      %v1966 = vsel %vm673, %v1831, 0
      %v1969 = vsel %vm673, %v1832, 0
      %v1972 = vsel %vm673, %v1833, 0
      %v1975 = vsel %vm673, %v1834, 0
      %v1978 = vsel %vm673, %v1835, 0
      %v1981 = vsel %vm673, %v1836, 0
      %v1984 = vsel %vm673, %v1837, 0
      %v1987 = vsel %vm673, %v1838, 0
      %v1990 = vsel %vm673, %v1839, 0
      %v1993 = vsel %vm673, %v1840, 0
      %v1996 = vsel %vm673, %v1841, 0
      %v1999 = vsel %vm673, %v1842, 0
      %v2002 = vsel %vm673, %v1843, 0
      %v2005 = vsel %vm673, %v1844, 0
      %v2008 = vsel %vm673, %v1845, 0
      %v2011 = vsel %vm673, %v1846, 0
      %v2014 = vsel %vm673, %v1847, 0
      %v2017 = vsel %vm673, %v1848, 0
      %v2020 = vsel %vm673, %v1849, 0
      %v2023 = vsel %vm673, %v1850, 0
      %v2026 = vsel %vm673, %v1851, 0
      %v2029 = vsel %vm673, %v1852, 0
      %v2032 = vsel %vm673, %v1853, 0
      %v2035 = vsel %vm673, %v1854, 0
      %v2038 = vsel %vm673, %v1855, 0
      %v2041 = vsel %vm673, %v1856, 0
      %v2044 = vsel %vm673, %v1857, 0
      %2046 = vmatprep.subr.mxu0 0.0
      %2047 = vmatpush1.msra.mxu0 %v1858
      %2048 = vmatprep.subr.mxu0 0.0
      %2049 = vmatpush1.msra.mxu0 %v1859
      %2050 = vmatprep.subr.mxu0 0.0
      %2051 = vmatpush1.msra.mxu0 0.0
      %2052 = vmatprep.subr.mxu0 0.0
      %2053 = vmatpush1.msra.mxu0 0.0
      %2054 = vmatprep.subr.mxu0 0.0
      %2055 = vmatpush1.msra.mxu0 0.0
      %2056 = vmatprep.subr.mxu0 0.0
      %2057 = vmatpush1.msra.mxu0 0.0
      %2058 = vmatprep.subr.mxu0 0.0
      %2059 = vmatpush1.msra.mxu0 0.0
      %2060 = vmatprep.subr.mxu0 0.0
      %2061 = vmatpush1.msra.mxu0 0.0
      %2062 = vmatprep.subr.mxu0 0.0
      %2063 = vmatpush1.msra.mxu0 0.0
      %2064 = vmatprep.subr.mxu0 0.0
      %2065 = vmatpush1.msra.mxu0 0.0
      %2066 = vmatprep.subr.mxu0 0.0
      %2067 = vmatpush1.msra.mxu0 0.0
      %2068 = vmatprep.subr.mxu0 0.0
      %2069 = vmatpush1.msra.mxu0 0.0
      %2070 = vmatprep.subr.mxu0 0.0
      %2071 = vmatpush1.msra.mxu0 0.0
      %2072 = vmatprep.subr.mxu0 0.0
      %2073 = vmatpush1.msra.mxu0 0.0
      %2074 = vmatprep.subr.mxu0 0.0
      %2075 = vmatpush1.msra.mxu0 0.0
      %2076 = vmatprep.subr.mxu0 0.0
      %2077 = vmatpush1.msra.mxu0 0.0
      %2078 = vmatprep.subr.mxu0 0.0
      %2079 = vmatpush1.msra.mxu0 0.0
      %2080 = vmatprep.subr.mxu0 0.0
      %2081 = vmatpush1.msra.mxu0 0.0
      %2082 = vmatprep.subr.mxu0 0.0
      %2083 = vmatpush1.msra.mxu0 0.0
      %2084 = vmatprep.subr.mxu0 0.0
      %2085 = vmatpush1.msra.mxu0 0.0
      %2086 = vmatprep.subr.mxu0 0.0
      %2087 = vmatpush1.msra.mxu0 0.0
      %2088 = vmatprep.subr.mxu0 0.0
      %2089 = vmatpush1.msra.mxu0 0.0
      %2090 = vmatprep.subr.mxu0 0.0
      %2091 = vmatpush1.msra.mxu0 0.0
      %2092 = vmatprep.subr.mxu0 0.0
      %2093 = vmatpush1.msra.mxu0 0.0
      %2094 = vmatprep.subr.mxu0 0.0
      %2095 = vmatpush1.msra.mxu0 0.0
      %2096 = vmatprep.subr.mxu0 0.0
      %2097 = vmatpush1.msra.mxu0 0.0
      %2098 = vmatprep.subr.mxu0 0.0
      %2099 = vmatpush1.msra.mxu0 0.0
      %2100 = vmatprep.subr.mxu0 0.0
      %2101 = vmatpush1.msra.mxu0 0.0
      %2102 = vmatprep.subr.mxu0 0.0
      %2103 = vmatpush1.msra.mxu0 0.0
      %2104 = vmatprep.subr.mxu0 0.0
      %2105 = vmatpush1.msra.mxu0 0.0
      %2106 = vmatprep.subr.mxu0 0.0
      %2107 = vmatpush1.msra.mxu0 0.0
      %2108 = vmatprep.subr.mxu0 0.0
      %2109 = vmatpush1.msra.mxu0 0.0
      %2110 = vmatprep.mubr.f32.mxu0 0.0
      %2111 = vmatmul.mubr.f32.gmra.mrb[0].mxu0 %v1861
      %v2112 = vpop.f32.mrb[0].mxu0
      %v2113 = vadd.f32 0.0, %v2112
      %v2114 = vpop.f32.mrb[0].mxu0
      %2115 = vmatprep.mubr.f32.mxu0 0.0
      %2116 = vmatmul.mubr.f32.gmra.mrb[0].mxu0 %v1864
      %v2117 = vpop.f32.mrb[0].mxu0
      %v2118 = vadd.f32 0.0, %v2117
      %v2119 = vpop.f32.mrb[0].mxu0
      %2120 = vmatprep.mubr.f32.mxu0 0.0
      %2121 = vmatmul.mubr.f32.gmra.mrb[0].mxu0 %v1867
      %v2122 = vpop.f32.mrb[0].mxu0
      %v2123 = vadd.f32 0.0, %v2122
      %v2124 = vpop.f32.mrb[0].mxu0
      %2125 = vmatprep.mubr.f32.mxu0 0.0
      %2126 = vmatmul.mubr.f32.gmra.mrb[0].mxu0 %v1870
      %v2127 = vpop.f32.mrb[0].mxu0
      %v2128 = vadd.f32 0.0, %v2127
      %v2129 = vpop.f32.mrb[0].mxu0
      %2130 = vmatprep.mubr.f32.mxu0 0.0
      %2131 = vmatmul.mubr.f32.gmra.mrb[0].mxu0 %v1873
      %v2132 = vpop.f32.mrb[0].mxu0
      %v2133 = vadd.f32 0.0, %v2132
      %v2134 = vpop.f32.mrb[0].mxu0
      %2135 = vmatprep.mubr.f32.mxu0 0.0
      %2136 = vmatmul.mubr.f32.gmra.mrb[0].mxu0 %v1876
      %v2137 = vpop.f32.mrb[0].mxu0
      %v2138 = vadd.f32 0.0, %v2137
      %v2139 = vpop.f32.mrb[0].mxu0
      %2140 = vmatprep.mubr.f32.mxu0 0.0
      %2141 = vmatmul.mubr.f32.gmra.mrb[0].mxu0 %v1879
      %v2142 = vpop.f32.mrb[0].mxu0
      %v2143 = vadd.f32 0.0, %v2142
      %v2144 = vpop.f32.mrb[0].mxu0
      %2145 = vmatprep.mubr.f32.mxu0 0.0
      %2146 = vmatmul.mubr.f32.gmra.mrb[0].mxu0 %v1882
      %v2147 = vpop.f32.mrb[0].mxu0
      %v2148 = vadd.f32 0.0, %v2147
      %v2149 = vpop.f32.mrb[0].mxu0
      %2150 = vmatprep.mubr.f32.mxu0 0.0
      %2151 = vmatmul.mubr.f32.gmra.mrb[0].mxu0 %v1885
      %v2152 = vpop.f32.mrb[0].mxu0
      %v2153 = vadd.f32 0.0, %v2152
      %v2154 = vpop.f32.mrb[0].mxu0
      %2155 = vmatprep.mubr.f32.mxu0 0.0
      %2156 = vmatmul.mubr.f32.gmra.mrb[0].mxu0 %v1888
      %v2157 = vpop.f32.mrb[0].mxu0
      %v2158 = vadd.f32 0.0, %v2157
      %v2159 = vpop.f32.mrb[0].mxu0
      %2160 = vmatprep.mubr.f32.mxu0 0.0
      %2161 = vmatmul.mubr.f32.gmra.mrb[0].mxu0 %v1891
      %v2162 = vpop.f32.mrb[0].mxu0
      %v2163 = vadd.f32 0.0, %v2162
      %v2164 = vpop.f32.mrb[0].mxu0
      %2165 = vmatprep.mubr.f32.mxu0 0.0
      %2166 = vmatmul.mubr.f32.gmra.mrb[0].mxu0 %v1894
      %v2167 = vpop.f32.mrb[0].mxu0
      %v2168 = vadd.f32 0.0, %v2167
      %v2169 = vpop.f32.mrb[0].mxu0
      %2170 = vmatprep.mubr.f32.mxu0 0.0
      %2171 = vmatmul.mubr.f32.gmra.mrb[0].mxu0 %v1897
      %v2172 = vpop.f32.mrb[0].mxu0
      %v2173 = vadd.f32 0.0, %v2172
      %v2174 = vpop.f32.mrb[0].mxu0
      %2175 = vmatprep.mubr.f32.mxu0 0.0
      %2176 = vmatmul.mubr.f32.gmra.mrb[0].mxu0 %v1900
      %v2177 = vpop.f32.mrb[0].mxu0
      %v2178 = vadd.f32 0.0, %v2177
      %v2179 = vpop.f32.mrb[0].mxu0
      %2180 = vmatprep.mubr.f32.mxu0 0.0
      %2181 = vmatmul.mubr.f32.gmra.mrb[0].mxu0 %v1903
      %v2182 = vpop.f32.mrb[0].mxu0
      %v2183 = vadd.f32 0.0, %v2182
      %v2184 = vpop.f32.mrb[0].mxu0
      %2185 = vmatprep.mubr.f32.mxu0 0.0
      %2186 = vmatmul.mubr.f32.gmra.mrb[0].mxu0 %v1906
      %v2187 = vpop.f32.mrb[0].mxu0
      %v2188 = vadd.f32 0.0, %v2187
      %v2189 = vpop.f32.mrb[0].mxu0
      %2190 = vmatprep.mubr.f32.mxu0 0.0
      %2191 = vmatmul.mubr.f32.gmra.mrb[0].mxu0 %v1909
      %v2192 = vpop.f32.mrb[0].mxu0
      %v2193 = vadd.f32 0.0, %v2192
      %v2194 = vpop.f32.mrb[0].mxu0
      %2195 = vmatprep.mubr.f32.mxu0 0.0
      %2196 = vmatmul.mubr.f32.gmra.mrb[0].mxu0 %v1912
      %v2197 = vpop.f32.mrb[0].mxu0
      %v2198 = vadd.f32 0.0, %v2197
      %v2199 = vpop.f32.mrb[0].mxu0
      %2200 = vmatprep.mubr.f32.mxu0 0.0
      %2201 = vmatmul.mubr.f32.gmra.mrb[0].mxu0 %v1915
      %v2202 = vpop.f32.mrb[0].mxu0
      %v2203 = vadd.f32 0.0, %v2202
      %v2204 = vpop.f32.mrb[0].mxu0
      %2205 = vmatprep.mubr.f32.mxu0 0.0
      %2206 = vmatmul.mubr.f32.gmra.mrb[0].mxu0 %v1918
      %v2207 = vpop.f32.mrb[0].mxu0
      %v2208 = vadd.f32 0.0, %v2207
      %v2209 = vpop.f32.mrb[0].mxu0
      %2210 = vmatprep.mubr.f32.mxu0 0.0
      %2211 = vmatmul.mubr.f32.gmra.mrb[0].mxu0 %v1921
      %v2212 = vpop.f32.mrb[0].mxu0
      %v2213 = vadd.f32 0.0, %v2212
      %v2214 = vpop.f32.mrb[0].mxu0
      %2215 = vmatprep.mubr.f32.mxu0 0.0
      %2216 = vmatmul.mubr.f32.gmra.mrb[0].mxu0 %v1924
      %v2217 = vpop.f32.mrb[0].mxu0
      %v2218 = vadd.f32 0.0, %v2217
      %v2219 = vpop.f32.mrb[0].mxu0
      %2220 = vmatprep.mubr.f32.mxu0 0.0
      %2221 = vmatmul.mubr.f32.gmra.mrb[0].mxu0 %v1927
      %v2222 = vpop.f32.mrb[0].mxu0
      %v2223 = vadd.f32 0.0, %v2222
      %v2224 = vpop.f32.mrb[0].mxu0
      %2225 = vmatprep.mubr.f32.mxu0 0.0
      %2226 = vmatmul.mubr.f32.gmra.mrb[0].mxu0 %v1930
      %v2227 = vpop.f32.mrb[0].mxu0
      %v2228 = vadd.f32 0.0, %v2227
      %v2229 = vpop.f32.mrb[0].mxu0
      %2230 = vmatprep.mubr.f32.mxu0 0.0
      %2231 = vmatmul.mubr.f32.gmra.mrb[0].mxu0 %v1933
      %v2232 = vpop.f32.mrb[0].mxu0
      %v2233 = vadd.f32 0.0, %v2232
      %v2234 = vpop.f32.mrb[0].mxu0
      %2235 = vmatprep.mubr.f32.mxu0 0.0
      %2236 = vmatmul.mubr.f32.gmra.mrb[0].mxu0 %v1936
      %v2237 = vpop.f32.mrb[0].mxu0
      %v2238 = vadd.f32 0.0, %v2237
      %v2239 = vpop.f32.mrb[0].mxu0
      %2240 = vmatprep.mubr.f32.mxu0 0.0
      %2241 = vmatmul.mubr.f32.gmra.mrb[0].mxu0 %v1939
      %v2242 = vpop.f32.mrb[0].mxu0
      %v2243 = vadd.f32 0.0, %v2242
      %v2244 = vpop.f32.mrb[0].mxu0
      %2245 = vmatprep.mubr.f32.mxu0 0.0
      %2246 = vmatmul.mubr.f32.gmra.mrb[0].mxu0 %v1942
      %v2247 = vpop.f32.mrb[0].mxu0
      %v2248 = vadd.f32 0.0, %v2247
      %v2249 = vpop.f32.mrb[0].mxu0
      %2250 = vmatprep.mubr.f32.mxu0 0.0
      %2251 = vmatmul.mubr.f32.gmra.mrb[0].mxu0 %v1945
      %v2252 = vpop.f32.mrb[0].mxu0
      %v2253 = vadd.f32 0.0, %v2252
      %v2254 = vpop.f32.mrb[0].mxu0
      %2255 = vmatprep.mubr.f32.mxu0 0.0
      %2256 = vmatmul.mubr.f32.gmra.mrb[0].mxu0 %v1948
      %v2257 = vpop.f32.mrb[0].mxu0
      %v2258 = vadd.f32 0.0, %v2257
      %v2259 = vpop.f32.mrb[0].mxu0
      %2260 = vmatprep.mubr.f32.mxu0 0.0
      %2261 = vmatmul.mubr.f32.gmra.mrb[0].mxu0 %v1951
      %v2262 = vpop.f32.mrb[0].mxu0
      %v2263 = vadd.f32 0.0, %v2262
      %v2264 = vpop.f32.mrb[0].mxu0
      %2265 = vmatprep.mubr.f32.mxu0 0.0
      %2266 = vmatmul.mubr.f32.gmra.mrb[0].mxu0 %v1954
      %v2267 = vpop.f32.mrb[0].mxu0
      %v2268 = vadd.f32 0.0, %v2267
      %v2269 = vpop.f32.mrb[0].mxu0
      %2270 = vmatprep.mubr.f32.mxu0 0.0
      %2271 = vmatmul.mubr.f32.gmra.mrb[0].mxu0 %v1957
      %v2272 = vpop.f32.mrb[0].mxu0
      %v2273 = vadd.f32 0.0, %v2272
      %v2274 = vpop.f32.mrb[0].mxu0
      %2275 = vmatprep.mubr.f32.mxu0 0.0
      %2276 = vmatmul.mubr.f32.gmra.mrb[0].mxu0 %v1960
      %v2277 = vpop.f32.mrb[0].mxu0
      %v2278 = vadd.f32 0.0, %v2277
      %v2279 = vpop.f32.mrb[0].mxu0
      %2280 = vmatprep.mubr.f32.mxu0 0.0
      %2281 = vmatmul.mubr.f32.gmra.mrb[0].mxu0 %v1963
      %v2282 = vpop.f32.mrb[0].mxu0
      %v2283 = vadd.f32 0.0, %v2282
      %v2284 = vpop.f32.mrb[0].mxu0
      %2285 = vmatprep.mubr.f32.mxu0 0.0
      %2286 = vmatmul.mubr.f32.gmra.mrb[0].mxu0 %v1966
      %v2287 = vpop.f32.mrb[0].mxu0
      %v2288 = vadd.f32 0.0, %v2287
      %v2289 = vpop.f32.mrb[0].mxu0
      %2290 = vmatprep.mubr.f32.mxu0 0.0
      %2291 = vmatmul.mubr.f32.gmra.mrb[0].mxu0 %v1969
      %v2292 = vpop.f32.mrb[0].mxu0
      %v2293 = vadd.f32 0.0, %v2292
      %v2294 = vpop.f32.mrb[0].mxu0
      %2295 = vmatprep.mubr.f32.mxu0 0.0
      %2296 = vmatmul.mubr.f32.gmra.mrb[0].mxu0 %v1972
      %v2297 = vpop.f32.mrb[0].mxu0
      %v2298 = vadd.f32 0.0, %v2297
      %v2299 = vpop.f32.mrb[0].mxu0
      %2300 = vmatprep.mubr.f32.mxu0 0.0
      %2301 = vmatmul.mubr.f32.gmra.mrb[0].mxu0 %v1975
      %v2302 = vpop.f32.mrb[0].mxu0
      %v2303 = vadd.f32 0.0, %v2302
      %v2304 = vpop.f32.mrb[0].mxu0
      %2305 = vmatprep.mubr.f32.mxu0 0.0
      %2306 = vmatmul.mubr.f32.gmra.mrb[0].mxu0 %v1978
      %v2307 = vpop.f32.mrb[0].mxu0
      %v2308 = vadd.f32 0.0, %v2307
      %v2309 = vpop.f32.mrb[0].mxu0
      %2310 = vmatprep.mubr.f32.mxu0 0.0
      %2311 = vmatmul.mubr.f32.gmra.mrb[0].mxu0 %v1981
      %v2312 = vpop.f32.mrb[0].mxu0
      %v2313 = vadd.f32 0.0, %v2312
      %v2314 = vpop.f32.mrb[0].mxu0
      %2315 = vmatprep.mubr.f32.mxu0 0.0
      %2316 = vmatmul.mubr.f32.gmra.mrb[0].mxu0 %v1984
      %v2317 = vpop.f32.mrb[0].mxu0
      %v2318 = vadd.f32 0.0, %v2317
      %v2319 = vpop.f32.mrb[0].mxu0
      %2320 = vmatprep.mubr.f32.mxu0 0.0
      %2321 = vmatmul.mubr.f32.gmra.mrb[0].mxu0 %v1987
      %v2322 = vpop.f32.mrb[0].mxu0
      %v2323 = vadd.f32 0.0, %v2322
      %v2324 = vpop.f32.mrb[0].mxu0
      %2325 = vmatprep.mubr.f32.mxu0 0.0
      %2326 = vmatmul.mubr.f32.gmra.mrb[0].mxu0 %v1990
      %v2327 = vpop.f32.mrb[0].mxu0
      %v2328 = vadd.f32 0.0, %v2327
      %v2329 = vpop.f32.mrb[0].mxu0
      %2330 = vmatprep.mubr.f32.mxu0 0.0
      %2331 = vmatmul.mubr.f32.gmra.mrb[0].mxu0 %v1993
      %v2332 = vpop.f32.mrb[0].mxu0
      %v2333 = vadd.f32 0.0, %v2332
      %v2334 = vpop.f32.mrb[0].mxu0
      %2335 = vmatprep.mubr.f32.mxu0 0.0
      %2336 = vmatmul.mubr.f32.gmra.mrb[0].mxu0 %v1996
      %v2337 = vpop.f32.mrb[0].mxu0
      %v2338 = vadd.f32 0.0, %v2337
      %v2339 = vpop.f32.mrb[0].mxu0
      %2340 = vmatprep.mubr.f32.mxu0 0.0
      %2341 = vmatmul.mubr.f32.gmra.mrb[0].mxu0 %v1999
      %v2342 = vpop.f32.mrb[0].mxu0
      %v2343 = vadd.f32 0.0, %v2342
      %v2344 = vpop.f32.mrb[0].mxu0
      %2345 = vmatprep.mubr.f32.mxu0 0.0
      %2346 = vmatmul.mubr.f32.gmra.mrb[0].mxu0 %v2002
      %v2347 = vpop.f32.mrb[0].mxu0
      %v2348 = vadd.f32 0.0, %v2347
      %v2349 = vpop.f32.mrb[0].mxu0
      %2350 = vmatprep.mubr.f32.mxu0 0.0
      %2351 = vmatmul.mubr.f32.gmra.mrb[0].mxu0 %v2005
      %v2352 = vpop.f32.mrb[0].mxu0
      %v2353 = vadd.f32 0.0, %v2352
      %v2354 = vpop.f32.mrb[0].mxu0
      %2355 = vmatprep.mubr.f32.mxu0 0.0
      %2356 = vmatmul.mubr.f32.gmra.mrb[0].mxu0 %v2008
      %v2357 = vpop.f32.mrb[0].mxu0
      %v2358 = vadd.f32 0.0, %v2357
      %v2359 = vpop.f32.mrb[0].mxu0
      %2360 = vmatprep.mubr.f32.mxu0 0.0
      %2361 = vmatmul.mubr.f32.gmra.mrb[0].mxu0 %v2011
      %v2362 = vpop.f32.mrb[0].mxu0
      %v2363 = vadd.f32 0.0, %v2362
      %v2364 = vpop.f32.mrb[0].mxu0
      %2365 = vmatprep.mubr.f32.mxu0 0.0
      %2366 = vmatmul.mubr.f32.gmra.mrb[0].mxu0 %v2014
      %v2367 = vpop.f32.mrb[0].mxu0
      %v2368 = vadd.f32 0.0, %v2367
      %v2369 = vpop.f32.mrb[0].mxu0
      %2370 = vmatprep.mubr.f32.mxu0 0.0
      %2371 = vmatmul.mubr.f32.gmra.mrb[0].mxu0 %v2017
      %v2372 = vpop.f32.mrb[0].mxu0
      %v2373 = vadd.f32 0.0, %v2372
      %v2374 = vpop.f32.mrb[0].mxu0
      %2375 = vmatprep.mubr.f32.mxu0 0.0
      %2376 = vmatmul.mubr.f32.gmra.mrb[0].mxu0 %v2020
      %v2377 = vpop.f32.mrb[0].mxu0
      %v2378 = vadd.f32 0.0, %v2377
      %v2379 = vpop.f32.mrb[0].mxu0
      %2380 = vmatprep.mubr.f32.mxu0 0.0
      %2381 = vmatmul.mubr.f32.gmra.mrb[0].mxu0 %v2023
      %v2382 = vpop.f32.mrb[0].mxu0
      %v2383 = vadd.f32 0.0, %v2382
      %v2384 = vpop.f32.mrb[0].mxu0
      %2385 = vmatprep.mubr.f32.mxu0 0.0
      %2386 = vmatmul.mubr.f32.gmra.mrb[0].mxu0 %v2026
      %v2387 = vpop.f32.mrb[0].mxu0
      %v2388 = vadd.f32 0.0, %v2387
      %v2389 = vpop.f32.mrb[0].mxu0
      %2390 = vmatprep.mubr.f32.mxu0 0.0
      %2391 = vmatmul.mubr.f32.gmra.mrb[0].mxu0 %v2029
      %v2392 = vpop.f32.mrb[0].mxu0
      %v2393 = vadd.f32 0.0, %v2392
      %v2394 = vpop.f32.mrb[0].mxu0
      %2395 = vmatprep.mubr.f32.mxu0 0.0
      %2396 = vmatmul.mubr.f32.gmra.mrb[0].mxu0 %v2032
      %v2397 = vpop.f32.mrb[0].mxu0
      %v2398 = vadd.f32 0.0, %v2397
      %v2399 = vpop.f32.mrb[0].mxu0
      %2400 = vmatprep.mubr.f32.mxu0 0.0
      %2401 = vmatmul.mubr.f32.gmra.mrb[0].mxu0 %v2035
      %v2402 = vpop.f32.mrb[0].mxu0
      %v2403 = vadd.f32 0.0, %v2402
      %v2404 = vpop.f32.mrb[0].mxu0
      %2405 = vmatprep.mubr.f32.mxu0 0.0
      %2406 = vmatmul.mubr.f32.gmra.mrb[0].mxu0 %v2038
      %v2407 = vpop.f32.mrb[0].mxu0
      %v2408 = vadd.f32 0.0, %v2407
      %v2409 = vpop.f32.mrb[0].mxu0
      %2410 = vmatprep.mubr.f32.mxu0 0.0
      %2411 = vmatmul.mubr.f32.gmra.mrb[0].mxu0 %v2041
      %v2412 = vpop.f32.mrb[0].mxu0
      %v2413 = vadd.f32 0.0, %v2412
      %v2414 = vpop.f32.mrb[0].mxu0
      %2415 = vmatprep.mubr.f32.mxu0 0.0
      %2416 = vmatmul.mubr.f32.gmra.mrb[0].mxu0 %v2044
      %v2417 = vpop.f32.mrb[0].mxu0
      %v2418 = vadd.f32 0.0, %v2417
      %v2419 = vpop.f32.mrb[0].mxu0
      %2420 = vdwg.mxu0
      %v2421 = vadd.f32 %v1488, %v2113
      %v2422 = vadd.f32 %v1493, %v2118
      %v2423 = vadd.f32 %v1498, %v2123
      %v2424 = vadd.f32 %v1503, %v2128
      %v2425 = vadd.f32 %v1508, %v2133
      %v2426 = vadd.f32 %v1513, %v2138
      %v2427 = vadd.f32 %v1518, %v2143
      %v2428 = vadd.f32 %v1523, %v2148
      %v2429 = vadd.f32 %v1528, %v2153
      %v2430 = vadd.f32 %v1533, %v2158
      %v2431 = vadd.f32 %v1538, %v2163
      %v2432 = vadd.f32 %v1543, %v2168
      %v2433 = vadd.f32 %v1548, %v2173
      %v2434 = vadd.f32 %v1553, %v2178
      %v2435 = vadd.f32 %v1558, %v2183
      %v2436 = vadd.f32 %v1563, %v2188
      %v2437 = vadd.f32 %v1568, %v2193
      %v2438 = vadd.f32 %v1573, %v2198
      %v2439 = vadd.f32 %v1578, %v2203
      %v2440 = vadd.f32 %v1583, %v2208
      %v2441 = vadd.f32 %v1588, %v2213
      %v2442 = vadd.f32 %v1593, %v2218
      %v2443 = vadd.f32 %v1598, %v2223
      %v2444 = vadd.f32 %v1603, %v2228
      %v2445 = vadd.f32 %v1608, %v2233
      %v2446 = vadd.f32 %v1613, %v2238
      %v2447 = vadd.f32 %v1618, %v2243
      %v2448 = vadd.f32 %v1623, %v2248
      %v2449 = vadd.f32 %v1628, %v2253
      %v2450 = vadd.f32 %v1633, %v2258
      %v2451 = vadd.f32 %v1638, %v2263
      %v2452 = vadd.f32 %v1643, %v2268
      %v2453 = vadd.f32 %v1648, %v2273
      %v2454 = vadd.f32 %v1653, %v2278
      %v2455 = vadd.f32 %v1658, %v2283
      %v2456 = vadd.f32 %v1663, %v2288
      %v2457 = vadd.f32 %v1668, %v2293
      %v2458 = vadd.f32 %v1673, %v2298
      %v2459 = vadd.f32 %v1678, %v2303
      %v2460 = vadd.f32 %v1683, %v2308
      %v2461 = vadd.f32 %v1688, %v2313
      %v2462 = vadd.f32 %v1693, %v2318
      %v2463 = vadd.f32 %v1698, %v2323
      %v2464 = vadd.f32 %v1703, %v2328
      %v2465 = vadd.f32 %v1708, %v2333
      %v2466 = vadd.f32 %v1713, %v2338
      %v2467 = vadd.f32 %v1718, %v2343
      %v2468 = vadd.f32 %v1723, %v2348
      %v2469 = vadd.f32 %v1728, %v2353
      %v2470 = vadd.f32 %v1733, %v2358
      %v2471 = vadd.f32 %v1738, %v2363
      %v2472 = vadd.f32 %v1743, %v2368
      %v2473 = vadd.f32 %v1748, %v2373
      %v2474 = vadd.f32 %v1753, %v2378
      %v2475 = vadd.f32 %v1758, %v2383
      %v2476 = vadd.f32 %v1763, %v2388
      %v2477 = vadd.f32 %v1768, %v2393
      %v2478 = vadd.f32 %v1773, %v2398
      %v2479 = vadd.f32 %v1778, %v2403
      %v2480 = vadd.f32 %v1783, %v2408
      %v2481 = vadd.f32 %v1788, %v2413
      %v2482 = vadd.f32 %v1793, %v2418
      %v2483 = vld [vmem:[%s541 + $0x3] sm:$0xff]
      %v2484 = vld [vmem:[%s541 + $0xb] sm:$0xff]
      %v2485 = vld [vmem:[%s541 + $0x13] sm:$0xff]
      %v2486 = vld [vmem:[%s541 + $0x1b] sm:$0xff]
      %v2487 = vld [vmem:[%s541 + $0x23] sm:$0xff]
      %v2488 = vld [vmem:[%s541 + $0x2b] sm:$0xff]
      %v2489 = vld [vmem:[%s541 + $0x33] sm:$0xff]
      %v2490 = vld [vmem:[%s541 + $0x3b] sm:$0xff]
      %v2491 = vld [vmem:[%s541 + $0x43] sm:$0xff]
      %v2492 = vld [vmem:[%s541 + $0x4b] sm:$0xff]
      %v2493 = vld [vmem:[%s541 + $0x53] sm:$0xff]
      %v2494 = vld [vmem:[%s541 + $0x5b] sm:$0xff]
      %v2495 = vld [vmem:[%s541 + $0x63] sm:$0xff]
      %v2496 = vld [vmem:[%s541 + $0x6b] sm:$0xff]
      %v2497 = vld [vmem:[%s541 + $0x73] sm:$0xff]
      %v2498 = vld [vmem:[%s541 + $0x7b] sm:$0xff]
      %v2499 = vld [vmem:[%s541 + $0x83] sm:$0xff]
      %v2500 = vld [vmem:[%s541 + $0x8b] sm:$0xff]
      %v2501 = vld [vmem:[%s541 + $0x93] sm:$0xff]
      %v2502 = vld [vmem:[%s541 + $0x9b] sm:$0xff]
      %v2503 = vld [vmem:[%s541 + $0xa3] sm:$0xff]
      %v2504 = vld [vmem:[%s541 + $0xab] sm:$0xff]
      %v2505 = vld [vmem:[%s541 + $0xb3] sm:$0xff]
      %v2506 = vld [vmem:[%s541 + $0xbb] sm:$0xff]
      %v2507 = vld [vmem:[%s541 + $0xc3] sm:$0xff]
      %v2508 = vld [vmem:[%s541 + $0xcb] sm:$0xff]
      %v2509 = vld [vmem:[%s541 + $0xd3] sm:$0xff]
      %v2510 = vld [vmem:[%s541 + $0xdb] sm:$0xff]
      %v2511 = vld [vmem:[%s541 + $0xe3] sm:$0xff]
      %v2512 = vld [vmem:[%s541 + $0xeb] sm:$0xff]
      %v2513 = vld [vmem:[%s541 + $0xf3] sm:$0xff]
      %v2514 = vld [vmem:[%s541 + $0xfb] sm:$0xff]
      %v2515 = vld [vmem:[%s541 + $0x103] sm:$0xff]
      %v2516 = vld [vmem:[%s541 + $0x10b] sm:$0xff]
      %v2517 = vld [vmem:[%s541 + $0x113] sm:$0xff]
      %v2518 = vld [vmem:[%s541 + $0x11b] sm:$0xff]
      %v2519 = vld [vmem:[%s541 + $0x123] sm:$0xff]
      %v2520 = vld [vmem:[%s541 + $0x12b] sm:$0xff]
      %v2521 = vld [vmem:[%s541 + $0x133] sm:$0xff]
      %v2522 = vld [vmem:[%s541 + $0x13b] sm:$0xff]
      %v2523 = vld [vmem:[%s541 + $0x143] sm:$0xff]
      %v2524 = vld [vmem:[%s541 + $0x14b] sm:$0xff]
      %v2525 = vld [vmem:[%s541 + $0x153] sm:$0xff]
      %v2526 = vld [vmem:[%s541 + $0x15b] sm:$0xff]
      %v2527 = vld [vmem:[%s541 + $0x163] sm:$0xff]
      %v2528 = vld [vmem:[%s541 + $0x16b] sm:$0xff]
      %v2529 = vld [vmem:[%s541 + $0x173] sm:$0xff]
      %v2530 = vld [vmem:[%s541 + $0x17b] sm:$0xff]
      %v2531 = vld [vmem:[%s541 + $0x183] sm:$0xff]
      %v2532 = vld [vmem:[%s541 + $0x18b] sm:$0xff]
      %v2533 = vld [vmem:[%s541 + $0x193] sm:$0xff]
      %v2534 = vld [vmem:[%s541 + $0x19b] sm:$0xff]
      %v2535 = vld [vmem:[%s541 + $0x1a3] sm:$0xff]
      %v2536 = vld [vmem:[%s541 + $0x1ab] sm:$0xff]
      %v2537 = vld [vmem:[%s541 + $0x1b3] sm:$0xff]
      %v2538 = vld [vmem:[%s541 + $0x1bb] sm:$0xff]
      %v2539 = vld [vmem:[%s541 + $0x1c3] sm:$0xff]
      %v2540 = vld [vmem:[%s541 + $0x1cb] sm:$0xff]
      %v2541 = vld [vmem:[%s541 + $0x1d3] sm:$0xff]
      %v2542 = vld [vmem:[%s541 + $0x1db] sm:$0xff]
      %v2543 = vld [vmem:[%s541 + $0x1e3] sm:$0xff]
      %v2544 = vld [vmem:[%s541 + $0x1eb] sm:$0xff]
      %v2545 = vld [vmem:[%s1 + $0x30] sm:$0xff]
      %v2546 = vld [vmem:[%s1 + $0x38] sm:$0xff]
      %v2548 = vsel %vm673, %v2483, 0
      %v2551 = vsel %vm673, %v2484, 0
      %v2554 = vsel %vm673, %v2485, 0
      %v2557 = vsel %vm673, %v2486, 0
      %v2560 = vsel %vm673, %v2487, 0
      %v2563 = vsel %vm673, %v2488, 0
      %v2566 = vsel %vm673, %v2489, 0
      %v2569 = vsel %vm673, %v2490, 0
      %v2572 = vsel %vm673, %v2491, 0
      %v2575 = vsel %vm673, %v2492, 0
      %v2578 = vsel %vm673, %v2493, 0
      %v2581 = vsel %vm673, %v2494, 0
      %v2584 = vsel %vm673, %v2495, 0
      %v2587 = vsel %vm673, %v2496, 0
      %v2590 = vsel %vm673, %v2497, 0
      %v2593 = vsel %vm673, %v2498, 0
      %v2596 = vsel %vm673, %v2499, 0
      %v2599 = vsel %vm673, %v2500, 0
      %v2602 = vsel %vm673, %v2501, 0
      %v2605 = vsel %vm673, %v2502, 0
      %v2608 = vsel %vm673, %v2503, 0
      %v2611 = vsel %vm673, %v2504, 0
      %v2614 = vsel %vm673, %v2505, 0
      %v2617 = vsel %vm673, %v2506, 0
      %v2620 = vsel %vm673, %v2507, 0
      %v2623 = vsel %vm673, %v2508, 0
      %v2626 = vsel %vm673, %v2509, 0
      %v2629 = vsel %vm673, %v2510, 0
      %v2632 = vsel %vm673, %v2511, 0
      %v2635 = vsel %vm673, %v2512, 0
      %v2638 = vsel %vm673, %v2513, 0
      %v2641 = vsel %vm673, %v2514, 0
      %v2644 = vsel %vm673, %v2515, 0
      %v2647 = vsel %vm673, %v2516, 0
      %v2650 = vsel %vm673, %v2517, 0
      %v2653 = vsel %vm673, %v2518, 0
      %v2656 = vsel %vm673, %v2519, 0
      %v2659 = vsel %vm673, %v2520, 0
      %v2662 = vsel %vm673, %v2521, 0
      %v2665 = vsel %vm673, %v2522, 0
      %v2668 = vsel %vm673, %v2523, 0
      %v2671 = vsel %vm673, %v2524, 0
      %v2674 = vsel %vm673, %v2525, 0
      %v2677 = vsel %vm673, %v2526, 0
      %v2680 = vsel %vm673, %v2527, 0
      %v2683 = vsel %vm673, %v2528, 0
      %v2686 = vsel %vm673, %v2529, 0
      %v2689 = vsel %vm673, %v2530, 0
      %v2692 = vsel %vm673, %v2531, 0
      %v2695 = vsel %vm673, %v2532, 0
      %v2698 = vsel %vm673, %v2533, 0
      %v2701 = vsel %vm673, %v2534, 0
      %v2704 = vsel %vm673, %v2535, 0
      %v2707 = vsel %vm673, %v2536, 0
      %v2710 = vsel %vm673, %v2537, 0
      %v2713 = vsel %vm673, %v2538, 0
      %v2716 = vsel %vm673, %v2539, 0
      %v2719 = vsel %vm673, %v2540, 0
      %v2722 = vsel %vm673, %v2541, 0
      %v2725 = vsel %vm673, %v2542, 0
      %v2728 = vsel %vm673, %v2543, 0
      %v2731 = vsel %vm673, %v2544, 0
      %2733 = vmatprep.subr.mxu0 0.0
      %2734 = vmatpush1.msra.mxu0 %v2545
      %2735 = vmatprep.subr.mxu0 0.0
      %2736 = vmatpush1.msra.mxu0 %v2546
      %2737 = vmatprep.subr.mxu0 0.0
      %2738 = vmatpush1.msra.mxu0 0.0
      %2739 = vmatprep.subr.mxu0 0.0
      %2740 = vmatpush1.msra.mxu0 0.0
      %2741 = vmatprep.subr.mxu0 0.0
      %2742 = vmatpush1.msra.mxu0 0.0
      %2743 = vmatprep.subr.mxu0 0.0
      %2744 = vmatpush1.msra.mxu0 0.0
      %2745 = vmatprep.subr.mxu0 0.0
      %2746 = vmatpush1.msra.mxu0 0.0
      %2747 = vmatprep.subr.mxu0 0.0
      %2748 = vmatpush1.msra.mxu0 0.0
      %2749 = vmatprep.subr.mxu0 0.0
      %2750 = vmatpush1.msra.mxu0 0.0
      %2751 = vmatprep.subr.mxu0 0.0
      %2752 = vmatpush1.msra.mxu0 0.0
      %2753 = vmatprep.subr.mxu0 0.0
      %2754 = vmatpush1.msra.mxu0 0.0
      %2755 = vmatprep.subr.mxu0 0.0
      %2756 = vmatpush1.msra.mxu0 0.0
      %2757 = vmatprep.subr.mxu0 0.0
      %2758 = vmatpush1.msra.mxu0 0.0
      %2759 = vmatprep.subr.mxu0 0.0
      %2760 = vmatpush1.msra.mxu0 0.0
      %2761 = vmatprep.subr.mxu0 0.0
      %2762 = vmatpush1.msra.mxu0 0.0
      %2763 = vmatprep.subr.mxu0 0.0
      %2764 = vmatpush1.msra.mxu0 0.0
      %2765 = vmatprep.subr.mxu0 0.0
      %2766 = vmatpush1.msra.mxu0 0.0
      %2767 = vmatprep.subr.mxu0 0.0
      %2768 = vmatpush1.msra.mxu0 0.0
      %2769 = vmatprep.subr.mxu0 0.0
      %2770 = vmatpush1.msra.mxu0 0.0
      %2771 = vmatprep.subr.mxu0 0.0
      %2772 = vmatpush1.msra.mxu0 0.0
      %2773 = vmatprep.subr.mxu0 0.0
      %2774 = vmatpush1.msra.mxu0 0.0
      %2775 = vmatprep.subr.mxu0 0.0
      %2776 = vmatpush1.msra.mxu0 0.0
      %2777 = vmatprep.subr.mxu0 0.0
      %2778 = vmatpush1.msra.mxu0 0.0
      %2779 = vmatprep.subr.mxu0 0.0
      %2780 = vmatpush1.msra.mxu0 0.0
      %2781 = vmatprep.subr.mxu0 0.0
      %2782 = vmatpush1.msra.mxu0 0.0
      %2783 = vmatprep.subr.mxu0 0.0
      %2784 = vmatpush1.msra.mxu0 0.0
      %2785 = vmatprep.subr.mxu0 0.0
      %2786 = vmatpush1.msra.mxu0 0.0
      %2787 = vmatprep.subr.mxu0 0.0
      %2788 = vmatpush1.msra.mxu0 0.0
      %2789 = vmatprep.subr.mxu0 0.0
      %2790 = vmatpush1.msra.mxu0 0.0
      %2791 = vmatprep.subr.mxu0 0.0
      %2792 = vmatpush1.msra.mxu0 0.0
      %2793 = vmatprep.subr.mxu0 0.0
      %2794 = vmatpush1.msra.mxu0 0.0
      %2795 = vmatprep.subr.mxu0 0.0
      %2796 = vmatpush1.msra.mxu0 0.0
      %2797 = vmatprep.mubr.f32.mxu0 0.0
      %2798 = vmatmul.mubr.f32.gmra.mrb[0].mxu0 %v2548
      %v2799 = vpop.f32.mrb[0].mxu0
      %v2800 = vadd.f32 0.0, %v2799
      %v2801 = vpop.f32.mrb[0].mxu0
      %2802 = vmatprep.mubr.f32.mxu0 0.0
      %2803 = vmatmul.mubr.f32.gmra.mrb[0].mxu0 %v2551
      %v2804 = vpop.f32.mrb[0].mxu0
      %v2805 = vadd.f32 0.0, %v2804
      %v2806 = vpop.f32.mrb[0].mxu0
      %2807 = vmatprep.mubr.f32.mxu0 0.0
      %2808 = vmatmul.mubr.f32.gmra.mrb[0].mxu0 %v2554
      %v2809 = vpop.f32.mrb[0].mxu0
      %v2810 = vadd.f32 0.0, %v2809
      %v2811 = vpop.f32.mrb[0].mxu0
      %2812 = vmatprep.mubr.f32.mxu0 0.0
      %2813 = vmatmul.mubr.f32.gmra.mrb[0].mxu0 %v2557
      %v2814 = vpop.f32.mrb[0].mxu0
      %v2815 = vadd.f32 0.0, %v2814
      %v2816 = vpop.f32.mrb[0].mxu0
      %2817 = vmatprep.mubr.f32.mxu0 0.0
      %2818 = vmatmul.mubr.f32.gmra.mrb[0].mxu0 %v2560
      %v2819 = vpop.f32.mrb[0].mxu0
      %v2820 = vadd.f32 0.0, %v2819
      %v2821 = vpop.f32.mrb[0].mxu0
      %2822 = vmatprep.mubr.f32.mxu0 0.0
      %2823 = vmatmul.mubr.f32.gmra.mrb[0].mxu0 %v2563
      %v2824 = vpop.f32.mrb[0].mxu0
      %v2825 = vadd.f32 0.0, %v2824
      %v2826 = vpop.f32.mrb[0].mxu0
      %2827 = vmatprep.mubr.f32.mxu0 0.0
      %2828 = vmatmul.mubr.f32.gmra.mrb[0].mxu0 %v2566
      %v2829 = vpop.f32.mrb[0].mxu0
      %v2830 = vadd.f32 0.0, %v2829
      %v2831 = vpop.f32.mrb[0].mxu0
      %2832 = vmatprep.mubr.f32.mxu0 0.0
      %2833 = vmatmul.mubr.f32.gmra.mrb[0].mxu0 %v2569
      %v2834 = vpop.f32.mrb[0].mxu0
      %v2835 = vadd.f32 0.0, %v2834
      %v2836 = vpop.f32.mrb[0].mxu0
      %2837 = vmatprep.mubr.f32.mxu0 0.0
      %2838 = vmatmul.mubr.f32.gmra.mrb[0].mxu0 %v2572
      %v2839 = vpop.f32.mrb[0].mxu0
      %v2840 = vadd.f32 0.0, %v2839
      %v2841 = vpop.f32.mrb[0].mxu0
      %2842 = vmatprep.mubr.f32.mxu0 0.0
      %2843 = vmatmul.mubr.f32.gmra.mrb[0].mxu0 %v2575
      %v2844 = vpop.f32.mrb[0].mxu0
      %v2845 = vadd.f32 0.0, %v2844
      %v2846 = vpop.f32.mrb[0].mxu0
      %2847 = vmatprep.mubr.f32.mxu0 0.0
      %2848 = vmatmul.mubr.f32.gmra.mrb[0].mxu0 %v2578
      %v2849 = vpop.f32.mrb[0].mxu0
      %v2850 = vadd.f32 0.0, %v2849
      %v2851 = vpop.f32.mrb[0].mxu0
      %2852 = vmatprep.mubr.f32.mxu0 0.0
      %2853 = vmatmul.mubr.f32.gmra.mrb[0].mxu0 %v2581
      %v2854 = vpop.f32.mrb[0].mxu0
      %v2855 = vadd.f32 0.0, %v2854
      %v2856 = vpop.f32.mrb[0].mxu0
      %2857 = vmatprep.mubr.f32.mxu0 0.0
      %2858 = vmatmul.mubr.f32.gmra.mrb[0].mxu0 %v2584
      %v2859 = vpop.f32.mrb[0].mxu0
      %v2860 = vadd.f32 0.0, %v2859
      %v2861 = vpop.f32.mrb[0].mxu0
      %2862 = vmatprep.mubr.f32.mxu0 0.0
      %2863 = vmatmul.mubr.f32.gmra.mrb[0].mxu0 %v2587
      %v2864 = vpop.f32.mrb[0].mxu0
      %v2865 = vadd.f32 0.0, %v2864
      %v2866 = vpop.f32.mrb[0].mxu0
      %2867 = vmatprep.mubr.f32.mxu0 0.0
      %2868 = vmatmul.mubr.f32.gmra.mrb[0].mxu0 %v2590
      %v2869 = vpop.f32.mrb[0].mxu0
      %v2870 = vadd.f32 0.0, %v2869
      %v2871 = vpop.f32.mrb[0].mxu0
      %2872 = vmatprep.mubr.f32.mxu0 0.0
      %2873 = vmatmul.mubr.f32.gmra.mrb[0].mxu0 %v2593
      %v2874 = vpop.f32.mrb[0].mxu0
      %v2875 = vadd.f32 0.0, %v2874
      %v2876 = vpop.f32.mrb[0].mxu0
      %2877 = vmatprep.mubr.f32.mxu0 0.0
      %2878 = vmatmul.mubr.f32.gmra.mrb[0].mxu0 %v2596
      %v2879 = vpop.f32.mrb[0].mxu0
      %v2880 = vadd.f32 0.0, %v2879
      %v2881 = vpop.f32.mrb[0].mxu0
      %2882 = vmatprep.mubr.f32.mxu0 0.0
      %2883 = vmatmul.mubr.f32.gmra.mrb[0].mxu0 %v2599
      %v2884 = vpop.f32.mrb[0].mxu0
      %v2885 = vadd.f32 0.0, %v2884
      %v2886 = vpop.f32.mrb[0].mxu0
      %2887 = vmatprep.mubr.f32.mxu0 0.0
      %2888 = vmatmul.mubr.f32.gmra.mrb[0].mxu0 %v2602
      %v2889 = vpop.f32.mrb[0].mxu0
      %v2890 = vadd.f32 0.0, %v2889
      %v2891 = vpop.f32.mrb[0].mxu0
      %2892 = vmatprep.mubr.f32.mxu0 0.0
      %2893 = vmatmul.mubr.f32.gmra.mrb[0].mxu0 %v2605
      %v2894 = vpop.f32.mrb[0].mxu0
      %v2895 = vadd.f32 0.0, %v2894
      %v2896 = vpop.f32.mrb[0].mxu0
      %2897 = vmatprep.mubr.f32.mxu0 0.0
      %2898 = vmatmul.mubr.f32.gmra.mrb[0].mxu0 %v2608
      %v2899 = vpop.f32.mrb[0].mxu0
      %v2900 = vadd.f32 0.0, %v2899
      %v2901 = vpop.f32.mrb[0].mxu0
      %2902 = vmatprep.mubr.f32.mxu0 0.0
      %2903 = vmatmul.mubr.f32.gmra.mrb[0].mxu0 %v2611
      %v2904 = vpop.f32.mrb[0].mxu0
      %v2905 = vadd.f32 0.0, %v2904
      %v2906 = vpop.f32.mrb[0].mxu0
      %2907 = vmatprep.mubr.f32.mxu0 0.0
      %2908 = vmatmul.mubr.f32.gmra.mrb[0].mxu0 %v2614
      %v2909 = vpop.f32.mrb[0].mxu0
      %v2910 = vadd.f32 0.0, %v2909
      %v2911 = vpop.f32.mrb[0].mxu0
      %2912 = vmatprep.mubr.f32.mxu0 0.0
      %2913 = vmatmul.mubr.f32.gmra.mrb[0].mxu0 %v2617
      %v2914 = vpop.f32.mrb[0].mxu0
      %v2915 = vadd.f32 0.0, %v2914
      %v2916 = vpop.f32.mrb[0].mxu0
      %2917 = vmatprep.mubr.f32.mxu0 0.0
      %2918 = vmatmul.mubr.f32.gmra.mrb[0].mxu0 %v2620
      %v2919 = vpop.f32.mrb[0].mxu0
      %v2920 = vadd.f32 0.0, %v2919
      %v2921 = vpop.f32.mrb[0].mxu0
      %2922 = vmatprep.mubr.f32.mxu0 0.0
      %2923 = vmatmul.mubr.f32.gmra.mrb[0].mxu0 %v2623
      %v2924 = vpop.f32.mrb[0].mxu0
      %v2925 = vadd.f32 0.0, %v2924
      %v2926 = vpop.f32.mrb[0].mxu0
      %2927 = vmatprep.mubr.f32.mxu0 0.0
      %2928 = vmatmul.mubr.f32.gmra.mrb[0].mxu0 %v2626
      %v2929 = vpop.f32.mrb[0].mxu0
      %v2930 = vadd.f32 0.0, %v2929
      %v2931 = vpop.f32.mrb[0].mxu0
      %2932 = vmatprep.mubr.f32.mxu0 0.0
      %2933 = vmatmul.mubr.f32.gmra.mrb[0].mxu0 %v2629
      %v2934 = vpop.f32.mrb[0].mxu0
      %v2935 = vadd.f32 0.0, %v2934
      %v2936 = vpop.f32.mrb[0].mxu0
      %2937 = vmatprep.mubr.f32.mxu0 0.0
      %2938 = vmatmul.mubr.f32.gmra.mrb[0].mxu0 %v2632
      %v2939 = vpop.f32.mrb[0].mxu0
      %v2940 = vadd.f32 0.0, %v2939
      %v2941 = vpop.f32.mrb[0].mxu0
      %2942 = vmatprep.mubr.f32.mxu0 0.0
      %2943 = vmatmul.mubr.f32.gmra.mrb[0].mxu0 %v2635
      %v2944 = vpop.f32.mrb[0].mxu0
      %v2945 = vadd.f32 0.0, %v2944
      %v2946 = vpop.f32.mrb[0].mxu0
      %2947 = vmatprep.mubr.f32.mxu0 0.0
      %2948 = vmatmul.mubr.f32.gmra.mrb[0].mxu0 %v2638
      %v2949 = vpop.f32.mrb[0].mxu0
      %v2950 = vadd.f32 0.0, %v2949
      %v2951 = vpop.f32.mrb[0].mxu0
      %2952 = vmatprep.mubr.f32.mxu0 0.0
      %2953 = vmatmul.mubr.f32.gmra.mrb[0].mxu0 %v2641
      %v2954 = vpop.f32.mrb[0].mxu0
      %v2955 = vadd.f32 0.0, %v2954
      %v2956 = vpop.f32.mrb[0].mxu0
      %2957 = vmatprep.mubr.f32.mxu0 0.0
      %2958 = vmatmul.mubr.f32.gmra.mrb[0].mxu0 %v2644
      %v2959 = vpop.f32.mrb[0].mxu0
      %v2960 = vadd.f32 0.0, %v2959
      %v2961 = vpop.f32.mrb[0].mxu0
      %2962 = vmatprep.mubr.f32.mxu0 0.0
      %2963 = vmatmul.mubr.f32.gmra.mrb[0].mxu0 %v2647
      %v2964 = vpop.f32.mrb[0].mxu0
      %v2965 = vadd.f32 0.0, %v2964
      %v2966 = vpop.f32.mrb[0].mxu0
      %2967 = vmatprep.mubr.f32.mxu0 0.0
      %2968 = vmatmul.mubr.f32.gmra.mrb[0].mxu0 %v2650
      %v2969 = vpop.f32.mrb[0].mxu0
      %v2970 = vadd.f32 0.0, %v2969
      %v2971 = vpop.f32.mrb[0].mxu0
      %2972 = vmatprep.mubr.f32.mxu0 0.0
      %2973 = vmatmul.mubr.f32.gmra.mrb[0].mxu0 %v2653
      %v2974 = vpop.f32.mrb[0].mxu0
      %v2975 = vadd.f32 0.0, %v2974
      %v2976 = vpop.f32.mrb[0].mxu0
      %2977 = vmatprep.mubr.f32.mxu0 0.0
      %2978 = vmatmul.mubr.f32.gmra.mrb[0].mxu0 %v2656
      %v2979 = vpop.f32.mrb[0].mxu0
      %v2980 = vadd.f32 0.0, %v2979
      %v2981 = vpop.f32.mrb[0].mxu0
      %2982 = vmatprep.mubr.f32.mxu0 0.0
      %2983 = vmatmul.mubr.f32.gmra.mrb[0].mxu0 %v2659
      %v2984 = vpop.f32.mrb[0].mxu0
      %v2985 = vadd.f32 0.0, %v2984
      %v2986 = vpop.f32.mrb[0].mxu0
      %2987 = vmatprep.mubr.f32.mxu0 0.0
      %2988 = vmatmul.mubr.f32.gmra.mrb[0].mxu0 %v2662
      %v2989 = vpop.f32.mrb[0].mxu0
      %v2990 = vadd.f32 0.0, %v2989
      %v2991 = vpop.f32.mrb[0].mxu0
      %2992 = vmatprep.mubr.f32.mxu0 0.0
      %2993 = vmatmul.mubr.f32.gmra.mrb[0].mxu0 %v2665
      %v2994 = vpop.f32.mrb[0].mxu0
      %v2995 = vadd.f32 0.0, %v2994
      %v2996 = vpop.f32.mrb[0].mxu0
      %2997 = vmatprep.mubr.f32.mxu0 0.0
      %2998 = vmatmul.mubr.f32.gmra.mrb[0].mxu0 %v2668
      %v2999 = vpop.f32.mrb[0].mxu0
      %v3000 = vadd.f32 0.0, %v2999
      %v3001 = vpop.f32.mrb[0].mxu0
      %3002 = vmatprep.mubr.f32.mxu0 0.0
      %3003 = vmatmul.mubr.f32.gmra.mrb[0].mxu0 %v2671
      %v3004 = vpop.f32.mrb[0].mxu0
      %v3005 = vadd.f32 0.0, %v3004
      %v3006 = vpop.f32.mrb[0].mxu0
      %3007 = vmatprep.mubr.f32.mxu0 0.0
      %3008 = vmatmul.mubr.f32.gmra.mrb[0].mxu0 %v2674
      %v3009 = vpop.f32.mrb[0].mxu0
      %v3010 = vadd.f32 0.0, %v3009
      %v3011 = vpop.f32.mrb[0].mxu0
      %3012 = vmatprep.mubr.f32.mxu0 0.0
      %3013 = vmatmul.mubr.f32.gmra.mrb[0].mxu0 %v2677
      %v3014 = vpop.f32.mrb[0].mxu0
      %v3015 = vadd.f32 0.0, %v3014
      %v3016 = vpop.f32.mrb[0].mxu0
      %3017 = vmatprep.mubr.f32.mxu0 0.0
      %3018 = vmatmul.mubr.f32.gmra.mrb[0].mxu0 %v2680
      %v3019 = vpop.f32.mrb[0].mxu0
      %v3020 = vadd.f32 0.0, %v3019
      %v3021 = vpop.f32.mrb[0].mxu0
      %3022 = vmatprep.mubr.f32.mxu0 0.0
      %3023 = vmatmul.mubr.f32.gmra.mrb[0].mxu0 %v2683
      %v3024 = vpop.f32.mrb[0].mxu0
      %v3025 = vadd.f32 0.0, %v3024
      %v3026 = vpop.f32.mrb[0].mxu0
      %3027 = vmatprep.mubr.f32.mxu0 0.0
      %3028 = vmatmul.mubr.f32.gmra.mrb[0].mxu0 %v2686
      %v3029 = vpop.f32.mrb[0].mxu0
      %v3030 = vadd.f32 0.0, %v3029
      %v3031 = vpop.f32.mrb[0].mxu0
      %3032 = vmatprep.mubr.f32.mxu0 0.0
      %3033 = vmatmul.mubr.f32.gmra.mrb[0].mxu0 %v2689
      %v3034 = vpop.f32.mrb[0].mxu0
      %v3035 = vadd.f32 0.0, %v3034
      %v3036 = vpop.f32.mrb[0].mxu0
      %3037 = vmatprep.mubr.f32.mxu0 0.0
      %3038 = vmatmul.mubr.f32.gmra.mrb[0].mxu0 %v2692
      %v3039 = vpop.f32.mrb[0].mxu0
      %v3040 = vadd.f32 0.0, %v3039
      %v3041 = vpop.f32.mrb[0].mxu0
      %3042 = vmatprep.mubr.f32.mxu0 0.0
      %3043 = vmatmul.mubr.f32.gmra.mrb[0].mxu0 %v2695
      %v3044 = vpop.f32.mrb[0].mxu0
      %v3045 = vadd.f32 0.0, %v3044
      %v3046 = vpop.f32.mrb[0].mxu0
      %3047 = vmatprep.mubr.f32.mxu0 0.0
      %3048 = vmatmul.mubr.f32.gmra.mrb[0].mxu0 %v2698
      %v3049 = vpop.f32.mrb[0].mxu0
      %v3050 = vadd.f32 0.0, %v3049
      %v3051 = vpop.f32.mrb[0].mxu0
      %3052 = vmatprep.mubr.f32.mxu0 0.0
      %3053 = vmatmul.mubr.f32.gmra.mrb[0].mxu0 %v2701
      %v3054 = vpop.f32.mrb[0].mxu0
      %v3055 = vadd.f32 0.0, %v3054
      %v3056 = vpop.f32.mrb[0].mxu0
      %3057 = vmatprep.mubr.f32.mxu0 0.0
      %3058 = vmatmul.mubr.f32.gmra.mrb[0].mxu0 %v2704
      %v3059 = vpop.f32.mrb[0].mxu0
      %v3060 = vadd.f32 0.0, %v3059
      %v3061 = vpop.f32.mrb[0].mxu0
      %3062 = vmatprep.mubr.f32.mxu0 0.0
      %3063 = vmatmul.mubr.f32.gmra.mrb[0].mxu0 %v2707
      %v3064 = vpop.f32.mrb[0].mxu0
      %v3065 = vadd.f32 0.0, %v3064
      %v3066 = vpop.f32.mrb[0].mxu0
      %3067 = vmatprep.mubr.f32.mxu0 0.0
      %3068 = vmatmul.mubr.f32.gmra.mrb[0].mxu0 %v2710
      %v3069 = vpop.f32.mrb[0].mxu0
      %v3070 = vadd.f32 0.0, %v3069
      %v3071 = vpop.f32.mrb[0].mxu0
      %3072 = vmatprep.mubr.f32.mxu0 0.0
      %3073 = vmatmul.mubr.f32.gmra.mrb[0].mxu0 %v2713
      %v3074 = vpop.f32.mrb[0].mxu0
      %v3075 = vadd.f32 0.0, %v3074
      %v3076 = vpop.f32.mrb[0].mxu0
      %3077 = vmatprep.mubr.f32.mxu0 0.0
      %3078 = vmatmul.mubr.f32.gmra.mrb[0].mxu0 %v2716
      %v3079 = vpop.f32.mrb[0].mxu0
      %v3080 = vadd.f32 0.0, %v3079
      %v3081 = vpop.f32.mrb[0].mxu0
      %3082 = vmatprep.mubr.f32.mxu0 0.0
      %3083 = vmatmul.mubr.f32.gmra.mrb[0].mxu0 %v2719
      %v3084 = vpop.f32.mrb[0].mxu0
      %v3085 = vadd.f32 0.0, %v3084
      %v3086 = vpop.f32.mrb[0].mxu0
      %3087 = vmatprep.mubr.f32.mxu0 0.0
      %3088 = vmatmul.mubr.f32.gmra.mrb[0].mxu0 %v2722
      %v3089 = vpop.f32.mrb[0].mxu0
      %v3090 = vadd.f32 0.0, %v3089
      %v3091 = vpop.f32.mrb[0].mxu0
      %3092 = vmatprep.mubr.f32.mxu0 0.0
      %3093 = vmatmul.mubr.f32.gmra.mrb[0].mxu0 %v2725
      %v3094 = vpop.f32.mrb[0].mxu0
      %v3095 = vadd.f32 0.0, %v3094
      %v3096 = vpop.f32.mrb[0].mxu0
      %3097 = vmatprep.mubr.f32.mxu0 0.0
      %3098 = vmatmul.mubr.f32.gmra.mrb[0].mxu0 %v2728
      %v3099 = vpop.f32.mrb[0].mxu0
      %v3100 = vadd.f32 0.0, %v3099
      %v3101 = vpop.f32.mrb[0].mxu0
      %3102 = vmatprep.mubr.f32.mxu0 0.0
      %3103 = vmatmul.mubr.f32.gmra.mrb[0].mxu0 %v2731
      %v3104 = vpop.f32.mrb[0].mxu0
      %v3105 = vadd.f32 0.0, %v3104
      %v3106 = vpop.f32.mrb[0].mxu0
      %3107 = vdwg.mxu0
      %v3108 = vadd.f32 %v2421, %v2800
      %v3109 = vadd.f32 %v2422, %v2805
      %v3110 = vadd.f32 %v2423, %v2810
      %v3111 = vadd.f32 %v2424, %v2815
      %v3112 = vadd.f32 %v2425, %v2820
      %v3113 = vadd.f32 %v2426, %v2825
      %v3114 = vadd.f32 %v2427, %v2830
      %v3115 = vadd.f32 %v2428, %v2835
      %v3116 = vadd.f32 %v2429, %v2840
      %v3117 = vadd.f32 %v2430, %v2845
      %v3118 = vadd.f32 %v2431, %v2850
      %v3119 = vadd.f32 %v2432, %v2855
      %v3120 = vadd.f32 %v2433, %v2860
      %v3121 = vadd.f32 %v2434, %v2865
      %v3122 = vadd.f32 %v2435, %v2870
      %v3123 = vadd.f32 %v2436, %v2875
      %v3124 = vadd.f32 %v2437, %v2880
      %v3125 = vadd.f32 %v2438, %v2885
      %v3126 = vadd.f32 %v2439, %v2890
      %v3127 = vadd.f32 %v2440, %v2895
      %v3128 = vadd.f32 %v2441, %v2900
      %v3129 = vadd.f32 %v2442, %v2905
      %v3130 = vadd.f32 %v2443, %v2910
      %v3131 = vadd.f32 %v2444, %v2915
      %v3132 = vadd.f32 %v2445, %v2920
      %v3133 = vadd.f32 %v2446, %v2925
      %v3134 = vadd.f32 %v2447, %v2930
      %v3135 = vadd.f32 %v2448, %v2935
      %v3136 = vadd.f32 %v2449, %v2940
      %v3137 = vadd.f32 %v2450, %v2945
      %v3138 = vadd.f32 %v2451, %v2950
      %v3139 = vadd.f32 %v2452, %v2955
      %v3140 = vadd.f32 %v2453, %v2960
      %v3141 = vadd.f32 %v2454, %v2965
      %v3142 = vadd.f32 %v2455, %v2970
      %v3143 = vadd.f32 %v2456, %v2975
      %v3144 = vadd.f32 %v2457, %v2980
      %v3145 = vadd.f32 %v2458, %v2985
      %v3146 = vadd.f32 %v2459, %v2990
      %v3147 = vadd.f32 %v2460, %v2995
      %v3148 = vadd.f32 %v2461, %v3000
      %v3149 = vadd.f32 %v2462, %v3005
      %v3150 = vadd.f32 %v2463, %v3010
      %v3151 = vadd.f32 %v2464, %v3015
      %v3152 = vadd.f32 %v2465, %v3020
      %v3153 = vadd.f32 %v2466, %v3025
      %v3154 = vadd.f32 %v2467, %v3030
      %v3155 = vadd.f32 %v2468, %v3035
      %v3156 = vadd.f32 %v2469, %v3040
      %v3157 = vadd.f32 %v2470, %v3045
      %v3158 = vadd.f32 %v2471, %v3050
      %v3159 = vadd.f32 %v2472, %v3055
      %v3160 = vadd.f32 %v2473, %v3060
      %v3161 = vadd.f32 %v2474, %v3065
      %v3162 = vadd.f32 %v2475, %v3070
      %v3163 = vadd.f32 %v2476, %v3075
      %v3164 = vadd.f32 %v2477, %v3080
      %v3165 = vadd.f32 %v2478, %v3085
      %v3166 = vadd.f32 %v2479, %v3090
      %v3167 = vadd.f32 %v2480, %v3095
      %v3168 = vadd.f32 %v2481, %v3100
      %v3169 = vadd.f32 %v2482, %v3105
      %v3170 = vld [vmem:[%s541 + $0x4] sm:$0xff]
      %v3171 = vld [vmem:[%s541 + $0xc] sm:$0xff]
      %v3172 = vld [vmem:[%s541 + $0x14] sm:$0xff]
      %v3173 = vld [vmem:[%s541 + $0x1c] sm:$0xff]
      %v3174 = vld [vmem:[%s541 + $0x24] sm:$0xff]
      %v3175 = vld [vmem:[%s541 + $0x2c] sm:$0xff]
      %v3176 = vld [vmem:[%s541 + $0x34] sm:$0xff]
      %v3177 = vld [vmem:[%s541 + $0x3c] sm:$0xff]
      %v3178 = vld [vmem:[%s541 + $0x44] sm:$0xff]
      %v3179 = vld [vmem:[%s541 + $0x4c] sm:$0xff]
      %v3180 = vld [vmem:[%s541 + $0x54] sm:$0xff]
      %v3181 = vld [vmem:[%s541 + $0x5c] sm:$0xff]
      %v3182 = vld [vmem:[%s541 + $0x64] sm:$0xff]
      %v3183 = vld [vmem:[%s541 + $0x6c] sm:$0xff]
      %v3184 = vld [vmem:[%s541 + $0x74] sm:$0xff]
      %v3185 = vld [vmem:[%s541 + $0x7c] sm:$0xff]
      %v3186 = vld [vmem:[%s541 + $0x84] sm:$0xff]
      %v3187 = vld [vmem:[%s541 + $0x8c] sm:$0xff]
      %v3188 = vld [vmem:[%s541 + $0x94] sm:$0xff]
      %v3189 = vld [vmem:[%s541 + $0x9c] sm:$0xff]
      %v3190 = vld [vmem:[%s541 + $0xa4] sm:$0xff]
      %v3191 = vld [vmem:[%s541 + $0xac] sm:$0xff]
      %v3192 = vld [vmem:[%s541 + $0xb4] sm:$0xff]
      %v3193 = vld [vmem:[%s541 + $0xbc] sm:$0xff]
      %v3194 = vld [vmem:[%s541 + $0xc4] sm:$0xff]
      %v3195 = vld [vmem:[%s541 + $0xcc] sm:$0xff]
      %v3196 = vld [vmem:[%s541 + $0xd4] sm:$0xff]
      %v3197 = vld [vmem:[%s541 + $0xdc] sm:$0xff]
      %v3198 = vld [vmem:[%s541 + $0xe4] sm:$0xff]
      %v3199 = vld [vmem:[%s541 + $0xec] sm:$0xff]
      %v3200 = vld [vmem:[%s541 + $0xf4] sm:$0xff]
      %v3201 = vld [vmem:[%s541 + $0xfc] sm:$0xff]
      %v3202 = vld [vmem:[%s541 + $0x104] sm:$0xff]
      %v3203 = vld [vmem:[%s541 + $0x10c] sm:$0xff]
      %v3204 = vld [vmem:[%s541 + $0x114] sm:$0xff]
      %v3205 = vld [vmem:[%s541 + $0x11c] sm:$0xff]
      %v3206 = vld [vmem:[%s541 + $0x124] sm:$0xff]
      %v3207 = vld [vmem:[%s541 + $0x12c] sm:$0xff]
      %v3208 = vld [vmem:[%s541 + $0x134] sm:$0xff]
      %v3209 = vld [vmem:[%s541 + $0x13c] sm:$0xff]
      %v3210 = vld [vmem:[%s541 + $0x144] sm:$0xff]
      %v3211 = vld [vmem:[%s541 + $0x14c] sm:$0xff]
      %v3212 = vld [vmem:[%s541 + $0x154] sm:$0xff]
      %v3213 = vld [vmem:[%s541 + $0x15c] sm:$0xff]
      %v3214 = vld [vmem:[%s541 + $0x164] sm:$0xff]
      %v3215 = vld [vmem:[%s541 + $0x16c] sm:$0xff]
      %v3216 = vld [vmem:[%s541 + $0x174] sm:$0xff]
      %v3217 = vld [vmem:[%s541 + $0x17c] sm:$0xff]
      %v3218 = vld [vmem:[%s541 + $0x184] sm:$0xff]
      %v3219 = vld [vmem:[%s541 + $0x18c] sm:$0xff]
      %v3220 = vld [vmem:[%s541 + $0x194] sm:$0xff]
      %v3221 = vld [vmem:[%s541 + $0x19c] sm:$0xff]
      %v3222 = vld [vmem:[%s541 + $0x1a4] sm:$0xff]
      %v3223 = vld [vmem:[%s541 + $0x1ac] sm:$0xff]
      %v3224 = vld [vmem:[%s541 + $0x1b4] sm:$0xff]
      %v3225 = vld [vmem:[%s541 + $0x1bc] sm:$0xff]
      %v3226 = vld [vmem:[%s541 + $0x1c4] sm:$0xff]
      %v3227 = vld [vmem:[%s541 + $0x1cc] sm:$0xff]
      %v3228 = vld [vmem:[%s541 + $0x1d4] sm:$0xff]
      %v3229 = vld [vmem:[%s541 + $0x1dc] sm:$0xff]
      %v3230 = vld [vmem:[%s541 + $0x1e4] sm:$0xff]
      %v3231 = vld [vmem:[%s541 + $0x1ec] sm:$0xff]
      %v3232 = vld [vmem:[%s1 + $0x40] sm:$0xff]
      %v3233 = vld [vmem:[%s1 + $0x48] sm:$0xff]
      %v3235 = vsel %vm673, %v3170, 0
      %v3238 = vsel %vm673, %v3171, 0
      %v3241 = vsel %vm673, %v3172, 0
      %v3244 = vsel %vm673, %v3173, 0
      %v3247 = vsel %vm673, %v3174, 0
      %v3250 = vsel %vm673, %v3175, 0
      %v3253 = vsel %vm673, %v3176, 0
      %v3256 = vsel %vm673, %v3177, 0
      %v3259 = vsel %vm673, %v3178, 0
      %v3262 = vsel %vm673, %v3179, 0
      %v3265 = vsel %vm673, %v3180, 0
      %v3268 = vsel %vm673, %v3181, 0
      %v3271 = vsel %vm673, %v3182, 0
      %v3274 = vsel %vm673, %v3183, 0
      %v3277 = vsel %vm673, %v3184, 0
      %v3280 = vsel %vm673, %v3185, 0
      %v3283 = vsel %vm673, %v3186, 0
      %v3286 = vsel %vm673, %v3187, 0
      %v3289 = vsel %vm673, %v3188, 0
      %v3292 = vsel %vm673, %v3189, 0
      %v3295 = vsel %vm673, %v3190, 0
      %v3298 = vsel %vm673, %v3191, 0
      %v3301 = vsel %vm673, %v3192, 0
      %v3304 = vsel %vm673, %v3193, 0
      %v3307 = vsel %vm673, %v3194, 0
      %v3310 = vsel %vm673, %v3195, 0
      %v3313 = vsel %vm673, %v3196, 0
      %v3316 = vsel %vm673, %v3197, 0
      %v3319 = vsel %vm673, %v3198, 0
      %v3322 = vsel %vm673, %v3199, 0
      %v3325 = vsel %vm673, %v3200, 0
      %v3328 = vsel %vm673, %v3201, 0
      %v3331 = vsel %vm673, %v3202, 0
      %v3334 = vsel %vm673, %v3203, 0
      %v3337 = vsel %vm673, %v3204, 0
      %v3340 = vsel %vm673, %v3205, 0
      %v3343 = vsel %vm673, %v3206, 0
      %v3346 = vsel %vm673, %v3207, 0
      %v3349 = vsel %vm673, %v3208, 0
      %v3352 = vsel %vm673, %v3209, 0
      %v3355 = vsel %vm673, %v3210, 0
      %v3358 = vsel %vm673, %v3211, 0
      %v3361 = vsel %vm673, %v3212, 0
      %v3364 = vsel %vm673, %v3213, 0
      %v3367 = vsel %vm673, %v3214, 0
      %v3370 = vsel %vm673, %v3215, 0
      %v3373 = vsel %vm673, %v3216, 0
      %v3376 = vsel %vm673, %v3217, 0
      %v3379 = vsel %vm673, %v3218, 0
      %v3382 = vsel %vm673, %v3219, 0
      %v3385 = vsel %vm673, %v3220, 0
      %v3388 = vsel %vm673, %v3221, 0
      %v3391 = vsel %vm673, %v3222, 0
      %v3394 = vsel %vm673, %v3223, 0
      %v3397 = vsel %vm673, %v3224, 0
      %v3400 = vsel %vm673, %v3225, 0
      %v3403 = vsel %vm673, %v3226, 0
      %v3406 = vsel %vm673, %v3227, 0
      %v3409 = vsel %vm673, %v3228, 0
      %v3412 = vsel %vm673, %v3229, 0
      %v3415 = vsel %vm673, %v3230, 0
      %v3418 = vsel %vm673, %v3231, 0
      %3420 = vmatprep.subr.mxu0 0.0
      %3421 = vmatpush1.msra.mxu0 %v3232
      %3422 = vmatprep.subr.mxu0 0.0
      %3423 = vmatpush1.msra.mxu0 %v3233
      %3424 = vmatprep.subr.mxu0 0.0
      %3425 = vmatpush1.msra.mxu0 0.0
      %3426 = vmatprep.subr.mxu0 0.0
      %3427 = vmatpush1.msra.mxu0 0.0
      %3428 = vmatprep.subr.mxu0 0.0
      %3429 = vmatpush1.msra.mxu0 0.0
      %3430 = vmatprep.subr.mxu0 0.0
      %3431 = vmatpush1.msra.mxu0 0.0
      %3432 = vmatprep.subr.mxu0 0.0
      %3433 = vmatpush1.msra.mxu0 0.0
      %3434 = vmatprep.subr.mxu0 0.0
      %3435 = vmatpush1.msra.mxu0 0.0
      %3436 = vmatprep.subr.mxu0 0.0
      %3437 = vmatpush1.msra.mxu0 0.0
      %3438 = vmatprep.subr.mxu0 0.0
      %3439 = vmatpush1.msra.mxu0 0.0
      %3440 = vmatprep.subr.mxu0 0.0
      %3441 = vmatpush1.msra.mxu0 0.0
      %3442 = vmatprep.subr.mxu0 0.0
      %3443 = vmatpush1.msra.mxu0 0.0
      %3444 = vmatprep.subr.mxu0 0.0
      %3445 = vmatpush1.msra.mxu0 0.0
      %3446 = vmatprep.subr.mxu0 0.0
      %3447 = vmatpush1.msra.mxu0 0.0
      %3448 = vmatprep.subr.mxu0 0.0
      %3449 = vmatpush1.msra.mxu0 0.0
      %3450 = vmatprep.subr.mxu0 0.0
      %3451 = vmatpush1.msra.mxu0 0.0
      %3452 = vmatprep.subr.mxu0 0.0
      %3453 = vmatpush1.msra.mxu0 0.0
      %3454 = vmatprep.subr.mxu0 0.0
      %3455 = vmatpush1.msra.mxu0 0.0
      %3456 = vmatprep.subr.mxu0 0.0
      %3457 = vmatpush1.msra.mxu0 0.0
      %3458 = vmatprep.subr.mxu0 0.0
      %3459 = vmatpush1.msra.mxu0 0.0
      %3460 = vmatprep.subr.mxu0 0.0
      %3461 = vmatpush1.msra.mxu0 0.0
      %3462 = vmatprep.subr.mxu0 0.0
      %3463 = vmatpush1.msra.mxu0 0.0
      %3464 = vmatprep.subr.mxu0 0.0
      %3465 = vmatpush1.msra.mxu0 0.0
      %3466 = vmatprep.subr.mxu0 0.0
      %3467 = vmatpush1.msra.mxu0 0.0
      %3468 = vmatprep.subr.mxu0 0.0
      %3469 = vmatpush1.msra.mxu0 0.0
      %3470 = vmatprep.subr.mxu0 0.0
      %3471 = vmatpush1.msra.mxu0 0.0
      %3472 = vmatprep.subr.mxu0 0.0
      %3473 = vmatpush1.msra.mxu0 0.0
      %3474 = vmatprep.subr.mxu0 0.0
      %3475 = vmatpush1.msra.mxu0 0.0
      %3476 = vmatprep.subr.mxu0 0.0
      %3477 = vmatpush1.msra.mxu0 0.0
      %3478 = vmatprep.subr.mxu0 0.0
      %3479 = vmatpush1.msra.mxu0 0.0
      %3480 = vmatprep.subr.mxu0 0.0
      %3481 = vmatpush1.msra.mxu0 0.0
      %3482 = vmatprep.subr.mxu0 0.0
      %3483 = vmatpush1.msra.mxu0 0.0
      %3484 = vmatprep.mubr.f32.mxu0 0.0
      %3485 = vmatmul.mubr.f32.gmra.mrb[0].mxu0 %v3235
      %v3486 = vpop.f32.mrb[0].mxu0
      %v3487 = vadd.f32 0.0, %v3486
      %v3488 = vpop.f32.mrb[0].mxu0
      %3489 = vmatprep.mubr.f32.mxu0 0.0
      %3490 = vmatmul.mubr.f32.gmra.mrb[0].mxu0 %v3238
      %v3491 = vpop.f32.mrb[0].mxu0
      %v3492 = vadd.f32 0.0, %v3491
      %v3493 = vpop.f32.mrb[0].mxu0
      %3494 = vmatprep.mubr.f32.mxu0 0.0
      %3495 = vmatmul.mubr.f32.gmra.mrb[0].mxu0 %v3241
      %v3496 = vpop.f32.mrb[0].mxu0
      %v3497 = vadd.f32 0.0, %v3496
      %v3498 = vpop.f32.mrb[0].mxu0
      %3499 = vmatprep.mubr.f32.mxu0 0.0
      %3500 = vmatmul.mubr.f32.gmra.mrb[0].mxu0 %v3244
      %v3501 = vpop.f32.mrb[0].mxu0
      %v3502 = vadd.f32 0.0, %v3501
      %v3503 = vpop.f32.mrb[0].mxu0
      %3504 = vmatprep.mubr.f32.mxu0 0.0
      %3505 = vmatmul.mubr.f32.gmra.mrb[0].mxu0 %v3247
      %v3506 = vpop.f32.mrb[0].mxu0
      %v3507 = vadd.f32 0.0, %v3506
      %v3508 = vpop.f32.mrb[0].mxu0
      %3509 = vmatprep.mubr.f32.mxu0 0.0
      %3510 = vmatmul.mubr.f32.gmra.mrb[0].mxu0 %v3250
      %v3511 = vpop.f32.mrb[0].mxu0
      %v3512 = vadd.f32 0.0, %v3511
      %v3513 = vpop.f32.mrb[0].mxu0
      %3514 = vmatprep.mubr.f32.mxu0 0.0
      %3515 = vmatmul.mubr.f32.gmra.mrb[0].mxu0 %v3253
      %v3516 = vpop.f32.mrb[0].mxu0
      %v3517 = vadd.f32 0.0, %v3516
      %v3518 = vpop.f32.mrb[0].mxu0
      %3519 = vmatprep.mubr.f32.mxu0 0.0
      %3520 = vmatmul.mubr.f32.gmra.mrb[0].mxu0 %v3256
      %v3521 = vpop.f32.mrb[0].mxu0
      %v3522 = vadd.f32 0.0, %v3521
      %v3523 = vpop.f32.mrb[0].mxu0
      %3524 = vmatprep.mubr.f32.mxu0 0.0
      %3525 = vmatmul.mubr.f32.gmra.mrb[0].mxu0 %v3259
      %v3526 = vpop.f32.mrb[0].mxu0
      %v3527 = vadd.f32 0.0, %v3526
      %v3528 = vpop.f32.mrb[0].mxu0
      %3529 = vmatprep.mubr.f32.mxu0 0.0
      %3530 = vmatmul.mubr.f32.gmra.mrb[0].mxu0 %v3262
      %v3531 = vpop.f32.mrb[0].mxu0
      %v3532 = vadd.f32 0.0, %v3531
      %v3533 = vpop.f32.mrb[0].mxu0
      %3534 = vmatprep.mubr.f32.mxu0 0.0
      %3535 = vmatmul.mubr.f32.gmra.mrb[0].mxu0 %v3265
      %v3536 = vpop.f32.mrb[0].mxu0
      %v3537 = vadd.f32 0.0, %v3536
      %v3538 = vpop.f32.mrb[0].mxu0
      %3539 = vmatprep.mubr.f32.mxu0 0.0
      %3540 = vmatmul.mubr.f32.gmra.mrb[0].mxu0 %v3268
      %v3541 = vpop.f32.mrb[0].mxu0
      %v3542 = vadd.f32 0.0, %v3541
      %v3543 = vpop.f32.mrb[0].mxu0
      %3544 = vmatprep.mubr.f32.mxu0 0.0
      %3545 = vmatmul.mubr.f32.gmra.mrb[0].mxu0 %v3271
      %v3546 = vpop.f32.mrb[0].mxu0
      %v3547 = vadd.f32 0.0, %v3546
      %v3548 = vpop.f32.mrb[0].mxu0
      %3549 = vmatprep.mubr.f32.mxu0 0.0
      %3550 = vmatmul.mubr.f32.gmra.mrb[0].mxu0 %v3274
      %v3551 = vpop.f32.mrb[0].mxu0
      %v3552 = vadd.f32 0.0, %v3551
      %v3553 = vpop.f32.mrb[0].mxu0
      %3554 = vmatprep.mubr.f32.mxu0 0.0
      %3555 = vmatmul.mubr.f32.gmra.mrb[0].mxu0 %v3277
      %v3556 = vpop.f32.mrb[0].mxu0
      %v3557 = vadd.f32 0.0, %v3556
      %v3558 = vpop.f32.mrb[0].mxu0
      %3559 = vmatprep.mubr.f32.mxu0 0.0
      %3560 = vmatmul.mubr.f32.gmra.mrb[0].mxu0 %v3280
      %v3561 = vpop.f32.mrb[0].mxu0
      %v3562 = vadd.f32 0.0, %v3561
      %v3563 = vpop.f32.mrb[0].mxu0
      %3564 = vmatprep.mubr.f32.mxu0 0.0
      %3565 = vmatmul.mubr.f32.gmra.mrb[0].mxu0 %v3283
      %v3566 = vpop.f32.mrb[0].mxu0
      %v3567 = vadd.f32 0.0, %v3566
      %v3568 = vpop.f32.mrb[0].mxu0
      %3569 = vmatprep.mubr.f32.mxu0 0.0
      %3570 = vmatmul.mubr.f32.gmra.mrb[0].mxu0 %v3286
      %v3571 = vpop.f32.mrb[0].mxu0
      %v3572 = vadd.f32 0.0, %v3571
      %v3573 = vpop.f32.mrb[0].mxu0
      %3574 = vmatprep.mubr.f32.mxu0 0.0
      %3575 = vmatmul.mubr.f32.gmra.mrb[0].mxu0 %v3289
      %v3576 = vpop.f32.mrb[0].mxu0
      %v3577 = vadd.f32 0.0, %v3576
      %v3578 = vpop.f32.mrb[0].mxu0
      %3579 = vmatprep.mubr.f32.mxu0 0.0
      %3580 = vmatmul.mubr.f32.gmra.mrb[0].mxu0 %v3292
      %v3581 = vpop.f32.mrb[0].mxu0
      %v3582 = vadd.f32 0.0, %v3581
      %v3583 = vpop.f32.mrb[0].mxu0
      %3584 = vmatprep.mubr.f32.mxu0 0.0
      %3585 = vmatmul.mubr.f32.gmra.mrb[0].mxu0 %v3295
      %v3586 = vpop.f32.mrb[0].mxu0
      %v3587 = vadd.f32 0.0, %v3586
      %v3588 = vpop.f32.mrb[0].mxu0
      %3589 = vmatprep.mubr.f32.mxu0 0.0
      %3590 = vmatmul.mubr.f32.gmra.mrb[0].mxu0 %v3298
      %v3591 = vpop.f32.mrb[0].mxu0
      %v3592 = vadd.f32 0.0, %v3591
      %v3593 = vpop.f32.mrb[0].mxu0
      %3594 = vmatprep.mubr.f32.mxu0 0.0
      %3595 = vmatmul.mubr.f32.gmra.mrb[0].mxu0 %v3301
      %v3596 = vpop.f32.mrb[0].mxu0
      %v3597 = vadd.f32 0.0, %v3596
      %v3598 = vpop.f32.mrb[0].mxu0
      %3599 = vmatprep.mubr.f32.mxu0 0.0
      %3600 = vmatmul.mubr.f32.gmra.mrb[0].mxu0 %v3304
      %v3601 = vpop.f32.mrb[0].mxu0
      %v3602 = vadd.f32 0.0, %v3601
      %v3603 = vpop.f32.mrb[0].mxu0
      %3604 = vmatprep.mubr.f32.mxu0 0.0
      %3605 = vmatmul.mubr.f32.gmra.mrb[0].mxu0 %v3307
      %v3606 = vpop.f32.mrb[0].mxu0
      %v3607 = vadd.f32 0.0, %v3606
      %v3608 = vpop.f32.mrb[0].mxu0
      %3609 = vmatprep.mubr.f32.mxu0 0.0
      %3610 = vmatmul.mubr.f32.gmra.mrb[0].mxu0 %v3310
      %v3611 = vpop.f32.mrb[0].mxu0
      %v3612 = vadd.f32 0.0, %v3611
      %v3613 = vpop.f32.mrb[0].mxu0
      %3614 = vmatprep.mubr.f32.mxu0 0.0
      %3615 = vmatmul.mubr.f32.gmra.mrb[0].mxu0 %v3313
      %v3616 = vpop.f32.mrb[0].mxu0
      %v3617 = vadd.f32 0.0, %v3616
      %v3618 = vpop.f32.mrb[0].mxu0
      %3619 = vmatprep.mubr.f32.mxu0 0.0
      %3620 = vmatmul.mubr.f32.gmra.mrb[0].mxu0 %v3316
      %v3621 = vpop.f32.mrb[0].mxu0
      %v3622 = vadd.f32 0.0, %v3621
      %v3623 = vpop.f32.mrb[0].mxu0
      %3624 = vmatprep.mubr.f32.mxu0 0.0
      %3625 = vmatmul.mubr.f32.gmra.mrb[0].mxu0 %v3319
      %v3626 = vpop.f32.mrb[0].mxu0
      %v3627 = vadd.f32 0.0, %v3626
      %v3628 = vpop.f32.mrb[0].mxu0
      %3629 = vmatprep.mubr.f32.mxu0 0.0
      %3630 = vmatmul.mubr.f32.gmra.mrb[0].mxu0 %v3322
      %v3631 = vpop.f32.mrb[0].mxu0
      %v3632 = vadd.f32 0.0, %v3631
      %v3633 = vpop.f32.mrb[0].mxu0
      %3634 = vmatprep.mubr.f32.mxu0 0.0
      %3635 = vmatmul.mubr.f32.gmra.mrb[0].mxu0 %v3325
      %v3636 = vpop.f32.mrb[0].mxu0
      %v3637 = vadd.f32 0.0, %v3636
      %v3638 = vpop.f32.mrb[0].mxu0
      %3639 = vmatprep.mubr.f32.mxu0 0.0
      %3640 = vmatmul.mubr.f32.gmra.mrb[0].mxu0 %v3328
      %v3641 = vpop.f32.mrb[0].mxu0
      %v3642 = vadd.f32 0.0, %v3641
      %v3643 = vpop.f32.mrb[0].mxu0
      %3644 = vmatprep.mubr.f32.mxu0 0.0
      %3645 = vmatmul.mubr.f32.gmra.mrb[0].mxu0 %v3331
      %v3646 = vpop.f32.mrb[0].mxu0
      %v3647 = vadd.f32 0.0, %v3646
      %v3648 = vpop.f32.mrb[0].mxu0
      %3649 = vmatprep.mubr.f32.mxu0 0.0
      %3650 = vmatmul.mubr.f32.gmra.mrb[0].mxu0 %v3334
      %v3651 = vpop.f32.mrb[0].mxu0
      %v3652 = vadd.f32 0.0, %v3651
      %v3653 = vpop.f32.mrb[0].mxu0
      %3654 = vmatprep.mubr.f32.mxu0 0.0
      %3655 = vmatmul.mubr.f32.gmra.mrb[0].mxu0 %v3337
      %v3656 = vpop.f32.mrb[0].mxu0
      %v3657 = vadd.f32 0.0, %v3656
      %v3658 = vpop.f32.mrb[0].mxu0
      %3659 = vmatprep.mubr.f32.mxu0 0.0
      %3660 = vmatmul.mubr.f32.gmra.mrb[0].mxu0 %v3340
      %v3661 = vpop.f32.mrb[0].mxu0
      %v3662 = vadd.f32 0.0, %v3661
      %v3663 = vpop.f32.mrb[0].mxu0
      %3664 = vmatprep.mubr.f32.mxu0 0.0
      %3665 = vmatmul.mubr.f32.gmra.mrb[0].mxu0 %v3343
      %v3666 = vpop.f32.mrb[0].mxu0
      %v3667 = vadd.f32 0.0, %v3666
      %v3668 = vpop.f32.mrb[0].mxu0
      %3669 = vmatprep.mubr.f32.mxu0 0.0
      %3670 = vmatmul.mubr.f32.gmra.mrb[0].mxu0 %v3346
      %v3671 = vpop.f32.mrb[0].mxu0
      %v3672 = vadd.f32 0.0, %v3671
      %v3673 = vpop.f32.mrb[0].mxu0
      %3674 = vmatprep.mubr.f32.mxu0 0.0
      %3675 = vmatmul.mubr.f32.gmra.mrb[0].mxu0 %v3349
      %v3676 = vpop.f32.mrb[0].mxu0
      %v3677 = vadd.f32 0.0, %v3676
      %v3678 = vpop.f32.mrb[0].mxu0
      %3679 = vmatprep.mubr.f32.mxu0 0.0
      %3680 = vmatmul.mubr.f32.gmra.mrb[0].mxu0 %v3352
      %v3681 = vpop.f32.mrb[0].mxu0
      %v3682 = vadd.f32 0.0, %v3681
      %v3683 = vpop.f32.mrb[0].mxu0
      %3684 = vmatprep.mubr.f32.mxu0 0.0
      %3685 = vmatmul.mubr.f32.gmra.mrb[0].mxu0 %v3355
      %v3686 = vpop.f32.mrb[0].mxu0
      %v3687 = vadd.f32 0.0, %v3686
      %v3688 = vpop.f32.mrb[0].mxu0
      %3689 = vmatprep.mubr.f32.mxu0 0.0
      %3690 = vmatmul.mubr.f32.gmra.mrb[0].mxu0 %v3358
      %v3691 = vpop.f32.mrb[0].mxu0
      %v3692 = vadd.f32 0.0, %v3691
      %v3693 = vpop.f32.mrb[0].mxu0
      %3694 = vmatprep.mubr.f32.mxu0 0.0
      %3695 = vmatmul.mubr.f32.gmra.mrb[0].mxu0 %v3361
      %v3696 = vpop.f32.mrb[0].mxu0
      %v3697 = vadd.f32 0.0, %v3696
      %v3698 = vpop.f32.mrb[0].mxu0
      %3699 = vmatprep.mubr.f32.mxu0 0.0
      %3700 = vmatmul.mubr.f32.gmra.mrb[0].mxu0 %v3364
      %v3701 = vpop.f32.mrb[0].mxu0
      %v3702 = vadd.f32 0.0, %v3701
      %v3703 = vpop.f32.mrb[0].mxu0
      %3704 = vmatprep.mubr.f32.mxu0 0.0
      %3705 = vmatmul.mubr.f32.gmra.mrb[0].mxu0 %v3367
      %v3706 = vpop.f32.mrb[0].mxu0
      %v3707 = vadd.f32 0.0, %v3706
      %v3708 = vpop.f32.mrb[0].mxu0
      %3709 = vmatprep.mubr.f32.mxu0 0.0
      %3710 = vmatmul.mubr.f32.gmra.mrb[0].mxu0 %v3370
      %v3711 = vpop.f32.mrb[0].mxu0
      %v3712 = vadd.f32 0.0, %v3711
      %v3713 = vpop.f32.mrb[0].mxu0
      %3714 = vmatprep.mubr.f32.mxu0 0.0
      %3715 = vmatmul.mubr.f32.gmra.mrb[0].mxu0 %v3373
      %v3716 = vpop.f32.mrb[0].mxu0
      %v3717 = vadd.f32 0.0, %v3716
      %v3718 = vpop.f32.mrb[0].mxu0
      %3719 = vmatprep.mubr.f32.mxu0 0.0
      %3720 = vmatmul.mubr.f32.gmra.mrb[0].mxu0 %v3376
      %v3721 = vpop.f32.mrb[0].mxu0
      %v3722 = vadd.f32 0.0, %v3721
      %v3723 = vpop.f32.mrb[0].mxu0
      %3724 = vmatprep.mubr.f32.mxu0 0.0
      %3725 = vmatmul.mubr.f32.gmra.mrb[0].mxu0 %v3379
      %v3726 = vpop.f32.mrb[0].mxu0
      %v3727 = vadd.f32 0.0, %v3726
      %v3728 = vpop.f32.mrb[0].mxu0
      %3729 = vmatprep.mubr.f32.mxu0 0.0
      %3730 = vmatmul.mubr.f32.gmra.mrb[0].mxu0 %v3382
      %v3731 = vpop.f32.mrb[0].mxu0
      %v3732 = vadd.f32 0.0, %v3731
      %v3733 = vpop.f32.mrb[0].mxu0
      %3734 = vmatprep.mubr.f32.mxu0 0.0
      %3735 = vmatmul.mubr.f32.gmra.mrb[0].mxu0 %v3385
      %v3736 = vpop.f32.mrb[0].mxu0
      %v3737 = vadd.f32 0.0, %v3736
      %v3738 = vpop.f32.mrb[0].mxu0
      %3739 = vmatprep.mubr.f32.mxu0 0.0
      %3740 = vmatmul.mubr.f32.gmra.mrb[0].mxu0 %v3388
      %v3741 = vpop.f32.mrb[0].mxu0
      %v3742 = vadd.f32 0.0, %v3741
      %v3743 = vpop.f32.mrb[0].mxu0
      %3744 = vmatprep.mubr.f32.mxu0 0.0
      %3745 = vmatmul.mubr.f32.gmra.mrb[0].mxu0 %v3391
      %v3746 = vpop.f32.mrb[0].mxu0
      %v3747 = vadd.f32 0.0, %v3746
      %v3748 = vpop.f32.mrb[0].mxu0
      %3749 = vmatprep.mubr.f32.mxu0 0.0
      %3750 = vmatmul.mubr.f32.gmra.mrb[0].mxu0 %v3394
      %v3751 = vpop.f32.mrb[0].mxu0
      %v3752 = vadd.f32 0.0, %v3751
      %v3753 = vpop.f32.mrb[0].mxu0
      %3754 = vmatprep.mubr.f32.mxu0 0.0
      %3755 = vmatmul.mubr.f32.gmra.mrb[0].mxu0 %v3397
      %v3756 = vpop.f32.mrb[0].mxu0
      %v3757 = vadd.f32 0.0, %v3756
      %v3758 = vpop.f32.mrb[0].mxu0
      %3759 = vmatprep.mubr.f32.mxu0 0.0
      %3760 = vmatmul.mubr.f32.gmra.mrb[0].mxu0 %v3400
      %v3761 = vpop.f32.mrb[0].mxu0
      %v3762 = vadd.f32 0.0, %v3761
      %v3763 = vpop.f32.mrb[0].mxu0
      %3764 = vmatprep.mubr.f32.mxu0 0.0
      %3765 = vmatmul.mubr.f32.gmra.mrb[0].mxu0 %v3403
      %v3766 = vpop.f32.mrb[0].mxu0
      %v3767 = vadd.f32 0.0, %v3766
      %v3768 = vpop.f32.mrb[0].mxu0
      %3769 = vmatprep.mubr.f32.mxu0 0.0
      %3770 = vmatmul.mubr.f32.gmra.mrb[0].mxu0 %v3406
      %v3771 = vpop.f32.mrb[0].mxu0
      %v3772 = vadd.f32 0.0, %v3771
      %v3773 = vpop.f32.mrb[0].mxu0
      %3774 = vmatprep.mubr.f32.mxu0 0.0
      %3775 = vmatmul.mubr.f32.gmra.mrb[0].mxu0 %v3409
      %v3776 = vpop.f32.mrb[0].mxu0
      %v3777 = vadd.f32 0.0, %v3776
      %v3778 = vpop.f32.mrb[0].mxu0
      %3779 = vmatprep.mubr.f32.mxu0 0.0
      %3780 = vmatmul.mubr.f32.gmra.mrb[0].mxu0 %v3412
      %v3781 = vpop.f32.mrb[0].mxu0
      %v3782 = vadd.f32 0.0, %v3781
      %v3783 = vpop.f32.mrb[0].mxu0
      %3784 = vmatprep.mubr.f32.mxu0 0.0
      %3785 = vmatmul.mubr.f32.gmra.mrb[0].mxu0 %v3415
      %v3786 = vpop.f32.mrb[0].mxu0
      %v3787 = vadd.f32 0.0, %v3786
      %v3788 = vpop.f32.mrb[0].mxu0
      %3789 = vmatprep.mubr.f32.mxu0 0.0
      %3790 = vmatmul.mubr.f32.gmra.mrb[0].mxu0 %v3418
      %v3791 = vpop.f32.mrb[0].mxu0
      %v3792 = vadd.f32 0.0, %v3791
      %v3793 = vpop.f32.mrb[0].mxu0
      %3794 = vdwg.mxu0
      %v3795 = vadd.f32 %v3108, %v3487
      %v3796 = vadd.f32 %v3109, %v3492
      %v3797 = vadd.f32 %v3110, %v3497
      %v3798 = vadd.f32 %v3111, %v3502
      %v3799 = vadd.f32 %v3112, %v3507
      %v3800 = vadd.f32 %v3113, %v3512
      %v3801 = vadd.f32 %v3114, %v3517
      %v3802 = vadd.f32 %v3115, %v3522
      %v3803 = vadd.f32 %v3116, %v3527
      %v3804 = vadd.f32 %v3117, %v3532
      %v3805 = vadd.f32 %v3118, %v3537
      %v3806 = vadd.f32 %v3119, %v3542
      %v3807 = vadd.f32 %v3120, %v3547
      %v3808 = vadd.f32 %v3121, %v3552
      %v3809 = vadd.f32 %v3122, %v3557
      %v3810 = vadd.f32 %v3123, %v3562
      %v3811 = vadd.f32 %v3124, %v3567
      %v3812 = vadd.f32 %v3125, %v3572
      %v3813 = vadd.f32 %v3126, %v3577
      %v3814 = vadd.f32 %v3127, %v3582
      %v3815 = vadd.f32 %v3128, %v3587
      %v3816 = vadd.f32 %v3129, %v3592
      %v3817 = vadd.f32 %v3130, %v3597
      %v3818 = vadd.f32 %v3131, %v3602
      %v3819 = vadd.f32 %v3132, %v3607
      %v3820 = vadd.f32 %v3133, %v3612
      %v3821 = vadd.f32 %v3134, %v3617
      %v3822 = vadd.f32 %v3135, %v3622
      %v3823 = vadd.f32 %v3136, %v3627
      %v3824 = vadd.f32 %v3137, %v3632
      %v3825 = vadd.f32 %v3138, %v3637
      %v3826 = vadd.f32 %v3139, %v3642
      %v3827 = vadd.f32 %v3140, %v3647
      %v3828 = vadd.f32 %v3141, %v3652
      %v3829 = vadd.f32 %v3142, %v3657
      %v3830 = vadd.f32 %v3143, %v3662
      %v3831 = vadd.f32 %v3144, %v3667
      %v3832 = vadd.f32 %v3145, %v3672
      %v3833 = vadd.f32 %v3146, %v3677
      %v3834 = vadd.f32 %v3147, %v3682
      %v3835 = vadd.f32 %v3148, %v3687
      %v3836 = vadd.f32 %v3149, %v3692
      %v3837 = vadd.f32 %v3150, %v3697
      %v3838 = vadd.f32 %v3151, %v3702
      %v3839 = vadd.f32 %v3152, %v3707
      %v3840 = vadd.f32 %v3153, %v3712
      %v3841 = vadd.f32 %v3154, %v3717
      %v3842 = vadd.f32 %v3155, %v3722
      %v3843 = vadd.f32 %v3156, %v3727
      %v3844 = vadd.f32 %v3157, %v3732
      %v3845 = vadd.f32 %v3158, %v3737
      %v3846 = vadd.f32 %v3159, %v3742
      %v3847 = vadd.f32 %v3160, %v3747
      %v3848 = vadd.f32 %v3161, %v3752
      %v3849 = vadd.f32 %v3162, %v3757
      %v3850 = vadd.f32 %v3163, %v3762
      %v3851 = vadd.f32 %v3164, %v3767
      %v3852 = vadd.f32 %v3165, %v3772
      %v3853 = vadd.f32 %v3166, %v3777
      %v3854 = vadd.f32 %v3167, %v3782
      %v3855 = vadd.f32 %v3168, %v3787
      %v3856 = vadd.f32 %v3169, %v3792
      %v3857 = vld [vmem:[%s2] sm:$0x1]
      %v3859 = vlaneseq
      %v3860 = vshrl.u32 %v3859, 7
      %v3861 = vsub.s32 0, %v3860
      %v3862 = vrot.slane %v3857, %v3861
      %v3864 = vmul.f32 %v3795, %v3862
      %v3865 = vmul.f32 %v3796, %v3862
      %v3866 = vmul.f32 %v3797, %v3862
      %v3867 = vmul.f32 %v3798, %v3862
      %v3868 = vmul.f32 %v3799, %v3862
      %v3869 = vmul.f32 %v3800, %v3862
      %v3870 = vmul.f32 %v3801, %v3862
      %v3871 = vmul.f32 %v3802, %v3862
      %v3872 = vmul.f32 %v3803, %v3862
      %v3873 = vmul.f32 %v3804, %v3862
      %v3874 = vmul.f32 %v3805, %v3862
      %v3875 = vmul.f32 %v3806, %v3862
      %v3876 = vmul.f32 %v3807, %v3862
      %v3877 = vmul.f32 %v3808, %v3862
      %v3878 = vmul.f32 %v3809, %v3862
      %v3879 = vmul.f32 %v3810, %v3862
      %v3880 = vmul.f32 %v3811, %v3862
      %v3881 = vmul.f32 %v3812, %v3862
      %v3882 = vmul.f32 %v3813, %v3862
      %v3883 = vmul.f32 %v3814, %v3862
      %v3884 = vmul.f32 %v3815, %v3862
      %v3885 = vmul.f32 %v3816, %v3862
      %v3886 = vmul.f32 %v3817, %v3862
      %v3887 = vmul.f32 %v3818, %v3862
      %v3888 = vmul.f32 %v3819, %v3862
      %v3889 = vmul.f32 %v3820, %v3862
      %v3890 = vmul.f32 %v3821, %v3862
      %v3891 = vmul.f32 %v3822, %v3862
      %v3892 = vmul.f32 %v3823, %v3862
      %v3893 = vmul.f32 %v3824, %v3862
      %v3894 = vmul.f32 %v3825, %v3862
      %v3895 = vmul.f32 %v3826, %v3862
      %v3896 = vmul.f32 %v3827, %v3862
      %v3897 = vmul.f32 %v3828, %v3862
      %v3898 = vmul.f32 %v3829, %v3862
      %v3899 = vmul.f32 %v3830, %v3862
      %v3900 = vmul.f32 %v3831, %v3862
      %v3901 = vmul.f32 %v3832, %v3862
      %v3902 = vmul.f32 %v3833, %v3862
      %v3903 = vmul.f32 %v3834, %v3862
      %v3904 = vmul.f32 %v3835, %v3862
      %v3905 = vmul.f32 %v3836, %v3862
      %v3906 = vmul.f32 %v3837, %v3862
      %v3907 = vmul.f32 %v3838, %v3862
      %v3908 = vmul.f32 %v3839, %v3862
      %v3909 = vmul.f32 %v3840, %v3862
      %v3910 = vmul.f32 %v3841, %v3862
      %v3911 = vmul.f32 %v3842, %v3862
      %v3912 = vmul.f32 %v3843, %v3862
      %v3913 = vmul.f32 %v3844, %v3862
      %v3914 = vmul.f32 %v3845, %v3862
      %v3915 = vmul.f32 %v3846, %v3862
      %v3916 = vmul.f32 %v3847, %v3862
      %v3917 = vmul.f32 %v3848, %v3862
      %v3918 = vmul.f32 %v3849, %v3862
      %v3919 = vmul.f32 %v3850, %v3862
      %v3920 = vmul.f32 %v3851, %v3862
      %v3921 = vmul.f32 %v3852, %v3862
      %v3922 = vmul.f32 %v3853, %v3862
      %v3923 = vmul.f32 %v3854, %v3862
      %v3924 = vmul.f32 %v3855, %v3862
      %v3925 = vmul.f32 %v3856, %v3862
      %v3926 = vld [vmem:[%s3] sm:$0x1]
      %v3928 = vlaneseq
      %v3929 = vshrl.u32 %v3928, 7
      %v3930 = vsub.s32 0, %v3929
      %v3931 = vrot.slane %v3926, %v3930
      %v3933 = vadd.f32 %v3864, %v3931
      %v3934 = vadd.f32 %v3865, %v3931
      %v3935 = vadd.f32 %v3866, %v3931
      %v3936 = vadd.f32 %v3867, %v3931
      %v3937 = vadd.f32 %v3868, %v3931
      %v3938 = vadd.f32 %v3869, %v3931
      %v3939 = vadd.f32 %v3870, %v3931
      %v3940 = vadd.f32 %v3871, %v3931
      %v3941 = vadd.f32 %v3872, %v3931
      %v3942 = vadd.f32 %v3873, %v3931
      %v3943 = vadd.f32 %v3874, %v3931
      %v3944 = vadd.f32 %v3875, %v3931
      %v3945 = vadd.f32 %v3876, %v3931
      %v3946 = vadd.f32 %v3877, %v3931
      %v3947 = vadd.f32 %v3878, %v3931
      %v3948 = vadd.f32 %v3879, %v3931
      %v3949 = vadd.f32 %v3880, %v3931
      %v3950 = vadd.f32 %v3881, %v3931
      %v3951 = vadd.f32 %v3882, %v3931
      %v3952 = vadd.f32 %v3883, %v3931
      %v3953 = vadd.f32 %v3884, %v3931
      %v3954 = vadd.f32 %v3885, %v3931
      %v3955 = vadd.f32 %v3886, %v3931
      %v3956 = vadd.f32 %v3887, %v3931
      %v3957 = vadd.f32 %v3888, %v3931
      %v3958 = vadd.f32 %v3889, %v3931
      %v3959 = vadd.f32 %v3890, %v3931
      %v3960 = vadd.f32 %v3891, %v3931
      %v3961 = vadd.f32 %v3892, %v3931
      %v3962 = vadd.f32 %v3893, %v3931
      %v3963 = vadd.f32 %v3894, %v3931
      %v3964 = vadd.f32 %v3895, %v3931
      %v3965 = vadd.f32 %v3896, %v3931
      %v3966 = vadd.f32 %v3897, %v3931
      %v3967 = vadd.f32 %v3898, %v3931
      %v3968 = vadd.f32 %v3899, %v3931
      %v3969 = vadd.f32 %v3900, %v3931
      %v3970 = vadd.f32 %v3901, %v3931
      %v3971 = vadd.f32 %v3902, %v3931
      %v3972 = vadd.f32 %v3903, %v3931
      %v3973 = vadd.f32 %v3904, %v3931
      %v3974 = vadd.f32 %v3905, %v3931
      %v3975 = vadd.f32 %v3906, %v3931
      %v3976 = vadd.f32 %v3907, %v3931
      %v3977 = vadd.f32 %v3908, %v3931
      %v3978 = vadd.f32 %v3909, %v3931
      %v3979 = vadd.f32 %v3910, %v3931
      %v3980 = vadd.f32 %v3911, %v3931
      %v3981 = vadd.f32 %v3912, %v3931
      %v3982 = vadd.f32 %v3913, %v3931
      %v3983 = vadd.f32 %v3914, %v3931
      %v3984 = vadd.f32 %v3915, %v3931
      %v3985 = vadd.f32 %v3916, %v3931
      %v3986 = vadd.f32 %v3917, %v3931
      %v3987 = vadd.f32 %v3918, %v3931
      %v3988 = vadd.f32 %v3919, %v3931
      %v3989 = vadd.f32 %v3920, %v3931
      %v3990 = vadd.f32 %v3921, %v3931
      %v3991 = vadd.f32 %v3922, %v3931
      %v3992 = vadd.f32 %v3923, %v3931
      %v3993 = vadd.f32 %v3924, %v3931
      %v3994 = vadd.f32 %v3925, %v3931
      %v3995 = vmax.f32 %v3933, 0.0
      %v3996 = vmax.f32 %v3934, 0.0
      %v3997 = vmax.f32 %v3935, 0.0
      %v3998 = vmax.f32 %v3936, 0.0
      %v3999 = vmax.f32 %v3937, 0.0
      %v4000 = vmax.f32 %v3938, 0.0
      %v4001 = vmax.f32 %v3939, 0.0
      %v4002 = vmax.f32 %v3940, 0.0
      %v4003 = vmax.f32 %v3941, 0.0
      %v4004 = vmax.f32 %v3942, 0.0
      %v4005 = vmax.f32 %v3943, 0.0
      %v4006 = vmax.f32 %v3944, 0.0
      %v4007 = vmax.f32 %v3945, 0.0
      %v4008 = vmax.f32 %v3946, 0.0
      %v4009 = vmax.f32 %v3947, 0.0
      %v4010 = vmax.f32 %v3948, 0.0
      %v4011 = vmax.f32 %v3949, 0.0
      %v4012 = vmax.f32 %v3950, 0.0
      %v4013 = vmax.f32 %v3951, 0.0
      %v4014 = vmax.f32 %v3952, 0.0
      %v4015 = vmax.f32 %v3953, 0.0
      %v4016 = vmax.f32 %v3954, 0.0
      %v4017 = vmax.f32 %v3955, 0.0
      %v4018 = vmax.f32 %v3956, 0.0
      %v4019 = vmax.f32 %v3957, 0.0
      %v4020 = vmax.f32 %v3958, 0.0
      %v4021 = vmax.f32 %v3959, 0.0
      %v4022 = vmax.f32 %v3960, 0.0
      %v4023 = vmax.f32 %v3961, 0.0
      %v4024 = vmax.f32 %v3962, 0.0
      %v4025 = vmax.f32 %v3963, 0.0
      %v4026 = vmax.f32 %v3964, 0.0
      %v4027 = vmax.f32 %v3965, 0.0
      %v4028 = vmax.f32 %v3966, 0.0
      %v4029 = vmax.f32 %v3967, 0.0
      %v4030 = vmax.f32 %v3968, 0.0
      %v4031 = vmax.f32 %v3969, 0.0
      %v4032 = vmax.f32 %v3970, 0.0
      %v4033 = vmax.f32 %v3971, 0.0
      %v4034 = vmax.f32 %v3972, 0.0
      %v4035 = vmax.f32 %v3973, 0.0
      %v4036 = vmax.f32 %v3974, 0.0
      %v4037 = vmax.f32 %v3975, 0.0
      %v4038 = vmax.f32 %v3976, 0.0
      %v4039 = vmax.f32 %v3977, 0.0
      %v4040 = vmax.f32 %v3978, 0.0
      %v4041 = vmax.f32 %v3979, 0.0
      %v4042 = vmax.f32 %v3980, 0.0
      %v4043 = vmax.f32 %v3981, 0.0
      %v4044 = vmax.f32 %v3982, 0.0
      %v4045 = vmax.f32 %v3983, 0.0
      %v4046 = vmax.f32 %v3984, 0.0
      %v4047 = vmax.f32 %v3985, 0.0
      %v4048 = vmax.f32 %v3986, 0.0
      %v4049 = vmax.f32 %v3987, 0.0
      %v4050 = vmax.f32 %v3988, 0.0
      %v4051 = vmax.f32 %v3989, 0.0
      %v4052 = vmax.f32 %v3990, 0.0
      %v4053 = vmax.f32 %v3991, 0.0
      %v4054 = vmax.f32 %v3992, 0.0
      %v4055 = vmax.f32 %v3993, 0.0
      %v4056 = vmax.f32 %v3994, 0.0
      %vm4057 = vcmask 261120
      %4058 = vst.msk [vmem:[#allocation2] sm:$0xff] %vm4057, %v3995
      %4059 = vst.msk [vmem:[#allocation2 + $0x8] sm:$0xff] %vm4057, %v3996
      %4060 = vst.msk [vmem:[#allocation2 + $0x10] sm:$0xff] %vm4057, %v3997
      %4061 = vst.msk [vmem:[#allocation2 + $0x18] sm:$0xff] %vm4057, %v3998
      %4062 = vst.msk [vmem:[#allocation2 + $0x20] sm:$0xff] %vm4057, %v3999
      %4063 = vst.msk [vmem:[#allocation2 + $0x28] sm:$0xff] %vm4057, %v4000
      %4064 = vst.msk [vmem:[#allocation2 + $0x30] sm:$0xff] %vm4057, %v4001
      %4065 = vst.msk [vmem:[#allocation2 + $0x38] sm:$0xff] %vm4057, %v4002
      %4066 = vst.msk [vmem:[#allocation2 + $0x40] sm:$0xff] %vm4057, %v4003
      %4067 = vst.msk [vmem:[#allocation2 + $0x48] sm:$0xff] %vm4057, %v4004
      %4068 = vst.msk [vmem:[#allocation2 + $0x50] sm:$0xff] %vm4057, %v4005
      %4069 = vst.msk [vmem:[#allocation2 + $0x58] sm:$0xff] %vm4057, %v4006
      %4070 = vst.msk [vmem:[#allocation2 + $0x60] sm:$0xff] %vm4057, %v4007
      %4071 = vst.msk [vmem:[#allocation2 + $0x68] sm:$0xff] %vm4057, %v4008
      %4072 = vst.msk [vmem:[#allocation2 + $0x70] sm:$0xff] %vm4057, %v4009
      %4073 = vst.msk [vmem:[#allocation2 + $0x78] sm:$0xff] %vm4057, %v4010
      %4074 = vst.msk [vmem:[#allocation2 + $0x80] sm:$0xff] %vm4057, %v4011
      %4075 = vst.msk [vmem:[#allocation2 + $0x88] sm:$0xff] %vm4057, %v4012
      %4076 = vst.msk [vmem:[#allocation2 + $0x90] sm:$0xff] %vm4057, %v4013
      %4077 = vst.msk [vmem:[#allocation2 + $0x98] sm:$0xff] %vm4057, %v4014
      %4078 = vst.msk [vmem:[#allocation2 + $0xa0] sm:$0xff] %vm4057, %v4015
      %4079 = vst.msk [vmem:[#allocation2 + $0xa8] sm:$0xff] %vm4057, %v4016
      %4080 = vst.msk [vmem:[#allocation2 + $0xb0] sm:$0xff] %vm4057, %v4017
      %4081 = vst.msk [vmem:[#allocation2 + $0xb8] sm:$0xff] %vm4057, %v4018
      %4082 = vst.msk [vmem:[#allocation2 + $0xc0] sm:$0xff] %vm4057, %v4019
      %4083 = vst.msk [vmem:[#allocation2 + $0xc8] sm:$0xff] %vm4057, %v4020
      %4084 = vst.msk [vmem:[#allocation2 + $0xd0] sm:$0xff] %vm4057, %v4021
      %4085 = vst.msk [vmem:[#allocation2 + $0xd8] sm:$0xff] %vm4057, %v4022
      %4086 = vst.msk [vmem:[#allocation2 + $0xe0] sm:$0xff] %vm4057, %v4023
      %4087 = vst.msk [vmem:[#allocation2 + $0xe8] sm:$0xff] %vm4057, %v4024
      %4088 = vst.msk [vmem:[#allocation2 + $0xf0] sm:$0xff] %vm4057, %v4025
      %4089 = vst.msk [vmem:[#allocation2 + $0xf8] sm:$0xff] %vm4057, %v4026
      %4090 = vst.msk [vmem:[#allocation2 + $0x100] sm:$0xff] %vm4057, %v4027
      %4091 = vst.msk [vmem:[#allocation2 + $0x108] sm:$0xff] %vm4057, %v4028
      %4092 = vst.msk [vmem:[#allocation2 + $0x110] sm:$0xff] %vm4057, %v4029
      %4093 = vst.msk [vmem:[#allocation2 + $0x118] sm:$0xff] %vm4057, %v4030
      %4094 = vst.msk [vmem:[#allocation2 + $0x120] sm:$0xff] %vm4057, %v4031
      %4095 = vst.msk [vmem:[#allocation2 + $0x128] sm:$0xff] %vm4057, %v4032
      %4096 = vst.msk [vmem:[#allocation2 + $0x130] sm:$0xff] %vm4057, %v4033
      %4097 = vst.msk [vmem:[#allocation2 + $0x138] sm:$0xff] %vm4057, %v4034
      %4098 = vst.msk [vmem:[#allocation2 + $0x140] sm:$0xff] %vm4057, %v4035
      %4099 = vst.msk [vmem:[#allocation2 + $0x148] sm:$0xff] %vm4057, %v4036
      %4100 = vst.msk [vmem:[#allocation2 + $0x150] sm:$0xff] %vm4057, %v4037
      %4101 = vst.msk [vmem:[#allocation2 + $0x158] sm:$0xff] %vm4057, %v4038
      %4102 = vst.msk [vmem:[#allocation2 + $0x160] sm:$0xff] %vm4057, %v4039
      %4103 = vst.msk [vmem:[#allocation2 + $0x168] sm:$0xff] %vm4057, %v4040
      %4104 = vst.msk [vmem:[#allocation2 + $0x170] sm:$0xff] %vm4057, %v4041
      %4105 = vst.msk [vmem:[#allocation2 + $0x178] sm:$0xff] %vm4057, %v4042
      %4106 = vst.msk [vmem:[#allocation2 + $0x180] sm:$0xff] %vm4057, %v4043
      %4107 = vst.msk [vmem:[#allocation2 + $0x188] sm:$0xff] %vm4057, %v4044
      %4108 = vst.msk [vmem:[#allocation2 + $0x190] sm:$0xff] %vm4057, %v4045
      %4109 = vst.msk [vmem:[#allocation2 + $0x198] sm:$0xff] %vm4057, %v4046
      %4110 = vst.msk [vmem:[#allocation2 + $0x1a0] sm:$0xff] %vm4057, %v4047
      %4111 = vst.msk [vmem:[#allocation2 + $0x1a8] sm:$0xff] %vm4057, %v4048
      %4112 = vst.msk [vmem:[#allocation2 + $0x1b0] sm:$0xff] %vm4057, %v4049
      %4113 = vst.msk [vmem:[#allocation2 + $0x1b8] sm:$0xff] %vm4057, %v4050
      %4114 = vst.msk [vmem:[#allocation2 + $0x1c0] sm:$0xff] %vm4057, %v4051
      %4115 = vst.msk [vmem:[#allocation2 + $0x1c8] sm:$0xff] %vm4057, %v4052
      %4116 = vst.msk [vmem:[#allocation2 + $0x1d0] sm:$0xff] %vm4057, %v4053
      %4117 = vst.msk [vmem:[#allocation2 + $0x1d8] sm:$0xff] %vm4057, %v4054
      %4118 = vst.msk [vmem:[#allocation2 + $0x1e0] sm:$0xff] %vm4057, %v4055
      %4119 = vst.msk [vmem:[#allocation2 + $0x1e8] sm:$0xff] %vm4057, %v4056
      %v4120 = vld [vmem:[#allocation2] ss:$4 sm:$0xff]
      %s4121 = scalar_lea.vmem [#allocation2], 32
      %v4122 = vld [vmem:[%s4121] ss:$4 sm:$0xff]
      %s4123 = scalar_lea.vmem [#allocation2], 64
      %v4124 = vld [vmem:[%s4123] ss:$4 sm:$0xff]
      %s4125 = scalar_lea.vmem [#allocation2], 96
      %v4126 = vld [vmem:[%s4125] ss:$4 sm:$0xff]
      %s4127 = scalar_lea.vmem [#allocation2], 128
      %v4128 = vld [vmem:[%s4127] ss:$4 sm:$0xff]
      %s4129 = scalar_lea.vmem [#allocation2], 160
      %v4130 = vld [vmem:[%s4129] ss:$4 sm:$0xff]
      %s4131 = scalar_lea.vmem [#allocation2], 192
      %v4132 = vld [vmem:[%s4131] ss:$4 sm:$0xff]
      %s4133 = scalar_lea.vmem [#allocation2], 224
      %v4134 = vld [vmem:[%s4133] ss:$4 sm:$0xff]
      %s4135 = scalar_lea.vmem [#allocation2], 256
      %v4136 = vld [vmem:[%s4135] ss:$4 sm:$0xff]
      %s4137 = scalar_lea.vmem [#allocation2], 288
      %v4138 = vld [vmem:[%s4137] ss:$4 sm:$0xff]
      %s4139 = scalar_lea.vmem [#allocation2], 320
      %v4140 = vld [vmem:[%s4139] ss:$4 sm:$0xff]
      %s4141 = scalar_lea.vmem [#allocation2], 352
      %v4142 = vld [vmem:[%s4141] ss:$4 sm:$0xff]
      %s4143 = scalar_lea.vmem [#allocation2], 384
      %v4144 = vld [vmem:[%s4143] ss:$4 sm:$0xff]
      %s4145 = scalar_lea.vmem [#allocation2], 416
      %v4146 = vld [vmem:[%s4145] ss:$4 sm:$0xff]
      %s4147 = scalar_lea.vmem [#allocation2], 448
      %v4148 = vld [vmem:[%s4147] ss:$4 sm:$0xff]
      %s4149 = scalar_lea.vmem [#allocation2], 480
      %v4150 = vld [vmem:[%s4149] ss:$4 sm:$0x3]
      %s4151 = scalar_lea.vmem [#allocation2], 1
      %v4152 = vld [vmem:[%s4151] ss:$4 sm:$0xff]
      %s4153 = scalar_lea.vmem [#allocation2], 33
      %v4154 = vld [vmem:[%s4153] ss:$4 sm:$0xff]
      %s4155 = scalar_lea.vmem [#allocation2], 65
      %v4156 = vld [vmem:[%s4155] ss:$4 sm:$0xff]
      %s4157 = scalar_lea.vmem [#allocation2], 97
      %v4158 = vld [vmem:[%s4157] ss:$4 sm:$0xff]
      %s4159 = scalar_lea.vmem [#allocation2], 129
      %v4160 = vld [vmem:[%s4159] ss:$4 sm:$0xff]
      %s4161 = scalar_lea.vmem [#allocation2], 161
      %v4162 = vld [vmem:[%s4161] ss:$4 sm:$0xff]
      %s4163 = scalar_lea.vmem [#allocation2], 193
      %v4164 = vld [vmem:[%s4163] ss:$4 sm:$0xff]
      %s4165 = scalar_lea.vmem [#allocation2], 225
      %v4166 = vld [vmem:[%s4165] ss:$4 sm:$0xff]
      %s4167 = scalar_lea.vmem [#allocation2], 257
      %v4168 = vld [vmem:[%s4167] ss:$4 sm:$0xff]
      %s4169 = scalar_lea.vmem [#allocation2], 289
      %v4170 = vld [vmem:[%s4169] ss:$4 sm:$0xff]
      %s4171 = scalar_lea.vmem [#allocation2], 321
      %v4172 = vld [vmem:[%s4171] ss:$4 sm:$0xff]
      %s4173 = scalar_lea.vmem [#allocation2], 353
      %v4174 = vld [vmem:[%s4173] ss:$4 sm:$0xff]
      %s4175 = scalar_lea.vmem [#allocation2], 385
      %v4176 = vld [vmem:[%s4175] ss:$4 sm:$0xff]
      %s4177 = scalar_lea.vmem [#allocation2], 417
      %v4178 = vld [vmem:[%s4177] ss:$4 sm:$0xff]
      %s4179 = scalar_lea.vmem [#allocation2], 449
      %v4180 = vld [vmem:[%s4179] ss:$4 sm:$0xff]
      %s4181 = scalar_lea.vmem [#allocation2], 481
      %v4182 = vld [vmem:[%s4181] ss:$4 sm:$0x3]
      %v4183 = vmax.f32 %v4120, %v4152
      %v4184 = vmax.f32 %v4122, %v4154
      %v4185 = vmax.f32 %v4124, %v4156
      %v4186 = vmax.f32 %v4126, %v4158
      %v4187 = vmax.f32 %v4128, %v4160
      %v4188 = vmax.f32 %v4130, %v4162
      %v4189 = vmax.f32 %v4132, %v4164
      %v4190 = vmax.f32 %v4134, %v4166
      %v4191 = vmax.f32 %v4136, %v4168
      %v4192 = vmax.f32 %v4138, %v4170
      %v4193 = vmax.f32 %v4140, %v4172
      %v4194 = vmax.f32 %v4142, %v4174
      %v4195 = vmax.f32 %v4144, %v4176
      %v4196 = vmax.f32 %v4146, %v4178
      %v4197 = vmax.f32 %v4148, %v4180
      %v4198 = vmax.f32 %v4150, %v4182
      %s4199 = scalar_lea.vmem [#allocation2], 2
      %v4200 = vld [vmem:[%s4199] ss:$4 sm:$0xff]
      %s4201 = scalar_lea.vmem [#allocation2], 34
      %v4202 = vld [vmem:[%s4201] ss:$4 sm:$0xff]
      %s4203 = scalar_lea.vmem [#allocation2], 66
      %v4204 = vld [vmem:[%s4203] ss:$4 sm:$0xff]
      %s4205 = scalar_lea.vmem [#allocation2], 98
      %v4206 = vld [vmem:[%s4205] ss:$4 sm:$0xff]
      %s4207 = scalar_lea.vmem [#allocation2], 130
      %v4208 = vld [vmem:[%s4207] ss:$4 sm:$0xff]
      %s4209 = scalar_lea.vmem [#allocation2], 162
      %v4210 = vld [vmem:[%s4209] ss:$4 sm:$0xff]
      %s4211 = scalar_lea.vmem [#allocation2], 194
      %v4212 = vld [vmem:[%s4211] ss:$4 sm:$0xff]
      %s4213 = scalar_lea.vmem [#allocation2], 226
      %v4214 = vld [vmem:[%s4213] ss:$4 sm:$0xff]
      %s4215 = scalar_lea.vmem [#allocation2], 258
      %v4216 = vld [vmem:[%s4215] ss:$4 sm:$0xff]
      %s4217 = scalar_lea.vmem [#allocation2], 290
      %v4218 = vld [vmem:[%s4217] ss:$4 sm:$0xff]
      %s4219 = scalar_lea.vmem [#allocation2], 322
      %v4220 = vld [vmem:[%s4219] ss:$4 sm:$0xff]
      %s4221 = scalar_lea.vmem [#allocation2], 354
      %v4222 = vld [vmem:[%s4221] ss:$4 sm:$0xff]
      %s4223 = scalar_lea.vmem [#allocation2], 386
      %v4224 = vld [vmem:[%s4223] ss:$4 sm:$0xff]
      %s4225 = scalar_lea.vmem [#allocation2], 418
      %v4226 = vld [vmem:[%s4225] ss:$4 sm:$0xff]
      %s4227 = scalar_lea.vmem [#allocation2], 450
      %v4228 = vld [vmem:[%s4227] ss:$4 sm:$0xff]
      %s4229 = scalar_lea.vmem [#allocation2], 482
      %v4230 = vld [vmem:[%s4229] ss:$4 sm:$0x3]
      %v4231 = vmax.f32 %v4183, %v4200
      %v4232 = vmax.f32 %v4184, %v4202
      %v4233 = vmax.f32 %v4185, %v4204
      %v4234 = vmax.f32 %v4186, %v4206
      %v4235 = vmax.f32 %v4187, %v4208
      %v4236 = vmax.f32 %v4188, %v4210
      %v4237 = vmax.f32 %v4189, %v4212
      %v4238 = vmax.f32 %v4190, %v4214
      %v4239 = vmax.f32 %v4191, %v4216
      %v4240 = vmax.f32 %v4192, %v4218
      %v4241 = vmax.f32 %v4193, %v4220
      %v4242 = vmax.f32 %v4194, %v4222
      %v4243 = vmax.f32 %v4195, %v4224
      %v4244 = vmax.f32 %v4196, %v4226
      %v4245 = vmax.f32 %v4197, %v4228
      %v4246 = vmax.f32 %v4198, %v4230
      %s4247 = scalar_lea.vmem [#allocation2], 3
      %v4248 = vld [vmem:[%s4247] ss:$4 sm:$0xff]
      %s4249 = scalar_lea.vmem [#allocation2], 35
      %v4250 = vld [vmem:[%s4249] ss:$4 sm:$0xff]
      %s4251 = scalar_lea.vmem [#allocation2], 67
      %v4252 = vld [vmem:[%s4251] ss:$4 sm:$0xff]
      %s4253 = scalar_lea.vmem [#allocation2], 99
      %v4254 = vld [vmem:[%s4253] ss:$4 sm:$0xff]
      %s4255 = scalar_lea.vmem [#allocation2], 131
      %v4256 = vld [vmem:[%s4255] ss:$4 sm:$0xff]
      %s4257 = scalar_lea.vmem [#allocation2], 163
      %v4258 = vld [vmem:[%s4257] ss:$4 sm:$0xff]
      %s4259 = scalar_lea.vmem [#allocation2], 195
      %v4260 = vld [vmem:[%s4259] ss:$4 sm:$0xff]
      %s4261 = scalar_lea.vmem [#allocation2], 227
      %v4262 = vld [vmem:[%s4261] ss:$4 sm:$0xff]
      %s4263 = scalar_lea.vmem [#allocation2], 259
      %v4264 = vld [vmem:[%s4263] ss:$4 sm:$0xff]
      %s4265 = scalar_lea.vmem [#allocation2], 291
      %v4266 = vld [vmem:[%s4265] ss:$4 sm:$0xff]
      %s4267 = scalar_lea.vmem [#allocation2], 323
      %v4268 = vld [vmem:[%s4267] ss:$4 sm:$0xff]
      %s4269 = scalar_lea.vmem [#allocation2], 355
      %v4270 = vld [vmem:[%s4269] ss:$4 sm:$0xff]
      %s4271 = scalar_lea.vmem [#allocation2], 387
      %v4272 = vld [vmem:[%s4271] ss:$4 sm:$0xff]
      %s4273 = scalar_lea.vmem [#allocation2], 419
      %v4274 = vld [vmem:[%s4273] ss:$4 sm:$0xff]
      %s4275 = scalar_lea.vmem [#allocation2], 451
      %v4276 = vld [vmem:[%s4275] ss:$4 sm:$0xff]
      %s4277 = scalar_lea.vmem [#allocation2], 483
      %v4278 = vld [vmem:[%s4277] ss:$4 sm:$0x3]
      %v4279 = vmax.f32 %v4231, %v4248
      %v4280 = vmax.f32 %v4232, %v4250
      %v4281 = vmax.f32 %v4233, %v4252
      %v4282 = vmax.f32 %v4234, %v4254
      %v4283 = vmax.f32 %v4235, %v4256
      %v4284 = vmax.f32 %v4236, %v4258
      %v4285 = vmax.f32 %v4237, %v4260
      %v4286 = vmax.f32 %v4238, %v4262
      %v4287 = vmax.f32 %v4239, %v4264
      %v4288 = vmax.f32 %v4240, %v4266
      %v4289 = vmax.f32 %v4241, %v4268
      %v4290 = vmax.f32 %v4242, %v4270
      %v4291 = vmax.f32 %v4243, %v4272
      %v4292 = vmax.f32 %v4244, %v4274
      %v4293 = vmax.f32 %v4245, %v4276
      %v4294 = vmax.f32 %v4246, %v4278
      %v4295 = vld [vmem:[%s4] sm:$0xff]
      %v4296 = vld [vmem:[%s4 + $0x8] sm:$0xff]
      %v4297 = vld [vmem:[%s4 + $0x10] sm:$0xff]
      %v4298 = vld [vmem:[%s4 + $0x18] sm:$0xff]
      %s4299 = scalar_lea.vmem [#allocation2], 4
      %v4300 = vld [vmem:[%s4299] ss:$4 sm:$0xff]
      %s4301 = scalar_lea.vmem [#allocation2], 36
      %v4302 = vld [vmem:[%s4301] ss:$4 sm:$0xff]
      %s4303 = scalar_lea.vmem [#allocation2], 68
      %v4304 = vld [vmem:[%s4303] ss:$4 sm:$0xff]
      %s4305 = scalar_lea.vmem [#allocation2], 100
      %v4306 = vld [vmem:[%s4305] ss:$4 sm:$0xff]
      %s4307 = scalar_lea.vmem [#allocation2], 132
      %v4308 = vld [vmem:[%s4307] ss:$4 sm:$0xff]
      %s4309 = scalar_lea.vmem [#allocation2], 164
      %v4310 = vld [vmem:[%s4309] ss:$4 sm:$0xff]
      %s4311 = scalar_lea.vmem [#allocation2], 196
      %v4312 = vld [vmem:[%s4311] ss:$4 sm:$0xff]
      %s4313 = scalar_lea.vmem [#allocation2], 228
      %v4314 = vld [vmem:[%s4313] ss:$4 sm:$0xff]
      %s4315 = scalar_lea.vmem [#allocation2], 260
      %v4316 = vld [vmem:[%s4315] ss:$4 sm:$0xff]
      %s4317 = scalar_lea.vmem [#allocation2], 292
      %v4318 = vld [vmem:[%s4317] ss:$4 sm:$0xff]
      %s4319 = scalar_lea.vmem [#allocation2], 324
      %v4320 = vld [vmem:[%s4319] ss:$4 sm:$0xff]
      %s4321 = scalar_lea.vmem [#allocation2], 356
      %v4322 = vld [vmem:[%s4321] ss:$4 sm:$0xff]
      %s4323 = scalar_lea.vmem [#allocation2], 388
      %v4324 = vld [vmem:[%s4323] ss:$4 sm:$0xff]
      %s4325 = scalar_lea.vmem [#allocation2], 420
      %v4326 = vld [vmem:[%s4325] ss:$4 sm:$0xff]
      %s4327 = scalar_lea.vmem [#allocation2], 452
      %v4328 = vld [vmem:[%s4327] ss:$4 sm:$0xff]
      %s4329 = scalar_lea.vmem [#allocation2], 484
      %v4330 = vld [vmem:[%s4329] ss:$4 sm:$0x3]
      %s4331 = scalar_lea.vmem [#allocation2], 5
      %v4332 = vld [vmem:[%s4331] ss:$4 sm:$0xff]
      %s4333 = scalar_lea.vmem [#allocation2], 37
      %v4334 = vld [vmem:[%s4333] ss:$4 sm:$0xff]
      %s4335 = scalar_lea.vmem [#allocation2], 69
      %v4336 = vld [vmem:[%s4335] ss:$4 sm:$0xff]
      %s4337 = scalar_lea.vmem [#allocation2], 101
      %v4338 = vld [vmem:[%s4337] ss:$4 sm:$0xff]
      %s4339 = scalar_lea.vmem [#allocation2], 133
      %v4340 = vld [vmem:[%s4339] ss:$4 sm:$0xff]
      %s4341 = scalar_lea.vmem [#allocation2], 165
      %v4342 = vld [vmem:[%s4341] ss:$4 sm:$0xff]
      %s4343 = scalar_lea.vmem [#allocation2], 197
      %v4344 = vld [vmem:[%s4343] ss:$4 sm:$0xff]
      %s4345 = scalar_lea.vmem [#allocation2], 229
      %v4346 = vld [vmem:[%s4345] ss:$4 sm:$0xff]
      %s4347 = scalar_lea.vmem [#allocation2], 261
      %v4348 = vld [vmem:[%s4347] ss:$4 sm:$0xff]
      %s4349 = scalar_lea.vmem [#allocation2], 293
      %v4350 = vld [vmem:[%s4349] ss:$4 sm:$0xff]
      %s4351 = scalar_lea.vmem [#allocation2], 325
      %v4352 = vld [vmem:[%s4351] ss:$4 sm:$0xff]
      %s4353 = scalar_lea.vmem [#allocation2], 357
      %v4354 = vld [vmem:[%s4353] ss:$4 sm:$0xff]
      %s4355 = scalar_lea.vmem [#allocation2], 389
      %v4356 = vld [vmem:[%s4355] ss:$4 sm:$0xff]
      %s4357 = scalar_lea.vmem [#allocation2], 421
      %v4358 = vld [vmem:[%s4357] ss:$4 sm:$0xff]
      %s4359 = scalar_lea.vmem [#allocation2], 453
      %v4360 = vld [vmem:[%s4359] ss:$4 sm:$0xff]
      %s4361 = scalar_lea.vmem [#allocation2], 485
      %v4362 = vld [vmem:[%s4361] ss:$4 sm:$0x3]
      %v4363 = vmax.f32 %v4300, %v4332
      %v4364 = vmax.f32 %v4302, %v4334
      %v4365 = vmax.f32 %v4304, %v4336
      %v4366 = vmax.f32 %v4306, %v4338
      %v4367 = vmax.f32 %v4308, %v4340
      %v4368 = vmax.f32 %v4310, %v4342
      %v4369 = vmax.f32 %v4312, %v4344
      %v4370 = vmax.f32 %v4314, %v4346
      %v4371 = vmax.f32 %v4316, %v4348
      %v4372 = vmax.f32 %v4318, %v4350
      %v4373 = vmax.f32 %v4320, %v4352
      %v4374 = vmax.f32 %v4322, %v4354
      %v4375 = vmax.f32 %v4324, %v4356
      %v4376 = vmax.f32 %v4326, %v4358
      %v4377 = vmax.f32 %v4328, %v4360
      %v4378 = vmax.f32 %v4330, %v4362
      %s4379 = scalar_lea.vmem [#allocation2], 6
      %v4380 = vld [vmem:[%s4379] ss:$4 sm:$0xff]
      %s4381 = scalar_lea.vmem [#allocation2], 38
      %v4382 = vld [vmem:[%s4381] ss:$4 sm:$0xff]
      %s4383 = scalar_lea.vmem [#allocation2], 70
      %v4384 = vld [vmem:[%s4383] ss:$4 sm:$0xff]
      %s4385 = scalar_lea.vmem [#allocation2], 102
      %v4386 = vld [vmem:[%s4385] ss:$4 sm:$0xff]
      %s4387 = scalar_lea.vmem [#allocation2], 134
      %v4388 = vld [vmem:[%s4387] ss:$4 sm:$0xff]
      %s4389 = scalar_lea.vmem [#allocation2], 166
      %v4390 = vld [vmem:[%s4389] ss:$4 sm:$0xff]
      %s4391 = scalar_lea.vmem [#allocation2], 198
      %v4392 = vld [vmem:[%s4391] ss:$4 sm:$0xff]
      %s4393 = scalar_lea.vmem [#allocation2], 230
      %v4394 = vld [vmem:[%s4393] ss:$4 sm:$0xff]
      %s4395 = scalar_lea.vmem [#allocation2], 262
      %v4396 = vld [vmem:[%s4395] ss:$4 sm:$0xff]
      %s4397 = scalar_lea.vmem [#allocation2], 294
      %v4398 = vld [vmem:[%s4397] ss:$4 sm:$0xff]
      %s4399 = scalar_lea.vmem [#allocation2], 326
      %v4400 = vld [vmem:[%s4399] ss:$4 sm:$0xff]
      %s4401 = scalar_lea.vmem [#allocation2], 358
      %v4402 = vld [vmem:[%s4401] ss:$4 sm:$0xff]
      %s4403 = scalar_lea.vmem [#allocation2], 390
      %v4404 = vld [vmem:[%s4403] ss:$4 sm:$0xff]
      %s4405 = scalar_lea.vmem [#allocation2], 422
      %v4406 = vld [vmem:[%s4405] ss:$4 sm:$0xff]
      %s4407 = scalar_lea.vmem [#allocation2], 454
      %v4408 = vld [vmem:[%s4407] ss:$4 sm:$0xff]
      %s4409 = scalar_lea.vmem [#allocation2], 486
      %v4410 = vld [vmem:[%s4409] ss:$4 sm:$0x3]
      %v4411 = vmax.f32 %v4363, %v4380
      %v4412 = vmax.f32 %v4364, %v4382
      %v4413 = vmax.f32 %v4365, %v4384
      %v4414 = vmax.f32 %v4366, %v4386
      %v4415 = vmax.f32 %v4367, %v4388
      %v4416 = vmax.f32 %v4368, %v4390
      %v4417 = vmax.f32 %v4369, %v4392
      %v4418 = vmax.f32 %v4370, %v4394
      %v4419 = vmax.f32 %v4371, %v4396
      %v4420 = vmax.f32 %v4372, %v4398
      %v4421 = vmax.f32 %v4373, %v4400
      %v4422 = vmax.f32 %v4374, %v4402
      %v4423 = vmax.f32 %v4375, %v4404
      %v4424 = vmax.f32 %v4376, %v4406
      %v4425 = vmax.f32 %v4377, %v4408
      %v4426 = vmax.f32 %v4378, %v4410
      %s4427 = scalar_lea.vmem [#allocation2], 7
      %v4428 = vld [vmem:[%s4427] ss:$4 sm:$0xff]
      %s4429 = scalar_lea.vmem [#allocation2], 39
      %v4430 = vld [vmem:[%s4429] ss:$4 sm:$0xff]
      %s4431 = scalar_lea.vmem [#allocation2], 71
      %v4432 = vld [vmem:[%s4431] ss:$4 sm:$0xff]
      %s4433 = scalar_lea.vmem [#allocation2], 103
      %v4434 = vld [vmem:[%s4433] ss:$4 sm:$0xff]
      %s4435 = scalar_lea.vmem [#allocation2], 135
      %v4436 = vld [vmem:[%s4435] ss:$4 sm:$0xff]
      %s4437 = scalar_lea.vmem [#allocation2], 167
      %v4438 = vld [vmem:[%s4437] ss:$4 sm:$0xff]
      %s4439 = scalar_lea.vmem [#allocation2], 199
      %v4440 = vld [vmem:[%s4439] ss:$4 sm:$0xff]
      %s4441 = scalar_lea.vmem [#allocation2], 231
      %v4442 = vld [vmem:[%s4441] ss:$4 sm:$0xff]
      %s4443 = scalar_lea.vmem [#allocation2], 263
      %v4444 = vld [vmem:[%s4443] ss:$4 sm:$0xff]
      %s4445 = scalar_lea.vmem [#allocation2], 295
      %v4446 = vld [vmem:[%s4445] ss:$4 sm:$0xff]
      %s4447 = scalar_lea.vmem [#allocation2], 327
      %v4448 = vld [vmem:[%s4447] ss:$4 sm:$0xff]
      %s4449 = scalar_lea.vmem [#allocation2], 359
      %v4450 = vld [vmem:[%s4449] ss:$4 sm:$0xff]
      %s4451 = scalar_lea.vmem [#allocation2], 391
      %v4452 = vld [vmem:[%s4451] ss:$4 sm:$0xff]
      %s4453 = scalar_lea.vmem [#allocation2], 423
      %v4454 = vld [vmem:[%s4453] ss:$4 sm:$0xff]
      %s4455 = scalar_lea.vmem [#allocation2], 455
      %v4456 = vld [vmem:[%s4455] ss:$4 sm:$0xff]
      %s4457 = scalar_lea.vmem [#allocation2], 487
      %v4458 = vld [vmem:[%s4457] ss:$4 sm:$0x3]
      %v4459 = vmax.f32 %v4411, %v4428
      %v4460 = vmax.f32 %v4412, %v4430
      %v4461 = vmax.f32 %v4413, %v4432
      %v4462 = vmax.f32 %v4414, %v4434
      %v4463 = vmax.f32 %v4415, %v4436
      %v4464 = vmax.f32 %v4416, %v4438
      %v4465 = vmax.f32 %v4417, %v4440
      %v4466 = vmax.f32 %v4418, %v4442
      %v4467 = vmax.f32 %v4419, %v4444
      %v4468 = vmax.f32 %v4420, %v4446
      %v4469 = vmax.f32 %v4421, %v4448
      %v4470 = vmax.f32 %v4422, %v4450
      %v4471 = vmax.f32 %v4423, %v4452
      %v4472 = vmax.f32 %v4424, %v4454
      %v4473 = vmax.f32 %v4425, %v4456
      %v4474 = vmax.f32 %v4426, %v4458
      %v4475 = vld [vmem:[%s4 + $0x20] sm:$0xff]
      %v4476 = vld [vmem:[%s4 + $0x28] sm:$0xff]
      %v4477 = vld [vmem:[%s4 + $0x30] sm:$0xff]
      %v4478 = vld [vmem:[%s4 + $0x38] sm:$0xff]
      %v4480 = vsel %vm4057, %v4459, 0
      %v4483 = vsel %vm4057, %v4460, 0
      %v4486 = vsel %vm4057, %v4461, 0
      %v4489 = vsel %vm4057, %v4462, 0
      %v4492 = vsel %vm4057, %v4463, 0
      %v4495 = vsel %vm4057, %v4464, 0
      %v4498 = vsel %vm4057, %v4465, 0
      %v4501 = vsel %vm4057, %v4466, 0
      %v4504 = vsel %vm4057, %v4467, 0
      %v4507 = vsel %vm4057, %v4468, 0
      %v4510 = vsel %vm4057, %v4469, 0
      %v4513 = vsel %vm4057, %v4470, 0
      %v4516 = vsel %vm4057, %v4471, 0
      %v4519 = vsel %vm4057, %v4472, 0
      %v4522 = vsel %vm4057, %v4473, 0
      %v4525 = vsel %vm4057, %v4474, 0
      %4527 = vmatprep.subr.mxu0 0.0
      %4528 = vmatpush1.msra.mxu0 %v4475
      %4529 = vmatprep.subr.mxu0 0.0
      %4530 = vmatpush1.msra.mxu0 %v4476
      %4531 = vmatprep.subr.mxu0 0.0
      %4532 = vmatpush1.msra.mxu0 %v4477
      %4533 = vmatprep.subr.mxu0 0.0
      %4534 = vmatpush1.msra.mxu0 %v4478
      %4535 = vmatprep.subr.mxu0 0.0
      %4536 = vmatpush1.msra.mxu0 0.0
      %4537 = vmatprep.subr.mxu0 0.0
      %4538 = vmatpush1.msra.mxu0 0.0
      %4539 = vmatprep.subr.mxu0 0.0
      %4540 = vmatpush1.msra.mxu0 0.0
      %4541 = vmatprep.subr.mxu0 0.0
      %4542 = vmatpush1.msra.mxu0 0.0
      %4543 = vmatprep.subr.mxu0 0.0
      %4544 = vmatpush1.msra.mxu0 0.0
      %4545 = vmatprep.subr.mxu0 0.0
      %4546 = vmatpush1.msra.mxu0 0.0
      %4547 = vmatprep.subr.mxu0 0.0
      %4548 = vmatpush1.msra.mxu0 0.0
      %4549 = vmatprep.subr.mxu0 0.0
      %4550 = vmatpush1.msra.mxu0 0.0
      %4551 = vmatprep.subr.mxu0 0.0
      %4552 = vmatpush1.msra.mxu0 0.0
      %4553 = vmatprep.subr.mxu0 0.0
      %4554 = vmatpush1.msra.mxu0 0.0
      %4555 = vmatprep.subr.mxu0 0.0
      %4556 = vmatpush1.msra.mxu0 0.0
      %4557 = vmatprep.subr.mxu0 0.0
      %4558 = vmatpush1.msra.mxu0 0.0
      %4559 = vmatprep.subr.mxu0 0.0
      %4560 = vmatpush1.msra.mxu0 0.0
      %4561 = vmatprep.subr.mxu0 0.0
      %4562 = vmatpush1.msra.mxu0 0.0
      %4563 = vmatprep.subr.mxu0 0.0
      %4564 = vmatpush1.msra.mxu0 0.0
      %4565 = vmatprep.subr.mxu0 0.0
      %4566 = vmatpush1.msra.mxu0 0.0
      %4567 = vmatprep.subr.mxu0 0.0
      %4568 = vmatpush1.msra.mxu0 0.0
      %4569 = vmatprep.subr.mxu0 0.0
      %4570 = vmatpush1.msra.mxu0 0.0
      %4571 = vmatprep.subr.mxu0 0.0
      %4572 = vmatpush1.msra.mxu0 0.0
      %4573 = vmatprep.subr.mxu0 0.0
      %4574 = vmatpush1.msra.mxu0 0.0
      %4575 = vmatprep.subr.mxu0 0.0
      %4576 = vmatpush1.msra.mxu0 0.0
      %4577 = vmatprep.subr.mxu0 0.0
      %4578 = vmatpush1.msra.mxu0 0.0
      %4579 = vmatprep.subr.mxu0 0.0
      %4580 = vmatpush1.msra.mxu0 0.0
      %4581 = vmatprep.subr.mxu0 0.0
      %4582 = vmatpush1.msra.mxu0 0.0
      %4583 = vmatprep.subr.mxu0 0.0
      %4584 = vmatpush1.msra.mxu0 0.0
      %4585 = vmatprep.subr.mxu0 0.0
      %4586 = vmatpush1.msra.mxu0 0.0
      %4587 = vmatprep.subr.mxu0 0.0
      %4588 = vmatpush1.msra.mxu0 0.0
      %4589 = vmatprep.subr.mxu0 0.0
      %4590 = vmatpush1.msra.mxu0 0.0
      %4591 = vmatprep.mubr.f32.mxu0 0.0
      %4592 = vmatmul.mubr.f32.gmra.mrb[0].mxu0 %v4480
      %v4593 = vpop.f32.mrb[0].mxu0
      %v4594 = vadd.f32 0.0, %v4593
      %v4595 = vpop.f32.mrb[0].mxu0
      %4596 = vmatprep.mubr.f32.mxu0 0.0
      %4597 = vmatmul.mubr.f32.gmra.mrb[0].mxu0 %v4483
      %v4598 = vpop.f32.mrb[0].mxu0
      %v4599 = vadd.f32 0.0, %v4598
      %v4600 = vpop.f32.mrb[0].mxu0
      %4601 = vmatprep.mubr.f32.mxu0 0.0
      %4602 = vmatmul.mubr.f32.gmra.mrb[0].mxu0 %v4486
      %v4603 = vpop.f32.mrb[0].mxu0
      %v4604 = vadd.f32 0.0, %v4603
      %v4605 = vpop.f32.mrb[0].mxu0
      %4606 = vmatprep.mubr.f32.mxu0 0.0
      %4607 = vmatmul.mubr.f32.gmra.mrb[0].mxu0 %v4489
      %v4608 = vpop.f32.mrb[0].mxu0
      %v4609 = vadd.f32 0.0, %v4608
      %v4610 = vpop.f32.mrb[0].mxu0
      %4611 = vmatprep.mubr.f32.mxu0 0.0
      %4612 = vmatmul.mubr.f32.gmra.mrb[0].mxu0 %v4492
      %v4613 = vpop.f32.mrb[0].mxu0
      %v4614 = vadd.f32 0.0, %v4613
      %v4615 = vpop.f32.mrb[0].mxu0
      %4616 = vmatprep.mubr.f32.mxu0 0.0
      %4617 = vmatmul.mubr.f32.gmra.mrb[0].mxu0 %v4495
      %v4618 = vpop.f32.mrb[0].mxu0
      %v4619 = vadd.f32 0.0, %v4618
      %v4620 = vpop.f32.mrb[0].mxu0
      %4621 = vmatprep.mubr.f32.mxu0 0.0
      %4622 = vmatmul.mubr.f32.gmra.mrb[0].mxu0 %v4498
      %v4623 = vpop.f32.mrb[0].mxu0
      %v4624 = vadd.f32 0.0, %v4623
      %v4625 = vpop.f32.mrb[0].mxu0
      %4626 = vmatprep.mubr.f32.mxu0 0.0
      %4627 = vmatmul.mubr.f32.gmra.mrb[0].mxu0 %v4501
      %v4628 = vpop.f32.mrb[0].mxu0
      %v4629 = vadd.f32 0.0, %v4628
      %v4630 = vpop.f32.mrb[0].mxu0
      %4631 = vmatprep.mubr.f32.mxu0 0.0
      %4632 = vmatmul.mubr.f32.gmra.mrb[0].mxu0 %v4504
      %v4633 = vpop.f32.mrb[0].mxu0
      %v4634 = vadd.f32 0.0, %v4633
      %v4635 = vpop.f32.mrb[0].mxu0
      %4636 = vmatprep.mubr.f32.mxu0 0.0
      %4637 = vmatmul.mubr.f32.gmra.mrb[0].mxu0 %v4507
      %v4638 = vpop.f32.mrb[0].mxu0
      %v4639 = vadd.f32 0.0, %v4638
      %v4640 = vpop.f32.mrb[0].mxu0
      %4641 = vmatprep.mubr.f32.mxu0 0.0
      %4642 = vmatmul.mubr.f32.gmra.mrb[0].mxu0 %v4510
      %v4643 = vpop.f32.mrb[0].mxu0
      %v4644 = vadd.f32 0.0, %v4643
      %v4645 = vpop.f32.mrb[0].mxu0
      %4646 = vmatprep.mubr.f32.mxu0 0.0
      %4647 = vmatmul.mubr.f32.gmra.mrb[0].mxu0 %v4513
      %v4648 = vpop.f32.mrb[0].mxu0
      %v4649 = vadd.f32 0.0, %v4648
      %v4650 = vpop.f32.mrb[0].mxu0
      %4651 = vmatprep.mubr.f32.mxu0 0.0
      %4652 = vmatmul.mubr.f32.gmra.mrb[0].mxu0 %v4516
      %v4653 = vpop.f32.mrb[0].mxu0
      %v4654 = vadd.f32 0.0, %v4653
      %v4655 = vpop.f32.mrb[0].mxu0
      %4656 = vmatprep.mubr.f32.mxu0 0.0
      %4657 = vmatmul.mubr.f32.gmra.mrb[0].mxu0 %v4519
      %v4658 = vpop.f32.mrb[0].mxu0
      %v4659 = vadd.f32 0.0, %v4658
      %v4660 = vpop.f32.mrb[0].mxu0
      %4661 = vmatprep.mubr.f32.mxu0 0.0
      %4662 = vmatmul.mubr.f32.gmra.mrb[0].mxu0 %v4522
      %v4663 = vpop.f32.mrb[0].mxu0
      %v4664 = vadd.f32 0.0, %v4663
      %v4665 = vpop.f32.mrb[0].mxu0
      %4666 = vmatprep.mubr.f32.mxu0 0.0
      %4667 = vmatmul.mubr.f32.gmra.mrb[0].mxu0 %v4525
      %v4668 = vpop.f32.mrb[0].mxu0
      %v4669 = vadd.f32 0.0, %v4668
      %v4670 = vpop.f32.mrb[0].mxu0
      %4671 = vdwg.mxu0
      %v4673 = vsel %vm4057, %v4279, 0
      %v4676 = vsel %vm4057, %v4280, 0
      %v4679 = vsel %vm4057, %v4281, 0
      %v4682 = vsel %vm4057, %v4282, 0
      %v4685 = vsel %vm4057, %v4283, 0
      %v4688 = vsel %vm4057, %v4284, 0
      %v4691 = vsel %vm4057, %v4285, 0
      %v4694 = vsel %vm4057, %v4286, 0
      %v4697 = vsel %vm4057, %v4287, 0
      %v4700 = vsel %vm4057, %v4288, 0
      %v4703 = vsel %vm4057, %v4289, 0
      %v4706 = vsel %vm4057, %v4290, 0
      %v4709 = vsel %vm4057, %v4291, 0
      %v4712 = vsel %vm4057, %v4292, 0
      %v4715 = vsel %vm4057, %v4293, 0
      %v4718 = vsel %vm4057, %v4294, 0
      %4720 = vmatprep.subr.mxu0 0.0
      %4721 = vmatpush1.msra.mxu0 %v4295
      %4722 = vmatprep.subr.mxu0 0.0
      %4723 = vmatpush1.msra.mxu0 %v4296
      %4724 = vmatprep.subr.mxu0 0.0
      %4725 = vmatpush1.msra.mxu0 %v4297
      %4726 = vmatprep.subr.mxu0 0.0
      %4727 = vmatpush1.msra.mxu0 %v4298
      %4728 = vmatprep.subr.mxu0 0.0
      %4729 = vmatpush1.msra.mxu0 0.0
      %4730 = vmatprep.subr.mxu0 0.0
      %4731 = vmatpush1.msra.mxu0 0.0
      %4732 = vmatprep.subr.mxu0 0.0
      %4733 = vmatpush1.msra.mxu0 0.0
      %4734 = vmatprep.subr.mxu0 0.0
      %4735 = vmatpush1.msra.mxu0 0.0
      %4736 = vmatprep.subr.mxu0 0.0
      %4737 = vmatpush1.msra.mxu0 0.0
      %4738 = vmatprep.subr.mxu0 0.0
      %4739 = vmatpush1.msra.mxu0 0.0
      %4740 = vmatprep.subr.mxu0 0.0
      %4741 = vmatpush1.msra.mxu0 0.0
      %4742 = vmatprep.subr.mxu0 0.0
      %4743 = vmatpush1.msra.mxu0 0.0
      %4744 = vmatprep.subr.mxu0 0.0
      %4745 = vmatpush1.msra.mxu0 0.0
      %4746 = vmatprep.subr.mxu0 0.0
      %4747 = vmatpush1.msra.mxu0 0.0
      %4748 = vmatprep.subr.mxu0 0.0
      %4749 = vmatpush1.msra.mxu0 0.0
      %4750 = vmatprep.subr.mxu0 0.0
      %4751 = vmatpush1.msra.mxu0 0.0
      %4752 = vmatprep.subr.mxu0 0.0
      %4753 = vmatpush1.msra.mxu0 0.0
      %4754 = vmatprep.subr.mxu0 0.0
      %4755 = vmatpush1.msra.mxu0 0.0
      %4756 = vmatprep.subr.mxu0 0.0
      %4757 = vmatpush1.msra.mxu0 0.0
      %4758 = vmatprep.subr.mxu0 0.0
      %4759 = vmatpush1.msra.mxu0 0.0
      %4760 = vmatprep.subr.mxu0 0.0
      %4761 = vmatpush1.msra.mxu0 0.0
      %4762 = vmatprep.subr.mxu0 0.0
      %4763 = vmatpush1.msra.mxu0 0.0
      %4764 = vmatprep.subr.mxu0 0.0
      %4765 = vmatpush1.msra.mxu0 0.0
      %4766 = vmatprep.subr.mxu0 0.0
      %4767 = vmatpush1.msra.mxu0 0.0
      %4768 = vmatprep.subr.mxu0 0.0
      %4769 = vmatpush1.msra.mxu0 0.0
      %4770 = vmatprep.subr.mxu0 0.0
      %4771 = vmatpush1.msra.mxu0 0.0
      %4772 = vmatprep.subr.mxu0 0.0
      %4773 = vmatpush1.msra.mxu0 0.0
      %4774 = vmatprep.subr.mxu0 0.0
      %4775 = vmatpush1.msra.mxu0 0.0
      %4776 = vmatprep.subr.mxu0 0.0
      %4777 = vmatpush1.msra.mxu0 0.0
      %4778 = vmatprep.subr.mxu0 0.0
      %4779 = vmatpush1.msra.mxu0 0.0
      %4780 = vmatprep.subr.mxu0 0.0
      %4781 = vmatpush1.msra.mxu0 0.0
      %4782 = vmatprep.subr.mxu0 0.0
      %4783 = vmatpush1.msra.mxu0 0.0
      %4784 = vmatprep.mubr.f32.mxu0 0.0
      %4785 = vmatmul.mubr.f32.gmra.mrb[0].mxu0 %v4673
      %v4786 = vpop.f32.mrb[0].mxu0
      %v4787 = vadd.f32 %v4594, %v4786
      %v4788 = vpop.f32.mrb[0].mxu0
      %4789 = vmatprep.mubr.f32.mxu0 0.0
      %4790 = vmatmul.mubr.f32.gmra.mrb[0].mxu0 %v4676
      %v4791 = vpop.f32.mrb[0].mxu0
      %v4792 = vadd.f32 %v4599, %v4791
      %v4793 = vpop.f32.mrb[0].mxu0
      %4794 = vmatprep.mubr.f32.mxu0 0.0
      %4795 = vmatmul.mubr.f32.gmra.mrb[0].mxu0 %v4679
      %v4796 = vpop.f32.mrb[0].mxu0
      %v4797 = vadd.f32 %v4604, %v4796
      %v4798 = vpop.f32.mrb[0].mxu0
      %4799 = vmatprep.mubr.f32.mxu0 0.0
      %4800 = vmatmul.mubr.f32.gmra.mrb[0].mxu0 %v4682
      %v4801 = vpop.f32.mrb[0].mxu0
      %v4802 = vadd.f32 %v4609, %v4801
      %v4803 = vpop.f32.mrb[0].mxu0
      %4804 = vmatprep.mubr.f32.mxu0 0.0
      %4805 = vmatmul.mubr.f32.gmra.mrb[0].mxu0 %v4685
      %v4806 = vpop.f32.mrb[0].mxu0
      %v4807 = vadd.f32 %v4614, %v4806
      %v4808 = vpop.f32.mrb[0].mxu0
      %4809 = vmatprep.mubr.f32.mxu0 0.0
      %4810 = vmatmul.mubr.f32.gmra.mrb[0].mxu0 %v4688
      %v4811 = vpop.f32.mrb[0].mxu0
      %v4812 = vadd.f32 %v4619, %v4811
      %v4813 = vpop.f32.mrb[0].mxu0
      %4814 = vmatprep.mubr.f32.mxu0 0.0
      %4815 = vmatmul.mubr.f32.gmra.mrb[0].mxu0 %v4691
      %v4816 = vpop.f32.mrb[0].mxu0
      %v4817 = vadd.f32 %v4624, %v4816
      %v4818 = vpop.f32.mrb[0].mxu0
      %4819 = vmatprep.mubr.f32.mxu0 0.0
      %4820 = vmatmul.mubr.f32.gmra.mrb[0].mxu0 %v4694
      %v4821 = vpop.f32.mrb[0].mxu0
      %v4822 = vadd.f32 %v4629, %v4821
      %v4823 = vpop.f32.mrb[0].mxu0
      %4824 = vmatprep.mubr.f32.mxu0 0.0
      %4825 = vmatmul.mubr.f32.gmra.mrb[0].mxu0 %v4697
      %v4826 = vpop.f32.mrb[0].mxu0
      %v4827 = vadd.f32 %v4634, %v4826
      %v4828 = vpop.f32.mrb[0].mxu0
      %4829 = vmatprep.mubr.f32.mxu0 0.0
      %4830 = vmatmul.mubr.f32.gmra.mrb[0].mxu0 %v4700
      %v4831 = vpop.f32.mrb[0].mxu0
      %v4832 = vadd.f32 %v4639, %v4831
      %v4833 = vpop.f32.mrb[0].mxu0
      %4834 = vmatprep.mubr.f32.mxu0 0.0
      %4835 = vmatmul.mubr.f32.gmra.mrb[0].mxu0 %v4703
      %v4836 = vpop.f32.mrb[0].mxu0
      %v4837 = vadd.f32 %v4644, %v4836
      %v4838 = vpop.f32.mrb[0].mxu0
      %4839 = vmatprep.mubr.f32.mxu0 0.0
      %4840 = vmatmul.mubr.f32.gmra.mrb[0].mxu0 %v4706
      %v4841 = vpop.f32.mrb[0].mxu0
      %v4842 = vadd.f32 %v4649, %v4841
      %v4843 = vpop.f32.mrb[0].mxu0
      %4844 = vmatprep.mubr.f32.mxu0 0.0
      %4845 = vmatmul.mubr.f32.gmra.mrb[0].mxu0 %v4709
      %v4846 = vpop.f32.mrb[0].mxu0
      %v4847 = vadd.f32 %v4654, %v4846
      %v4848 = vpop.f32.mrb[0].mxu0
      %4849 = vmatprep.mubr.f32.mxu0 0.0
      %4850 = vmatmul.mubr.f32.gmra.mrb[0].mxu0 %v4712
      %v4851 = vpop.f32.mrb[0].mxu0
      %v4852 = vadd.f32 %v4659, %v4851
      %v4853 = vpop.f32.mrb[0].mxu0
      %4854 = vmatprep.mubr.f32.mxu0 0.0
      %4855 = vmatmul.mubr.f32.gmra.mrb[0].mxu0 %v4715
      %v4856 = vpop.f32.mrb[0].mxu0
      %v4857 = vadd.f32 %v4664, %v4856
      %v4858 = vpop.f32.mrb[0].mxu0
      %4859 = vmatprep.mubr.f32.mxu0 0.0
      %4860 = vmatmul.mubr.f32.gmra.mrb[0].mxu0 %v4718
      %v4861 = vpop.f32.mrb[0].mxu0
      %v4862 = vadd.f32 %v4669, %v4861
      %v4863 = vpop.f32.mrb[0].mxu0
      %4864 = vdwg.mxu0
      %s4865 = scalar_lea.vmem [#allocation2], 8
      %v4866 = vld [vmem:[%s4865] ss:$4 sm:$0xff]
      %s4867 = scalar_lea.vmem [#allocation2], 40
      %v4868 = vld [vmem:[%s4867] ss:$4 sm:$0xff]
      %s4869 = scalar_lea.vmem [#allocation2], 72
      %v4870 = vld [vmem:[%s4869] ss:$4 sm:$0xff]
      %s4871 = scalar_lea.vmem [#allocation2], 104
      %v4872 = vld [vmem:[%s4871] ss:$4 sm:$0xff]
      %s4873 = scalar_lea.vmem [#allocation2], 136
      %v4874 = vld [vmem:[%s4873] ss:$4 sm:$0xff]
      %s4875 = scalar_lea.vmem [#allocation2], 168
      %v4876 = vld [vmem:[%s4875] ss:$4 sm:$0xff]
      %s4877 = scalar_lea.vmem [#allocation2], 200
      %v4878 = vld [vmem:[%s4877] ss:$4 sm:$0xff]
      %s4879 = scalar_lea.vmem [#allocation2], 232
      %v4880 = vld [vmem:[%s4879] ss:$4 sm:$0xff]
      %s4881 = scalar_lea.vmem [#allocation2], 264
      %v4882 = vld [vmem:[%s4881] ss:$4 sm:$0xff]
      %s4883 = scalar_lea.vmem [#allocation2], 296
      %v4884 = vld [vmem:[%s4883] ss:$4 sm:$0xff]
      %s4885 = scalar_lea.vmem [#allocation2], 328
      %v4886 = vld [vmem:[%s4885] ss:$4 sm:$0xff]
      %s4887 = scalar_lea.vmem [#allocation2], 360
      %v4888 = vld [vmem:[%s4887] ss:$4 sm:$0xff]
      %s4889 = scalar_lea.vmem [#allocation2], 392
      %v4890 = vld [vmem:[%s4889] ss:$4 sm:$0xff]
      %s4891 = scalar_lea.vmem [#allocation2], 424
      %v4892 = vld [vmem:[%s4891] ss:$4 sm:$0xff]
      %s4893 = scalar_lea.vmem [#allocation2], 456
      %v4894 = vld [vmem:[%s4893] ss:$4 sm:$0xff]
      %s4895 = scalar_lea.vmem [#allocation2], 488
      %v4896 = vld [vmem:[%s4895] ss:$4 sm:$0x3]
      %s4897 = scalar_lea.vmem [#allocation2], 9
      %v4898 = vld [vmem:[%s4897] ss:$4 sm:$0xff]
      %s4899 = scalar_lea.vmem [#allocation2], 41
      %v4900 = vld [vmem:[%s4899] ss:$4 sm:$0xff]
      %s4901 = scalar_lea.vmem [#allocation2], 73
      %v4902 = vld [vmem:[%s4901] ss:$4 sm:$0xff]
      %s4903 = scalar_lea.vmem [#allocation2], 105
      %v4904 = vld [vmem:[%s4903] ss:$4 sm:$0xff]
      %s4905 = scalar_lea.vmem [#allocation2], 137
      %v4906 = vld [vmem:[%s4905] ss:$4 sm:$0xff]
      %s4907 = scalar_lea.vmem [#allocation2], 169
      %v4908 = vld [vmem:[%s4907] ss:$4 sm:$0xff]
      %s4909 = scalar_lea.vmem [#allocation2], 201
      %v4910 = vld [vmem:[%s4909] ss:$4 sm:$0xff]
      %s4911 = scalar_lea.vmem [#allocation2], 233
      %v4912 = vld [vmem:[%s4911] ss:$4 sm:$0xff]
      %s4913 = scalar_lea.vmem [#allocation2], 265
      %v4914 = vld [vmem:[%s4913] ss:$4 sm:$0xff]
      %s4915 = scalar_lea.vmem [#allocation2], 297
      %v4916 = vld [vmem:[%s4915] ss:$4 sm:$0xff]
      %s4917 = scalar_lea.vmem [#allocation2], 329
      %v4918 = vld [vmem:[%s4917] ss:$4 sm:$0xff]
      %s4919 = scalar_lea.vmem [#allocation2], 361
      %v4920 = vld [vmem:[%s4919] ss:$4 sm:$0xff]
      %s4921 = scalar_lea.vmem [#allocation2], 393
      %v4922 = vld [vmem:[%s4921] ss:$4 sm:$0xff]
      %s4923 = scalar_lea.vmem [#allocation2], 425
      %v4924 = vld [vmem:[%s4923] ss:$4 sm:$0xff]
      %s4925 = scalar_lea.vmem [#allocation2], 457
      %v4926 = vld [vmem:[%s4925] ss:$4 sm:$0xff]
      %s4927 = scalar_lea.vmem [#allocation2], 489
      %v4928 = vld [vmem:[%s4927] ss:$4 sm:$0x3]
      %v4929 = vmax.f32 %v4866, %v4898
      %v4930 = vmax.f32 %v4868, %v4900
      %v4931 = vmax.f32 %v4870, %v4902
      %v4932 = vmax.f32 %v4872, %v4904
      %v4933 = vmax.f32 %v4874, %v4906
      %v4934 = vmax.f32 %v4876, %v4908
      %v4935 = vmax.f32 %v4878, %v4910
      %v4936 = vmax.f32 %v4880, %v4912
      %v4937 = vmax.f32 %v4882, %v4914
      %v4938 = vmax.f32 %v4884, %v4916
      %v4939 = vmax.f32 %v4886, %v4918
      %v4940 = vmax.f32 %v4888, %v4920
      %v4941 = vmax.f32 %v4890, %v4922
      %v4942 = vmax.f32 %v4892, %v4924
      %v4943 = vmax.f32 %v4894, %v4926
      %v4944 = vmax.f32 %v4896, %v4928
      %s4945 = scalar_lea.vmem [#allocation2], 10
      %v4946 = vld [vmem:[%s4945] ss:$4 sm:$0xff]
      %s4947 = scalar_lea.vmem [#allocation2], 42
      %v4948 = vld [vmem:[%s4947] ss:$4 sm:$0xff]
      %s4949 = scalar_lea.vmem [#allocation2], 74
      %v4950 = vld [vmem:[%s4949] ss:$4 sm:$0xff]
      %s4951 = scalar_lea.vmem [#allocation2], 106
      %v4952 = vld [vmem:[%s4951] ss:$4 sm:$0xff]
      %s4953 = scalar_lea.vmem [#allocation2], 138
      %v4954 = vld [vmem:[%s4953] ss:$4 sm:$0xff]
      %s4955 = scalar_lea.vmem [#allocation2], 170
      %v4956 = vld [vmem:[%s4955] ss:$4 sm:$0xff]
      %s4957 = scalar_lea.vmem [#allocation2], 202
      %v4958 = vld [vmem:[%s4957] ss:$4 sm:$0xff]
      %s4959 = scalar_lea.vmem [#allocation2], 234
      %v4960 = vld [vmem:[%s4959] ss:$4 sm:$0xff]
      %s4961 = scalar_lea.vmem [#allocation2], 266
      %v4962 = vld [vmem:[%s4961] ss:$4 sm:$0xff]
      %s4963 = scalar_lea.vmem [#allocation2], 298
      %v4964 = vld [vmem:[%s4963] ss:$4 sm:$0xff]
      %s4965 = scalar_lea.vmem [#allocation2], 330
      %v4966 = vld [vmem:[%s4965] ss:$4 sm:$0xff]
      %s4967 = scalar_lea.vmem [#allocation2], 362
      %v4968 = vld [vmem:[%s4967] ss:$4 sm:$0xff]
      %s4969 = scalar_lea.vmem [#allocation2], 394
      %v4970 = vld [vmem:[%s4969] ss:$4 sm:$0xff]
      %s4971 = scalar_lea.vmem [#allocation2], 426
      %v4972 = vld [vmem:[%s4971] ss:$4 sm:$0xff]
      %s4973 = scalar_lea.vmem [#allocation2], 458
      %v4974 = vld [vmem:[%s4973] ss:$4 sm:$0xff]
      %s4975 = scalar_lea.vmem [#allocation2], 490
      %v4976 = vld [vmem:[%s4975] ss:$4 sm:$0x3]
      %v4977 = vmax.f32 %v4929, %v4946
      %v4978 = vmax.f32 %v4930, %v4948
      %v4979 = vmax.f32 %v4931, %v4950
      %v4980 = vmax.f32 %v4932, %v4952
      %v4981 = vmax.f32 %v4933, %v4954
      %v4982 = vmax.f32 %v4934, %v4956
      %v4983 = vmax.f32 %v4935, %v4958
      %v4984 = vmax.f32 %v4936, %v4960
      %v4985 = vmax.f32 %v4937, %v4962
      %v4986 = vmax.f32 %v4938, %v4964
      %v4987 = vmax.f32 %v4939, %v4966
      %v4988 = vmax.f32 %v4940, %v4968
      %v4989 = vmax.f32 %v4941, %v4970
      %v4990 = vmax.f32 %v4942, %v4972
      %v4991 = vmax.f32 %v4943, %v4974
      %v4992 = vmax.f32 %v4944, %v4976
      %s4993 = scalar_lea.vmem [#allocation2], 11
      %v4994 = vld [vmem:[%s4993] ss:$4 sm:$0xff]
      %s4995 = scalar_lea.vmem [#allocation2], 43
      %v4996 = vld [vmem:[%s4995] ss:$4 sm:$0xff]
      %s4997 = scalar_lea.vmem [#allocation2], 75
      %v4998 = vld [vmem:[%s4997] ss:$4 sm:$0xff]
      %s4999 = scalar_lea.vmem [#allocation2], 107
      %v5000 = vld [vmem:[%s4999] ss:$4 sm:$0xff]
      %s5001 = scalar_lea.vmem [#allocation2], 139
      %v5002 = vld [vmem:[%s5001] ss:$4 sm:$0xff]
      %s5003 = scalar_lea.vmem [#allocation2], 171
      %v5004 = vld [vmem:[%s5003] ss:$4 sm:$0xff]
      %s5005 = scalar_lea.vmem [#allocation2], 203
      %v5006 = vld [vmem:[%s5005] ss:$4 sm:$0xff]
      %s5007 = scalar_lea.vmem [#allocation2], 235
      %v5008 = vld [vmem:[%s5007] ss:$4 sm:$0xff]
      %s5009 = scalar_lea.vmem [#allocation2], 267
      %v5010 = vld [vmem:[%s5009] ss:$4 sm:$0xff]
      %s5011 = scalar_lea.vmem [#allocation2], 299
      %v5012 = vld [vmem:[%s5011] ss:$4 sm:$0xff]
      %s5013 = scalar_lea.vmem [#allocation2], 331
      %v5014 = vld [vmem:[%s5013] ss:$4 sm:$0xff]
      %s5015 = scalar_lea.vmem [#allocation2], 363
      %v5016 = vld [vmem:[%s5015] ss:$4 sm:$0xff]
      %s5017 = scalar_lea.vmem [#allocation2], 395
      %v5018 = vld [vmem:[%s5017] ss:$4 sm:$0xff]
      %s5019 = scalar_lea.vmem [#allocation2], 427
      %v5020 = vld [vmem:[%s5019] ss:$4 sm:$0xff]
      %s5021 = scalar_lea.vmem [#allocation2], 459
      %v5022 = vld [vmem:[%s5021] ss:$4 sm:$0xff]
      %s5023 = scalar_lea.vmem [#allocation2], 491
      %v5024 = vld [vmem:[%s5023] ss:$4 sm:$0x3]
      %v5025 = vmax.f32 %v4977, %v4994
      %v5026 = vmax.f32 %v4978, %v4996
      %v5027 = vmax.f32 %v4979, %v4998
      %v5028 = vmax.f32 %v4980, %v5000
      %v5029 = vmax.f32 %v4981, %v5002
      %v5030 = vmax.f32 %v4982, %v5004
      %v5031 = vmax.f32 %v4983, %v5006
      %v5032 = vmax.f32 %v4984, %v5008
      %v5033 = vmax.f32 %v4985, %v5010
      %v5034 = vmax.f32 %v4986, %v5012
      %v5035 = vmax.f32 %v4987, %v5014
      %v5036 = vmax.f32 %v4988, %v5016
      %v5037 = vmax.f32 %v4989, %v5018
      %v5038 = vmax.f32 %v4990, %v5020
      %v5039 = vmax.f32 %v4991, %v5022
      %v5040 = vmax.f32 %v4992, %v5024
      %v5041 = vld [vmem:[%s4 + $0x40] sm:$0xff]
      %v5042 = vld [vmem:[%s4 + $0x48] sm:$0xff]
      %v5043 = vld [vmem:[%s4 + $0x50] sm:$0xff]
      %v5044 = vld [vmem:[%s4 + $0x58] sm:$0xff]
      %v5046 = vsel %vm4057, %v5025, 0
      %v5049 = vsel %vm4057, %v5026, 0
      %v5052 = vsel %vm4057, %v5027, 0
      %v5055 = vsel %vm4057, %v5028, 0
      %v5058 = vsel %vm4057, %v5029, 0
      %v5061 = vsel %vm4057, %v5030, 0
      %v5064 = vsel %vm4057, %v5031, 0
      %v5067 = vsel %vm4057, %v5032, 0
      %v5070 = vsel %vm4057, %v5033, 0
      %v5073 = vsel %vm4057, %v5034, 0
      %v5076 = vsel %vm4057, %v5035, 0
      %v5079 = vsel %vm4057, %v5036, 0
      %v5082 = vsel %vm4057, %v5037, 0
      %v5085 = vsel %vm4057, %v5038, 0
      %v5088 = vsel %vm4057, %v5039, 0
      %v5091 = vsel %vm4057, %v5040, 0
      %5093 = vmatprep.subr.mxu0 0.0
      %5094 = vmatpush1.msra.mxu0 %v5041
      %5095 = vmatprep.subr.mxu0 0.0
      %5096 = vmatpush1.msra.mxu0 %v5042
      %5097 = vmatprep.subr.mxu0 0.0
      %5098 = vmatpush1.msra.mxu0 %v5043
      %5099 = vmatprep.subr.mxu0 0.0
      %5100 = vmatpush1.msra.mxu0 %v5044
      %5101 = vmatprep.subr.mxu0 0.0
      %5102 = vmatpush1.msra.mxu0 0.0
      %5103 = vmatprep.subr.mxu0 0.0
      %5104 = vmatpush1.msra.mxu0 0.0
      %5105 = vmatprep.subr.mxu0 0.0
      %5106 = vmatpush1.msra.mxu0 0.0
      %5107 = vmatprep.subr.mxu0 0.0
      %5108 = vmatpush1.msra.mxu0 0.0
      %5109 = vmatprep.subr.mxu0 0.0
      %5110 = vmatpush1.msra.mxu0 0.0
      %5111 = vmatprep.subr.mxu0 0.0
      %5112 = vmatpush1.msra.mxu0 0.0
      %5113 = vmatprep.subr.mxu0 0.0
      %5114 = vmatpush1.msra.mxu0 0.0
      %5115 = vmatprep.subr.mxu0 0.0
      %5116 = vmatpush1.msra.mxu0 0.0
      %5117 = vmatprep.subr.mxu0 0.0
      %5118 = vmatpush1.msra.mxu0 0.0
      %5119 = vmatprep.subr.mxu0 0.0
      %5120 = vmatpush1.msra.mxu0 0.0
      %5121 = vmatprep.subr.mxu0 0.0
      %5122 = vmatpush1.msra.mxu0 0.0
      %5123 = vmatprep.subr.mxu0 0.0
      %5124 = vmatpush1.msra.mxu0 0.0
      %5125 = vmatprep.subr.mxu0 0.0
      %5126 = vmatpush1.msra.mxu0 0.0
      %5127 = vmatprep.subr.mxu0 0.0
      %5128 = vmatpush1.msra.mxu0 0.0
      %5129 = vmatprep.subr.mxu0 0.0
      %5130 = vmatpush1.msra.mxu0 0.0
      %5131 = vmatprep.subr.mxu0 0.0
      %5132 = vmatpush1.msra.mxu0 0.0
      %5133 = vmatprep.subr.mxu0 0.0
      %5134 = vmatpush1.msra.mxu0 0.0
      %5135 = vmatprep.subr.mxu0 0.0
      %5136 = vmatpush1.msra.mxu0 0.0
      %5137 = vmatprep.subr.mxu0 0.0
      %5138 = vmatpush1.msra.mxu0 0.0
      %5139 = vmatprep.subr.mxu0 0.0
      %5140 = vmatpush1.msra.mxu0 0.0
      %5141 = vmatprep.subr.mxu0 0.0
      %5142 = vmatpush1.msra.mxu0 0.0
      %5143 = vmatprep.subr.mxu0 0.0
      %5144 = vmatpush1.msra.mxu0 0.0
      %5145 = vmatprep.subr.mxu0 0.0
      %5146 = vmatpush1.msra.mxu0 0.0
      %5147 = vmatprep.subr.mxu0 0.0
      %5148 = vmatpush1.msra.mxu0 0.0
      %5149 = vmatprep.subr.mxu0 0.0
      %5150 = vmatpush1.msra.mxu0 0.0
      %5151 = vmatprep.subr.mxu0 0.0
      %5152 = vmatpush1.msra.mxu0 0.0
      %5153 = vmatprep.subr.mxu0 0.0
      %5154 = vmatpush1.msra.mxu0 0.0
      %5155 = vmatprep.subr.mxu0 0.0
      %5156 = vmatpush1.msra.mxu0 0.0
      %5157 = vmatprep.mubr.f32.mxu0 0.0
      %5158 = vmatmul.mubr.f32.gmra.mrb[0].mxu0 %v5046
      %v5159 = vpop.f32.mrb[0].mxu0
      %v5160 = vadd.f32 0.0, %v5159
      %v5161 = vpop.f32.mrb[0].mxu0
      %5162 = vmatprep.mubr.f32.mxu0 0.0
      %5163 = vmatmul.mubr.f32.gmra.mrb[0].mxu0 %v5049
      %v5164 = vpop.f32.mrb[0].mxu0
      %v5165 = vadd.f32 0.0, %v5164
      %v5166 = vpop.f32.mrb[0].mxu0
      %5167 = vmatprep.mubr.f32.mxu0 0.0
      %5168 = vmatmul.mubr.f32.gmra.mrb[0].mxu0 %v5052
      %v5169 = vpop.f32.mrb[0].mxu0
      %v5170 = vadd.f32 0.0, %v5169
      %v5171 = vpop.f32.mrb[0].mxu0
      %5172 = vmatprep.mubr.f32.mxu0 0.0
      %5173 = vmatmul.mubr.f32.gmra.mrb[0].mxu0 %v5055
      %v5174 = vpop.f32.mrb[0].mxu0
      %v5175 = vadd.f32 0.0, %v5174
      %v5176 = vpop.f32.mrb[0].mxu0
      %5177 = vmatprep.mubr.f32.mxu0 0.0
      %5178 = vmatmul.mubr.f32.gmra.mrb[0].mxu0 %v5058
      %v5179 = vpop.f32.mrb[0].mxu0
      %v5180 = vadd.f32 0.0, %v5179
      %v5181 = vpop.f32.mrb[0].mxu0
      %5182 = vmatprep.mubr.f32.mxu0 0.0
      %5183 = vmatmul.mubr.f32.gmra.mrb[0].mxu0 %v5061
      %v5184 = vpop.f32.mrb[0].mxu0
      %v5185 = vadd.f32 0.0, %v5184
      %v5186 = vpop.f32.mrb[0].mxu0
      %5187 = vmatprep.mubr.f32.mxu0 0.0
      %5188 = vmatmul.mubr.f32.gmra.mrb[0].mxu0 %v5064
      %v5189 = vpop.f32.mrb[0].mxu0
      %v5190 = vadd.f32 0.0, %v5189
      %v5191 = vpop.f32.mrb[0].mxu0
      %5192 = vmatprep.mubr.f32.mxu0 0.0
      %5193 = vmatmul.mubr.f32.gmra.mrb[0].mxu0 %v5067
      %v5194 = vpop.f32.mrb[0].mxu0
      %v5195 = vadd.f32 0.0, %v5194
      %v5196 = vpop.f32.mrb[0].mxu0
      %5197 = vmatprep.mubr.f32.mxu0 0.0
      %5198 = vmatmul.mubr.f32.gmra.mrb[0].mxu0 %v5070
      %v5199 = vpop.f32.mrb[0].mxu0
      %v5200 = vadd.f32 0.0, %v5199
      %v5201 = vpop.f32.mrb[0].mxu0
      %5202 = vmatprep.mubr.f32.mxu0 0.0
      %5203 = vmatmul.mubr.f32.gmra.mrb[0].mxu0 %v5073
      %v5204 = vpop.f32.mrb[0].mxu0
      %v5205 = vadd.f32 0.0, %v5204
      %v5206 = vpop.f32.mrb[0].mxu0
      %5207 = vmatprep.mubr.f32.mxu0 0.0
      %5208 = vmatmul.mubr.f32.gmra.mrb[0].mxu0 %v5076
      %v5209 = vpop.f32.mrb[0].mxu0
      %v5210 = vadd.f32 0.0, %v5209
      %v5211 = vpop.f32.mrb[0].mxu0
      %5212 = vmatprep.mubr.f32.mxu0 0.0
      %5213 = vmatmul.mubr.f32.gmra.mrb[0].mxu0 %v5079
      %v5214 = vpop.f32.mrb[0].mxu0
      %v5215 = vadd.f32 0.0, %v5214
      %v5216 = vpop.f32.mrb[0].mxu0
      %5217 = vmatprep.mubr.f32.mxu0 0.0
      %5218 = vmatmul.mubr.f32.gmra.mrb[0].mxu0 %v5082
      %v5219 = vpop.f32.mrb[0].mxu0
      %v5220 = vadd.f32 0.0, %v5219
      %v5221 = vpop.f32.mrb[0].mxu0
      %5222 = vmatprep.mubr.f32.mxu0 0.0
      %5223 = vmatmul.mubr.f32.gmra.mrb[0].mxu0 %v5085
      %v5224 = vpop.f32.mrb[0].mxu0
      %v5225 = vadd.f32 0.0, %v5224
      %v5226 = vpop.f32.mrb[0].mxu0
      %5227 = vmatprep.mubr.f32.mxu0 0.0
      %5228 = vmatmul.mubr.f32.gmra.mrb[0].mxu0 %v5088
      %v5229 = vpop.f32.mrb[0].mxu0
      %v5230 = vadd.f32 0.0, %v5229
      %v5231 = vpop.f32.mrb[0].mxu0
      %5232 = vmatprep.mubr.f32.mxu0 0.0
      %5233 = vmatmul.mubr.f32.gmra.mrb[0].mxu0 %v5091
      %v5234 = vpop.f32.mrb[0].mxu0
      %v5235 = vadd.f32 0.0, %v5234
      %v5236 = vpop.f32.mrb[0].mxu0
      %5237 = vdwg.mxu0
      %v5238 = vadd.f32 %v4787, %v5160
      %v5239 = vadd.f32 %v4792, %v5165
      %v5240 = vadd.f32 %v4797, %v5170
      %v5241 = vadd.f32 %v4802, %v5175
      %v5242 = vadd.f32 %v4807, %v5180
      %v5243 = vadd.f32 %v4812, %v5185
      %v5244 = vadd.f32 %v4817, %v5190
      %v5245 = vadd.f32 %v4822, %v5195
      %v5246 = vadd.f32 %v4827, %v5200
      %v5247 = vadd.f32 %v4832, %v5205
      %v5248 = vadd.f32 %v4837, %v5210
      %v5249 = vadd.f32 %v4842, %v5215
      %v5250 = vadd.f32 %v4847, %v5220
      %v5251 = vadd.f32 %v4852, %v5225
      %v5252 = vadd.f32 %v4857, %v5230
      %v5253 = vadd.f32 %v4862, %v5235
      %v5254 = vld [vmem:[%s5] sm:$0x1]
      %v5256 = vlaneseq
      %v5257 = vshrl.u32 %v5256, 7
      %v5258 = vsub.s32 0, %v5257
      %v5259 = vrot.slane %v5254, %v5258
      %v5261 = vmul.f32 %v5238, %v5259
      %v5262 = vmul.f32 %v5239, %v5259
      %v5263 = vmul.f32 %v5240, %v5259
      %v5264 = vmul.f32 %v5241, %v5259
      %v5265 = vmul.f32 %v5242, %v5259
      %v5266 = vmul.f32 %v5243, %v5259
      %v5267 = vmul.f32 %v5244, %v5259
      %v5268 = vmul.f32 %v5245, %v5259
      %v5269 = vmul.f32 %v5246, %v5259
      %v5270 = vmul.f32 %v5247, %v5259
      %v5271 = vmul.f32 %v5248, %v5259
      %v5272 = vmul.f32 %v5249, %v5259
      %v5273 = vmul.f32 %v5250, %v5259
      %v5274 = vmul.f32 %v5251, %v5259
      %v5275 = vmul.f32 %v5252, %v5259
      %v5276 = vmul.f32 %v5253, %v5259
      %v5277 = vld [vmem:[%s6] sm:$0x1]
      %v5279 = vlaneseq
      %v5280 = vshrl.u32 %v5279, 7
      %v5281 = vsub.s32 0, %v5280
      %v5282 = vrot.slane %v5277, %v5281
      %v5284 = vadd.f32 %v5261, %v5282
      %v5285 = vadd.f32 %v5262, %v5282
      %v5286 = vadd.f32 %v5263, %v5282
      %v5287 = vadd.f32 %v5264, %v5282
      %v5288 = vadd.f32 %v5265, %v5282
      %v5289 = vadd.f32 %v5266, %v5282
      %v5290 = vadd.f32 %v5267, %v5282
      %v5291 = vadd.f32 %v5268, %v5282
      %v5292 = vadd.f32 %v5269, %v5282
      %v5293 = vadd.f32 %v5270, %v5282
      %v5294 = vadd.f32 %v5271, %v5282
      %v5295 = vadd.f32 %v5272, %v5282
      %v5296 = vadd.f32 %v5273, %v5282
      %v5297 = vadd.f32 %v5274, %v5282
      %v5298 = vadd.f32 %v5275, %v5282
      %v5299 = vadd.f32 %v5276, %v5282
      %v5300 = vmax.f32 %v5284, 0.0
      %v5301 = vmax.f32 %v5285, 0.0
      %v5302 = vmax.f32 %v5286, 0.0
      %v5303 = vmax.f32 %v5287, 0.0
      %v5304 = vmax.f32 %v5288, 0.0
      %v5305 = vmax.f32 %v5289, 0.0
      %v5306 = vmax.f32 %v5290, 0.0
      %v5307 = vmax.f32 %v5291, 0.0
      %v5308 = vmax.f32 %v5292, 0.0
      %v5309 = vmax.f32 %v5293, 0.0
      %v5310 = vmax.f32 %v5294, 0.0
      %v5311 = vmax.f32 %v5295, 0.0
      %v5312 = vmax.f32 %v5296, 0.0
      %v5313 = vmax.f32 %v5297, 0.0
      %v5314 = vmax.f32 %v5298, 0.0
      %v5315 = vmax.f32 %v5299, 0.0
      %5316 = vst.msk [vmem:[#allocation3] sm:$0xff] %vm4057, %v5300
      %5317 = vst.msk [vmem:[#allocation3 + $0x8] sm:$0xff] %vm4057, %v5301
      %5318 = vst.msk [vmem:[#allocation3 + $0x10] sm:$0xff] %vm4057, %v5302
      %5319 = vst.msk [vmem:[#allocation3 + $0x18] sm:$0xff] %vm4057, %v5303
      %5320 = vst.msk [vmem:[#allocation3 + $0x20] sm:$0xff] %vm4057, %v5304
      %5321 = vst.msk [vmem:[#allocation3 + $0x28] sm:$0xff] %vm4057, %v5305
      %5322 = vst.msk [vmem:[#allocation3 + $0x30] sm:$0xff] %vm4057, %v5306
      %5323 = vst.msk [vmem:[#allocation3 + $0x38] sm:$0xff] %vm4057, %v5307
      %5324 = vst.msk [vmem:[#allocation3 + $0x40] sm:$0xff] %vm4057, %v5308
      %5325 = vst.msk [vmem:[#allocation3 + $0x48] sm:$0xff] %vm4057, %v5309
      %5326 = vst.msk [vmem:[#allocation3 + $0x50] sm:$0xff] %vm4057, %v5310
      %5327 = vst.msk [vmem:[#allocation3 + $0x58] sm:$0xff] %vm4057, %v5311
      %5328 = vst.msk [vmem:[#allocation3 + $0x60] sm:$0xff] %vm4057, %v5312
      %5329 = vst.msk [vmem:[#allocation3 + $0x68] sm:$0xff] %vm4057, %v5313
      %5330 = vst.msk [vmem:[#allocation3 + $0x70] sm:$0xff] %vm4057, %v5314
      %vm5331 = vcmask 254976
      %5332 = vst.msk [vmem:[#allocation3 + $0x78] sm:$0x3] %vm5331, %v5315
      %v5333 = vld [vmem:[#allocation3] ss:$4 sm:$0xff]
      %s5334 = scalar_lea.vmem [#allocation3], 32
      %v5335 = vld [vmem:[%s5334] ss:$4 sm:$0xff]
      %s5336 = scalar_lea.vmem [#allocation3], 64
      %v5337 = vld [vmem:[%s5336] ss:$4 sm:$0xff]
      %s5338 = scalar_lea.vmem [#allocation3], 96
      %v5339 = vld [vmem:[%s5338] ss:$4 sm:$0xf]
      %s5340 = scalar_lea.vmem [#allocation3], 1
      %v5341 = vld [vmem:[%s5340] ss:$4 sm:$0xff]
      %s5342 = scalar_lea.vmem [#allocation3], 33
      %v5343 = vld [vmem:[%s5342] ss:$4 sm:$0xff]
      %s5344 = scalar_lea.vmem [#allocation3], 65
      %v5345 = vld [vmem:[%s5344] ss:$4 sm:$0xff]
      %s5346 = scalar_lea.vmem [#allocation3], 97
      %v5347 = vld [vmem:[%s5346] ss:$4 sm:$0xf]
      %v5348 = vmax.f32 %v5333, %v5341
      %v5349 = vmax.f32 %v5335, %v5343
      %v5350 = vmax.f32 %v5337, %v5345
      %v5351 = vmax.f32 %v5339, %v5347
      %s5352 = scalar_lea.vmem [#allocation3], 2
      %v5353 = vld [vmem:[%s5352] ss:$4 sm:$0xff]
      %s5354 = scalar_lea.vmem [#allocation3], 34
      %v5355 = vld [vmem:[%s5354] ss:$4 sm:$0xff]
      %s5356 = scalar_lea.vmem [#allocation3], 66
      %v5357 = vld [vmem:[%s5356] ss:$4 sm:$0xff]
      %s5358 = scalar_lea.vmem [#allocation3], 98
      %v5359 = vld [vmem:[%s5358] ss:$4 sm:$0xf]
      %v5360 = vmax.f32 %v5348, %v5353
      %v5361 = vmax.f32 %v5349, %v5355
      %v5362 = vmax.f32 %v5350, %v5357
      %v5363 = vmax.f32 %v5351, %v5359
      %s5364 = scalar_lea.vmem [#allocation3], 3
      %v5365 = vld [vmem:[%s5364] ss:$4 sm:$0xff]
      %s5366 = scalar_lea.vmem [#allocation3], 35
      %v5367 = vld [vmem:[%s5366] ss:$4 sm:$0xff]
      %s5368 = scalar_lea.vmem [#allocation3], 67
      %v5369 = vld [vmem:[%s5368] ss:$4 sm:$0xff]
      %s5370 = scalar_lea.vmem [#allocation3], 99
      %v5371 = vld [vmem:[%s5370] ss:$4 sm:$0xf]
      %v5372 = vmax.f32 %v5360, %v5365
      %v5373 = vmax.f32 %v5361, %v5367
      %v5374 = vmax.f32 %v5362, %v5369
      %v5375 = vmax.f32 %v5363, %v5371
      %v5376 = vld [vmem:[%s7] sm:$0xff]
      %v5377 = vld [vmem:[%s7 + $0x8] sm:$0xff]
      %v5378 = vld [vmem:[%s7 + $0x10] sm:$0xff]
      %v5379 = vld [vmem:[%s7 + $0x18] sm:$0xff]
      %s5380 = scalar_lea.vmem [#allocation3], 4
      %v5381 = vld [vmem:[%s5380] ss:$4 sm:$0xff]
      %s5382 = scalar_lea.vmem [#allocation3], 36
      %v5383 = vld [vmem:[%s5382] ss:$4 sm:$0xff]
      %s5384 = scalar_lea.vmem [#allocation3], 68
      %v5385 = vld [vmem:[%s5384] ss:$4 sm:$0xff]
      %s5386 = scalar_lea.vmem [#allocation3], 100
      %v5387 = vld [vmem:[%s5386] ss:$4 sm:$0xf]
      %s5388 = scalar_lea.vmem [#allocation3], 5
      %v5389 = vld [vmem:[%s5388] ss:$4 sm:$0xff]
      %s5390 = scalar_lea.vmem [#allocation3], 37
      %v5391 = vld [vmem:[%s5390] ss:$4 sm:$0xff]
      %s5392 = scalar_lea.vmem [#allocation3], 69
      %v5393 = vld [vmem:[%s5392] ss:$4 sm:$0xff]
      %s5394 = scalar_lea.vmem [#allocation3], 101
      %v5395 = vld [vmem:[%s5394] ss:$4 sm:$0xf]
      %v5396 = vmax.f32 %v5381, %v5389
      %v5397 = vmax.f32 %v5383, %v5391
      %v5398 = vmax.f32 %v5385, %v5393
      %v5399 = vmax.f32 %v5387, %v5395
      %s5400 = scalar_lea.vmem [#allocation3], 6
      %v5401 = vld [vmem:[%s5400] ss:$4 sm:$0xff]
      %s5402 = scalar_lea.vmem [#allocation3], 38
      %v5403 = vld [vmem:[%s5402] ss:$4 sm:$0xff]
      %s5404 = scalar_lea.vmem [#allocation3], 70
      %v5405 = vld [vmem:[%s5404] ss:$4 sm:$0xff]
      %s5406 = scalar_lea.vmem [#allocation3], 102
      %v5407 = vld [vmem:[%s5406] ss:$4 sm:$0xf]
      %v5408 = vmax.f32 %v5396, %v5401
      %v5409 = vmax.f32 %v5397, %v5403
      %v5410 = vmax.f32 %v5398, %v5405
      %v5411 = vmax.f32 %v5399, %v5407
      %s5412 = scalar_lea.vmem [#allocation3], 7
      %v5413 = vld [vmem:[%s5412] ss:$4 sm:$0xff]
      %s5414 = scalar_lea.vmem [#allocation3], 39
      %v5415 = vld [vmem:[%s5414] ss:$4 sm:$0xff]
      %s5416 = scalar_lea.vmem [#allocation3], 71
      %v5417 = vld [vmem:[%s5416] ss:$4 sm:$0xff]
      %s5418 = scalar_lea.vmem [#allocation3], 103
      %v5419 = vld [vmem:[%s5418] ss:$4 sm:$0xf]
      %v5420 = vmax.f32 %v5408, %v5413
      %v5421 = vmax.f32 %v5409, %v5415
      %v5422 = vmax.f32 %v5410, %v5417
      %v5423 = vmax.f32 %v5411, %v5419
      %v5424 = vld [vmem:[%s7 + $0x20] sm:$0xff]
      %v5425 = vld [vmem:[%s7 + $0x28] sm:$0xff]
      %v5426 = vld [vmem:[%s7 + $0x30] sm:$0xff]
      %v5427 = vld [vmem:[%s7 + $0x38] sm:$0xff]
      %v5429 = vsel %vm4057, %v5420, 0
      %v5432 = vsel %vm4057, %v5421, 0
      %v5435 = vsel %vm4057, %v5422, 0
      %v5438 = vsel %vm4057, %v5423, 0
      %5440 = vmatprep.subr.mxu0 0.0
      %5441 = vmatpush1.msra.mxu0 %v5424
      %5442 = vmatprep.subr.mxu0 0.0
      %5443 = vmatpush1.msra.mxu0 %v5425
      %5444 = vmatprep.subr.mxu0 0.0
      %5445 = vmatpush1.msra.mxu0 %v5426
      %5446 = vmatprep.subr.mxu0 0.0
      %5447 = vmatpush1.msra.mxu0 %v5427
      %5448 = vmatprep.subr.mxu0 0.0
      %5449 = vmatpush1.msra.mxu0 0.0
      %5450 = vmatprep.subr.mxu0 0.0
      %5451 = vmatpush1.msra.mxu0 0.0
      %5452 = vmatprep.subr.mxu0 0.0
      %5453 = vmatpush1.msra.mxu0 0.0
      %5454 = vmatprep.subr.mxu0 0.0
      %5455 = vmatpush1.msra.mxu0 0.0
      %5456 = vmatprep.subr.mxu0 0.0
      %5457 = vmatpush1.msra.mxu0 0.0
      %5458 = vmatprep.subr.mxu0 0.0
      %5459 = vmatpush1.msra.mxu0 0.0
      %5460 = vmatprep.subr.mxu0 0.0
      %5461 = vmatpush1.msra.mxu0 0.0
      %5462 = vmatprep.subr.mxu0 0.0
      %5463 = vmatpush1.msra.mxu0 0.0
      %5464 = vmatprep.subr.mxu0 0.0
      %5465 = vmatpush1.msra.mxu0 0.0
      %5466 = vmatprep.subr.mxu0 0.0
      %5467 = vmatpush1.msra.mxu0 0.0
      %5468 = vmatprep.subr.mxu0 0.0
      %5469 = vmatpush1.msra.mxu0 0.0
      %5470 = vmatprep.subr.mxu0 0.0
      %5471 = vmatpush1.msra.mxu0 0.0
      %5472 = vmatprep.subr.mxu0 0.0
      %5473 = vmatpush1.msra.mxu0 0.0
      %5474 = vmatprep.subr.mxu0 0.0
      %5475 = vmatpush1.msra.mxu0 0.0
      %5476 = vmatprep.subr.mxu0 0.0
      %5477 = vmatpush1.msra.mxu0 0.0
      %5478 = vmatprep.subr.mxu0 0.0
      %5479 = vmatpush1.msra.mxu0 0.0
      %5480 = vmatprep.subr.mxu0 0.0
      %5481 = vmatpush1.msra.mxu0 0.0
      %5482 = vmatprep.subr.mxu0 0.0
      %5483 = vmatpush1.msra.mxu0 0.0
      %5484 = vmatprep.subr.mxu0 0.0
      %5485 = vmatpush1.msra.mxu0 0.0
      %5486 = vmatprep.subr.mxu0 0.0
      %5487 = vmatpush1.msra.mxu0 0.0
      %5488 = vmatprep.subr.mxu0 0.0
      %5489 = vmatpush1.msra.mxu0 0.0
      %5490 = vmatprep.subr.mxu0 0.0
      %5491 = vmatpush1.msra.mxu0 0.0
      %5492 = vmatprep.subr.mxu0 0.0
      %5493 = vmatpush1.msra.mxu0 0.0
      %5494 = vmatprep.subr.mxu0 0.0
      %5495 = vmatpush1.msra.mxu0 0.0
      %5496 = vmatprep.subr.mxu0 0.0
      %5497 = vmatpush1.msra.mxu0 0.0
      %5498 = vmatprep.subr.mxu0 0.0
      %5499 = vmatpush1.msra.mxu0 0.0
      %5500 = vmatprep.subr.mxu0 0.0
      %5501 = vmatpush1.msra.mxu0 0.0
      %5502 = vmatprep.subr.mxu0 0.0
      %5503 = vmatpush1.msra.mxu0 0.0
      %5504 = vmatprep.mubr.f32.mxu0 0.0
      %5505 = vmatmul.mubr.f32.gmra.mrb[0].mxu0 %v5429
      %v5506 = vpop.f32.mrb[0].mxu0
      %v5507 = vadd.f32 0.0, %v5506
      %v5508 = vpop.f32.mrb[0].mxu0
      %5509 = vmatprep.mubr.f32.mxu0 0.0
      %5510 = vmatmul.mubr.f32.gmra.mrb[0].mxu0 %v5432
      %v5511 = vpop.f32.mrb[0].mxu0
      %v5512 = vadd.f32 0.0, %v5511
      %v5513 = vpop.f32.mrb[0].mxu0
      %5514 = vmatprep.mubr.f32.mxu0 0.0
      %5515 = vmatmul.mubr.f32.gmra.mrb[0].mxu0 %v5435
      %v5516 = vpop.f32.mrb[0].mxu0
      %v5517 = vadd.f32 0.0, %v5516
      %v5518 = vpop.f32.mrb[0].mxu0
      %5519 = vmatprep.mubr.f32.mxu0 0.0
      %5520 = vmatmul.mubr.f32.gmra.mrb[0].mxu0 %v5438
      %v5521 = vpop.f32.mrb[0].mxu0
      %v5522 = vadd.f32 0.0, %v5521
      %v5523 = vpop.f32.mrb[0].mxu0
      %5524 = vdwg.mxu0
      %v5526 = vsel %vm4057, %v5372, 0
      %v5529 = vsel %vm4057, %v5373, 0
      %v5532 = vsel %vm4057, %v5374, 0
      %v5535 = vsel %vm4057, %v5375, 0
      %5537 = vmatprep.subr.mxu0 0.0
      %5538 = vmatpush1.msra.mxu0 %v5376
      %5539 = vmatprep.subr.mxu0 0.0
      %5540 = vmatpush1.msra.mxu0 %v5377
      %5541 = vmatprep.subr.mxu0 0.0
      %5542 = vmatpush1.msra.mxu0 %v5378
      %5543 = vmatprep.subr.mxu0 0.0
      %5544 = vmatpush1.msra.mxu0 %v5379
      %5545 = vmatprep.subr.mxu0 0.0
      %5546 = vmatpush1.msra.mxu0 0.0
      %5547 = vmatprep.subr.mxu0 0.0
      %5548 = vmatpush1.msra.mxu0 0.0
      %5549 = vmatprep.subr.mxu0 0.0
      %5550 = vmatpush1.msra.mxu0 0.0
      %5551 = vmatprep.subr.mxu0 0.0
      %5552 = vmatpush1.msra.mxu0 0.0
      %5553 = vmatprep.subr.mxu0 0.0
      %5554 = vmatpush1.msra.mxu0 0.0
      %5555 = vmatprep.subr.mxu0 0.0
      %5556 = vmatpush1.msra.mxu0 0.0
      %5557 = vmatprep.subr.mxu0 0.0
      %5558 = vmatpush1.msra.mxu0 0.0
      %5559 = vmatprep.subr.mxu0 0.0
      %5560 = vmatpush1.msra.mxu0 0.0
      %5561 = vmatprep.subr.mxu0 0.0
      %5562 = vmatpush1.msra.mxu0 0.0
      %5563 = vmatprep.subr.mxu0 0.0
      %5564 = vmatpush1.msra.mxu0 0.0
      %5565 = vmatprep.subr.mxu0 0.0
      %5566 = vmatpush1.msra.mxu0 0.0
      %5567 = vmatprep.subr.mxu0 0.0
      %5568 = vmatpush1.msra.mxu0 0.0
      %5569 = vmatprep.subr.mxu0 0.0
      %5570 = vmatpush1.msra.mxu0 0.0
      %5571 = vmatprep.subr.mxu0 0.0
      %5572 = vmatpush1.msra.mxu0 0.0
      %5573 = vmatprep.subr.mxu0 0.0
      %5574 = vmatpush1.msra.mxu0 0.0
      %5575 = vmatprep.subr.mxu0 0.0
      %5576 = vmatpush1.msra.mxu0 0.0
      %5577 = vmatprep.subr.mxu0 0.0
      %5578 = vmatpush1.msra.mxu0 0.0
      %5579 = vmatprep.subr.mxu0 0.0
      %5580 = vmatpush1.msra.mxu0 0.0
      %5581 = vmatprep.subr.mxu0 0.0
      %5582 = vmatpush1.msra.mxu0 0.0
      %5583 = vmatprep.subr.mxu0 0.0
      %5584 = vmatpush1.msra.mxu0 0.0
      %5585 = vmatprep.subr.mxu0 0.0
      %5586 = vmatpush1.msra.mxu0 0.0
      %5587 = vmatprep.subr.mxu0 0.0
      %5588 = vmatpush1.msra.mxu0 0.0
      %5589 = vmatprep.subr.mxu0 0.0
      %5590 = vmatpush1.msra.mxu0 0.0
      %5591 = vmatprep.subr.mxu0 0.0
      %5592 = vmatpush1.msra.mxu0 0.0
      %5593 = vmatprep.subr.mxu0 0.0
      %5594 = vmatpush1.msra.mxu0 0.0
      %5595 = vmatprep.subr.mxu0 0.0
      %5596 = vmatpush1.msra.mxu0 0.0
      %5597 = vmatprep.subr.mxu0 0.0
      %5598 = vmatpush1.msra.mxu0 0.0
      %5599 = vmatprep.subr.mxu0 0.0
      %5600 = vmatpush1.msra.mxu0 0.0
      %5601 = vmatprep.mubr.f32.mxu0 0.0
      %5602 = vmatmul.mubr.f32.gmra.mrb[0].mxu0 %v5526
      %v5603 = vpop.f32.mrb[0].mxu0
      %v5604 = vadd.f32 %v5507, %v5603
      %v5605 = vpop.f32.mrb[0].mxu0
      %5606 = vmatprep.mubr.f32.mxu0 0.0
      %5607 = vmatmul.mubr.f32.gmra.mrb[0].mxu0 %v5529
      %v5608 = vpop.f32.mrb[0].mxu0
      %v5609 = vadd.f32 %v5512, %v5608
      %v5610 = vpop.f32.mrb[0].mxu0
      %5611 = vmatprep.mubr.f32.mxu0 0.0
      %5612 = vmatmul.mubr.f32.gmra.mrb[0].mxu0 %v5532
      %v5613 = vpop.f32.mrb[0].mxu0
      %v5614 = vadd.f32 %v5517, %v5613
      %v5615 = vpop.f32.mrb[0].mxu0
      %5616 = vmatprep.mubr.f32.mxu0 0.0
      %5617 = vmatmul.mubr.f32.gmra.mrb[0].mxu0 %v5535
      %v5618 = vpop.f32.mrb[0].mxu0
      %v5619 = vadd.f32 %v5522, %v5618
      %v5620 = vpop.f32.mrb[0].mxu0
      %5621 = vdwg.mxu0
      %s5622 = scalar_lea.vmem [#allocation3], 8
      %v5623 = vld [vmem:[%s5622] ss:$4 sm:$0xff]
      %s5624 = scalar_lea.vmem [#allocation3], 40
      %v5625 = vld [vmem:[%s5624] ss:$4 sm:$0xff]
      %s5626 = scalar_lea.vmem [#allocation3], 72
      %v5627 = vld [vmem:[%s5626] ss:$4 sm:$0xff]
      %s5628 = scalar_lea.vmem [#allocation3], 104
      %v5629 = vld [vmem:[%s5628] ss:$4 sm:$0xf]
      %s5630 = scalar_lea.vmem [#allocation3], 9
      %v5631 = vld [vmem:[%s5630] ss:$4 sm:$0xff]
      %s5632 = scalar_lea.vmem [#allocation3], 41
      %v5633 = vld [vmem:[%s5632] ss:$4 sm:$0xff]
      %s5634 = scalar_lea.vmem [#allocation3], 73
      %v5635 = vld [vmem:[%s5634] ss:$4 sm:$0xff]
      %s5636 = scalar_lea.vmem [#allocation3], 105
      %v5637 = vld [vmem:[%s5636] ss:$4 sm:$0xf]
      %v5638 = vmax.f32 %v5623, %v5631
      %v5639 = vmax.f32 %v5625, %v5633
      %v5640 = vmax.f32 %v5627, %v5635
      %v5641 = vmax.f32 %v5629, %v5637
      %s5642 = scalar_lea.vmem [#allocation3], 10
      %v5643 = vld [vmem:[%s5642] ss:$4 sm:$0xff]
      %s5644 = scalar_lea.vmem [#allocation3], 42
      %v5645 = vld [vmem:[%s5644] ss:$4 sm:$0xff]
      %s5646 = scalar_lea.vmem [#allocation3], 74
      %v5647 = vld [vmem:[%s5646] ss:$4 sm:$0xff]
      %s5648 = scalar_lea.vmem [#allocation3], 106
      %v5649 = vld [vmem:[%s5648] ss:$4 sm:$0xf]
      %v5650 = vmax.f32 %v5638, %v5643
      %v5651 = vmax.f32 %v5639, %v5645
      %v5652 = vmax.f32 %v5640, %v5647
      %v5653 = vmax.f32 %v5641, %v5649
      %s5654 = scalar_lea.vmem [#allocation3], 11
      %v5655 = vld [vmem:[%s5654] ss:$4 sm:$0xff]
      %s5656 = scalar_lea.vmem [#allocation3], 43
      %v5657 = vld [vmem:[%s5656] ss:$4 sm:$0xff]
      %s5658 = scalar_lea.vmem [#allocation3], 75
      %v5659 = vld [vmem:[%s5658] ss:$4 sm:$0xff]
      %s5660 = scalar_lea.vmem [#allocation3], 107
      %v5661 = vld [vmem:[%s5660] ss:$4 sm:$0xf]
      %v5662 = vmax.f32 %v5650, %v5655
      %v5663 = vmax.f32 %v5651, %v5657
      %v5664 = vmax.f32 %v5652, %v5659
      %v5665 = vmax.f32 %v5653, %v5661
      %v5666 = vld [vmem:[%s7 + $0x40] sm:$0xff]
      %v5667 = vld [vmem:[%s7 + $0x48] sm:$0xff]
      %v5668 = vld [vmem:[%s7 + $0x50] sm:$0xff]
      %v5669 = vld [vmem:[%s7 + $0x58] sm:$0xff]
      %v5671 = vsel %vm4057, %v5662, 0
      %v5674 = vsel %vm4057, %v5663, 0
      %v5677 = vsel %vm4057, %v5664, 0
      %v5680 = vsel %vm4057, %v5665, 0
      %5682 = vmatprep.subr.mxu0 0.0
      %5683 = vmatpush1.msra.mxu0 %v5666
      %5684 = vmatprep.subr.mxu0 0.0
      %5685 = vmatpush1.msra.mxu0 %v5667
      %5686 = vmatprep.subr.mxu0 0.0
      %5687 = vmatpush1.msra.mxu0 %v5668
      %5688 = vmatprep.subr.mxu0 0.0
      %5689 = vmatpush1.msra.mxu0 %v5669
      %5690 = vmatprep.subr.mxu0 0.0
      %5691 = vmatpush1.msra.mxu0 0.0
      %5692 = vmatprep.subr.mxu0 0.0
      %5693 = vmatpush1.msra.mxu0 0.0
      %5694 = vmatprep.subr.mxu0 0.0
      %5695 = vmatpush1.msra.mxu0 0.0
      %5696 = vmatprep.subr.mxu0 0.0
      %5697 = vmatpush1.msra.mxu0 0.0
      %5698 = vmatprep.subr.mxu0 0.0
      %5699 = vmatpush1.msra.mxu0 0.0
      %5700 = vmatprep.subr.mxu0 0.0
      %5701 = vmatpush1.msra.mxu0 0.0
      %5702 = vmatprep.subr.mxu0 0.0
      %5703 = vmatpush1.msra.mxu0 0.0
      %5704 = vmatprep.subr.mxu0 0.0
      %5705 = vmatpush1.msra.mxu0 0.0
      %5706 = vmatprep.subr.mxu0 0.0
      %5707 = vmatpush1.msra.mxu0 0.0
      %5708 = vmatprep.subr.mxu0 0.0
      %5709 = vmatpush1.msra.mxu0 0.0
      %5710 = vmatprep.subr.mxu0 0.0
      %5711 = vmatpush1.msra.mxu0 0.0
      %5712 = vmatprep.subr.mxu0 0.0
      %5713 = vmatpush1.msra.mxu0 0.0
      %5714 = vmatprep.subr.mxu0 0.0
      %5715 = vmatpush1.msra.mxu0 0.0
      %5716 = vmatprep.subr.mxu0 0.0
      %5717 = vmatpush1.msra.mxu0 0.0
      %5718 = vmatprep.subr.mxu0 0.0
      %5719 = vmatpush1.msra.mxu0 0.0
      %5720 = vmatprep.subr.mxu0 0.0
      %5721 = vmatpush1.msra.mxu0 0.0
      %5722 = vmatprep.subr.mxu0 0.0
      %5723 = vmatpush1.msra.mxu0 0.0
      %5724 = vmatprep.subr.mxu0 0.0
      %5725 = vmatpush1.msra.mxu0 0.0
      %5726 = vmatprep.subr.mxu0 0.0
      %5727 = vmatpush1.msra.mxu0 0.0
      %5728 = vmatprep.subr.mxu0 0.0
      %5729 = vmatpush1.msra.mxu0 0.0
      %5730 = vmatprep.subr.mxu0 0.0
      %5731 = vmatpush1.msra.mxu0 0.0
      %5732 = vmatprep.subr.mxu0 0.0
      %5733 = vmatpush1.msra.mxu0 0.0
      %5734 = vmatprep.subr.mxu0 0.0
      %5735 = vmatpush1.msra.mxu0 0.0
      %5736 = vmatprep.subr.mxu0 0.0
      %5737 = vmatpush1.msra.mxu0 0.0
      %5738 = vmatprep.subr.mxu0 0.0
      %5739 = vmatpush1.msra.mxu0 0.0
      %5740 = vmatprep.subr.mxu0 0.0
      %5741 = vmatpush1.msra.mxu0 0.0
      %5742 = vmatprep.subr.mxu0 0.0
      %5743 = vmatpush1.msra.mxu0 0.0
      %5744 = vmatprep.subr.mxu0 0.0
      %5745 = vmatpush1.msra.mxu0 0.0
      %5746 = vmatprep.mubr.f32.mxu0 0.0
      %5747 = vmatmul.mubr.f32.gmra.mrb[0].mxu0 %v5671
      %v5748 = vpop.f32.mrb[0].mxu0
      %v5749 = vadd.f32 0.0, %v5748
      %v5750 = vpop.f32.mrb[0].mxu0
      %5751 = vmatprep.mubr.f32.mxu0 0.0
      %5752 = vmatmul.mubr.f32.gmra.mrb[0].mxu0 %v5674
      %v5753 = vpop.f32.mrb[0].mxu0
      %v5754 = vadd.f32 0.0, %v5753
      %v5755 = vpop.f32.mrb[0].mxu0
      %5756 = vmatprep.mubr.f32.mxu0 0.0
      %5757 = vmatmul.mubr.f32.gmra.mrb[0].mxu0 %v5677
      %v5758 = vpop.f32.mrb[0].mxu0
      %v5759 = vadd.f32 0.0, %v5758
      %v5760 = vpop.f32.mrb[0].mxu0
      %5761 = vmatprep.mubr.f32.mxu0 0.0
      %5762 = vmatmul.mubr.f32.gmra.mrb[0].mxu0 %v5680
      %v5763 = vpop.f32.mrb[0].mxu0
      %v5764 = vadd.f32 0.0, %v5763
      %v5765 = vpop.f32.mrb[0].mxu0
      %5766 = vdwg.mxu0
      %v5767 = vadd.f32 %v5604, %v5749
      %v5768 = vadd.f32 %v5609, %v5754
      %v5769 = vadd.f32 %v5614, %v5759
      %v5770 = vadd.f32 %v5619, %v5764
      %v5771 = vld [vmem:[%s8] sm:$0x1]
      %v5773 = vlaneseq
      %v5774 = vshrl.u32 %v5773, 7
      %v5775 = vsub.s32 0, %v5774
      %v5776 = vrot.slane %v5771, %v5775
      %v5778 = vmul.f32 %v5767, %v5776
      %v5779 = vmul.f32 %v5768, %v5776
      %v5780 = vmul.f32 %v5769, %v5776
      %v5781 = vmul.f32 %v5770, %v5776
      %v5782 = vld [vmem:[%s9] sm:$0x1]
      %v5784 = vlaneseq
      %v5785 = vshrl.u32 %v5784, 7
      %v5786 = vsub.s32 0, %v5785
      %v5787 = vrot.slane %v5782, %v5786
      %v5789 = vadd.f32 %v5778, %v5787
      %v5790 = vadd.f32 %v5779, %v5787
      %v5791 = vadd.f32 %v5780, %v5787
      %v5792 = vadd.f32 %v5781, %v5787
      %v5793 = vmax.f32 %v5789, 0.0
      %v5794 = vmax.f32 %v5790, 0.0
      %v5795 = vmax.f32 %v5791, 0.0
      %v5796 = vmax.f32 %v5792, 0.0
      %vm5797 = vcmask 523264
      %5798 = vst.msk [vmem:[#allocation4] sm:$0xff] %vm5797, %v5793
      %5799 = vst.msk [vmem:[#allocation4 + $0x8] sm:$0xff] %vm5797, %v5794
      %5800 = vst.msk [vmem:[#allocation4 + $0x10] sm:$0xff] %vm5797, %v5795
      %vm5801 = vcmask 519168
      %5802 = vst.msk [vmem:[#allocation4 + $0x18] sm:$0xf] %vm5801, %v5796
      %v5803 = vld [vmem:[#allocation4] ss:$4 sm:$0x1f]
      %s5804 = scalar_lea.vmem [#allocation4], 1
      %v5805 = vld [vmem:[%s5804] ss:$4 sm:$0x1f]
      %v5806 = vmax.f32 %v5803, %v5805
      %s5807 = scalar_lea.vmem [#allocation4], 2
      %v5808 = vld [vmem:[%s5807] ss:$4 sm:$0x1f]
      %v5809 = vmax.f32 %v5806, %v5808
      %s5810 = scalar_lea.vmem [#allocation4], 3
      %v5811 = vld [vmem:[%s5810] ss:$4 sm:$0x1f]
      %v5812 = vmax.f32 %v5809, %v5811
      %v5813 = vld [vmem:[%s10] sm:$0xff]
      %v5814 = vld [vmem:[%s10 + $0x8] sm:$0xff]
      %v5815 = vld [vmem:[%s10 + $0x10] sm:$0xff]
      %v5816 = vld [vmem:[%s10 + $0x18] sm:$0xff]
      %v5817 = vld [vmem:[%s10 + $0x20] sm:$0xff]
      %v5818 = vld [vmem:[%s10 + $0x28] sm:$0xff]
      %v5819 = vld [vmem:[%s10 + $0x30] sm:$0xff]
      %v5820 = vld [vmem:[%s10 + $0x38] sm:$0xff]
      %s5821 = scalar_lea.vmem [#allocation4], 4
      %v5822 = vld [vmem:[%s5821] ss:$4 sm:$0x1f]
      %s5823 = scalar_lea.vmem [#allocation4], 5
      %v5824 = vld [vmem:[%s5823] ss:$4 sm:$0x1f]
      %v5825 = vmax.f32 %v5822, %v5824
      %s5826 = scalar_lea.vmem [#allocation4], 6
      %v5827 = vld [vmem:[%s5826] ss:$4 sm:$0x1f]
      %v5828 = vmax.f32 %v5825, %v5827
      %s5829 = scalar_lea.vmem [#allocation4], 7
      %v5830 = vld [vmem:[%s5829] ss:$4 sm:$0x1f]
      %v5831 = vmax.f32 %v5828, %v5830
      %v5832 = vld [vmem:[%s10 + $0x40] sm:$0xff]
      %v5833 = vld [vmem:[%s10 + $0x48] sm:$0xff]
      %v5834 = vld [vmem:[%s10 + $0x50] sm:$0xff]
      %v5835 = vld [vmem:[%s10 + $0x58] sm:$0xff]
      %v5836 = vld [vmem:[%s10 + $0x60] sm:$0xff]
      %v5837 = vld [vmem:[%s10 + $0x68] sm:$0xff]
      %v5838 = vld [vmem:[%s10 + $0x70] sm:$0xff]
      %v5839 = vld [vmem:[%s10 + $0x78] sm:$0xff]
      %v5841 = vsel %vm5797, %v5831, 0
      %5843 = vmatprep.subr.mxu0 0.0
      %5844 = vmatpush1.msra.mxu0 %v5832
      %5845 = vmatprep.subr.mxu0 0.0
      %5846 = vmatpush1.msra.mxu0 %v5833
      %5847 = vmatprep.subr.mxu0 0.0
      %5848 = vmatpush1.msra.mxu0 %v5834
      %5849 = vmatprep.subr.mxu0 0.0
      %5850 = vmatpush1.msra.mxu0 %v5835
      %5851 = vmatprep.subr.mxu0 0.0
      %5852 = vmatpush1.msra.mxu0 %v5836
      %5853 = vmatprep.subr.mxu0 0.0
      %5854 = vmatpush1.msra.mxu0 %v5837
      %5855 = vmatprep.subr.mxu0 0.0
      %5856 = vmatpush1.msra.mxu0 %v5838
      %5857 = vmatprep.subr.mxu0 0.0
      %5858 = vmatpush1.msra.mxu0 %v5839
      %5859 = vmatprep.subr.mxu0 0.0
      %5860 = vmatpush1.msra.mxu0 0.0
      %5861 = vmatprep.subr.mxu0 0.0
      %5862 = vmatpush1.msra.mxu0 0.0
      %5863 = vmatprep.subr.mxu0 0.0
      %5864 = vmatpush1.msra.mxu0 0.0
      %5865 = vmatprep.subr.mxu0 0.0
      %5866 = vmatpush1.msra.mxu0 0.0
      %5867 = vmatprep.subr.mxu0 0.0
      %5868 = vmatpush1.msra.mxu0 0.0
      %5869 = vmatprep.subr.mxu0 0.0
      %5870 = vmatpush1.msra.mxu0 0.0
      %5871 = vmatprep.subr.mxu0 0.0
      %5872 = vmatpush1.msra.mxu0 0.0
      %5873 = vmatprep.subr.mxu0 0.0
      %5874 = vmatpush1.msra.mxu0 0.0
      %5875 = vmatprep.subr.mxu0 0.0
      %5876 = vmatpush1.msra.mxu0 0.0
      %5877 = vmatprep.subr.mxu0 0.0
      %5878 = vmatpush1.msra.mxu0 0.0
      %5879 = vmatprep.subr.mxu0 0.0
      %5880 = vmatpush1.msra.mxu0 0.0
      %5881 = vmatprep.subr.mxu0 0.0
      %5882 = vmatpush1.msra.mxu0 0.0
      %5883 = vmatprep.subr.mxu0 0.0
      %5884 = vmatpush1.msra.mxu0 0.0
      %5885 = vmatprep.subr.mxu0 0.0
      %5886 = vmatpush1.msra.mxu0 0.0
      %5887 = vmatprep.subr.mxu0 0.0
      %5888 = vmatpush1.msra.mxu0 0.0
      %5889 = vmatprep.subr.mxu0 0.0
      %5890 = vmatpush1.msra.mxu0 0.0
      %5891 = vmatprep.subr.mxu0 0.0
      %5892 = vmatpush1.msra.mxu0 0.0
      %5893 = vmatprep.subr.mxu0 0.0
      %5894 = vmatpush1.msra.mxu0 0.0
      %5895 = vmatprep.subr.mxu0 0.0
      %5896 = vmatpush1.msra.mxu0 0.0
      %5897 = vmatprep.subr.mxu0 0.0
      %5898 = vmatpush1.msra.mxu0 0.0
      %5899 = vmatprep.subr.mxu0 0.0
      %5900 = vmatpush1.msra.mxu0 0.0
      %5901 = vmatprep.subr.mxu0 0.0
      %5902 = vmatpush1.msra.mxu0 0.0
      %5903 = vmatprep.subr.mxu0 0.0
      %5904 = vmatpush1.msra.mxu0 0.0
      %5905 = vmatprep.subr.mxu0 0.0
      %5906 = vmatpush1.msra.mxu0 0.0
      %5907 = vmatprep.mubr.f32.mxu0 0.0
      %5908 = vmatmul.mubr.f32.gmra.mrb[0].mxu0 %v5841
      %v5909 = vpop.f32.mrb[0].mxu0
      %v5910 = vadd.f32 0.0, %v5909
      %v5911 = vpop.f32.mrb[0].mxu0
      %5912 = vdwg.mxu0
      %v5914 = vsel %vm5797, %v5812, 0
      %5916 = vmatprep.subr.mxu0 0.0
      %5917 = vmatpush1.msra.mxu0 %v5813
      %5918 = vmatprep.subr.mxu0 0.0
      %5919 = vmatpush1.msra.mxu0 %v5814
      %5920 = vmatprep.subr.mxu0 0.0
      %5921 = vmatpush1.msra.mxu0 %v5815
      %5922 = vmatprep.subr.mxu0 0.0
      %5923 = vmatpush1.msra.mxu0 %v5816
      %5924 = vmatprep.subr.mxu0 0.0
      %5925 = vmatpush1.msra.mxu0 %v5817
      %5926 = vmatprep.subr.mxu0 0.0
      %5927 = vmatpush1.msra.mxu0 %v5818
      %5928 = vmatprep.subr.mxu0 0.0
      %5929 = vmatpush1.msra.mxu0 %v5819
      %5930 = vmatprep.subr.mxu0 0.0
      %5931 = vmatpush1.msra.mxu0 %v5820
      %5932 = vmatprep.subr.mxu0 0.0
      %5933 = vmatpush1.msra.mxu0 0.0
      %5934 = vmatprep.subr.mxu0 0.0
      %5935 = vmatpush1.msra.mxu0 0.0
      %5936 = vmatprep.subr.mxu0 0.0
      %5937 = vmatpush1.msra.mxu0 0.0
      %5938 = vmatprep.subr.mxu0 0.0
      %5939 = vmatpush1.msra.mxu0 0.0
      %5940 = vmatprep.subr.mxu0 0.0
      %5941 = vmatpush1.msra.mxu0 0.0
      %5942 = vmatprep.subr.mxu0 0.0
      %5943 = vmatpush1.msra.mxu0 0.0
      %5944 = vmatprep.subr.mxu0 0.0
      %5945 = vmatpush1.msra.mxu0 0.0
      %5946 = vmatprep.subr.mxu0 0.0
      %5947 = vmatpush1.msra.mxu0 0.0
      %5948 = vmatprep.subr.mxu0 0.0
      %5949 = vmatpush1.msra.mxu0 0.0
      %5950 = vmatprep.subr.mxu0 0.0
      %5951 = vmatpush1.msra.mxu0 0.0
      %5952 = vmatprep.subr.mxu0 0.0
      %5953 = vmatpush1.msra.mxu0 0.0
      %5954 = vmatprep.subr.mxu0 0.0
      %5955 = vmatpush1.msra.mxu0 0.0
      %5956 = vmatprep.subr.mxu0 0.0
      %5957 = vmatpush1.msra.mxu0 0.0
      %5958 = vmatprep.subr.mxu0 0.0
      %5959 = vmatpush1.msra.mxu0 0.0
      %5960 = vmatprep.subr.mxu0 0.0
      %5961 = vmatpush1.msra.mxu0 0.0
      %5962 = vmatprep.subr.mxu0 0.0
      %5963 = vmatpush1.msra.mxu0 0.0
      %5964 = vmatprep.subr.mxu0 0.0
      %5965 = vmatpush1.msra.mxu0 0.0
      %5966 = vmatprep.subr.mxu0 0.0
      %5967 = vmatpush1.msra.mxu0 0.0
      %5968 = vmatprep.subr.mxu0 0.0
      %5969 = vmatpush1.msra.mxu0 0.0
      %5970 = vmatprep.subr.mxu0 0.0
      %5971 = vmatpush1.msra.mxu0 0.0
      %5972 = vmatprep.subr.mxu0 0.0
      %5973 = vmatpush1.msra.mxu0 0.0
      %5974 = vmatprep.subr.mxu0 0.0
      %5975 = vmatpush1.msra.mxu0 0.0
      %5976 = vmatprep.subr.mxu0 0.0
      %5977 = vmatpush1.msra.mxu0 0.0
      %5978 = vmatprep.subr.mxu0 0.0
      %5979 = vmatpush1.msra.mxu0 0.0
      %5980 = vmatprep.mubr.f32.mxu0 0.0
      %5981 = vmatmul.mubr.f32.gmra.mrb[0].mxu0 %v5914
      %v5982 = vpop.f32.mrb[0].mxu0
      %v5983 = vadd.f32 %v5910, %v5982
      %v5984 = vpop.f32.mrb[0].mxu0
      %5985 = vdwg.mxu0
      %s5986 = scalar_lea.vmem [#allocation4], 8
      %v5987 = vld [vmem:[%s5986] ss:$4 sm:$0x1f]
      %s5988 = scalar_lea.vmem [#allocation4], 9
      %v5989 = vld [vmem:[%s5988] ss:$4 sm:$0x1f]
      %v5990 = vmax.f32 %v5987, %v5989
      %s5991 = scalar_lea.vmem [#allocation4], 10
      %v5992 = vld [vmem:[%s5991] ss:$4 sm:$0x1f]
      %v5993 = vmax.f32 %v5990, %v5992
      %s5994 = scalar_lea.vmem [#allocation4], 11
      %v5995 = vld [vmem:[%s5994] ss:$4 sm:$0x1f]
      %v5996 = vmax.f32 %v5993, %v5995
      %v5997 = vld [vmem:[%s10 + $0x80] sm:$0xff]
      %v5998 = vld [vmem:[%s10 + $0x88] sm:$0xff]
      %v5999 = vld [vmem:[%s10 + $0x90] sm:$0xff]
      %v6000 = vld [vmem:[%s10 + $0x98] sm:$0xff]
      %v6001 = vld [vmem:[%s10 + $0xa0] sm:$0xff]
      %v6002 = vld [vmem:[%s10 + $0xa8] sm:$0xff]
      %v6003 = vld [vmem:[%s10 + $0xb0] sm:$0xff]
      %v6004 = vld [vmem:[%s10 + $0xb8] sm:$0xff]
      %v6006 = vsel %vm5797, %v5996, 0
      %6008 = vmatprep.subr.mxu0 0.0
      %6009 = vmatpush1.msra.mxu0 %v5997
      %6010 = vmatprep.subr.mxu0 0.0
      %6011 = vmatpush1.msra.mxu0 %v5998
      %6012 = vmatprep.subr.mxu0 0.0
      %6013 = vmatpush1.msra.mxu0 %v5999
      %6014 = vmatprep.subr.mxu0 0.0
      %6015 = vmatpush1.msra.mxu0 %v6000
      %6016 = vmatprep.subr.mxu0 0.0
      %6017 = vmatpush1.msra.mxu0 %v6001
      %6018 = vmatprep.subr.mxu0 0.0
      %6019 = vmatpush1.msra.mxu0 %v6002
      %6020 = vmatprep.subr.mxu0 0.0
      %6021 = vmatpush1.msra.mxu0 %v6003
      %6022 = vmatprep.subr.mxu0 0.0
      %6023 = vmatpush1.msra.mxu0 %v6004
      %6024 = vmatprep.subr.mxu0 0.0
      %6025 = vmatpush1.msra.mxu0 0.0
      %6026 = vmatprep.subr.mxu0 0.0
      %6027 = vmatpush1.msra.mxu0 0.0
      %6028 = vmatprep.subr.mxu0 0.0
      %6029 = vmatpush1.msra.mxu0 0.0
      %6030 = vmatprep.subr.mxu0 0.0
      %6031 = vmatpush1.msra.mxu0 0.0
      %6032 = vmatprep.subr.mxu0 0.0
      %6033 = vmatpush1.msra.mxu0 0.0
      %6034 = vmatprep.subr.mxu0 0.0
      %6035 = vmatpush1.msra.mxu0 0.0
      %6036 = vmatprep.subr.mxu0 0.0
      %6037 = vmatpush1.msra.mxu0 0.0
      %6038 = vmatprep.subr.mxu0 0.0
      %6039 = vmatpush1.msra.mxu0 0.0
      %6040 = vmatprep.subr.mxu0 0.0
      %6041 = vmatpush1.msra.mxu0 0.0
      %6042 = vmatprep.subr.mxu0 0.0
      %6043 = vmatpush1.msra.mxu0 0.0
      %6044 = vmatprep.subr.mxu0 0.0
      %6045 = vmatpush1.msra.mxu0 0.0
      %6046 = vmatprep.subr.mxu0 0.0
      %6047 = vmatpush1.msra.mxu0 0.0
      %6048 = vmatprep.subr.mxu0 0.0
      %6049 = vmatpush1.msra.mxu0 0.0
      %6050 = vmatprep.subr.mxu0 0.0
      %6051 = vmatpush1.msra.mxu0 0.0
      %6052 = vmatprep.subr.mxu0 0.0
      %6053 = vmatpush1.msra.mxu0 0.0
      %6054 = vmatprep.subr.mxu0 0.0
      %6055 = vmatpush1.msra.mxu0 0.0
      %6056 = vmatprep.subr.mxu0 0.0
      %6057 = vmatpush1.msra.mxu0 0.0
      %6058 = vmatprep.subr.mxu0 0.0
      %6059 = vmatpush1.msra.mxu0 0.0
      %6060 = vmatprep.subr.mxu0 0.0
      %6061 = vmatpush1.msra.mxu0 0.0
      %6062 = vmatprep.subr.mxu0 0.0
      %6063 = vmatpush1.msra.mxu0 0.0
      %6064 = vmatprep.subr.mxu0 0.0
      %6065 = vmatpush1.msra.mxu0 0.0
      %6066 = vmatprep.subr.mxu0 0.0
      %6067 = vmatpush1.msra.mxu0 0.0
      %6068 = vmatprep.subr.mxu0 0.0
      %6069 = vmatpush1.msra.mxu0 0.0
      %6070 = vmatprep.subr.mxu0 0.0
      %6071 = vmatpush1.msra.mxu0 0.0
      %6072 = vmatprep.mubr.f32.mxu0 0.0
      %6073 = vmatmul.mubr.f32.gmra.mrb[0].mxu0 %v6006
      %v6074 = vpop.f32.mrb[0].mxu0
      %v6075 = vadd.f32 0.0, %v6074
      %v6076 = vpop.f32.mrb[0].mxu0
      %6077 = vdwg.mxu0
      %v6078 = vadd.f32 %v5983, %v6075
      %v6079 = vld [vmem:[%s11] sm:$0x1]
      %v6081 = vlaneseq
      %v6082 = vshrl.u32 %v6081, 7
      %v6083 = vsub.s32 0, %v6082
      %v6084 = vrot.slane %v6079, %v6083
      %v6086 = vmul.f32 %v6078, %v6084
      %v6087 = vld [vmem:[%s12] sm:$0x1]
      %v6089 = vlaneseq
      %v6090 = vshrl.u32 %v6089, 7
      %v6091 = vsub.s32 0, %v6090
      %v6092 = vrot.slane %v6087, %v6091
      %v6094 = vadd.f32 %v6086, %v6092
      %v6095 = vmax.f32 %v6094, 0.0
      %vm6096 = vcmask 520192
      %6097 = vst.msk [vmem:[#allocation5] sm:$0x1f] %vm6096, %v6095
      %v6098 = vld [vmem:[#allocation5] ss:$4 sm:$0x1]
      %s6099 = scalar_lea.vmem [#allocation5], 1
      %v6100 = vld [vmem:[%s6099] ss:$4 sm:$0x1]
      %v6101 = vmax.f32 %v6098, %v6100
      %s6102 = scalar_lea.vmem [#allocation5], 2
      %v6103 = vld [vmem:[%s6102] ss:$4 sm:$0x1]
      %v6104 = vmax.f32 %v6101, %v6103
      %s6105 = scalar_lea.vmem [#allocation5], 3
      %v6106 = vld [vmem:[%s6105] ss:$4 sm:$0x1]
      %v6107 = vmax.f32 %v6104, %v6106
      %v6108 = vadd.f32 %v6107, 0.0
      %v6109 = vld [vmem:[%s13] sm:$0xff]
      %v6110 = vld [vmem:[%s13 + $0x8] sm:$0xff]
      %v6111 = vld [vmem:[%s13 + $0x10] sm:$0xff]
      %v6112 = vld [vmem:[%s13 + $0x18] sm:$0xff]
      %v6113 = vld [vmem:[%s13 + $0x20] sm:$0xff]
      %v6114 = vld [vmem:[%s13 + $0x28] sm:$0xff]
      %v6115 = vld [vmem:[%s13 + $0x30] sm:$0xff]
      %v6116 = vld [vmem:[%s13 + $0x38] sm:$0xff]
      %v6117 = vld [vmem:[%s13 + $0x40] sm:$0xff]
      %v6118 = vld [vmem:[%s13 + $0x48] sm:$0xff]
      %v6119 = vld [vmem:[%s13 + $0x50] sm:$0xff]
      %v6120 = vld [vmem:[%s13 + $0x58] sm:$0xff]
      %v6121 = vld [vmem:[%s13 + $0x60] sm:$0xff]
      %v6122 = vld [vmem:[%s13 + $0x68] sm:$0xff]
      %v6123 = vld [vmem:[%s13 + $0x70] sm:$0xff]
      %v6124 = vld [vmem:[%s13 + $0x78] sm:$0xff]
      %v6125 = vld [vmem:[%s14] sm:$0x3]
      %v6127 = vlaneseq
      %v6128 = vshrl.u32 %v6127, 7
      %v6129 = vsub.s32 0, %v6128
      %v6130 = vrot.slane %v6125, %v6129
      %v6131 = vlaneseq
      %v6132 = vshrl.u32 %v6131, 7
      %v6133 = vsub.s32 1, %v6132
      %v6134 = vrot.slane %v6125, %v6133
      %v6138 = vsel %vm5797, %v6108, 0
      %6140 = vmatprep.subr.mxu0 %v6110
      %6141 = vmatpush1.msra.mxu0 %v6109
      %6142 = vmatprep.subr.mxu0 %v6112
      %6143 = vmatpush1.msra.mxu0 %v6111
      %6144 = vmatprep.subr.mxu0 %v6114
      %6145 = vmatpush1.msra.mxu0 %v6113
      %6146 = vmatprep.subr.mxu0 %v6116
      %6147 = vmatpush1.msra.mxu0 %v6115
      %6148 = vmatprep.subr.mxu0 %v6118
      %6149 = vmatpush1.msra.mxu0 %v6117
      %6150 = vmatprep.subr.mxu0 %v6120
      %6151 = vmatpush1.msra.mxu0 %v6119
      %6152 = vmatprep.subr.mxu0 %v6122
      %6153 = vmatpush1.msra.mxu0 %v6121
      %6154 = vmatprep.subr.mxu0 %v6124
      %6155 = vmatpush1.msra.mxu0 %v6123
      %6156 = vmatprep.subr.mxu0 0.0
      %6157 = vmatpush1.msra.mxu0 0.0
      %6158 = vmatprep.subr.mxu0 0.0
      %6159 = vmatpush1.msra.mxu0 0.0
      %6160 = vmatprep.subr.mxu0 0.0
      %6161 = vmatpush1.msra.mxu0 0.0
      %6162 = vmatprep.subr.mxu0 0.0
      %6163 = vmatpush1.msra.mxu0 0.0
      %6164 = vmatprep.subr.mxu0 0.0
      %6165 = vmatpush1.msra.mxu0 0.0
      %6166 = vmatprep.subr.mxu0 0.0
      %6167 = vmatpush1.msra.mxu0 0.0
      %6168 = vmatprep.subr.mxu0 0.0
      %6169 = vmatpush1.msra.mxu0 0.0
      %6170 = vmatprep.subr.mxu0 0.0
      %6171 = vmatpush1.msra.mxu0 0.0
      %6172 = vmatprep.subr.mxu0 0.0
      %6173 = vmatpush1.msra.mxu0 0.0
      %6174 = vmatprep.subr.mxu0 0.0
      %6175 = vmatpush1.msra.mxu0 0.0
      %6176 = vmatprep.subr.mxu0 0.0
      %6177 = vmatpush1.msra.mxu0 0.0
      %6178 = vmatprep.subr.mxu0 0.0
      %6179 = vmatpush1.msra.mxu0 0.0
      %6180 = vmatprep.subr.mxu0 0.0
      %6181 = vmatpush1.msra.mxu0 0.0
      %6182 = vmatprep.subr.mxu0 0.0
      %6183 = vmatpush1.msra.mxu0 0.0
      %6184 = vmatprep.subr.mxu0 0.0
      %6185 = vmatpush1.msra.mxu0 0.0
      %6186 = vmatprep.subr.mxu0 0.0
      %6187 = vmatpush1.msra.mxu0 0.0
      %6188 = vmatprep.subr.mxu0 0.0
      %6189 = vmatpush1.msra.mxu0 0.0
      %6190 = vmatprep.subr.mxu0 0.0
      %6191 = vmatpush1.msra.mxu0 0.0
      %6192 = vmatprep.subr.mxu0 0.0
      %6193 = vmatpush1.msra.mxu0 0.0
      %6194 = vmatprep.subr.mxu0 0.0
      %6195 = vmatpush1.msra.mxu0 0.0
      %6196 = vmatprep.subr.mxu0 0.0
      %6197 = vmatpush1.msra.mxu0 0.0
      %6198 = vmatprep.subr.mxu0 0.0
      %6199 = vmatpush1.msra.mxu0 0.0
      %6200 = vmatprep.subr.mxu0 0.0
      %6201 = vmatpush1.msra.mxu0 0.0
      %6202 = vmatprep.subr.mxu0 0.0
      %6203 = vmatpush1.msra.mxu0 0.0
      %6204 = vmatprep.mubr.f32.mxu0 0.0
      %6205 = vmatmul.mubr.f32.gmra.mrb[0].mxu0 %v6138
      %v6206 = vpop.f32.mrb[0].mxu0
      %v6207 = vadd.f32 %v6130, %v6206
      %v6208 = vpop.f32.mrb[0].mxu0
      %v6209 = vadd.f32 %v6134, %v6208
      %6210 = vdwg.mxu0
      %v6211 = vld [vmem:[%s15] sm:$0xff]
      %v6212 = vld [vmem:[%s15 + $0x8] sm:$0xff]
      %v6213 = vld [vmem:[%s15 + $0x10] sm:$0xff]
      %v6214 = vld [vmem:[%s15 + $0x18] sm:$0xff]
      %v6215 = vld [vmem:[%s15 + $0x20] sm:$0xff]
      %v6216 = vld [vmem:[%s15 + $0x28] sm:$0xff]
      %v6217 = vld [vmem:[%s15 + $0x30] sm:$0xff]
      %v6218 = vld [vmem:[%s15 + $0x38] sm:$0xff]
      %v6219 = vld [vmem:[%s15 + $0x40] sm:$0xff]
      %v6220 = vld [vmem:[%s15 + $0x48] sm:$0xff]
      %v6221 = vld [vmem:[%s15 + $0x50] sm:$0xff]
      %v6222 = vld [vmem:[%s15 + $0x58] sm:$0xff]
      %v6223 = vld [vmem:[%s15 + $0x60] sm:$0xff]
      %v6224 = vld [vmem:[%s15 + $0x68] sm:$0xff]
      %v6225 = vld [vmem:[%s15 + $0x70] sm:$0xff]
      %v6226 = vld [vmem:[%s15 + $0x78] sm:$0xff]
      %v6227 = vld [vmem:[%s15 + $0x80] sm:$0xff]
      %v6228 = vld [vmem:[%s15 + $0x88] sm:$0xff]
      %v6229 = vld [vmem:[%s15 + $0x90] sm:$0xff]
      %v6230 = vld [vmem:[%s15 + $0x98] sm:$0xff]
      %v6231 = vld [vmem:[%s15 + $0xa0] sm:$0xff]
      %v6232 = vld [vmem:[%s15 + $0xa8] sm:$0xff]
      %v6233 = vld [vmem:[%s15 + $0xb0] sm:$0xff]
      %v6234 = vld [vmem:[%s15 + $0xb8] sm:$0xff]
      %v6235 = vld [vmem:[%s16] sm:$0x1]
      %v6237 = vsel %vm5797, %v6209, 0
      %6239 = vmatprep.subr.mxu0 0.0
      %6240 = vmatpush1.msra.mxu0 %v6211
      %6241 = vmatprep.subr.mxu0 0.0
      %6242 = vmatpush1.msra.mxu0 %v6212
      %6243 = vmatprep.subr.mxu0 0.0
      %6244 = vmatpush1.msra.mxu0 %v6213
      %6245 = vmatprep.subr.mxu0 0.0
      %6246 = vmatpush1.msra.mxu0 %v6214
      %6247 = vmatprep.subr.mxu0 0.0
      %6248 = vmatpush1.msra.mxu0 %v6215
      %6249 = vmatprep.subr.mxu0 0.0
      %6250 = vmatpush1.msra.mxu0 %v6216
      %6251 = vmatprep.subr.mxu0 0.0
      %6252 = vmatpush1.msra.mxu0 %v6217
      %6253 = vmatprep.subr.mxu0 0.0
      %6254 = vmatpush1.msra.mxu0 %v6218
      %6255 = vmatprep.subr.mxu0 0.0
      %6256 = vmatpush1.msra.mxu0 %v6219
      %6257 = vmatprep.subr.mxu0 0.0
      %6258 = vmatpush1.msra.mxu0 %v6220
      %6259 = vmatprep.subr.mxu0 0.0
      %6260 = vmatpush1.msra.mxu0 %v6221
      %6261 = vmatprep.subr.mxu0 0.0
      %6262 = vmatpush1.msra.mxu0 %v6222
      %6263 = vmatprep.subr.mxu0 0.0
      %6264 = vmatpush1.msra.mxu0 %v6223
      %6265 = vmatprep.subr.mxu0 0.0
      %6266 = vmatpush1.msra.mxu0 %v6224
      %6267 = vmatprep.subr.mxu0 0.0
      %6268 = vmatpush1.msra.mxu0 %v6225
      %6269 = vmatprep.subr.mxu0 0.0
      %6270 = vmatpush1.msra.mxu0 %v6226
      %6271 = vmatprep.subr.mxu0 0.0
      %6272 = vmatpush1.msra.mxu0 %v6227
      %6273 = vmatprep.subr.mxu0 0.0
      %6274 = vmatpush1.msra.mxu0 %v6228
      %6275 = vmatprep.subr.mxu0 0.0
      %6276 = vmatpush1.msra.mxu0 %v6229
      %6277 = vmatprep.subr.mxu0 0.0
      %6278 = vmatpush1.msra.mxu0 %v6230
      %6279 = vmatprep.subr.mxu0 0.0
      %6280 = vmatpush1.msra.mxu0 %v6231
      %6281 = vmatprep.subr.mxu0 0.0
      %6282 = vmatpush1.msra.mxu0 %v6232
      %6283 = vmatprep.subr.mxu0 0.0
      %6284 = vmatpush1.msra.mxu0 %v6233
      %6285 = vmatprep.subr.mxu0 0.0
      %6286 = vmatpush1.msra.mxu0 %v6234
      %6287 = vmatprep.subr.mxu0 0.0
      %6288 = vmatpush1.msra.mxu0 0.0
      %6289 = vmatprep.subr.mxu0 0.0
      %6290 = vmatpush1.msra.mxu0 0.0
      %6291 = vmatprep.subr.mxu0 0.0
      %6292 = vmatpush1.msra.mxu0 0.0
      %6293 = vmatprep.subr.mxu0 0.0
      %6294 = vmatpush1.msra.mxu0 0.0
      %6295 = vmatprep.subr.mxu0 0.0
      %6296 = vmatpush1.msra.mxu0 0.0
      %6297 = vmatprep.subr.mxu0 0.0
      %6298 = vmatpush1.msra.mxu0 0.0
      %6299 = vmatprep.subr.mxu0 0.0
      %6300 = vmatpush1.msra.mxu0 0.0
      %6301 = vmatprep.subr.mxu0 0.0
      %6302 = vmatpush1.msra.mxu0 0.0
      %6303 = vmatprep.mubr.f32.mxu0 %v6237
      %6304 = vmatmul.mubr.f32.gmra.mrb[0].mxu0 %v6207
      %v6305 = vpop.f32.mrb[0].mxu0
      %v6306 = vadd.f32 %v6235, %v6305
      %v6307 = vpop.f32.mrb[0].mxu0
      %6308 = vdwg.mxu0
      %vm6309 = vcmask 73728
      %6310 = vst.msk [vmem:[%s544] sm:$0x1] %vm6309, %v6306
      %p6311 = scmp.lt.s32.totalorder %s28, 1
      %s6312 = scalar_select %p6311, %s28, 1
      %s6313 = scalar_lea.vmem %s17, %s6312
      // Predicated region
      $region89: #{audio_classifier_forward.1} parent=87 // pred_check
        %p6314 = pneg %p408
      $region90: #{audio_classifier_forward.1} parent=87 // pred_check_branch
        %6316 = sbr.rel (%p6314) target = $region92
      $region91: #{audio_classifier_forward.1} parent=87 // pred_region
        _
      $region92: #{audio_classifier_forward.1} parent=87 // pred_fallthru
        _
    $region88: #{audio_classifier_forward.1} parent=5 // pred_fallthru
      _
    %p6317 = scmp.le.s32.totalorder 2, %s23
    // Predicated region
    $region93: #{audio_classifier_forward.1} parent=5 // pred_check
      %p6318 = pneg %p6317
    $region94: #{audio_classifier_forward.1} parent=5 // pred_check_branch
      %6320 = sbr.rel (%p6318) target = $region96
    $region95: #{audio_classifier_forward.1} parent=5 // pred_region
      %s6321 = ssub.s32 %s23, 2
      // Predicated region
      $region97: #{audio_classifier_forward.1} parent=95 // pred_check
        %p6322 = pneg %p414
      $region98: #{audio_classifier_forward.1} parent=95 // pred_check_branch
        %6324 = sbr.rel (%p6322) target = $region100
      $region99: #{audio_classifier_forward.1} parent=95 // pred_region
        %p6325 = scmp.lt.s32.totalorder %s29, 1
        %s6326 = scalar_select %p6325, %s29, 1
        %s6327 = scalar_lea.vmem %s17, %s6326
      $region100: #{audio_classifier_forward.1} parent=95 // pred_fallthru
        _
    $region96: #{audio_classifier_forward.1} parent=5 // pred_fallthru
      _
  $region6: #{audio_classifier_forward.1} parent=0 // loop_footer
    %s27 = sadd.s32 1, %s23
  $region7: #{audio_classifier_forward.1} parent=0 // loop_footer_branch
    %22 = sbr.rel target = $region3
  $region8: #{audio_classifier_forward.1} parent=0 // loop_exit
    _

</llo_original>
